<compile_context>
chip_gen: v7x
topology: tpu7x:2x2x1
jax: 0.10.0
libtpu: 0.0.40
codegen_flags: <defaults>
</compile_context>

<pallas_src>
import functools

import jax
import jax.numpy as jnp
from jax import lax
from jax.experimental import pallas as pl
from jax.experimental.pallas import tpu as pltpu


# --------------------------------------------------------------------------
# Fused kernel: CAM gate + channel maps + 7x7 SAM conv + final gating,
# all in the lane-dense (C, HW) layout.
# --------------------------------------------------------------------------
def _cbam_kernel(x_ref, w1_ref, b1_ref, w2t_ref, b2_ref, hh_ref, ww_ref,
                 wconv_ref, out_ref, *, C, H, W, K, P, TB):
    HW = H * W
    inv_hw = 1.0 / HW
    inv_c = 1.0 / C

    w1 = w1_ref[...]               # (C, R)  Linear(C -> R) weight
    w2t = w2t_ref[...]             # (C, R)  Linear(R -> C) weight, transposed
    b1 = b1_ref[...]               # (1, R)
    b2 = b2_ref[...]               # (C, 1)
    hh = hh_ref[...]               # (1, HW) row index of each flat position
    ww = ww_ref[...]               # (1, HW) col index of each flat position

    # 7x7 conv taps, read once from SMEM (scalars), layout c*K*K + kh*K + kw.
    wk = [wconv_ref[j] for j in range(2 * K * K)]

    for i in range(TB):            # static unroll over images in this block
        xm = x_ref[i]              # (C, HW) f32

        # ---------------- Channel attention (CAM) ----------------
        p_max = jnp.max(xm, axis=1, keepdims=True)               # (C, 1)
        p_avg = jnp.sum(xm, axis=1, keepdims=True) * inv_hw      # (C, 1)

        # Shared MLP on VPU/XLU only (no N=2 MXU matmul on the critical path).
        # TODO(synk): nn.Dropout(0.2) is identity at inference; no RNG applied.
        h_max = jnp.maximum(
            jnp.sum(w1 * p_max, axis=0, keepdims=True) + b1, 0.0)   # (1, R)
        h_avg = jnp.maximum(
            jnp.sum(w1 * p_avg, axis=0, keepdims=True) + b1, 0.0)   # (1, R)
        o_max = jnp.sum(w2t * h_max, axis=1, keepdims=True) + b2    # (C, 1)
        o_avg = jnp.sum(w2t * h_avg, axis=1, keepdims=True) + b2    # (C, 1)

        gate_c = jax.nn.sigmoid(o_max + o_avg)                    # (C, 1)
        y = xm * gate_c                                           # (C, HW)

        # ---------------- Spatial attention (SAM), fused ----------------
        # Channel-wise max / mean (sublane reductions) -> (2, HW) rows.
        sp = jnp.concatenate(
            [jnp.max(y, axis=0, keepdims=True),
             jnp.sum(y, axis=0, keepdims=True) * inv_c], axis=0)  # (2, HW)

        # Direct 7x7 conv (pad=3, no bias) in the flat layout: each tap is a
        # static lane roll of the (2, HW) maps (XLU, off the VPU slot) plus a
        # boundary mask that zeroes contributions crossing image edges.
        acc = jnp.zeros((1, HW), jnp.float32)
        for kh in range(K):
            dh = kh - P
            mh = (hh >= -dh) & (hh < H - dh)
            for kw in range(K):
                dw = kw - P
                m = mh & (ww >= -dw) & (ww < W - dw)
                shift = (-(dh * W + dw)) % HW
                r = sp if shift == 0 else pltpu.roll(sp, shift=shift, axis=1)
                tap = (wk[kh * K + kw] * r[0:1]
                       + wk[K * K + kh * K + kw] * r[1:2])        # (1, HW)
                acc = acc + jnp.where(m, tap, 0.0)

        out_ref[i] = y * jax.nn.sigmoid(acc)                      # (C, HW)


# --------------------------------------------------------------------------
# Wrapper
# --------------------------------------------------------------------------
def _vmem_limit_bytes():
    try:
        cap = pltpu.get_tpu_info().vmem_capacity_bytes
    except Exception:  # best-effort hardware query
        cap = None
    if not cap:
        return 48 * 1024 * 1024          # conservative, works on every part
    # ~56 MiB on v7x (64 MiB physical), capped at 100 MiB on v5e/v6e (128 MiB).
    return int(min(cap - 8 * 1024 * 1024, 100 * 1024 * 1024))


def _pick_images_per_block(B, C, HW, itemsize=4,
                           max_block_bytes=1 << 20, max_tb=8):
    """Images per grid step: amortize ~0.35us/step when C*HW is small."""
    per_image = max(C * HW * itemsize, 1)
    tb = 1
    for cand in range(1, min(B, max_tb) + 1):
        if B % cand == 0 and cand * per_image <= max_block_bytes:
            tb = cand
    return tb


def cbam_pallas(x, w1, b1, w2, b2, wconv_flat):
    B, C, H, W = x.shape
    R = w1.shape[1]
    HW = H * W
    K, P = 7, 3

    # Free trailing-dim merge to the lane-dense flat layout; tiny param prep.
    x3 = x.reshape(B, C, HW).astype(jnp.float32)
    w1f = w1.astype(jnp.float32)                     # (C, R)
    w2t = jnp.transpose(w2).astype(jnp.float32)      # (C, R)
    b1r = b1.reshape(1, R).astype(jnp.float32)
    b2c = b2.reshape(C, 1).astype(jnp.float32)
    idx = jnp.arange(HW, dtype=jnp.int32)
    hh = (idx // W).reshape(1, HW)                   # flat -> row index
    ww = (idx % W).reshape(1, HW)                    # flat -> col index

    TB = _pick_images_per_block(B, C, HW)

    # Memory-bound hint: one read of x, one write of out, tiny params.
    flops = B * (8 * C * R + 4 * C * HW + 4 * K * K * HW)
    bytes_accessed = 2 * B * C * HW * 4 + (2 * C * R + C + R + 2 * HW) * 4
    transcendentals = B * (C + HW)

    kern = functools.partial(_cbam_kernel, C=C, H=H, W=W, K=K, P=P, TB=TB)
    out3 = pl.pallas_call(
        kern,
        out_shape=jax.ShapeDtypeStruct((B, C, HW), jnp.float32),
        grid=(B // TB,),
        in_specs=[
            pl.BlockSpec((TB, C, HW), lambda b: (b, 0, 0)),      # x
            # TODO(synk): on v7x with huge C, single-buffer these resident
            # weights (constant index_map) instead of default double buffering.
            pl.BlockSpec((C, R), lambda b: (0, 0)),              # w1
            pl.BlockSpec((1, R), lambda b: (0, 0)),              # b1 (row)
            pl.BlockSpec((C, R), lambda b: (0, 0)),              # w2^T
            pl.BlockSpec((C, 1), lambda b: (0, 0)),              # b2 (col)
            pl.BlockSpec((1, HW), lambda b: (0, 0)),             # hh indices
            pl.BlockSpec((1, HW), lambda b: (0, 0)),             # ww indices
            pl.BlockSpec(memory_space=pltpu.MemorySpace.SMEM),   # conv taps
        ],
        out_specs=pl.BlockSpec((TB, C, HW), lambda b: (b, 0, 0)),
        compiler_params=pltpu.CompilerParams(
            dimension_semantics=("parallel",),
            vmem_limit_bytes=_vmem_limit_bytes()),
        cost_estimate=pl.CostEstimate(
            flops=int(flops),
            bytes_accessed=int(bytes_accessed),
            transcendentals=int(transcendentals)),
        # TODO(synk): for very large C*HW (e.g. C=1024 @ 56x56 on v7x's 64 MiB
        # VMEM) stream x/out as bf16 or add an HW-tiled grid axis; whole-image
        # blocks fit comfortably for the shapes exercised here.
    )(x3, w1f, b1r, w2t, b2c, hh, ww, wconv_flat.astype(jnp.float32))

    return out3.reshape(B, C, H, W)


# --------------------------------------------------------------------------
# Pure-JAX reference (mirrors the PyTorch forward, dropout in eval mode)
# --------------------------------------------------------------------------
def cbam_ref(x, w1, b1, w2, b2, wconv_flat):
    q_max = jnp.max(x, axis=(2, 3))
    q_avg = jnp.mean(x, axis=(2, 3))

    def mlp(v):
        h = jnp.maximum(v @ w1 + b1[0], 0.0)
        return h @ w2 + b2[0]

    gate = jax.nn.sigmoid(mlp(q_max) + mlp(q_avg))
    y = x * gate[:, :, None, None]

    sp = jnp.concatenate([jnp.max(y, axis=1, keepdims=True),
                          jnp.mean(y, axis=1, keepdims=True)], axis=1)
    wk = wconv_flat.reshape(1, 2, 7, 7)
    conv = lax.conv_general_dilated(sp, wk, (1, 1), [(3, 3), (3, 3)],
                                    dimension_numbers=("NCHW", "OIHW", "NCHW"))
    return y * jax.nn.sigmoid(conv)


if __name__ == "__main__":
    B, C, H, W = 2, 4, 16, 16
    reduction_ratio = 8
    red = C // reduction_ratio
    if red < 1:
        red = C

    key = jax.random.PRNGKey(0)
    kx, k1, k2, k3, k4, k5 = jax.random.split(key, 6)
    x = jax.random.normal(kx, (B, C, H, W), jnp.float32)
    w1 = 0.2 * jax.random.normal(k1, (C, red), jnp.float32)         # Linear(C -> red)
    b1 = 0.1 * jax.random.normal(k2, (1, red), jnp.float32)
    w2 = 0.2 * jax.random.normal(k3, (red, C), jnp.float32)         # Linear(red -> C)
    b2 = 0.1 * jax.random.normal(k4, (1, C), jnp.float32)
    wconv = 0.1 * jax.random.normal(k5, (2 * 7 * 7,), jnp.float32)  # Conv2d(2,1,7,7), no bias

    out = jax.block_until_ready(cbam_pallas(x, w1, b1, w2, b2, wconv))
    ref = jax.block_until_ready(cbam_ref(x, w1, b1, w2, b2, wconv))

    assert out.shape == (B, C, H, W), out.shape
    err = float(jnp.max(jnp.abs(out - ref)))
    assert err < 1e-4, f"max abs error {err}"
    print("KERNEL_OK")
</pallas_src>

<mosaic_0001>
module attributes {stable_mosaic.version = 11 : i64} {
  func.func @_cbam_kernel(%arg0: i32, %arg1: memref<2x4x256xf32, #tpu.memory_space<vmem>>, %arg2: memref<4x4xf32, #tpu.memory_space<vmem>>, %arg3: memref<1x4xf32, #tpu.memory_space<vmem>>, %arg4: memref<4x4xf32, #tpu.memory_space<vmem>>, %arg5: memref<4x1xf32, #tpu.memory_space<vmem>>, %arg6: memref<1x256xi32, #tpu.memory_space<vmem>>, %arg7: memref<1x256xi32, #tpu.memory_space<vmem>>, %arg8: memref<98xf32, #tpu.memory_space<smem>>, %arg9: memref<2x4x256xf32, #tpu.memory_space<vmem>>) attributes {dimension_semantics = [#tpu.dimension_semantics<parallel>], iteration_bounds = array<i64: 1>, scalar_prefetch = 0 : i64, scratch_operands = 0 : i64, tpu.core_type = #tpu.core_type<tc>, window_params = [{transform_indices = @transform_0, window_bounds = array<i64: 2, 4, 256>}, {pipeline_mode = #tpu.pipeline_mode<synchronous>, transform_indices = @transform_1, window_bounds = array<i64: 4, 4>}, {pipeline_mode = #tpu.pipeline_mode<synchronous>, transform_indices = @transform_2, window_bounds = array<i64: 1, 4>}, {pipeline_mode = #tpu.pipeline_mode<synchronous>, transform_indices = @transform_3, window_bounds = array<i64: 4, 4>}, {pipeline_mode = #tpu.pipeline_mode<synchronous>, transform_indices = @transform_4, window_bounds = array<i64: 4, 1>}, {pipeline_mode = #tpu.pipeline_mode<synchronous>, transform_indices = @transform_5, window_bounds = array<i64: 1, 256>}, {pipeline_mode = #tpu.pipeline_mode<synchronous>, transform_indices = @transform_6, window_bounds = array<i64: 1, 256>}, {transform_indices = @transform_7, window_bounds = array<i64: 98>}, {transform_indices = @transform_8, window_bounds = array<i64: 2, 4, 256>}]} {
    %c0 = arith.constant 0 : index
    %c0_0 = arith.constant 0 : index
    %0 = vector.load %arg2[%c0, %c0_0] : memref<4x4xf32, #tpu.memory_space<vmem>>, vector<4x4xf32>
    %c0_1 = arith.constant 0 : index
    %c0_2 = arith.constant 0 : index
    %1 = vector.load %arg4[%c0_1, %c0_2] : memref<4x4xf32, #tpu.memory_space<vmem>>, vector<4x4xf32>
    %c0_3 = arith.constant 0 : index
    %c0_4 = arith.constant 0 : index
    %2 = vector.load %arg3[%c0_3, %c0_4] : memref<1x4xf32, #tpu.memory_space<vmem>>, vector<1x4xf32>
    %c0_5 = arith.constant 0 : index
    %c0_6 = arith.constant 0 : index
    %3 = vector.load %arg5[%c0_5, %c0_6] : memref<4x1xf32, #tpu.memory_space<vmem>>, vector<4x1xf32>
    %c0_7 = arith.constant 0 : index
    %c0_8 = arith.constant 0 : index
    %4 = vector.load %arg6[%c0_7, %c0_8] : memref<1x256xi32, #tpu.memory_space<vmem>>, vector<1x256xi32>
    %c0_9 = arith.constant 0 : index
    %c0_10 = arith.constant 0 : index
    %5 = vector.load %arg7[%c0_9, %c0_10] : memref<1x256xi32, #tpu.memory_space<vmem>>, vector<1x256xi32>
    %c0_11 = arith.constant 0 : index
    %6 = memref.load %arg8[%c0_11] : memref<98xf32, #tpu.memory_space<smem>>
    %c1 = arith.constant 1 : index
    %7 = memref.load %arg8[%c1] : memref<98xf32, #tpu.memory_space<smem>>
    %c2 = arith.constant 2 : index
    %8 = memref.load %arg8[%c2] : memref<98xf32, #tpu.memory_space<smem>>
    %c3 = arith.constant 3 : index
    %9 = memref.load %arg8[%c3] : memref<98xf32, #tpu.memory_space<smem>>
    %c4 = arith.constant 4 : index
    %10 = memref.load %arg8[%c4] : memref<98xf32, #tpu.memory_space<smem>>
    %c5 = arith.constant 5 : index
    %11 = memref.load %arg8[%c5] : memref<98xf32, #tpu.memory_space<smem>>
    %c6 = arith.constant 6 : index
    %12 = memref.load %arg8[%c6] : memref<98xf32, #tpu.memory_space<smem>>
    %c7 = arith.constant 7 : index
    %13 = memref.load %arg8[%c7] : memref<98xf32, #tpu.memory_space<smem>>
    %c8 = arith.constant 8 : index
    %14 = memref.load %arg8[%c8] : memref<98xf32, #tpu.memory_space<smem>>
    %c9 = arith.constant 9 : index
    %15 = memref.load %arg8[%c9] : memref<98xf32, #tpu.memory_space<smem>>
    %c10 = arith.constant 10 : index
    %16 = memref.load %arg8[%c10] : memref<98xf32, #tpu.memory_space<smem>>
    %c11 = arith.constant 11 : index
    %17 = memref.load %arg8[%c11] : memref<98xf32, #tpu.memory_space<smem>>
    %c12 = arith.constant 12 : index
    %18 = memref.load %arg8[%c12] : memref<98xf32, #tpu.memory_space<smem>>
    %c13 = arith.constant 13 : index
    %19 = memref.load %arg8[%c13] : memref<98xf32, #tpu.memory_space<smem>>
    %c14 = arith.constant 14 : index
    %20 = memref.load %arg8[%c14] : memref<98xf32, #tpu.memory_space<smem>>
    %c15 = arith.constant 15 : index
    %21 = memref.load %arg8[%c15] : memref<98xf32, #tpu.memory_space<smem>>
    %c16 = arith.constant 16 : index
    %22 = memref.load %arg8[%c16] : memref<98xf32, #tpu.memory_space<smem>>
    %c17 = arith.constant 17 : index
    %23 = memref.load %arg8[%c17] : memref<98xf32, #tpu.memory_space<smem>>
    %c18 = arith.constant 18 : index
    %24 = memref.load %arg8[%c18] : memref<98xf32, #tpu.memory_space<smem>>
    %c19 = arith.constant 19 : index
    %25 = memref.load %arg8[%c19] : memref<98xf32, #tpu.memory_space<smem>>
    %c20 = arith.constant 20 : index
    %26 = memref.load %arg8[%c20] : memref<98xf32, #tpu.memory_space<smem>>
    %c21 = arith.constant 21 : index
    %27 = memref.load %arg8[%c21] : memref<98xf32, #tpu.memory_space<smem>>
    %c22 = arith.constant 22 : index
    %28 = memref.load %arg8[%c22] : memref<98xf32, #tpu.memory_space<smem>>
    %c23 = arith.constant 23 : index
    %29 = memref.load %arg8[%c23] : memref<98xf32, #tpu.memory_space<smem>>
    %c24 = arith.constant 24 : index
    %30 = memref.load %arg8[%c24] : memref<98xf32, #tpu.memory_space<smem>>
    %c25 = arith.constant 25 : index
    %31 = memref.load %arg8[%c25] : memref<98xf32, #tpu.memory_space<smem>>
    %c26 = arith.constant 26 : index
    %32 = memref.load %arg8[%c26] : memref<98xf32, #tpu.memory_space<smem>>
    %c27 = arith.constant 27 : index
    %33 = memref.load %arg8[%c27] : memref<98xf32, #tpu.memory_space<smem>>
    %c28 = arith.constant 28 : index
    %34 = memref.load %arg8[%c28] : memref<98xf32, #tpu.memory_space<smem>>
    %c29 = arith.constant 29 : index
    %35 = memref.load %arg8[%c29] : memref<98xf32, #tpu.memory_space<smem>>
    %c30 = arith.constant 30 : index
    %36 = memref.load %arg8[%c30] : memref<98xf32, #tpu.memory_space<smem>>
    %c31 = arith.constant 31 : index
    %37 = memref.load %arg8[%c31] : memref<98xf32, #tpu.memory_space<smem>>
    %c32 = arith.constant 32 : index
    %38 = memref.load %arg8[%c32] : memref<98xf32, #tpu.memory_space<smem>>
    %c33 = arith.constant 33 : index
    %39 = memref.load %arg8[%c33] : memref<98xf32, #tpu.memory_space<smem>>
    %c34 = arith.constant 34 : index
    %40 = memref.load %arg8[%c34] : memref<98xf32, #tpu.memory_space<smem>>
    %c35 = arith.constant 35 : index
    %41 = memref.load %arg8[%c35] : memref<98xf32, #tpu.memory_space<smem>>
    %c36 = arith.constant 36 : index
    %42 = memref.load %arg8[%c36] : memref<98xf32, #tpu.memory_space<smem>>
    %c37 = arith.constant 37 : index
    %43 = memref.load %arg8[%c37] : memref<98xf32, #tpu.memory_space<smem>>
    %c38 = arith.constant 38 : index
    %44 = memref.load %arg8[%c38] : memref<98xf32, #tpu.memory_space<smem>>
    %c39 = arith.constant 39 : index
    %45 = memref.load %arg8[%c39] : memref<98xf32, #tpu.memory_space<smem>>
    %c40 = arith.constant 40 : index
    %46 = memref.load %arg8[%c40] : memref<98xf32, #tpu.memory_space<smem>>
    %c41 = arith.constant 41 : index
    %47 = memref.load %arg8[%c41] : memref<98xf32, #tpu.memory_space<smem>>
    %c42 = arith.constant 42 : index
    %48 = memref.load %arg8[%c42] : memref<98xf32, #tpu.memory_space<smem>>
    %c43 = arith.constant 43 : index
    %49 = memref.load %arg8[%c43] : memref<98xf32, #tpu.memory_space<smem>>
    %c44 = arith.constant 44 : index
    %50 = memref.load %arg8[%c44] : memref<98xf32, #tpu.memory_space<smem>>
    %c45 = arith.constant 45 : index
    %51 = memref.load %arg8[%c45] : memref<98xf32, #tpu.memory_space<smem>>
    %c46 = arith.constant 46 : index
    %52 = memref.load %arg8[%c46] : memref<98xf32, #tpu.memory_space<smem>>
    %c47 = arith.constant 47 : index
    %53 = memref.load %arg8[%c47] : memref<98xf32, #tpu.memory_space<smem>>
    %c48 = arith.constant 48 : index
    %54 = memref.load %arg8[%c48] : memref<98xf32, #tpu.memory_space<smem>>
    %c49 = arith.constant 49 : index
    %55 = memref.load %arg8[%c49] : memref<98xf32, #tpu.memory_space<smem>>
    %c50 = arith.constant 50 : index
    %56 = memref.load %arg8[%c50] : memref<98xf32, #tpu.memory_space<smem>>
    %c51 = arith.constant 51 : index
    %57 = memref.load %arg8[%c51] : memref<98xf32, #tpu.memory_space<smem>>
    %c52 = arith.constant 52 : index
    %58 = memref.load %arg8[%c52] : memref<98xf32, #tpu.memory_space<smem>>
    %c53 = arith.constant 53 : index
    %59 = memref.load %arg8[%c53] : memref<98xf32, #tpu.memory_space<smem>>
    %c54 = arith.constant 54 : index
    %60 = memref.load %arg8[%c54] : memref<98xf32, #tpu.memory_space<smem>>
    %c55 = arith.constant 55 : index
    %61 = memref.load %arg8[%c55] : memref<98xf32, #tpu.memory_space<smem>>
    %c56 = arith.constant 56 : index
    %62 = memref.load %arg8[%c56] : memref<98xf32, #tpu.memory_space<smem>>
    %c57 = arith.constant 57 : index
    %63 = memref.load %arg8[%c57] : memref<98xf32, #tpu.memory_space<smem>>
    %c58 = arith.constant 58 : index
    %64 = memref.load %arg8[%c58] : memref<98xf32, #tpu.memory_space<smem>>
    %c59 = arith.constant 59 : index
    %65 = memref.load %arg8[%c59] : memref<98xf32, #tpu.memory_space<smem>>
    %c60 = arith.constant 60 : index
    %66 = memref.load %arg8[%c60] : memref<98xf32, #tpu.memory_space<smem>>
    %c61 = arith.constant 61 : index
    %67 = memref.load %arg8[%c61] : memref<98xf32, #tpu.memory_space<smem>>
    %c62 = arith.constant 62 : index
    %68 = memref.load %arg8[%c62] : memref<98xf32, #tpu.memory_space<smem>>
    %c63 = arith.constant 63 : index
    %69 = memref.load %arg8[%c63] : memref<98xf32, #tpu.memory_space<smem>>
    %c64 = arith.constant 64 : index
    %70 = memref.load %arg8[%c64] : memref<98xf32, #tpu.memory_space<smem>>
    %c65 = arith.constant 65 : index
    %71 = memref.load %arg8[%c65] : memref<98xf32, #tpu.memory_space<smem>>
    %c66 = arith.constant 66 : index
    %72 = memref.load %arg8[%c66] : memref<98xf32, #tpu.memory_space<smem>>
    %c67 = arith.constant 67 : index
    %73 = memref.load %arg8[%c67] : memref<98xf32, #tpu.memory_space<smem>>
    %c68 = arith.constant 68 : index
    %74 = memref.load %arg8[%c68] : memref<98xf32, #tpu.memory_space<smem>>
    %c69 = arith.constant 69 : index
    %75 = memref.load %arg8[%c69] : memref<98xf32, #tpu.memory_space<smem>>
    %c70 = arith.constant 70 : index
    %76 = memref.load %arg8[%c70] : memref<98xf32, #tpu.memory_space<smem>>
    %c71 = arith.constant 71 : index
    %77 = memref.load %arg8[%c71] : memref<98xf32, #tpu.memory_space<smem>>
    %c72 = arith.constant 72 : index
    %78 = memref.load %arg8[%c72] : memref<98xf32, #tpu.memory_space<smem>>
    %c73 = arith.constant 73 : index
    %79 = memref.load %arg8[%c73] : memref<98xf32, #tpu.memory_space<smem>>
    %c74 = arith.constant 74 : index
    %80 = memref.load %arg8[%c74] : memref<98xf32, #tpu.memory_space<smem>>
    %c75 = arith.constant 75 : index
    %81 = memref.load %arg8[%c75] : memref<98xf32, #tpu.memory_space<smem>>
    %c76 = arith.constant 76 : index
    %82 = memref.load %arg8[%c76] : memref<98xf32, #tpu.memory_space<smem>>
    %c77 = arith.constant 77 : index
    %83 = memref.load %arg8[%c77] : memref<98xf32, #tpu.memory_space<smem>>
    %c78 = arith.constant 78 : index
    %84 = memref.load %arg8[%c78] : memref<98xf32, #tpu.memory_space<smem>>
    %c79 = arith.constant 79 : index
    %85 = memref.load %arg8[%c79] : memref<98xf32, #tpu.memory_space<smem>>
    %c80 = arith.constant 80 : index
    %86 = memref.load %arg8[%c80] : memref<98xf32, #tpu.memory_space<smem>>
    %c81 = arith.constant 81 : index
    %87 = memref.load %arg8[%c81] : memref<98xf32, #tpu.memory_space<smem>>
    %c82 = arith.constant 82 : index
    %88 = memref.load %arg8[%c82] : memref<98xf32, #tpu.memory_space<smem>>
    %c83 = arith.constant 83 : index
    %89 = memref.load %arg8[%c83] : memref<98xf32, #tpu.memory_space<smem>>
    %c84 = arith.constant 84 : index
    %90 = memref.load %arg8[%c84] : memref<98xf32, #tpu.memory_space<smem>>
    %c85 = arith.constant 85 : index
    %91 = memref.load %arg8[%c85] : memref<98xf32, #tpu.memory_space<smem>>
    %c86 = arith.constant 86 : index
    %92 = memref.load %arg8[%c86] : memref<98xf32, #tpu.memory_space<smem>>
    %c87 = arith.constant 87 : index
    %93 = memref.load %arg8[%c87] : memref<98xf32, #tpu.memory_space<smem>>
    %c88 = arith.constant 88 : index
    %94 = memref.load %arg8[%c88] : memref<98xf32, #tpu.memory_space<smem>>
    %c89 = arith.constant 89 : index
    %95 = memref.load %arg8[%c89] : memref<98xf32, #tpu.memory_space<smem>>
    %c90 = arith.constant 90 : index
    %96 = memref.load %arg8[%c90] : memref<98xf32, #tpu.memory_space<smem>>
    %c91 = arith.constant 91 : index
    %97 = memref.load %arg8[%c91] : memref<98xf32, #tpu.memory_space<smem>>
    %c92 = arith.constant 92 : index
    %98 = memref.load %arg8[%c92] : memref<98xf32, #tpu.memory_space<smem>>
    %c93 = arith.constant 93 : index
    %99 = memref.load %arg8[%c93] : memref<98xf32, #tpu.memory_space<smem>>
    %c94 = arith.constant 94 : index
    %100 = memref.load %arg8[%c94] : memref<98xf32, #tpu.memory_space<smem>>
    %c95 = arith.constant 95 : index
    %101 = memref.load %arg8[%c95] : memref<98xf32, #tpu.memory_space<smem>>
    %c96 = arith.constant 96 : index
    %102 = memref.load %arg8[%c96] : memref<98xf32, #tpu.memory_space<smem>>
    %c97 = arith.constant 97 : index
    %103 = memref.load %arg8[%c97] : memref<98xf32, #tpu.memory_space<smem>>
    %c0_12 = arith.constant 0 : index
    %c0_13 = arith.constant 0 : index
    %c0_14 = arith.constant 0 : index
    %104 = vector.load %arg1[%c0_12, %c0_13, %c0_14] : memref<2x4x256xf32, #tpu.memory_space<vmem>>, vector<1x4x256xf32>
    %105 = vector.shape_cast %104 : vector<1x4x256xf32> to vector<4x256xf32>
    %cst = arith.constant dense<0xFF800000> : vector<4xf32>
    %106 = vector.multi_reduction <maximumf>, %105, %cst [1] : vector<4x256xf32> to vector<4xf32>
    %107 = vector.shape_cast %106 : vector<4xf32> to vector<4x1xf32>
    %cst_15 = arith.constant dense<0.000000e+00> : vector<4xf32>
    %108 = vector.multi_reduction <add>, %105, %cst_15 [1] : vector<4x256xf32> to vector<4xf32>
    %109 = vector.shape_cast %108 : vector<4xf32> to vector<4x1xf32>
    %cst_16 = arith.constant 3.906250e-03 : f32
    %110 = vector.broadcast %cst_16 : f32 to vector<4x1xf32>
    %111 = arith.mulf %109, %110 : vector<4x1xf32>
    %112 = vector.broadcast %107 : vector<4x1xf32> to vector<4x4xf32>
    %113 = arith.mulf %0, %112 : vector<4x4xf32>
    %cst_17 = arith.constant dense<0.000000e+00> : vector<4xf32>
    %114 = vector.multi_reduction <add>, %113, %cst_17 [0] : vector<4x4xf32> to vector<4xf32>
    %115 = vector.shape_cast %114 : vector<4xf32> to vector<1x4xf32>
    %116 = arith.addf %115, %2 : vector<1x4xf32>
    %cst_18 = arith.constant 0.000000e+00 : f32
    %117 = vector.broadcast %cst_18 : f32 to vector<1x4xf32>
    %118 = arith.maximumf %116, %117 : vector<1x4xf32>
    %119 = vector.broadcast %111 : vector<4x1xf32> to vector<4x4xf32>
    %120 = arith.mulf %0, %119 : vector<4x4xf32>
    %cst_19 = arith.constant dense<0.000000e+00> : vector<4xf32>
    %121 = vector.multi_reduction <add>, %120, %cst_19 [0] : vector<4x4xf32> to vector<4xf32>
    %122 = vector.shape_cast %121 : vector<4xf32> to vector<1x4xf32>
    %123 = arith.addf %122, %2 : vector<1x4xf32>
    %cst_20 = arith.constant 0.000000e+00 : f32
    %124 = vector.broadcast %cst_20 : f32 to vector<1x4xf32>
    %125 = arith.maximumf %123, %124 : vector<1x4xf32>
    %126 = vector.broadcast %118 : vector<1x4xf32> to vector<4x4xf32>
    %127 = arith.mulf %1, %126 : vector<4x4xf32>
    %cst_21 = arith.constant dense<0.000000e+00> : vector<4xf32>
    %128 = vector.multi_reduction <add>, %127, %cst_21 [1] : vector<4x4xf32> to vector<4xf32>
    %129 = vector.shape_cast %128 : vector<4xf32> to vector<4x1xf32>
    %130 = arith.addf %129, %3 : vector<4x1xf32>
    %131 = vector.broadcast %125 : vector<1x4xf32> to vector<4x4xf32>
    %132 = arith.mulf %1, %131 : vector<4x4xf32>
    %cst_22 = arith.constant dense<0.000000e+00> : vector<4xf32>
    %133 = vector.multi_reduction <add>, %132, %cst_22 [1] : vector<4x4xf32> to vector<4xf32>
    %134 = vector.shape_cast %133 : vector<4xf32> to vector<4x1xf32>
    %135 = arith.addf %134, %3 : vector<4x1xf32>
    %136 = arith.addf %130, %135 : vector<4x1xf32>
    %137 = arith.negf %136 : vector<4x1xf32>
    %138 = math.exp %137 : vector<4x1xf32>
    %cst_23 = arith.constant 1.000000e+00 : f32
    %139 = vector.broadcast %cst_23 : f32 to vector<4x1xf32>
    %140 = arith.addf %139, %138 : vector<4x1xf32>
    %141 = arith.divf %139, %140 : vector<4x1xf32>
    %142 = vector.broadcast %141 : vector<4x1xf32> to vector<4x256xf32>
    %143 = arith.mulf %105, %142 : vector<4x256xf32>
    %cst_24 = arith.constant dense<0xFF800000> : vector<256xf32>
    %144 = vector.multi_reduction <maximumf>, %143, %cst_24 [0] : vector<4x256xf32> to vector<256xf32>
    %145 = vector.shape_cast %144 : vector<256xf32> to vector<1x256xf32>
    %cst_25 = arith.constant dense<0.000000e+00> : vector<256xf32>
    %146 = vector.multi_reduction <add>, %143, %cst_25 [0] : vector<4x256xf32> to vector<256xf32>
    %147 = vector.shape_cast %146 : vector<256xf32> to vector<1x256xf32>
    %cst_26 = arith.constant 2.500000e-01 : f32
    %148 = vector.broadcast %cst_26 : f32 to vector<1x256xf32>
    %149 = arith.mulf %147, %148 : vector<1x256xf32>
    %150 = tpu.concatenate %145, %149 in 0 : vector<1x256xf32>, vector<1x256xf32> -> vector<2x256xf32>
    %cst_27 = arith.constant 0.000000e+00 : f32
    %151 = vector.broadcast %cst_27 : f32 to vector<1x256xf32>
    %c3_i32 = arith.constant 3 : i32
    %152 = vector.broadcast %c3_i32 : i32 to vector<1x256xi32>
    %153 = arith.cmpi sge, %4, %152 : vector<1x256xi32>
    %c19_i32 = arith.constant 19 : i32
    %154 = vector.broadcast %c19_i32 : i32 to vector<1x256xi32>
    %155 = arith.cmpi slt, %4, %154 : vector<1x256xi32>
    %156 = arith.andi %153, %155 : vector<1x256xi1>
    %c3_i32_28 = arith.constant 3 : i32
    %157 = vector.broadcast %c3_i32_28 : i32 to vector<1x256xi32>
    %158 = arith.cmpi sge, %5, %157 : vector<1x256xi32>
    %159 = arith.andi %156, %158 : vector<1x256xi1>
    %c19_i32_29 = arith.constant 19 : i32
    %160 = vector.broadcast %c19_i32_29 : i32 to vector<1x256xi32>
    %161 = arith.cmpi slt, %5, %160 : vector<1x256xi32>
    %162 = arith.andi %159, %161 : vector<1x256xi1>
    %c51_i32 = arith.constant 51 : i32
    %163 = tpu.dynamic_rotate %150 by %c51_i32 dim 1 : vector<2x256xf32>, i32 -> vector<2x256xf32>
    %164 = vector.extract_strided_slice %163 {offsets = [0, 0], sizes = [1, 256], strides = [1, 1]} : vector<2x256xf32> to vector<1x256xf32>
    %165 = vector.broadcast %6 : f32 to vector<1x256xf32>
    %166 = arith.mulf %165, %164 : vector<1x256xf32>
    %167 = vector.extract_strided_slice %163 {offsets = [1, 0], sizes = [1, 256], strides = [1, 1]} : vector<2x256xf32> to vector<1x256xf32>
    %168 = vector.broadcast %55 : f32 to vector<1x256xf32>
    %169 = arith.mulf %168, %167 : vector<1x256xf32>
    %170 = arith.addf %166, %169 : vector<1x256xf32>
    %cst_30 = arith.constant 0.000000e+00 : f32
    %171 = vector.broadcast %cst_30 : f32 to vector<1x256xf32>
    %172 = arith.select %162, %170, %171 : vector<1x256xi1>, vector<1x256xf32>
    %173 = arith.addf %151, %172 : vector<1x256xf32>
    %c2_i32 = arith.constant 2 : i32
    %174 = vector.broadcast %c2_i32 : i32 to vector<1x256xi32>
    %175 = arith.cmpi sge, %5, %174 : vector<1x256xi32>
    %176 = arith.andi %156, %175 : vector<1x256xi1>
    %c18_i32 = arith.constant 18 : i32
    %177 = vector.broadcast %c18_i32 : i32 to vector<1x256xi32>
    %178 = arith.cmpi slt, %5, %177 : vector<1x256xi32>
    %179 = arith.andi %176, %178 : vector<1x256xi1>
    %c50_i32 = arith.constant 50 : i32
    %180 = tpu.dynamic_rotate %150 by %c50_i32 dim 1 : vector<2x256xf32>, i32 -> vector<2x256xf32>
    %181 = vector.extract_strided_slice %180 {offsets = [0, 0], sizes = [1, 256], strides = [1, 1]} : vector<2x256xf32> to vector<1x256xf32>
    %182 = vector.broadcast %7 : f32 to vector<1x256xf32>
    %183 = arith.mulf %182, %181 : vector<1x256xf32>
    %184 = vector.extract_strided_slice %180 {offsets = [1, 0], sizes = [1, 256], strides = [1, 1]} : vector<2x256xf32> to vector<1x256xf32>
    %185 = vector.broadcast %56 : f32 to vector<1x256xf32>
    %186 = arith.mulf %185, %184 : vector<1x256xf32>
    %187 = arith.addf %183, %186 : vector<1x256xf32>
    %cst_31 = arith.constant 0.000000e+00 : f32
    %188 = vector.broadcast %cst_31 : f32 to vector<1x256xf32>
    %189 = arith.select %179, %187, %188 : vector<1x256xi1>, vector<1x256xf32>
    %190 = arith.addf %173, %189 : vector<1x256xf32>
    %c1_i32 = arith.constant 1 : i32
    %191 = vector.broadcast %c1_i32 : i32 to vector<1x256xi32>
    %192 = arith.cmpi sge, %5, %191 : vector<1x256xi32>
    %193 = arith.andi %156, %192 : vector<1x256xi1>
    %c17_i32 = arith.constant 17 : i32
    %194 = vector.broadcast %c17_i32 : i32 to vector<1x256xi32>
    %195 = arith.cmpi slt, %5, %194 : vector<1x256xi32>
    %196 = arith.andi %193, %195 : vector<1x256xi1>
    %c49_i32 = arith.constant 49 : i32
    %197 = tpu.dynamic_rotate %150 by %c49_i32 dim 1 : vector<2x256xf32>, i32 -> vector<2x256xf32>
    %198 = vector.extract_strided_slice %197 {offsets = [0, 0], sizes = [1, 256], strides = [1, 1]} : vector<2x256xf32> to vector<1x256xf32>
    %199 = vector.broadcast %8 : f32 to vector<1x256xf32>
    %200 = arith.mulf %199, %198 : vector<1x256xf32>
    %201 = vector.extract_strided_slice %197 {offsets = [1, 0], sizes = [1, 256], strides = [1, 1]} : vector<2x256xf32> to vector<1x256xf32>
    %202 = vector.broadcast %57 : f32 to vector<1x256xf32>
    %203 = arith.mulf %202, %201 : vector<1x256xf32>
    %204 = arith.addf %200, %203 : vector<1x256xf32>
    %cst_32 = arith.constant 0.000000e+00 : f32
    %205 = vector.broadcast %cst_32 : f32 to vector<1x256xf32>
    %206 = arith.select %196, %204, %205 : vector<1x256xi1>, vector<1x256xf32>
    %207 = arith.addf %190, %206 : vector<1x256xf32>
    %c0_i32 = arith.constant 0 : i32
    %208 = vector.broadcast %c0_i32 : i32 to vector<1x256xi32>
    %209 = arith.cmpi sge, %5, %208 : vector<1x256xi32>
    %210 = arith.andi %156, %209 : vector<1x256xi1>
    %c16_i32 = arith.constant 16 : i32
    %211 = vector.broadcast %c16_i32 : i32 to vector<1x256xi32>
    %212 = arith.cmpi slt, %5, %211 : vector<1x256xi32>
    %213 = arith.andi %210, %212 : vector<1x256xi1>
    %c48_i32 = arith.constant 48 : i32
    %214 = tpu.dynamic_rotate %150 by %c48_i32 dim 1 : vector<2x256xf32>, i32 -> vector<2x256xf32>
    %215 = vector.extract_strided_slice %214 {offsets = [0, 0], sizes = [1, 256], strides = [1, 1]} : vector<2x256xf32> to vector<1x256xf32>
    %216 = vector.broadcast %9 : f32 to vector<1x256xf32>
    %217 = arith.mulf %216, %215 : vector<1x256xf32>
    %218 = vector.extract_strided_slice %214 {offsets = [1, 0], sizes = [1, 256], strides = [1, 1]} : vector<2x256xf32> to vector<1x256xf32>
    %219 = vector.broadcast %58 : f32 to vector<1x256xf32>
    %220 = arith.mulf %219, %218 : vector<1x256xf32>
    %221 = arith.addf %217, %220 : vector<1x256xf32>
    %cst_33 = arith.constant 0.000000e+00 : f32
    %222 = vector.broadcast %cst_33 : f32 to vector<1x256xf32>
    %223 = arith.select %213, %221, %222 : vector<1x256xi1>, vector<1x256xf32>
    %224 = arith.addf %207, %223 : vector<1x256xf32>
    %c-1_i32 = arith.constant -1 : i32
    %225 = vector.broadcast %c-1_i32 : i32 to vector<1x256xi32>
    %226 = arith.cmpi sge, %5, %225 : vector<1x256xi32>
    %227 = arith.andi %156, %226 : vector<1x256xi1>
    %c15_i32 = arith.constant 15 : i32
    %228 = vector.broadcast %c15_i32 : i32 to vector<1x256xi32>
    %229 = arith.cmpi slt, %5, %228 : vector<1x256xi32>
    %230 = arith.andi %227, %229 : vector<1x256xi1>
    %c47_i32 = arith.constant 47 : i32
    %231 = tpu.dynamic_rotate %150 by %c47_i32 dim 1 : vector<2x256xf32>, i32 -> vector<2x256xf32>
    %232 = vector.extract_strided_slice %231 {offsets = [0, 0], sizes = [1, 256], strides = [1, 1]} : vector<2x256xf32> to vector<1x256xf32>
    %233 = vector.broadcast %10 : f32 to vector<1x256xf32>
    %234 = arith.mulf %233, %232 : vector<1x256xf32>
    %235 = vector.extract_strided_slice %231 {offsets = [1, 0], sizes = [1, 256], strides = [1, 1]} : vector<2x256xf32> to vector<1x256xf32>
    %236 = vector.broadcast %59 : f32 to vector<1x256xf32>
    %237 = arith.mulf %236, %235 : vector<1x256xf32>
    %238 = arith.addf %234, %237 : vector<1x256xf32>
    %cst_34 = arith.constant 0.000000e+00 : f32
    %239 = vector.broadcast %cst_34 : f32 to vector<1x256xf32>
    %240 = arith.select %230, %238, %239 : vector<1x256xi1>, vector<1x256xf32>
    %241 = arith.addf %224, %240 : vector<1x256xf32>
    %c-2_i32 = arith.constant -2 : i32
    %242 = vector.broadcast %c-2_i32 : i32 to vector<1x256xi32>
    %243 = arith.cmpi sge, %5, %242 : vector<1x256xi32>
    %244 = arith.andi %156, %243 : vector<1x256xi1>
    %c14_i32 = arith.constant 14 : i32
    %245 = vector.broadcast %c14_i32 : i32 to vector<1x256xi32>
    %246 = arith.cmpi slt, %5, %245 : vector<1x256xi32>
    %247 = arith.andi %244, %246 : vector<1x256xi1>
    %c46_i32 = arith.constant 46 : i32
    %248 = tpu.dynamic_rotate %150 by %c46_i32 dim 1 : vector<2x256xf32>, i32 -> vector<2x256xf32>
    %249 = vector.extract_strided_slice %248 {offsets = [0, 0], sizes = [1, 256], strides = [1, 1]} : vector<2x256xf32> to vector<1x256xf32>
    %250 = vector.broadcast %11 : f32 to vector<1x256xf32>
    %251 = arith.mulf %250, %249 : vector<1x256xf32>
    %252 = vector.extract_strided_slice %248 {offsets = [1, 0], sizes = [1, 256], strides = [1, 1]} : vector<2x256xf32> to vector<1x256xf32>
    %253 = vector.broadcast %60 : f32 to vector<1x256xf32>
    %254 = arith.mulf %253, %252 : vector<1x256xf32>
    %255 = arith.addf %251, %254 : vector<1x256xf32>
    %cst_35 = arith.constant 0.000000e+00 : f32
    %256 = vector.broadcast %cst_35 : f32 to vector<1x256xf32>
    %257 = arith.select %247, %255, %256 : vector<1x256xi1>, vector<1x256xf32>
    %258 = arith.addf %241, %257 : vector<1x256xf32>
    %c-3_i32 = arith.constant -3 : i32
    %259 = vector.broadcast %c-3_i32 : i32 to vector<1x256xi32>
    %260 = arith.cmpi sge, %5, %259 : vector<1x256xi32>
    %261 = arith.andi %156, %260 : vector<1x256xi1>
    %c13_i32 = arith.constant 13 : i32
    %262 = vector.broadcast %c13_i32 : i32 to vector<1x256xi32>
    %263 = arith.cmpi slt, %5, %262 : vector<1x256xi32>
    %264 = arith.andi %261, %263 : vector<1x256xi1>
    %c45_i32 = arith.constant 45 : i32
    %265 = tpu.dynamic_rotate %150 by %c45_i32 dim 1 : vector<2x256xf32>, i32 -> vector<2x256xf32>
    %266 = vector.extract_strided_slice %265 {offsets = [0, 0], sizes = [1, 256], strides = [1, 1]} : vector<2x256xf32> to vector<1x256xf32>
    %267 = vector.broadcast %12 : f32 to vector<1x256xf32>
    %268 = arith.mulf %267, %266 : vector<1x256xf32>
    %269 = vector.extract_strided_slice %265 {offsets = [1, 0], sizes = [1, 256], strides = [1, 1]} : vector<2x256xf32> to vector<1x256xf32>
    %270 = vector.broadcast %61 : f32 to vector<1x256xf32>
    %271 = arith.mulf %270, %269 : vector<1x256xf32>
    %272 = arith.addf %268, %271 : vector<1x256xf32>
    %cst_36 = arith.constant 0.000000e+00 : f32
    %273 = vector.broadcast %cst_36 : f32 to vector<1x256xf32>
    %274 = arith.select %264, %272, %273 : vector<1x256xi1>, vector<1x256xf32>
    %275 = arith.addf %258, %274 : vector<1x256xf32>
    %c2_i32_37 = arith.constant 2 : i32
    %276 = vector.broadcast %c2_i32_37 : i32 to vector<1x256xi32>
    %277 = arith.cmpi sge, %4, %276 : vector<1x256xi32>
    %c18_i32_38 = arith.constant 18 : i32
    %278 = vector.broadcast %c18_i32_38 : i32 to vector<1x256xi32>
    %279 = arith.cmpi slt, %4, %278 : vector<1x256xi32>
    %280 = arith.andi %277, %279 : vector<1x256xi1>
    %c3_i32_39 = arith.constant 3 : i32
    %281 = vector.broadcast %c3_i32_39 : i32 to vector<1x256xi32>
    %282 = arith.cmpi sge, %5, %281 : vector<1x256xi32>
    %283 = arith.andi %280, %282 : vector<1x256xi1>
    %c19_i32_40 = arith.constant 19 : i32
    %284 = vector.broadcast %c19_i32_40 : i32 to vector<1x256xi32>
    %285 = arith.cmpi slt, %5, %284 : vector<1x256xi32>
    %286 = arith.andi %283, %285 : vector<1x256xi1>
    %c35_i32 = arith.constant 35 : i32
    %287 = tpu.dynamic_rotate %150 by %c35_i32 dim 1 : vector<2x256xf32>, i32 -> vector<2x256xf32>
    %288 = vector.extract_strided_slice %287 {offsets = [0, 0], sizes = [1, 256], strides = [1, 1]} : vector<2x256xf32> to vector<1x256xf32>
    %289 = vector.broadcast %13 : f32 to vector<1x256xf32>
    %290 = arith.mulf %289, %288 : vector<1x256xf32>
    %291 = vector.extract_strided_slice %287 {offsets = [1, 0], sizes = [1, 256], strides = [1, 1]} : vector<2x256xf32> to vector<1x256xf32>
    %292 = vector.broadcast %62 : f32 to vector<1x256xf32>
    %293 = arith.mulf %292, %291 : vector<1x256xf32>
    %294 = arith.addf %290, %293 : vector<1x256xf32>
    %cst_41 = arith.constant 0.000000e+00 : f32
    %295 = vector.broadcast %cst_41 : f32 to vector<1x256xf32>
    %296 = arith.select %286, %294, %295 : vector<1x256xi1>, vector<1x256xf32>
    %297 = arith.addf %275, %296 : vector<1x256xf32>
    %c2_i32_42 = arith.constant 2 : i32
    %298 = vector.broadcast %c2_i32_42 : i32 to vector<1x256xi32>
    %299 = arith.cmpi sge, %5, %298 : vector<1x256xi32>
    %300 = arith.andi %280, %299 : vector<1x256xi1>
    %c18_i32_43 = arith.constant 18 : i32
    %301 = vector.broadcast %c18_i32_43 : i32 to vector<1x256xi32>
    %302 = arith.cmpi slt, %5, %301 : vector<1x256xi32>
    %303 = arith.andi %300, %302 : vector<1x256xi1>
    %c34_i32 = arith.constant 34 : i32
    %304 = tpu.dynamic_rotate %150 by %c34_i32 dim 1 : vector<2x256xf32>, i32 -> vector<2x256xf32>
    %305 = vector.extract_strided_slice %304 {offsets = [0, 0], sizes = [1, 256], strides = [1, 1]} : vector<2x256xf32> to vector<1x256xf32>
    %306 = vector.broadcast %14 : f32 to vector<1x256xf32>
    %307 = arith.mulf %306, %305 : vector<1x256xf32>
    %308 = vector.extract_strided_slice %304 {offsets = [1, 0], sizes = [1, 256], strides = [1, 1]} : vector<2x256xf32> to vector<1x256xf32>
    %309 = vector.broadcast %63 : f32 to vector<1x256xf32>
    %310 = arith.mulf %309, %308 : vector<1x256xf32>
    %311 = arith.addf %307, %310 : vector<1x256xf32>
    %cst_44 = arith.constant 0.000000e+00 : f32
    %312 = vector.broadcast %cst_44 : f32 to vector<1x256xf32>
    %313 = arith.select %303, %311, %312 : vector<1x256xi1>, vector<1x256xf32>
    %314 = arith.addf %297, %313 : vector<1x256xf32>
    %c1_i32_45 = arith.constant 1 : i32
    %315 = vector.broadcast %c1_i32_45 : i32 to vector<1x256xi32>
    %316 = arith.cmpi sge, %5, %315 : vector<1x256xi32>
    %317 = arith.andi %280, %316 : vector<1x256xi1>
    %c17_i32_46 = arith.constant 17 : i32
    %318 = vector.broadcast %c17_i32_46 : i32 to vector<1x256xi32>
    %319 = arith.cmpi slt, %5, %318 : vector<1x256xi32>
    %320 = arith.andi %317, %319 : vector<1x256xi1>
    %c33_i32 = arith.constant 33 : i32
    %321 = tpu.dynamic_rotate %150 by %c33_i32 dim 1 : vector<2x256xf32>, i32 -> vector<2x256xf32>
    %322 = vector.extract_strided_slice %321 {offsets = [0, 0], sizes = [1, 256], strides = [1, 1]} : vector<2x256xf32> to vector<1x256xf32>
    %323 = vector.broadcast %15 : f32 to vector<1x256xf32>
    %324 = arith.mulf %323, %322 : vector<1x256xf32>
    %325 = vector.extract_strided_slice %321 {offsets = [1, 0], sizes = [1, 256], strides = [1, 1]} : vector<2x256xf32> to vector<1x256xf32>
    %326 = vector.broadcast %64 : f32 to vector<1x256xf32>
    %327 = arith.mulf %326, %325 : vector<1x256xf32>
    %328 = arith.addf %324, %327 : vector<1x256xf32>
    %cst_47 = arith.constant 0.000000e+00 : f32
    %329 = vector.broadcast %cst_47 : f32 to vector<1x256xf32>
    %330 = arith.select %320, %328, %329 : vector<1x256xi1>, vector<1x256xf32>
    %331 = arith.addf %314, %330 : vector<1x256xf32>
    %c0_i32_48 = arith.constant 0 : i32
    %332 = vector.broadcast %c0_i32_48 : i32 to vector<1x256xi32>
    %333 = arith.cmpi sge, %5, %332 : vector<1x256xi32>
    %334 = arith.andi %280, %333 : vector<1x256xi1>
    %c16_i32_49 = arith.constant 16 : i32
    %335 = vector.broadcast %c16_i32_49 : i32 to vector<1x256xi32>
    %336 = arith.cmpi slt, %5, %335 : vector<1x256xi32>
    %337 = arith.andi %334, %336 : vector<1x256xi1>
    %c32_i32 = arith.constant 32 : i32
    %338 = tpu.dynamic_rotate %150 by %c32_i32 dim 1 : vector<2x256xf32>, i32 -> vector<2x256xf32>
    %339 = vector.extract_strided_slice %338 {offsets = [0, 0], sizes = [1, 256], strides = [1, 1]} : vector<2x256xf32> to vector<1x256xf32>
    %340 = vector.broadcast %16 : f32 to vector<1x256xf32>
    %341 = arith.mulf %340, %339 : vector<1x256xf32>
    %342 = vector.extract_strided_slice %338 {offsets = [1, 0], sizes = [1, 256], strides = [1, 1]} : vector<2x256xf32> to vector<1x256xf32>
    %343 = vector.broadcast %65 : f32 to vector<1x256xf32>
    %344 = arith.mulf %343, %342 : vector<1x256xf32>
    %345 = arith.addf %341, %344 : vector<1x256xf32>
    %cst_50 = arith.constant 0.000000e+00 : f32
    %346 = vector.broadcast %cst_50 : f32 to vector<1x256xf32>
    %347 = arith.select %337, %345, %346 : vector<1x256xi1>, vector<1x256xf32>
    %348 = arith.addf %331, %347 : vector<1x256xf32>
    %c-1_i32_51 = arith.constant -1 : i32
    %349 = vector.broadcast %c-1_i32_51 : i32 to vector<1x256xi32>
    %350 = arith.cmpi sge, %5, %349 : vector<1x256xi32>
    %351 = arith.andi %280, %350 : vector<1x256xi1>
    %c15_i32_52 = arith.constant 15 : i32
    %352 = vector.broadcast %c15_i32_52 : i32 to vector<1x256xi32>
    %353 = arith.cmpi slt, %5, %352 : vector<1x256xi32>
    %354 = arith.andi %351, %353 : vector<1x256xi1>
    %c31_i32 = arith.constant 31 : i32
    %355 = tpu.dynamic_rotate %150 by %c31_i32 dim 1 : vector<2x256xf32>, i32 -> vector<2x256xf32>
    %356 = vector.extract_strided_slice %355 {offsets = [0, 0], sizes = [1, 256], strides = [1, 1]} : vector<2x256xf32> to vector<1x256xf32>
    %357 = vector.broadcast %17 : f32 to vector<1x256xf32>
    %358 = arith.mulf %357, %356 : vector<1x256xf32>
    %359 = vector.extract_strided_slice %355 {offsets = [1, 0], sizes = [1, 256], strides = [1, 1]} : vector<2x256xf32> to vector<1x256xf32>
    %360 = vector.broadcast %66 : f32 to vector<1x256xf32>
    %361 = arith.mulf %360, %359 : vector<1x256xf32>
    %362 = arith.addf %358, %361 : vector<1x256xf32>
    %cst_53 = arith.constant 0.000000e+00 : f32
    %363 = vector.broadcast %cst_53 : f32 to vector<1x256xf32>
    %364 = arith.select %354, %362, %363 : vector<1x256xi1>, vector<1x256xf32>
    %365 = arith.addf %348, %364 : vector<1x256xf32>
    %c-2_i32_54 = arith.constant -2 : i32
    %366 = vector.broadcast %c-2_i32_54 : i32 to vector<1x256xi32>
    %367 = arith.cmpi sge, %5, %366 : vector<1x256xi32>
    %368 = arith.andi %280, %367 : vector<1x256xi1>
    %c14_i32_55 = arith.constant 14 : i32
    %369 = vector.broadcast %c14_i32_55 : i32 to vector<1x256xi32>
    %370 = arith.cmpi slt, %5, %369 : vector<1x256xi32>
    %371 = arith.andi %368, %370 : vector<1x256xi1>
    %c30_i32 = arith.constant 30 : i32
    %372 = tpu.dynamic_rotate %150 by %c30_i32 dim 1 : vector<2x256xf32>, i32 -> vector<2x256xf32>
    %373 = vector.extract_strided_slice %372 {offsets = [0, 0], sizes = [1, 256], strides = [1, 1]} : vector<2x256xf32> to vector<1x256xf32>
    %374 = vector.broadcast %18 : f32 to vector<1x256xf32>
    %375 = arith.mulf %374, %373 : vector<1x256xf32>
    %376 = vector.extract_strided_slice %372 {offsets = [1, 0], sizes = [1, 256], strides = [1, 1]} : vector<2x256xf32> to vector<1x256xf32>
    %377 = vector.broadcast %67 : f32 to vector<1x256xf32>
    %378 = arith.mulf %377, %376 : vector<1x256xf32>
    %379 = arith.addf %375, %378 : vector<1x256xf32>
    %cst_56 = arith.constant 0.000000e+00 : f32
    %380 = vector.broadcast %cst_56 : f32 to vector<1x256xf32>
    %381 = arith.select %371, %379, %380 : vector<1x256xi1>, vector<1x256xf32>
    %382 = arith.addf %365, %381 : vector<1x256xf32>
    %c-3_i32_57 = arith.constant -3 : i32
    %383 = vector.broadcast %c-3_i32_57 : i32 to vector<1x256xi32>
    %384 = arith.cmpi sge, %5, %383 : vector<1x256xi32>
    %385 = arith.andi %280, %384 : vector<1x256xi1>
    %c13_i32_58 = arith.constant 13 : i32
    %386 = vector.broadcast %c13_i32_58 : i32 to vector<1x256xi32>
    %387 = arith.cmpi slt, %5, %386 : vector<1x256xi32>
    %388 = arith.andi %385, %387 : vector<1x256xi1>
    %c29_i32 = arith.constant 29 : i32
    %389 = tpu.dynamic_rotate %150 by %c29_i32 dim 1 : vector<2x256xf32>, i32 -> vector<2x256xf32>
    %390 = vector.extract_strided_slice %389 {offsets = [0, 0], sizes = [1, 256], strides = [1, 1]} : vector<2x256xf32> to vector<1x256xf32>
    %391 = vector.broadcast %19 : f32 to vector<1x256xf32>
    %392 = arith.mulf %391, %390 : vector<1x256xf32>
    %393 = vector.extract_strided_slice %389 {offsets = [1, 0], sizes = [1, 256], strides = [1, 1]} : vector<2x256xf32> to vector<1x256xf32>
    %394 = vector.broadcast %68 : f32 to vector<1x256xf32>
    %395 = arith.mulf %394, %393 : vector<1x256xf32>
    %396 = arith.addf %392, %395 : vector<1x256xf32>
    %cst_59 = arith.constant 0.000000e+00 : f32
    %397 = vector.broadcast %cst_59 : f32 to vector<1x256xf32>
    %398 = arith.select %388, %396, %397 : vector<1x256xi1>, vector<1x256xf32>
    %399 = arith.addf %382, %398 : vector<1x256xf32>
    %c1_i32_60 = arith.constant 1 : i32
    %400 = vector.broadcast %c1_i32_60 : i32 to vector<1x256xi32>
    %401 = arith.cmpi sge, %4, %400 : vector<1x256xi32>
    %c17_i32_61 = arith.constant 17 : i32
    %402 = vector.broadcast %c17_i32_61 : i32 to vector<1x256xi32>
    %403 = arith.cmpi slt, %4, %402 : vector<1x256xi32>
    %404 = arith.andi %401, %403 : vector<1x256xi1>
    %c3_i32_62 = arith.constant 3 : i32
    %405 = vector.broadcast %c3_i32_62 : i32 to vector<1x256xi32>
    %406 = arith.cmpi sge, %5, %405 : vector<1x256xi32>
    %407 = arith.andi %404, %406 : vector<1x256xi1>
    %c19_i32_63 = arith.constant 19 : i32
    %408 = vector.broadcast %c19_i32_63 : i32 to vector<1x256xi32>
    %409 = arith.cmpi slt, %5, %408 : vector<1x256xi32>
    %410 = arith.andi %407, %409 : vector<1x256xi1>
    %c19_i32_64 = arith.constant 19 : i32
    %411 = tpu.dynamic_rotate %150 by %c19_i32_64 dim 1 : vector<2x256xf32>, i32 -> vector<2x256xf32>
    %412 = vector.extract_strided_slice %411 {offsets = [0, 0], sizes = [1, 256], strides = [1, 1]} : vector<2x256xf32> to vector<1x256xf32>
    %413 = vector.broadcast %20 : f32 to vector<1x256xf32>
    %414 = arith.mulf %413, %412 : vector<1x256xf32>
    %415 = vector.extract_strided_slice %411 {offsets = [1, 0], sizes = [1, 256], strides = [1, 1]} : vector<2x256xf32> to vector<1x256xf32>
    %416 = vector.broadcast %69 : f32 to vector<1x256xf32>
    %417 = arith.mulf %416, %415 : vector<1x256xf32>
    %418 = arith.addf %414, %417 : vector<1x256xf32>
    %cst_65 = arith.constant 0.000000e+00 : f32
    %419 = vector.broadcast %cst_65 : f32 to vector<1x256xf32>
    %420 = arith.select %410, %418, %419 : vector<1x256xi1>, vector<1x256xf32>
    %421 = arith.addf %399, %420 : vector<1x256xf32>
    %c2_i32_66 = arith.constant 2 : i32
    %422 = vector.broadcast %c2_i32_66 : i32 to vector<1x256xi32>
    %423 = arith.cmpi sge, %5, %422 : vector<1x256xi32>
    %424 = arith.andi %404, %423 : vector<1x256xi1>
    %c18_i32_67 = arith.constant 18 : i32
    %425 = vector.broadcast %c18_i32_67 : i32 to vector<1x256xi32>
    %426 = arith.cmpi slt, %5, %425 : vector<1x256xi32>
    %427 = arith.andi %424, %426 : vector<1x256xi1>
    %c18_i32_68 = arith.constant 18 : i32
    %428 = tpu.dynamic_rotate %150 by %c18_i32_68 dim 1 : vector<2x256xf32>, i32 -> vector<2x256xf32>
    %429 = vector.extract_strided_slice %428 {offsets = [0, 0], sizes = [1, 256], strides = [1, 1]} : vector<2x256xf32> to vector<1x256xf32>
    %430 = vector.broadcast %21 : f32 to vector<1x256xf32>
    %431 = arith.mulf %430, %429 : vector<1x256xf32>
    %432 = vector.extract_strided_slice %428 {offsets = [1, 0], sizes = [1, 256], strides = [1, 1]} : vector<2x256xf32> to vector<1x256xf32>
    %433 = vector.broadcast %70 : f32 to vector<1x256xf32>
    %434 = arith.mulf %433, %432 : vector<1x256xf32>
    %435 = arith.addf %431, %434 : vector<1x256xf32>
    %cst_69 = arith.constant 0.000000e+00 : f32
    %436 = vector.broadcast %cst_69 : f32 to vector<1x256xf32>
    %437 = arith.select %427, %435, %436 : vector<1x256xi1>, vector<1x256xf32>
    %438 = arith.addf %421, %437 : vector<1x256xf32>
    %c1_i32_70 = arith.constant 1 : i32
    %439 = vector.broadcast %c1_i32_70 : i32 to vector<1x256xi32>
    %440 = arith.cmpi sge, %5, %439 : vector<1x256xi32>
    %441 = arith.andi %404, %440 : vector<1x256xi1>
    %c17_i32_71 = arith.constant 17 : i32
    %442 = vector.broadcast %c17_i32_71 : i32 to vector<1x256xi32>
    %443 = arith.cmpi slt, %5, %442 : vector<1x256xi32>
    %444 = arith.andi %441, %443 : vector<1x256xi1>
    %c17_i32_72 = arith.constant 17 : i32
    %445 = tpu.dynamic_rotate %150 by %c17_i32_72 dim 1 : vector<2x256xf32>, i32 -> vector<2x256xf32>
    %446 = vector.extract_strided_slice %445 {offsets = [0, 0], sizes = [1, 256], strides = [1, 1]} : vector<2x256xf32> to vector<1x256xf32>
    %447 = vector.broadcast %22 : f32 to vector<1x256xf32>
    %448 = arith.mulf %447, %446 : vector<1x256xf32>
    %449 = vector.extract_strided_slice %445 {offsets = [1, 0], sizes = [1, 256], strides = [1, 1]} : vector<2x256xf32> to vector<1x256xf32>
    %450 = vector.broadcast %71 : f32 to vector<1x256xf32>
    %451 = arith.mulf %450, %449 : vector<1x256xf32>
    %452 = arith.addf %448, %451 : vector<1x256xf32>
    %cst_73 = arith.constant 0.000000e+00 : f32
    %453 = vector.broadcast %cst_73 : f32 to vector<1x256xf32>
    %454 = arith.select %444, %452, %453 : vector<1x256xi1>, vector<1x256xf32>
    %455 = arith.addf %438, %454 : vector<1x256xf32>
    %c0_i32_74 = arith.constant 0 : i32
    %456 = vector.broadcast %c0_i32_74 : i32 to vector<1x256xi32>
    %457 = arith.cmpi sge, %5, %456 : vector<1x256xi32>
    %458 = arith.andi %404, %457 : vector<1x256xi1>
    %c16_i32_75 = arith.constant 16 : i32
    %459 = vector.broadcast %c16_i32_75 : i32 to vector<1x256xi32>
    %460 = arith.cmpi slt, %5, %459 : vector<1x256xi32>
    %461 = arith.andi %458, %460 : vector<1x256xi1>
    %c16_i32_76 = arith.constant 16 : i32
    %462 = tpu.dynamic_rotate %150 by %c16_i32_76 dim 1 : vector<2x256xf32>, i32 -> vector<2x256xf32>
    %463 = vector.extract_strided_slice %462 {offsets = [0, 0], sizes = [1, 256], strides = [1, 1]} : vector<2x256xf32> to vector<1x256xf32>
    %464 = vector.broadcast %23 : f32 to vector<1x256xf32>
    %465 = arith.mulf %464, %463 : vector<1x256xf32>
    %466 = vector.extract_strided_slice %462 {offsets = [1, 0], sizes = [1, 256], strides = [1, 1]} : vector<2x256xf32> to vector<1x256xf32>
    %467 = vector.broadcast %72 : f32 to vector<1x256xf32>
    %468 = arith.mulf %467, %466 : vector<1x256xf32>
    %469 = arith.addf %465, %468 : vector<1x256xf32>
    %cst_77 = arith.constant 0.000000e+00 : f32
    %470 = vector.broadcast %cst_77 : f32 to vector<1x256xf32>
    %471 = arith.select %461, %469, %470 : vector<1x256xi1>, vector<1x256xf32>
    %472 = arith.addf %455, %471 : vector<1x256xf32>
    %c-1_i32_78 = arith.constant -1 : i32
    %473 = vector.broadcast %c-1_i32_78 : i32 to vector<1x256xi32>
    %474 = arith.cmpi sge, %5, %473 : vector<1x256xi32>
    %475 = arith.andi %404, %474 : vector<1x256xi1>
    %c15_i32_79 = arith.constant 15 : i32
    %476 = vector.broadcast %c15_i32_79 : i32 to vector<1x256xi32>
    %477 = arith.cmpi slt, %5, %476 : vector<1x256xi32>
    %478 = arith.andi %475, %477 : vector<1x256xi1>
    %c15_i32_80 = arith.constant 15 : i32
    %479 = tpu.dynamic_rotate %150 by %c15_i32_80 dim 1 : vector<2x256xf32>, i32 -> vector<2x256xf32>
    %480 = vector.extract_strided_slice %479 {offsets = [0, 0], sizes = [1, 256], strides = [1, 1]} : vector<2x256xf32> to vector<1x256xf32>
    %481 = vector.broadcast %24 : f32 to vector<1x256xf32>
    %482 = arith.mulf %481, %480 : vector<1x256xf32>
    %483 = vector.extract_strided_slice %479 {offsets = [1, 0], sizes = [1, 256], strides = [1, 1]} : vector<2x256xf32> to vector<1x256xf32>
    %484 = vector.broadcast %73 : f32 to vector<1x256xf32>
    %485 = arith.mulf %484, %483 : vector<1x256xf32>
    %486 = arith.addf %482, %485 : vector<1x256xf32>
    %cst_81 = arith.constant 0.000000e+00 : f32
    %487 = vector.broadcast %cst_81 : f32 to vector<1x256xf32>
    %488 = arith.select %478, %486, %487 : vector<1x256xi1>, vector<1x256xf32>
    %489 = arith.addf %472, %488 : vector<1x256xf32>
    %c-2_i32_82 = arith.constant -2 : i32
    %490 = vector.broadcast %c-2_i32_82 : i32 to vector<1x256xi32>
    %491 = arith.cmpi sge, %5, %490 : vector<1x256xi32>
    %492 = arith.andi %404, %491 : vector<1x256xi1>
    %c14_i32_83 = arith.constant 14 : i32
    %493 = vector.broadcast %c14_i32_83 : i32 to vector<1x256xi32>
    %494 = arith.cmpi slt, %5, %493 : vector<1x256xi32>
    %495 = arith.andi %492, %494 : vector<1x256xi1>
    %c14_i32_84 = arith.constant 14 : i32
    %496 = tpu.dynamic_rotate %150 by %c14_i32_84 dim 1 : vector<2x256xf32>, i32 -> vector<2x256xf32>
    %497 = vector.extract_strided_slice %496 {offsets = [0, 0], sizes = [1, 256], strides = [1, 1]} : vector<2x256xf32> to vector<1x256xf32>
    %498 = vector.broadcast %25 : f32 to vector<1x256xf32>
    %499 = arith.mulf %498, %497 : vector<1x256xf32>
    %500 = vector.extract_strided_slice %496 {offsets = [1, 0], sizes = [1, 256], strides = [1, 1]} : vector<2x256xf32> to vector<1x256xf32>
    %501 = vector.broadcast %74 : f32 to vector<1x256xf32>
    %502 = arith.mulf %501, %500 : vector<1x256xf32>
    %503 = arith.addf %499, %502 : vector<1x256xf32>
    %cst_85 = arith.constant 0.000000e+00 : f32
    %504 = vector.broadcast %cst_85 : f32 to vector<1x256xf32>
    %505 = arith.select %495, %503, %504 : vector<1x256xi1>, vector<1x256xf32>
    %506 = arith.addf %489, %505 : vector<1x256xf32>
    %c-3_i32_86 = arith.constant -3 : i32
    %507 = vector.broadcast %c-3_i32_86 : i32 to vector<1x256xi32>
    %508 = arith.cmpi sge, %5, %507 : vector<1x256xi32>
    %509 = arith.andi %404, %508 : vector<1x256xi1>
    %c13_i32_87 = arith.constant 13 : i32
    %510 = vector.broadcast %c13_i32_87 : i32 to vector<1x256xi32>
    %511 = arith.cmpi slt, %5, %510 : vector<1x256xi32>
    %512 = arith.andi %509, %511 : vector<1x256xi1>
    %c13_i32_88 = arith.constant 13 : i32
    %513 = tpu.dynamic_rotate %150 by %c13_i32_88 dim 1 : vector<2x256xf32>, i32 -> vector<2x256xf32>
    %514 = vector.extract_strided_slice %513 {offsets = [0, 0], sizes = [1, 256], strides = [1, 1]} : vector<2x256xf32> to vector<1x256xf32>
    %515 = vector.broadcast %26 : f32 to vector<1x256xf32>
    %516 = arith.mulf %515, %514 : vector<1x256xf32>
    %517 = vector.extract_strided_slice %513 {offsets = [1, 0], sizes = [1, 256], strides = [1, 1]} : vector<2x256xf32> to vector<1x256xf32>
    %518 = vector.broadcast %75 : f32 to vector<1x256xf32>
    %519 = arith.mulf %518, %517 : vector<1x256xf32>
    %520 = arith.addf %516, %519 : vector<1x256xf32>
    %cst_89 = arith.constant 0.000000e+00 : f32
    %521 = vector.broadcast %cst_89 : f32 to vector<1x256xf32>
    %522 = arith.select %512, %520, %521 : vector<1x256xi1>, vector<1x256xf32>
    %523 = arith.addf %506, %522 : vector<1x256xf32>
    %c0_i32_90 = arith.constant 0 : i32
    %524 = vector.broadcast %c0_i32_90 : i32 to vector<1x256xi32>
    %525 = arith.cmpi sge, %4, %524 : vector<1x256xi32>
    %c16_i32_91 = arith.constant 16 : i32
    %526 = vector.broadcast %c16_i32_91 : i32 to vector<1x256xi32>
    %527 = arith.cmpi slt, %4, %526 : vector<1x256xi32>
    %528 = arith.andi %525, %527 : vector<1x256xi1>
    %c3_i32_92 = arith.constant 3 : i32
    %529 = vector.broadcast %c3_i32_92 : i32 to vector<1x256xi32>
    %530 = arith.cmpi sge, %5, %529 : vector<1x256xi32>
    %531 = arith.andi %528, %530 : vector<1x256xi1>
    %c19_i32_93 = arith.constant 19 : i32
    %532 = vector.broadcast %c19_i32_93 : i32 to vector<1x256xi32>
    %533 = arith.cmpi slt, %5, %532 : vector<1x256xi32>
    %534 = arith.andi %531, %533 : vector<1x256xi1>
    %c3_i32_94 = arith.constant 3 : i32
    %535 = tpu.dynamic_rotate %150 by %c3_i32_94 dim 1 : vector<2x256xf32>, i32 -> vector<2x256xf32>
    %536 = vector.extract_strided_slice %535 {offsets = [0, 0], sizes = [1, 256], strides = [1, 1]} : vector<2x256xf32> to vector<1x256xf32>
    %537 = vector.broadcast %27 : f32 to vector<1x256xf32>
    %538 = arith.mulf %537, %536 : vector<1x256xf32>
    %539 = vector.extract_strided_slice %535 {offsets = [1, 0], sizes = [1, 256], strides = [1, 1]} : vector<2x256xf32> to vector<1x256xf32>
    %540 = vector.broadcast %76 : f32 to vector<1x256xf32>
    %541 = arith.mulf %540, %539 : vector<1x256xf32>
    %542 = arith.addf %538, %541 : vector<1x256xf32>
    %cst_95 = arith.constant 0.000000e+00 : f32
    %543 = vector.broadcast %cst_95 : f32 to vector<1x256xf32>
    %544 = arith.select %534, %542, %543 : vector<1x256xi1>, vector<1x256xf32>
    %545 = arith.addf %523, %544 : vector<1x256xf32>
    %c2_i32_96 = arith.constant 2 : i32
    %546 = vector.broadcast %c2_i32_96 : i32 to vector<1x256xi32>
    %547 = arith.cmpi sge, %5, %546 : vector<1x256xi32>
    %548 = arith.andi %528, %547 : vector<1x256xi1>
    %c18_i32_97 = arith.constant 18 : i32
    %549 = vector.broadcast %c18_i32_97 : i32 to vector<1x256xi32>
    %550 = arith.cmpi slt, %5, %549 : vector<1x256xi32>
    %551 = arith.andi %548, %550 : vector<1x256xi1>
    %c2_i32_98 = arith.constant 2 : i32
    %552 = tpu.dynamic_rotate %150 by %c2_i32_98 dim 1 : vector<2x256xf32>, i32 -> vector<2x256xf32>
    %553 = vector.extract_strided_slice %552 {offsets = [0, 0], sizes = [1, 256], strides = [1, 1]} : vector<2x256xf32> to vector<1x256xf32>
    %554 = vector.broadcast %28 : f32 to vector<1x256xf32>
    %555 = arith.mulf %554, %553 : vector<1x256xf32>
    %556 = vector.extract_strided_slice %552 {offsets = [1, 0], sizes = [1, 256], strides = [1, 1]} : vector<2x256xf32> to vector<1x256xf32>
    %557 = vector.broadcast %77 : f32 to vector<1x256xf32>
    %558 = arith.mulf %557, %556 : vector<1x256xf32>
    %559 = arith.addf %555, %558 : vector<1x256xf32>
    %cst_99 = arith.constant 0.000000e+00 : f32
    %560 = vector.broadcast %cst_99 : f32 to vector<1x256xf32>
    %561 = arith.select %551, %559, %560 : vector<1x256xi1>, vector<1x256xf32>
    %562 = arith.addf %545, %561 : vector<1x256xf32>
    %c1_i32_100 = arith.constant 1 : i32
    %563 = vector.broadcast %c1_i32_100 : i32 to vector<1x256xi32>
    %564 = arith.cmpi sge, %5, %563 : vector<1x256xi32>
    %565 = arith.andi %528, %564 : vector<1x256xi1>
    %c17_i32_101 = arith.constant 17 : i32
    %566 = vector.broadcast %c17_i32_101 : i32 to vector<1x256xi32>
    %567 = arith.cmpi slt, %5, %566 : vector<1x256xi32>
    %568 = arith.andi %565, %567 : vector<1x256xi1>
    %c1_i32_102 = arith.constant 1 : i32
    %569 = tpu.dynamic_rotate %150 by %c1_i32_102 dim 1 : vector<2x256xf32>, i32 -> vector<2x256xf32>
    %570 = vector.extract_strided_slice %569 {offsets = [0, 0], sizes = [1, 256], strides = [1, 1]} : vector<2x256xf32> to vector<1x256xf32>
    %571 = vector.broadcast %29 : f32 to vector<1x256xf32>
    %572 = arith.mulf %571, %570 : vector<1x256xf32>
    %573 = vector.extract_strided_slice %569 {offsets = [1, 0], sizes = [1, 256], strides = [1, 1]} : vector<2x256xf32> to vector<1x256xf32>
    %574 = vector.broadcast %78 : f32 to vector<1x256xf32>
    %575 = arith.mulf %574, %573 : vector<1x256xf32>
    %576 = arith.addf %572, %575 : vector<1x256xf32>
    %cst_103 = arith.constant 0.000000e+00 : f32
    %577 = vector.broadcast %cst_103 : f32 to vector<1x256xf32>
    %578 = arith.select %568, %576, %577 : vector<1x256xi1>, vector<1x256xf32>
    %579 = arith.addf %562, %578 : vector<1x256xf32>
    %c0_i32_104 = arith.constant 0 : i32
    %580 = vector.broadcast %c0_i32_104 : i32 to vector<1x256xi32>
    %581 = arith.cmpi sge, %5, %580 : vector<1x256xi32>
    %582 = arith.andi %528, %581 : vector<1x256xi1>
    %c16_i32_105 = arith.constant 16 : i32
    %583 = vector.broadcast %c16_i32_105 : i32 to vector<1x256xi32>
    %584 = arith.cmpi slt, %5, %583 : vector<1x256xi32>
    %585 = arith.andi %582, %584 : vector<1x256xi1>
    %586 = vector.extract_strided_slice %150 {offsets = [0, 0], sizes = [1, 256], strides = [1, 1]} : vector<2x256xf32> to vector<1x256xf32>
    %587 = vector.broadcast %30 : f32 to vector<1x256xf32>
    %588 = arith.mulf %587, %586 : vector<1x256xf32>
    %589 = vector.extract_strided_slice %150 {offsets = [1, 0], sizes = [1, 256], strides = [1, 1]} : vector<2x256xf32> to vector<1x256xf32>
    %590 = vector.broadcast %79 : f32 to vector<1x256xf32>
    %591 = arith.mulf %590, %589 : vector<1x256xf32>
    %592 = arith.addf %588, %591 : vector<1x256xf32>
    %cst_106 = arith.constant 0.000000e+00 : f32
    %593 = vector.broadcast %cst_106 : f32 to vector<1x256xf32>
    %594 = arith.select %585, %592, %593 : vector<1x256xi1>, vector<1x256xf32>
    %595 = arith.addf %579, %594 : vector<1x256xf32>
    %c-1_i32_107 = arith.constant -1 : i32
    %596 = vector.broadcast %c-1_i32_107 : i32 to vector<1x256xi32>
    %597 = arith.cmpi sge, %5, %596 : vector<1x256xi32>
    %598 = arith.andi %528, %597 : vector<1x256xi1>
    %c15_i32_108 = arith.constant 15 : i32
    %599 = vector.broadcast %c15_i32_108 : i32 to vector<1x256xi32>
    %600 = arith.cmpi slt, %5, %599 : vector<1x256xi32>
    %601 = arith.andi %598, %600 : vector<1x256xi1>
    %c255_i32 = arith.constant 255 : i32
    %602 = tpu.dynamic_rotate %150 by %c255_i32 dim 1 : vector<2x256xf32>, i32 -> vector<2x256xf32>
    %603 = vector.extract_strided_slice %602 {offsets = [0, 0], sizes = [1, 256], strides = [1, 1]} : vector<2x256xf32> to vector<1x256xf32>
    %604 = vector.broadcast %31 : f32 to vector<1x256xf32>
    %605 = arith.mulf %604, %603 : vector<1x256xf32>
    %606 = vector.extract_strided_slice %602 {offsets = [1, 0], sizes = [1, 256], strides = [1, 1]} : vector<2x256xf32> to vector<1x256xf32>
    %607 = vector.broadcast %80 : f32 to vector<1x256xf32>
    %608 = arith.mulf %607, %606 : vector<1x256xf32>
    %609 = arith.addf %605, %608 : vector<1x256xf32>
    %cst_109 = arith.constant 0.000000e+00 : f32
    %610 = vector.broadcast %cst_109 : f32 to vector<1x256xf32>
    %611 = arith.select %601, %609, %610 : vector<1x256xi1>, vector<1x256xf32>
    %612 = arith.addf %595, %611 : vector<1x256xf32>
    %c-2_i32_110 = arith.constant -2 : i32
    %613 = vector.broadcast %c-2_i32_110 : i32 to vector<1x256xi32>
    %614 = arith.cmpi sge, %5, %613 : vector<1x256xi32>
    %615 = arith.andi %528, %614 : vector<1x256xi1>
    %c14_i32_111 = arith.constant 14 : i32
    %616 = vector.broadcast %c14_i32_111 : i32 to vector<1x256xi32>
    %617 = arith.cmpi slt, %5, %616 : vector<1x256xi32>
    %618 = arith.andi %615, %617 : vector<1x256xi1>
    %c254_i32 = arith.constant 254 : i32
    %619 = tpu.dynamic_rotate %150 by %c254_i32 dim 1 : vector<2x256xf32>, i32 -> vector<2x256xf32>
    %620 = vector.extract_strided_slice %619 {offsets = [0, 0], sizes = [1, 256], strides = [1, 1]} : vector<2x256xf32> to vector<1x256xf32>
    %621 = vector.broadcast %32 : f32 to vector<1x256xf32>
    %622 = arith.mulf %621, %620 : vector<1x256xf32>
    %623 = vector.extract_strided_slice %619 {offsets = [1, 0], sizes = [1, 256], strides = [1, 1]} : vector<2x256xf32> to vector<1x256xf32>
    %624 = vector.broadcast %81 : f32 to vector<1x256xf32>
    %625 = arith.mulf %624, %623 : vector<1x256xf32>
    %626 = arith.addf %622, %625 : vector<1x256xf32>
    %cst_112 = arith.constant 0.000000e+00 : f32
    %627 = vector.broadcast %cst_112 : f32 to vector<1x256xf32>
    %628 = arith.select %618, %626, %627 : vector<1x256xi1>, vector<1x256xf32>
    %629 = arith.addf %612, %628 : vector<1x256xf32>
    %c-3_i32_113 = arith.constant -3 : i32
    %630 = vector.broadcast %c-3_i32_113 : i32 to vector<1x256xi32>
    %631 = arith.cmpi sge, %5, %630 : vector<1x256xi32>
    %632 = arith.andi %528, %631 : vector<1x256xi1>
    %c13_i32_114 = arith.constant 13 : i32
    %633 = vector.broadcast %c13_i32_114 : i32 to vector<1x256xi32>
    %634 = arith.cmpi slt, %5, %633 : vector<1x256xi32>
    %635 = arith.andi %632, %634 : vector<1x256xi1>
    %c253_i32 = arith.constant 253 : i32
    %636 = tpu.dynamic_rotate %150 by %c253_i32 dim 1 : vector<2x256xf32>, i32 -> vector<2x256xf32>
    %637 = vector.extract_strided_slice %636 {offsets = [0, 0], sizes = [1, 256], strides = [1, 1]} : vector<2x256xf32> to vector<1x256xf32>
    %638 = vector.broadcast %33 : f32 to vector<1x256xf32>
    %639 = arith.mulf %638, %637 : vector<1x256xf32>
    %640 = vector.extract_strided_slice %636 {offsets = [1, 0], sizes = [1, 256], strides = [1, 1]} : vector<2x256xf32> to vector<1x256xf32>
    %641 = vector.broadcast %82 : f32 to vector<1x256xf32>
    %642 = arith.mulf %641, %640 : vector<1x256xf32>
    %643 = arith.addf %639, %642 : vector<1x256xf32>
    %cst_115 = arith.constant 0.000000e+00 : f32
    %644 = vector.broadcast %cst_115 : f32 to vector<1x256xf32>
    %645 = arith.select %635, %643, %644 : vector<1x256xi1>, vector<1x256xf32>
    %646 = arith.addf %629, %645 : vector<1x256xf32>
    %c-1_i32_116 = arith.constant -1 : i32
    %647 = vector.broadcast %c-1_i32_116 : i32 to vector<1x256xi32>
    %648 = arith.cmpi sge, %4, %647 : vector<1x256xi32>
    %c15_i32_117 = arith.constant 15 : i32
    %649 = vector.broadcast %c15_i32_117 : i32 to vector<1x256xi32>
    %650 = arith.cmpi slt, %4, %649 : vector<1x256xi32>
    %651 = arith.andi %648, %650 : vector<1x256xi1>
    %c3_i32_118 = arith.constant 3 : i32
    %652 = vector.broadcast %c3_i32_118 : i32 to vector<1x256xi32>
    %653 = arith.cmpi sge, %5, %652 : vector<1x256xi32>
    %654 = arith.andi %651, %653 : vector<1x256xi1>
    %c19_i32_119 = arith.constant 19 : i32
    %655 = vector.broadcast %c19_i32_119 : i32 to vector<1x256xi32>
    %656 = arith.cmpi slt, %5, %655 : vector<1x256xi32>
    %657 = arith.andi %654, %656 : vector<1x256xi1>
    %c243_i32 = arith.constant 243 : i32
    %658 = tpu.dynamic_rotate %150 by %c243_i32 dim 1 : vector<2x256xf32>, i32 -> vector<2x256xf32>
    %659 = vector.extract_strided_slice %658 {offsets = [0, 0], sizes = [1, 256], strides = [1, 1]} : vector<2x256xf32> to vector<1x256xf32>
    %660 = vector.broadcast %34 : f32 to vector<1x256xf32>
    %661 = arith.mulf %660, %659 : vector<1x256xf32>
    %662 = vector.extract_strided_slice %658 {offsets = [1, 0], sizes = [1, 256], strides = [1, 1]} : vector<2x256xf32> to vector<1x256xf32>
    %663 = vector.broadcast %83 : f32 to vector<1x256xf32>
    %664 = arith.mulf %663, %662 : vector<1x256xf32>
    %665 = arith.addf %661, %664 : vector<1x256xf32>
    %cst_120 = arith.constant 0.000000e+00 : f32
    %666 = vector.broadcast %cst_120 : f32 to vector<1x256xf32>
    %667 = arith.select %657, %665, %666 : vector<1x256xi1>, vector<1x256xf32>
    %668 = arith.addf %646, %667 : vector<1x256xf32>
    %c2_i32_121 = arith.constant 2 : i32
    %669 = vector.broadcast %c2_i32_121 : i32 to vector<1x256xi32>
    %670 = arith.cmpi sge, %5, %669 : vector<1x256xi32>
    %671 = arith.andi %651, %670 : vector<1x256xi1>
    %c18_i32_122 = arith.constant 18 : i32
    %672 = vector.broadcast %c18_i32_122 : i32 to vector<1x256xi32>
    %673 = arith.cmpi slt, %5, %672 : vector<1x256xi32>
    %674 = arith.andi %671, %673 : vector<1x256xi1>
    %c242_i32 = arith.constant 242 : i32
    %675 = tpu.dynamic_rotate %150 by %c242_i32 dim 1 : vector<2x256xf32>, i32 -> vector<2x256xf32>
    %676 = vector.extract_strided_slice %675 {offsets = [0, 0], sizes = [1, 256], strides = [1, 1]} : vector<2x256xf32> to vector<1x256xf32>
    %677 = vector.broadcast %35 : f32 to vector<1x256xf32>
    %678 = arith.mulf %677, %676 : vector<1x256xf32>
    %679 = vector.extract_strided_slice %675 {offsets = [1, 0], sizes = [1, 256], strides = [1, 1]} : vector<2x256xf32> to vector<1x256xf32>
    %680 = vector.broadcast %84 : f32 to vector<1x256xf32>
    %681 = arith.mulf %680, %679 : vector<1x256xf32>
    %682 = arith.addf %678, %681 : vector<1x256xf32>
    %cst_123 = arith.constant 0.000000e+00 : f32
    %683 = vector.broadcast %cst_123 : f32 to vector<1x256xf32>
    %684 = arith.select %674, %682, %683 : vector<1x256xi1>, vector<1x256xf32>
    %685 = arith.addf %668, %684 : vector<1x256xf32>
    %c1_i32_124 = arith.constant 1 : i32
    %686 = vector.broadcast %c1_i32_124 : i32 to vector<1x256xi32>
    %687 = arith.cmpi sge, %5, %686 : vector<1x256xi32>
    %688 = arith.andi %651, %687 : vector<1x256xi1>
    %c17_i32_125 = arith.constant 17 : i32
    %689 = vector.broadcast %c17_i32_125 : i32 to vector<1x256xi32>
    %690 = arith.cmpi slt, %5, %689 : vector<1x256xi32>
    %691 = arith.andi %688, %690 : vector<1x256xi1>
    %c241_i32 = arith.constant 241 : i32
    %692 = tpu.dynamic_rotate %150 by %c241_i32 dim 1 : vector<2x256xf32>, i32 -> vector<2x256xf32>
    %693 = vector.extract_strided_slice %692 {offsets = [0, 0], sizes = [1, 256], strides = [1, 1]} : vector<2x256xf32> to vector<1x256xf32>
    %694 = vector.broadcast %36 : f32 to vector<1x256xf32>
    %695 = arith.mulf %694, %693 : vector<1x256xf32>
    %696 = vector.extract_strided_slice %692 {offsets = [1, 0], sizes = [1, 256], strides = [1, 1]} : vector<2x256xf32> to vector<1x256xf32>
    %697 = vector.broadcast %85 : f32 to vector<1x256xf32>
    %698 = arith.mulf %697, %696 : vector<1x256xf32>
    %699 = arith.addf %695, %698 : vector<1x256xf32>
    %cst_126 = arith.constant 0.000000e+00 : f32
    %700 = vector.broadcast %cst_126 : f32 to vector<1x256xf32>
    %701 = arith.select %691, %699, %700 : vector<1x256xi1>, vector<1x256xf32>
    %702 = arith.addf %685, %701 : vector<1x256xf32>
    %c0_i32_127 = arith.constant 0 : i32
    %703 = vector.broadcast %c0_i32_127 : i32 to vector<1x256xi32>
    %704 = arith.cmpi sge, %5, %703 : vector<1x256xi32>
    %705 = arith.andi %651, %704 : vector<1x256xi1>
    %c16_i32_128 = arith.constant 16 : i32
    %706 = vector.broadcast %c16_i32_128 : i32 to vector<1x256xi32>
    %707 = arith.cmpi slt, %5, %706 : vector<1x256xi32>
    %708 = arith.andi %705, %707 : vector<1x256xi1>
    %c240_i32 = arith.constant 240 : i32
    %709 = tpu.dynamic_rotate %150 by %c240_i32 dim 1 : vector<2x256xf32>, i32 -> vector<2x256xf32>
    %710 = vector.extract_strided_slice %709 {offsets = [0, 0], sizes = [1, 256], strides = [1, 1]} : vector<2x256xf32> to vector<1x256xf32>
    %711 = vector.broadcast %37 : f32 to vector<1x256xf32>
    %712 = arith.mulf %711, %710 : vector<1x256xf32>
    %713 = vector.extract_strided_slice %709 {offsets = [1, 0], sizes = [1, 256], strides = [1, 1]} : vector<2x256xf32> to vector<1x256xf32>
    %714 = vector.broadcast %86 : f32 to vector<1x256xf32>
    %715 = arith.mulf %714, %713 : vector<1x256xf32>
    %716 = arith.addf %712, %715 : vector<1x256xf32>
    %cst_129 = arith.constant 0.000000e+00 : f32
    %717 = vector.broadcast %cst_129 : f32 to vector<1x256xf32>
    %718 = arith.select %708, %716, %717 : vector<1x256xi1>, vector<1x256xf32>
    %719 = arith.addf %702, %718 : vector<1x256xf32>
    %c-1_i32_130 = arith.constant -1 : i32
    %720 = vector.broadcast %c-1_i32_130 : i32 to vector<1x256xi32>
    %721 = arith.cmpi sge, %5, %720 : vector<1x256xi32>
    %722 = arith.andi %651, %721 : vector<1x256xi1>
    %c15_i32_131 = arith.constant 15 : i32
    %723 = vector.broadcast %c15_i32_131 : i32 to vector<1x256xi32>
    %724 = arith.cmpi slt, %5, %723 : vector<1x256xi32>
    %725 = arith.andi %722, %724 : vector<1x256xi1>
    %c239_i32 = arith.constant 239 : i32
    %726 = tpu.dynamic_rotate %150 by %c239_i32 dim 1 : vector<2x256xf32>, i32 -> vector<2x256xf32>
    %727 = vector.extract_strided_slice %726 {offsets = [0, 0], sizes = [1, 256], strides = [1, 1]} : vector<2x256xf32> to vector<1x256xf32>
    %728 = vector.broadcast %38 : f32 to vector<1x256xf32>
    %729 = arith.mulf %728, %727 : vector<1x256xf32>
    %730 = vector.extract_strided_slice %726 {offsets = [1, 0], sizes = [1, 256], strides = [1, 1]} : vector<2x256xf32> to vector<1x256xf32>
    %731 = vector.broadcast %87 : f32 to vector<1x256xf32>
    %732 = arith.mulf %731, %730 : vector<1x256xf32>
    %733 = arith.addf %729, %732 : vector<1x256xf32>
    %cst_132 = arith.constant 0.000000e+00 : f32
    %734 = vector.broadcast %cst_132 : f32 to vector<1x256xf32>
    %735 = arith.select %725, %733, %734 : vector<1x256xi1>, vector<1x256xf32>
    %736 = arith.addf %719, %735 : vector<1x256xf32>
    %c-2_i32_133 = arith.constant -2 : i32
    %737 = vector.broadcast %c-2_i32_133 : i32 to vector<1x256xi32>
    %738 = arith.cmpi sge, %5, %737 : vector<1x256xi32>
    %739 = arith.andi %651, %738 : vector<1x256xi1>
    %c14_i32_134 = arith.constant 14 : i32
    %740 = vector.broadcast %c14_i32_134 : i32 to vector<1x256xi32>
    %741 = arith.cmpi slt, %5, %740 : vector<1x256xi32>
    %742 = arith.andi %739, %741 : vector<1x256xi1>
    %c238_i32 = arith.constant 238 : i32
    %743 = tpu.dynamic_rotate %150 by %c238_i32 dim 1 : vector<2x256xf32>, i32 -> vector<2x256xf32>
    %744 = vector.extract_strided_slice %743 {offsets = [0, 0], sizes = [1, 256], strides = [1, 1]} : vector<2x256xf32> to vector<1x256xf32>
    %745 = vector.broadcast %39 : f32 to vector<1x256xf32>
    %746 = arith.mulf %745, %744 : vector<1x256xf32>
    %747 = vector.extract_strided_slice %743 {offsets = [1, 0], sizes = [1, 256], strides = [1, 1]} : vector<2x256xf32> to vector<1x256xf32>
    %748 = vector.broadcast %88 : f32 to vector<1x256xf32>
    %749 = arith.mulf %748, %747 : vector<1x256xf32>
    %750 = arith.addf %746, %749 : vector<1x256xf32>
    %cst_135 = arith.constant 0.000000e+00 : f32
    %751 = vector.broadcast %cst_135 : f32 to vector<1x256xf32>
    %752 = arith.select %742, %750, %751 : vector<1x256xi1>, vector<1x256xf32>
    %753 = arith.addf %736, %752 : vector<1x256xf32>
    %c-3_i32_136 = arith.constant -3 : i32
    %754 = vector.broadcast %c-3_i32_136 : i32 to vector<1x256xi32>
    %755 = arith.cmpi sge, %5, %754 : vector<1x256xi32>
    %756 = arith.andi %651, %755 : vector<1x256xi1>
    %c13_i32_137 = arith.constant 13 : i32
    %757 = vector.broadcast %c13_i32_137 : i32 to vector<1x256xi32>
    %758 = arith.cmpi slt, %5, %757 : vector<1x256xi32>
    %759 = arith.andi %756, %758 : vector<1x256xi1>
    %c237_i32 = arith.constant 237 : i32
    %760 = tpu.dynamic_rotate %150 by %c237_i32 dim 1 : vector<2x256xf32>, i32 -> vector<2x256xf32>
    %761 = vector.extract_strided_slice %760 {offsets = [0, 0], sizes = [1, 256], strides = [1, 1]} : vector<2x256xf32> to vector<1x256xf32>
    %762 = vector.broadcast %40 : f32 to vector<1x256xf32>
    %763 = arith.mulf %762, %761 : vector<1x256xf32>
    %764 = vector.extract_strided_slice %760 {offsets = [1, 0], sizes = [1, 256], strides = [1, 1]} : vector<2x256xf32> to vector<1x256xf32>
    %765 = vector.broadcast %89 : f32 to vector<1x256xf32>
    %766 = arith.mulf %765, %764 : vector<1x256xf32>
    %767 = arith.addf %763, %766 : vector<1x256xf32>
    %cst_138 = arith.constant 0.000000e+00 : f32
    %768 = vector.broadcast %cst_138 : f32 to vector<1x256xf32>
    %769 = arith.select %759, %767, %768 : vector<1x256xi1>, vector<1x256xf32>
    %770 = arith.addf %753, %769 : vector<1x256xf32>
    %c-2_i32_139 = arith.constant -2 : i32
    %771 = vector.broadcast %c-2_i32_139 : i32 to vector<1x256xi32>
    %772 = arith.cmpi sge, %4, %771 : vector<1x256xi32>
    %c14_i32_140 = arith.constant 14 : i32
    %773 = vector.broadcast %c14_i32_140 : i32 to vector<1x256xi32>
    %774 = arith.cmpi slt, %4, %773 : vector<1x256xi32>
    %775 = arith.andi %772, %774 : vector<1x256xi1>
    %c3_i32_141 = arith.constant 3 : i32
    %776 = vector.broadcast %c3_i32_141 : i32 to vector<1x256xi32>
    %777 = arith.cmpi sge, %5, %776 : vector<1x256xi32>
    %778 = arith.andi %775, %777 : vector<1x256xi1>
    %c19_i32_142 = arith.constant 19 : i32
    %779 = vector.broadcast %c19_i32_142 : i32 to vector<1x256xi32>
    %780 = arith.cmpi slt, %5, %779 : vector<1x256xi32>
    %781 = arith.andi %778, %780 : vector<1x256xi1>
    %c227_i32 = arith.constant 227 : i32
    %782 = tpu.dynamic_rotate %150 by %c227_i32 dim 1 : vector<2x256xf32>, i32 -> vector<2x256xf32>
    %783 = vector.extract_strided_slice %782 {offsets = [0, 0], sizes = [1, 256], strides = [1, 1]} : vector<2x256xf32> to vector<1x256xf32>
    %784 = vector.broadcast %41 : f32 to vector<1x256xf32>
    %785 = arith.mulf %784, %783 : vector<1x256xf32>
    %786 = vector.extract_strided_slice %782 {offsets = [1, 0], sizes = [1, 256], strides = [1, 1]} : vector<2x256xf32> to vector<1x256xf32>
    %787 = vector.broadcast %90 : f32 to vector<1x256xf32>
    %788 = arith.mulf %787, %786 : vector<1x256xf32>
    %789 = arith.addf %785, %788 : vector<1x256xf32>
    %cst_143 = arith.constant 0.000000e+00 : f32
    %790 = vector.broadcast %cst_143 : f32 to vector<1x256xf32>
    %791 = arith.select %781, %789, %790 : vector<1x256xi1>, vector<1x256xf32>
    %792 = arith.addf %770, %791 : vector<1x256xf32>
    %c2_i32_144 = arith.constant 2 : i32
    %793 = vector.broadcast %c2_i32_144 : i32 to vector<1x256xi32>
    %794 = arith.cmpi sge, %5, %793 : vector<1x256xi32>
    %795 = arith.andi %775, %794 : vector<1x256xi1>
    %c18_i32_145 = arith.constant 18 : i32
    %796 = vector.broadcast %c18_i32_145 : i32 to vector<1x256xi32>
    %797 = arith.cmpi slt, %5, %796 : vector<1x256xi32>
    %798 = arith.andi %795, %797 : vector<1x256xi1>
    %c226_i32 = arith.constant 226 : i32
    %799 = tpu.dynamic_rotate %150 by %c226_i32 dim 1 : vector<2x256xf32>, i32 -> vector<2x256xf32>
    %800 = vector.extract_strided_slice %799 {offsets = [0, 0], sizes = [1, 256], strides = [1, 1]} : vector<2x256xf32> to vector<1x256xf32>
    %801 = vector.broadcast %42 : f32 to vector<1x256xf32>
    %802 = arith.mulf %801, %800 : vector<1x256xf32>
    %803 = vector.extract_strided_slice %799 {offsets = [1, 0], sizes = [1, 256], strides = [1, 1]} : vector<2x256xf32> to vector<1x256xf32>
    %804 = vector.broadcast %91 : f32 to vector<1x256xf32>
    %805 = arith.mulf %804, %803 : vector<1x256xf32>
    %806 = arith.addf %802, %805 : vector<1x256xf32>
    %cst_146 = arith.constant 0.000000e+00 : f32
    %807 = vector.broadcast %cst_146 : f32 to vector<1x256xf32>
    %808 = arith.select %798, %806, %807 : vector<1x256xi1>, vector<1x256xf32>
    %809 = arith.addf %792, %808 : vector<1x256xf32>
    %c1_i32_147 = arith.constant 1 : i32
    %810 = vector.broadcast %c1_i32_147 : i32 to vector<1x256xi32>
    %811 = arith.cmpi sge, %5, %810 : vector<1x256xi32>
    %812 = arith.andi %775, %811 : vector<1x256xi1>
    %c17_i32_148 = arith.constant 17 : i32
    %813 = vector.broadcast %c17_i32_148 : i32 to vector<1x256xi32>
    %814 = arith.cmpi slt, %5, %813 : vector<1x256xi32>
    %815 = arith.andi %812, %814 : vector<1x256xi1>
    %c225_i32 = arith.constant 225 : i32
    %816 = tpu.dynamic_rotate %150 by %c225_i32 dim 1 : vector<2x256xf32>, i32 -> vector<2x256xf32>
    %817 = vector.extract_strided_slice %816 {offsets = [0, 0], sizes = [1, 256], strides = [1, 1]} : vector<2x256xf32> to vector<1x256xf32>
    %818 = vector.broadcast %43 : f32 to vector<1x256xf32>
    %819 = arith.mulf %818, %817 : vector<1x256xf32>
    %820 = vector.extract_strided_slice %816 {offsets = [1, 0], sizes = [1, 256], strides = [1, 1]} : vector<2x256xf32> to vector<1x256xf32>
    %821 = vector.broadcast %92 : f32 to vector<1x256xf32>
    %822 = arith.mulf %821, %820 : vector<1x256xf32>
    %823 = arith.addf %819, %822 : vector<1x256xf32>
    %cst_149 = arith.constant 0.000000e+00 : f32
    %824 = vector.broadcast %cst_149 : f32 to vector<1x256xf32>
    %825 = arith.select %815, %823, %824 : vector<1x256xi1>, vector<1x256xf32>
    %826 = arith.addf %809, %825 : vector<1x256xf32>
    %c0_i32_150 = arith.constant 0 : i32
    %827 = vector.broadcast %c0_i32_150 : i32 to vector<1x256xi32>
    %828 = arith.cmpi sge, %5, %827 : vector<1x256xi32>
    %829 = arith.andi %775, %828 : vector<1x256xi1>
    %c16_i32_151 = arith.constant 16 : i32
    %830 = vector.broadcast %c16_i32_151 : i32 to vector<1x256xi32>
    %831 = arith.cmpi slt, %5, %830 : vector<1x256xi32>
    %832 = arith.andi %829, %831 : vector<1x256xi1>
    %c224_i32 = arith.constant 224 : i32
    %833 = tpu.dynamic_rotate %150 by %c224_i32 dim 1 : vector<2x256xf32>, i32 -> vector<2x256xf32>
    %834 = vector.extract_strided_slice %833 {offsets = [0, 0], sizes = [1, 256], strides = [1, 1]} : vector<2x256xf32> to vector<1x256xf32>
    %835 = vector.broadcast %44 : f32 to vector<1x256xf32>
    %836 = arith.mulf %835, %834 : vector<1x256xf32>
    %837 = vector.extract_strided_slice %833 {offsets = [1, 0], sizes = [1, 256], strides = [1, 1]} : vector<2x256xf32> to vector<1x256xf32>
    %838 = vector.broadcast %93 : f32 to vector<1x256xf32>
    %839 = arith.mulf %838, %837 : vector<1x256xf32>
    %840 = arith.addf %836, %839 : vector<1x256xf32>
    %cst_152 = arith.constant 0.000000e+00 : f32
    %841 = vector.broadcast %cst_152 : f32 to vector<1x256xf32>
    %842 = arith.select %832, %840, %841 : vector<1x256xi1>, vector<1x256xf32>
    %843 = arith.addf %826, %842 : vector<1x256xf32>
    %c-1_i32_153 = arith.constant -1 : i32
    %844 = vector.broadcast %c-1_i32_153 : i32 to vector<1x256xi32>
    %845 = arith.cmpi sge, %5, %844 : vector<1x256xi32>
    %846 = arith.andi %775, %845 : vector<1x256xi1>
    %c15_i32_154 = arith.constant 15 : i32
    %847 = vector.broadcast %c15_i32_154 : i32 to vector<1x256xi32>
    %848 = arith.cmpi slt, %5, %847 : vector<1x256xi32>
    %849 = arith.andi %846, %848 : vector<1x256xi1>
    %c223_i32 = arith.constant 223 : i32
    %850 = tpu.dynamic_rotate %150 by %c223_i32 dim 1 : vector<2x256xf32>, i32 -> vector<2x256xf32>
    %851 = vector.extract_strided_slice %850 {offsets = [0, 0], sizes = [1, 256], strides = [1, 1]} : vector<2x256xf32> to vector<1x256xf32>
    %852 = vector.broadcast %45 : f32 to vector<1x256xf32>
    %853 = arith.mulf %852, %851 : vector<1x256xf32>
    %854 = vector.extract_strided_slice %850 {offsets = [1, 0], sizes = [1, 256], strides = [1, 1]} : vector<2x256xf32> to vector<1x256xf32>
    %855 = vector.broadcast %94 : f32 to vector<1x256xf32>
    %856 = arith.mulf %855, %854 : vector<1x256xf32>
    %857 = arith.addf %853, %856 : vector<1x256xf32>
    %cst_155 = arith.constant 0.000000e+00 : f32
    %858 = vector.broadcast %cst_155 : f32 to vector<1x256xf32>
    %859 = arith.select %849, %857, %858 : vector<1x256xi1>, vector<1x256xf32>
    %860 = arith.addf %843, %859 : vector<1x256xf32>
    %c-2_i32_156 = arith.constant -2 : i32
    %861 = vector.broadcast %c-2_i32_156 : i32 to vector<1x256xi32>
    %862 = arith.cmpi sge, %5, %861 : vector<1x256xi32>
    %863 = arith.andi %775, %862 : vector<1x256xi1>
    %c14_i32_157 = arith.constant 14 : i32
    %864 = vector.broadcast %c14_i32_157 : i32 to vector<1x256xi32>
    %865 = arith.cmpi slt, %5, %864 : vector<1x256xi32>
    %866 = arith.andi %863, %865 : vector<1x256xi1>
    %c222_i32 = arith.constant 222 : i32
    %867 = tpu.dynamic_rotate %150 by %c222_i32 dim 1 : vector<2x256xf32>, i32 -> vector<2x256xf32>
    %868 = vector.extract_strided_slice %867 {offsets = [0, 0], sizes = [1, 256], strides = [1, 1]} : vector<2x256xf32> to vector<1x256xf32>
    %869 = vector.broadcast %46 : f32 to vector<1x256xf32>
    %870 = arith.mulf %869, %868 : vector<1x256xf32>
    %871 = vector.extract_strided_slice %867 {offsets = [1, 0], sizes = [1, 256], strides = [1, 1]} : vector<2x256xf32> to vector<1x256xf32>
    %872 = vector.broadcast %95 : f32 to vector<1x256xf32>
    %873 = arith.mulf %872, %871 : vector<1x256xf32>
    %874 = arith.addf %870, %873 : vector<1x256xf32>
    %cst_158 = arith.constant 0.000000e+00 : f32
    %875 = vector.broadcast %cst_158 : f32 to vector<1x256xf32>
    %876 = arith.select %866, %874, %875 : vector<1x256xi1>, vector<1x256xf32>
    %877 = arith.addf %860, %876 : vector<1x256xf32>
    %c-3_i32_159 = arith.constant -3 : i32
    %878 = vector.broadcast %c-3_i32_159 : i32 to vector<1x256xi32>
    %879 = arith.cmpi sge, %5, %878 : vector<1x256xi32>
    %880 = arith.andi %775, %879 : vector<1x256xi1>
    %c13_i32_160 = arith.constant 13 : i32
    %881 = vector.broadcast %c13_i32_160 : i32 to vector<1x256xi32>
    %882 = arith.cmpi slt, %5, %881 : vector<1x256xi32>
    %883 = arith.andi %880, %882 : vector<1x256xi1>
    %c221_i32 = arith.constant 221 : i32
    %884 = tpu.dynamic_rotate %150 by %c221_i32 dim 1 : vector<2x256xf32>, i32 -> vector<2x256xf32>
    %885 = vector.extract_strided_slice %884 {offsets = [0, 0], sizes = [1, 256], strides = [1, 1]} : vector<2x256xf32> to vector<1x256xf32>
    %886 = vector.broadcast %47 : f32 to vector<1x256xf32>
    %887 = arith.mulf %886, %885 : vector<1x256xf32>
    %888 = vector.extract_strided_slice %884 {offsets = [1, 0], sizes = [1, 256], strides = [1, 1]} : vector<2x256xf32> to vector<1x256xf32>
    %889 = vector.broadcast %96 : f32 to vector<1x256xf32>
    %890 = arith.mulf %889, %888 : vector<1x256xf32>
    %891 = arith.addf %887, %890 : vector<1x256xf32>
    %cst_161 = arith.constant 0.000000e+00 : f32
    %892 = vector.broadcast %cst_161 : f32 to vector<1x256xf32>
    %893 = arith.select %883, %891, %892 : vector<1x256xi1>, vector<1x256xf32>
    %894 = arith.addf %877, %893 : vector<1x256xf32>
    %c-3_i32_162 = arith.constant -3 : i32
    %895 = vector.broadcast %c-3_i32_162 : i32 to vector<1x256xi32>
    %896 = arith.cmpi sge, %4, %895 : vector<1x256xi32>
    %c13_i32_163 = arith.constant 13 : i32
    %897 = vector.broadcast %c13_i32_163 : i32 to vector<1x256xi32>
    %898 = arith.cmpi slt, %4, %897 : vector<1x256xi32>
    %899 = arith.andi %896, %898 : vector<1x256xi1>
    %c3_i32_164 = arith.constant 3 : i32
    %900 = vector.broadcast %c3_i32_164 : i32 to vector<1x256xi32>
    %901 = arith.cmpi sge, %5, %900 : vector<1x256xi32>
    %902 = arith.andi %899, %901 : vector<1x256xi1>
    %c19_i32_165 = arith.constant 19 : i32
    %903 = vector.broadcast %c19_i32_165 : i32 to vector<1x256xi32>
    %904 = arith.cmpi slt, %5, %903 : vector<1x256xi32>
    %905 = arith.andi %902, %904 : vector<1x256xi1>
    %c211_i32 = arith.constant 211 : i32
    %906 = tpu.dynamic_rotate %150 by %c211_i32 dim 1 : vector<2x256xf32>, i32 -> vector<2x256xf32>
    %907 = vector.extract_strided_slice %906 {offsets = [0, 0], sizes = [1, 256], strides = [1, 1]} : vector<2x256xf32> to vector<1x256xf32>
    %908 = vector.broadcast %48 : f32 to vector<1x256xf32>
    %909 = arith.mulf %908, %907 : vector<1x256xf32>
    %910 = vector.extract_strided_slice %906 {offsets = [1, 0], sizes = [1, 256], strides = [1, 1]} : vector<2x256xf32> to vector<1x256xf32>
    %911 = vector.broadcast %97 : f32 to vector<1x256xf32>
    %912 = arith.mulf %911, %910 : vector<1x256xf32>
    %913 = arith.addf %909, %912 : vector<1x256xf32>
    %cst_166 = arith.constant 0.000000e+00 : f32
    %914 = vector.broadcast %cst_166 : f32 to vector<1x256xf32>
    %915 = arith.select %905, %913, %914 : vector<1x256xi1>, vector<1x256xf32>
    %916 = arith.addf %894, %915 : vector<1x256xf32>
    %c2_i32_167 = arith.constant 2 : i32
    %917 = vector.broadcast %c2_i32_167 : i32 to vector<1x256xi32>
    %918 = arith.cmpi sge, %5, %917 : vector<1x256xi32>
    %919 = arith.andi %899, %918 : vector<1x256xi1>
    %c18_i32_168 = arith.constant 18 : i32
    %920 = vector.broadcast %c18_i32_168 : i32 to vector<1x256xi32>
    %921 = arith.cmpi slt, %5, %920 : vector<1x256xi32>
    %922 = arith.andi %919, %921 : vector<1x256xi1>
    %c210_i32 = arith.constant 210 : i32
    %923 = tpu.dynamic_rotate %150 by %c210_i32 dim 1 : vector<2x256xf32>, i32 -> vector<2x256xf32>
    %924 = vector.extract_strided_slice %923 {offsets = [0, 0], sizes = [1, 256], strides = [1, 1]} : vector<2x256xf32> to vector<1x256xf32>
    %925 = vector.broadcast %49 : f32 to vector<1x256xf32>
    %926 = arith.mulf %925, %924 : vector<1x256xf32>
    %927 = vector.extract_strided_slice %923 {offsets = [1, 0], sizes = [1, 256], strides = [1, 1]} : vector<2x256xf32> to vector<1x256xf32>
    %928 = vector.broadcast %98 : f32 to vector<1x256xf32>
    %929 = arith.mulf %928, %927 : vector<1x256xf32>
    %930 = arith.addf %926, %929 : vector<1x256xf32>
    %cst_169 = arith.constant 0.000000e+00 : f32
    %931 = vector.broadcast %cst_169 : f32 to vector<1x256xf32>
    %932 = arith.select %922, %930, %931 : vector<1x256xi1>, vector<1x256xf32>
    %933 = arith.addf %916, %932 : vector<1x256xf32>
    %c1_i32_170 = arith.constant 1 : i32
    %934 = vector.broadcast %c1_i32_170 : i32 to vector<1x256xi32>
    %935 = arith.cmpi sge, %5, %934 : vector<1x256xi32>
    %936 = arith.andi %899, %935 : vector<1x256xi1>
    %c17_i32_171 = arith.constant 17 : i32
    %937 = vector.broadcast %c17_i32_171 : i32 to vector<1x256xi32>
    %938 = arith.cmpi slt, %5, %937 : vector<1x256xi32>
    %939 = arith.andi %936, %938 : vector<1x256xi1>
    %c209_i32 = arith.constant 209 : i32
    %940 = tpu.dynamic_rotate %150 by %c209_i32 dim 1 : vector<2x256xf32>, i32 -> vector<2x256xf32>
    %941 = vector.extract_strided_slice %940 {offsets = [0, 0], sizes = [1, 256], strides = [1, 1]} : vector<2x256xf32> to vector<1x256xf32>
    %942 = vector.broadcast %50 : f32 to vector<1x256xf32>
    %943 = arith.mulf %942, %941 : vector<1x256xf32>
    %944 = vector.extract_strided_slice %940 {offsets = [1, 0], sizes = [1, 256], strides = [1, 1]} : vector<2x256xf32> to vector<1x256xf32>
    %945 = vector.broadcast %99 : f32 to vector<1x256xf32>
    %946 = arith.mulf %945, %944 : vector<1x256xf32>
    %947 = arith.addf %943, %946 : vector<1x256xf32>
    %cst_172 = arith.constant 0.000000e+00 : f32
    %948 = vector.broadcast %cst_172 : f32 to vector<1x256xf32>
    %949 = arith.select %939, %947, %948 : vector<1x256xi1>, vector<1x256xf32>
    %950 = arith.addf %933, %949 : vector<1x256xf32>
    %c0_i32_173 = arith.constant 0 : i32
    %951 = vector.broadcast %c0_i32_173 : i32 to vector<1x256xi32>
    %952 = arith.cmpi sge, %5, %951 : vector<1x256xi32>
    %953 = arith.andi %899, %952 : vector<1x256xi1>
    %c16_i32_174 = arith.constant 16 : i32
    %954 = vector.broadcast %c16_i32_174 : i32 to vector<1x256xi32>
    %955 = arith.cmpi slt, %5, %954 : vector<1x256xi32>
    %956 = arith.andi %953, %955 : vector<1x256xi1>
    %c208_i32 = arith.constant 208 : i32
    %957 = tpu.dynamic_rotate %150 by %c208_i32 dim 1 : vector<2x256xf32>, i32 -> vector<2x256xf32>
    %958 = vector.extract_strided_slice %957 {offsets = [0, 0], sizes = [1, 256], strides = [1, 1]} : vector<2x256xf32> to vector<1x256xf32>
    %959 = vector.broadcast %51 : f32 to vector<1x256xf32>
    %960 = arith.mulf %959, %958 : vector<1x256xf32>
    %961 = vector.extract_strided_slice %957 {offsets = [1, 0], sizes = [1, 256], strides = [1, 1]} : vector<2x256xf32> to vector<1x256xf32>
    %962 = vector.broadcast %100 : f32 to vector<1x256xf32>
    %963 = arith.mulf %962, %961 : vector<1x256xf32>
    %964 = arith.addf %960, %963 : vector<1x256xf32>
    %cst_175 = arith.constant 0.000000e+00 : f32
    %965 = vector.broadcast %cst_175 : f32 to vector<1x256xf32>
    %966 = arith.select %956, %964, %965 : vector<1x256xi1>, vector<1x256xf32>
    %967 = arith.addf %950, %966 : vector<1x256xf32>
    %c-1_i32_176 = arith.constant -1 : i32
    %968 = vector.broadcast %c-1_i32_176 : i32 to vector<1x256xi32>
    %969 = arith.cmpi sge, %5, %968 : vector<1x256xi32>
    %970 = arith.andi %899, %969 : vector<1x256xi1>
    %c15_i32_177 = arith.constant 15 : i32
    %971 = vector.broadcast %c15_i32_177 : i32 to vector<1x256xi32>
    %972 = arith.cmpi slt, %5, %971 : vector<1x256xi32>
    %973 = arith.andi %970, %972 : vector<1x256xi1>
    %c207_i32 = arith.constant 207 : i32
    %974 = tpu.dynamic_rotate %150 by %c207_i32 dim 1 : vector<2x256xf32>, i32 -> vector<2x256xf32>
    %975 = vector.extract_strided_slice %974 {offsets = [0, 0], sizes = [1, 256], strides = [1, 1]} : vector<2x256xf32> to vector<1x256xf32>
    %976 = vector.broadcast %52 : f32 to vector<1x256xf32>
    %977 = arith.mulf %976, %975 : vector<1x256xf32>
    %978 = vector.extract_strided_slice %974 {offsets = [1, 0], sizes = [1, 256], strides = [1, 1]} : vector<2x256xf32> to vector<1x256xf32>
    %979 = vector.broadcast %101 : f32 to vector<1x256xf32>
    %980 = arith.mulf %979, %978 : vector<1x256xf32>
    %981 = arith.addf %977, %980 : vector<1x256xf32>
    %cst_178 = arith.constant 0.000000e+00 : f32
    %982 = vector.broadcast %cst_178 : f32 to vector<1x256xf32>
    %983 = arith.select %973, %981, %982 : vector<1x256xi1>, vector<1x256xf32>
    %984 = arith.addf %967, %983 : vector<1x256xf32>
    %c-2_i32_179 = arith.constant -2 : i32
    %985 = vector.broadcast %c-2_i32_179 : i32 to vector<1x256xi32>
    %986 = arith.cmpi sge, %5, %985 : vector<1x256xi32>
    %987 = arith.andi %899, %986 : vector<1x256xi1>
    %c14_i32_180 = arith.constant 14 : i32
    %988 = vector.broadcast %c14_i32_180 : i32 to vector<1x256xi32>
    %989 = arith.cmpi slt, %5, %988 : vector<1x256xi32>
    %990 = arith.andi %987, %989 : vector<1x256xi1>
    %c206_i32 = arith.constant 206 : i32
    %991 = tpu.dynamic_rotate %150 by %c206_i32 dim 1 : vector<2x256xf32>, i32 -> vector<2x256xf32>
    %992 = vector.extract_strided_slice %991 {offsets = [0, 0], sizes = [1, 256], strides = [1, 1]} : vector<2x256xf32> to vector<1x256xf32>
    %993 = vector.broadcast %53 : f32 to vector<1x256xf32>
    %994 = arith.mulf %993, %992 : vector<1x256xf32>
    %995 = vector.extract_strided_slice %991 {offsets = [1, 0], sizes = [1, 256], strides = [1, 1]} : vector<2x256xf32> to vector<1x256xf32>
    %996 = vector.broadcast %102 : f32 to vector<1x256xf32>
    %997 = arith.mulf %996, %995 : vector<1x256xf32>
    %998 = arith.addf %994, %997 : vector<1x256xf32>
    %cst_181 = arith.constant 0.000000e+00 : f32
    %999 = vector.broadcast %cst_181 : f32 to vector<1x256xf32>
    %1000 = arith.select %990, %998, %999 : vector<1x256xi1>, vector<1x256xf32>
    %1001 = arith.addf %984, %1000 : vector<1x256xf32>
    %c-3_i32_182 = arith.constant -3 : i32
    %1002 = vector.broadcast %c-3_i32_182 : i32 to vector<1x256xi32>
    %1003 = arith.cmpi sge, %5, %1002 : vector<1x256xi32>
    %1004 = arith.andi %899, %1003 : vector<1x256xi1>
    %c13_i32_183 = arith.constant 13 : i32
    %1005 = vector.broadcast %c13_i32_183 : i32 to vector<1x256xi32>
    %1006 = arith.cmpi slt, %5, %1005 : vector<1x256xi32>
    %1007 = arith.andi %1004, %1006 : vector<1x256xi1>
    %c205_i32 = arith.constant 205 : i32
    %1008 = tpu.dynamic_rotate %150 by %c205_i32 dim 1 : vector<2x256xf32>, i32 -> vector<2x256xf32>
    %1009 = vector.extract_strided_slice %1008 {offsets = [0, 0], sizes = [1, 256], strides = [1, 1]} : vector<2x256xf32> to vector<1x256xf32>
    %1010 = vector.broadcast %54 : f32 to vector<1x256xf32>
    %1011 = arith.mulf %1010, %1009 : vector<1x256xf32>
    %1012 = vector.extract_strided_slice %1008 {offsets = [1, 0], sizes = [1, 256], strides = [1, 1]} : vector<2x256xf32> to vector<1x256xf32>
    %1013 = vector.broadcast %103 : f32 to vector<1x256xf32>
    %1014 = arith.mulf %1013, %1012 : vector<1x256xf32>
    %1015 = arith.addf %1011, %1014 : vector<1x256xf32>
    %cst_184 = arith.constant 0.000000e+00 : f32
    %1016 = vector.broadcast %cst_184 : f32 to vector<1x256xf32>
    %1017 = arith.select %1007, %1015, %1016 : vector<1x256xi1>, vector<1x256xf32>
    %1018 = arith.addf %1001, %1017 : vector<1x256xf32>
    %1019 = arith.negf %1018 : vector<1x256xf32>
    %1020 = math.exp %1019 : vector<1x256xf32>
    %cst_185 = arith.constant 1.000000e+00 : f32
    %1021 = vector.broadcast %cst_185 : f32 to vector<1x256xf32>
    %1022 = arith.addf %1021, %1020 : vector<1x256xf32>
    %1023 = arith.divf %1021, %1022 : vector<1x256xf32>
    %1024 = vector.broadcast %1023 : vector<1x256xf32> to vector<4x256xf32>
    %1025 = arith.mulf %143, %1024 : vector<4x256xf32>
    %c0_186 = arith.constant 0 : index
    %c0_187 = arith.constant 0 : index
    %c0_188 = arith.constant 0 : index
    %1026 = vector.load %arg9[%c0_186, %c0_187, %c0_188] : memref<2x4x256xf32, #tpu.memory_space<vmem>>, vector<1x4x256xf32>
    %1027 = vector.shape_cast %1026 : vector<1x4x256xf32> to vector<4x256xf32>
    %1028 = vector.shape_cast %1025 : vector<4x256xf32> to vector<1x4x256xf32>
    tpu.vector_store %arg9[%c0_186, %c0_187, %c0_188], %1028 {strides = array<i32>} : memref<2x4x256xf32, #tpu.memory_space<vmem>>, vector<1x4x256xf32>,
    %c1_189 = arith.constant 1 : index
    %c0_190 = arith.constant 0 : index
    %c0_191 = arith.constant 0 : index
    %1029 = vector.load %arg1[%c1_189, %c0_190, %c0_191] : memref<2x4x256xf32, #tpu.memory_space<vmem>>, vector<1x4x256xf32>
    %1030 = vector.shape_cast %1029 : vector<1x4x256xf32> to vector<4x256xf32>
    %cst_192 = arith.constant dense<0xFF800000> : vector<4xf32>
    %1031 = vector.multi_reduction <maximumf>, %1030, %cst_192 [1] : vector<4x256xf32> to vector<4xf32>
    %1032 = vector.shape_cast %1031 : vector<4xf32> to vector<4x1xf32>
    %cst_193 = arith.constant dense<0.000000e+00> : vector<4xf32>
    %1033 = vector.multi_reduction <add>, %1030, %cst_193 [1] : vector<4x256xf32> to vector<4xf32>
    %1034 = vector.shape_cast %1033 : vector<4xf32> to vector<4x1xf32>
    %cst_194 = arith.constant 3.906250e-03 : f32
    %1035 = vector.broadcast %cst_194 : f32 to vector<4x1xf32>
    %1036 = arith.mulf %1034, %1035 : vector<4x1xf32>
    %1037 = vector.broadcast %1032 : vector<4x1xf32> to vector<4x4xf32>
    %1038 = arith.mulf %0, %1037 : vector<4x4xf32>
    %cst_195 = arith.constant dense<0.000000e+00> : vector<4xf32>
    %1039 = vector.multi_reduction <add>, %1038, %cst_195 [0] : vector<4x4xf32> to vector<4xf32>
    %1040 = vector.shape_cast %1039 : vector<4xf32> to vector<1x4xf32>
    %1041 = arith.addf %1040, %2 : vector<1x4xf32>
    %cst_196 = arith.constant 0.000000e+00 : f32
    %1042 = vector.broadcast %cst_196 : f32 to vector<1x4xf32>
    %1043 = arith.maximumf %1041, %1042 : vector<1x4xf32>
    %1044 = vector.broadcast %1036 : vector<4x1xf32> to vector<4x4xf32>
    %1045 = arith.mulf %0, %1044 : vector<4x4xf32>
    %cst_197 = arith.constant dense<0.000000e+00> : vector<4xf32>
    %1046 = vector.multi_reduction <add>, %1045, %cst_197 [0] : vector<4x4xf32> to vector<4xf32>
    %1047 = vector.shape_cast %1046 : vector<4xf32> to vector<1x4xf32>
    %1048 = arith.addf %1047, %2 : vector<1x4xf32>
    %cst_198 = arith.constant 0.000000e+00 : f32
    %1049 = vector.broadcast %cst_198 : f32 to vector<1x4xf32>
    %1050 = arith.maximumf %1048, %1049 : vector<1x4xf32>
    %1051 = vector.broadcast %1043 : vector<1x4xf32> to vector<4x4xf32>
    %1052 = arith.mulf %1, %1051 : vector<4x4xf32>
    %cst_199 = arith.constant dense<0.000000e+00> : vector<4xf32>
    %1053 = vector.multi_reduction <add>, %1052, %cst_199 [1] : vector<4x4xf32> to vector<4xf32>
    %1054 = vector.shape_cast %1053 : vector<4xf32> to vector<4x1xf32>
    %1055 = arith.addf %1054, %3 : vector<4x1xf32>
    %1056 = vector.broadcast %1050 : vector<1x4xf32> to vector<4x4xf32>
    %1057 = arith.mulf %1, %1056 : vector<4x4xf32>
    %cst_200 = arith.constant dense<0.000000e+00> : vector<4xf32>
    %1058 = vector.multi_reduction <add>, %1057, %cst_200 [1] : vector<4x4xf32> to vector<4xf32>
    %1059 = vector.shape_cast %1058 : vector<4xf32> to vector<4x1xf32>
    %1060 = arith.addf %1059, %3 : vector<4x1xf32>
    %1061 = arith.addf %1055, %1060 : vector<4x1xf32>
    %1062 = arith.negf %1061 : vector<4x1xf32>
    %1063 = math.exp %1062 : vector<4x1xf32>
    %cst_201 = arith.constant 1.000000e+00 : f32
    %1064 = vector.broadcast %cst_201 : f32 to vector<4x1xf32>
    %1065 = arith.addf %1064, %1063 : vector<4x1xf32>
    %1066 = arith.divf %1064, %1065 : vector<4x1xf32>
    %1067 = vector.broadcast %1066 : vector<4x1xf32> to vector<4x256xf32>
    %1068 = arith.mulf %1030, %1067 : vector<4x256xf32>
    %cst_202 = arith.constant dense<0xFF800000> : vector<256xf32>
    %1069 = vector.multi_reduction <maximumf>, %1068, %cst_202 [0] : vector<4x256xf32> to vector<256xf32>
    %1070 = vector.shape_cast %1069 : vector<256xf32> to vector<1x256xf32>
    %cst_203 = arith.constant dense<0.000000e+00> : vector<256xf32>
    %1071 = vector.multi_reduction <add>, %1068, %cst_203 [0] : vector<4x256xf32> to vector<256xf32>
    %1072 = vector.shape_cast %1071 : vector<256xf32> to vector<1x256xf32>
    %cst_204 = arith.constant 2.500000e-01 : f32
    %1073 = vector.broadcast %cst_204 : f32 to vector<1x256xf32>
    %1074 = arith.mulf %1072, %1073 : vector<1x256xf32>
    %1075 = tpu.concatenate %1070, %1074 in 0 : vector<1x256xf32>, vector<1x256xf32> -> vector<2x256xf32>
    %cst_205 = arith.constant 0.000000e+00 : f32
    %1076 = vector.broadcast %cst_205 : f32 to vector<1x256xf32>
    %c3_i32_206 = arith.constant 3 : i32
    %1077 = vector.broadcast %c3_i32_206 : i32 to vector<1x256xi32>
    %1078 = arith.cmpi sge, %4, %1077 : vector<1x256xi32>
    %c19_i32_207 = arith.constant 19 : i32
    %1079 = vector.broadcast %c19_i32_207 : i32 to vector<1x256xi32>
    %1080 = arith.cmpi slt, %4, %1079 : vector<1x256xi32>
    %1081 = arith.andi %1078, %1080 : vector<1x256xi1>
    %c3_i32_208 = arith.constant 3 : i32
    %1082 = vector.broadcast %c3_i32_208 : i32 to vector<1x256xi32>
    %1083 = arith.cmpi sge, %5, %1082 : vector<1x256xi32>
    %1084 = arith.andi %1081, %1083 : vector<1x256xi1>
    %c19_i32_209 = arith.constant 19 : i32
    %1085 = vector.broadcast %c19_i32_209 : i32 to vector<1x256xi32>
    %1086 = arith.cmpi slt, %5, %1085 : vector<1x256xi32>
    %1087 = arith.andi %1084, %1086 : vector<1x256xi1>
    %c51_i32_210 = arith.constant 51 : i32
    %1088 = tpu.dynamic_rotate %1075 by %c51_i32_210 dim 1 : vector<2x256xf32>, i32 -> vector<2x256xf32>
    %1089 = vector.extract_strided_slice %1088 {offsets = [0, 0], sizes = [1, 256], strides = [1, 1]} : vector<2x256xf32> to vector<1x256xf32>
    %1090 = vector.broadcast %6 : f32 to vector<1x256xf32>
    %1091 = arith.mulf %1090, %1089 : vector<1x256xf32>
    %1092 = vector.extract_strided_slice %1088 {offsets = [1, 0], sizes = [1, 256], strides = [1, 1]} : vector<2x256xf32> to vector<1x256xf32>
    %1093 = vector.broadcast %55 : f32 to vector<1x256xf32>
    %1094 = arith.mulf %1093, %1092 : vector<1x256xf32>
    %1095 = arith.addf %1091, %1094 : vector<1x256xf32>
    %cst_211 = arith.constant 0.000000e+00 : f32
    %1096 = vector.broadcast %cst_211 : f32 to vector<1x256xf32>
    %1097 = arith.select %1087, %1095, %1096 : vector<1x256xi1>, vector<1x256xf32>
    %1098 = arith.addf %1076, %1097 : vector<1x256xf32>
    %c2_i32_212 = arith.constant 2 : i32
    %1099 = vector.broadcast %c2_i32_212 : i32 to vector<1x256xi32>
    %1100 = arith.cmpi sge, %5, %1099 : vector<1x256xi32>
    %1101 = arith.andi %1081, %1100 : vector<1x256xi1>
    %c18_i32_213 = arith.constant 18 : i32
    %1102 = vector.broadcast %c18_i32_213 : i32 to vector<1x256xi32>
    %1103 = arith.cmpi slt, %5, %1102 : vector<1x256xi32>
    %1104 = arith.andi %1101, %1103 : vector<1x256xi1>
    %c50_i32_214 = arith.constant 50 : i32
    %1105 = tpu.dynamic_rotate %1075 by %c50_i32_214 dim 1 : vector<2x256xf32>, i32 -> vector<2x256xf32>
    %1106 = vector.extract_strided_slice %1105 {offsets = [0, 0], sizes = [1, 256], strides = [1, 1]} : vector<2x256xf32> to vector<1x256xf32>
    %1107 = vector.broadcast %7 : f32 to vector<1x256xf32>
    %1108 = arith.mulf %1107, %1106 : vector<1x256xf32>
    %1109 = vector.extract_strided_slice %1105 {offsets = [1, 0], sizes = [1, 256], strides = [1, 1]} : vector<2x256xf32> to vector<1x256xf32>
    %1110 = vector.broadcast %56 : f32 to vector<1x256xf32>
    %1111 = arith.mulf %1110, %1109 : vector<1x256xf32>
    %1112 = arith.addf %1108, %1111 : vector<1x256xf32>
    %cst_215 = arith.constant 0.000000e+00 : f32
    %1113 = vector.broadcast %cst_215 : f32 to vector<1x256xf32>
    %1114 = arith.select %1104, %1112, %1113 : vector<1x256xi1>, vector<1x256xf32>
    %1115 = arith.addf %1098, %1114 : vector<1x256xf32>
    %c1_i32_216 = arith.constant 1 : i32
    %1116 = vector.broadcast %c1_i32_216 : i32 to vector<1x256xi32>
    %1117 = arith.cmpi sge, %5, %1116 : vector<1x256xi32>
    %1118 = arith.andi %1081, %1117 : vector<1x256xi1>
    %c17_i32_217 = arith.constant 17 : i32
    %1119 = vector.broadcast %c17_i32_217 : i32 to vector<1x256xi32>
    %1120 = arith.cmpi slt, %5, %1119 : vector<1x256xi32>
    %1121 = arith.andi %1118, %1120 : vector<1x256xi1>
    %c49_i32_218 = arith.constant 49 : i32
    %1122 = tpu.dynamic_rotate %1075 by %c49_i32_218 dim 1 : vector<2x256xf32>, i32 -> vector<2x256xf32>
    %1123 = vector.extract_strided_slice %1122 {offsets = [0, 0], sizes = [1, 256], strides = [1, 1]} : vector<2x256xf32> to vector<1x256xf32>
    %1124 = vector.broadcast %8 : f32 to vector<1x256xf32>
    %1125 = arith.mulf %1124, %1123 : vector<1x256xf32>
    %1126 = vector.extract_strided_slice %1122 {offsets = [1, 0], sizes = [1, 256], strides = [1, 1]} : vector<2x256xf32> to vector<1x256xf32>
    %1127 = vector.broadcast %57 : f32 to vector<1x256xf32>
    %1128 = arith.mulf %1127, %1126 : vector<1x256xf32>
    %1129 = arith.addf %1125, %1128 : vector<1x256xf32>
    %cst_219 = arith.constant 0.000000e+00 : f32
    %1130 = vector.broadcast %cst_219 : f32 to vector<1x256xf32>
    %1131 = arith.select %1121, %1129, %1130 : vector<1x256xi1>, vector<1x256xf32>
    %1132 = arith.addf %1115, %1131 : vector<1x256xf32>
    %c0_i32_220 = arith.constant 0 : i32
    %1133 = vector.broadcast %c0_i32_220 : i32 to vector<1x256xi32>
    %1134 = arith.cmpi sge, %5, %1133 : vector<1x256xi32>
    %1135 = arith.andi %1081, %1134 : vector<1x256xi1>
    %c16_i32_221 = arith.constant 16 : i32
    %1136 = vector.broadcast %c16_i32_221 : i32 to vector<1x256xi32>
    %1137 = arith.cmpi slt, %5, %1136 : vector<1x256xi32>
    %1138 = arith.andi %1135, %1137 : vector<1x256xi1>
    %c48_i32_222 = arith.constant 48 : i32
    %1139 = tpu.dynamic_rotate %1075 by %c48_i32_222 dim 1 : vector<2x256xf32>, i32 -> vector<2x256xf32>
    %1140 = vector.extract_strided_slice %1139 {offsets = [0, 0], sizes = [1, 256], strides = [1, 1]} : vector<2x256xf32> to vector<1x256xf32>
    %1141 = vector.broadcast %9 : f32 to vector<1x256xf32>
    %1142 = arith.mulf %1141, %1140 : vector<1x256xf32>
    %1143 = vector.extract_strided_slice %1139 {offsets = [1, 0], sizes = [1, 256], strides = [1, 1]} : vector<2x256xf32> to vector<1x256xf32>
    %1144 = vector.broadcast %58 : f32 to vector<1x256xf32>
    %1145 = arith.mulf %1144, %1143 : vector<1x256xf32>
    %1146 = arith.addf %1142, %1145 : vector<1x256xf32>
    %cst_223 = arith.constant 0.000000e+00 : f32
    %1147 = vector.broadcast %cst_223 : f32 to vector<1x256xf32>
    %1148 = arith.select %1138, %1146, %1147 : vector<1x256xi1>, vector<1x256xf32>
    %1149 = arith.addf %1132, %1148 : vector<1x256xf32>
    %c-1_i32_224 = arith.constant -1 : i32
    %1150 = vector.broadcast %c-1_i32_224 : i32 to vector<1x256xi32>
    %1151 = arith.cmpi sge, %5, %1150 : vector<1x256xi32>
    %1152 = arith.andi %1081, %1151 : vector<1x256xi1>
    %c15_i32_225 = arith.constant 15 : i32
    %1153 = vector.broadcast %c15_i32_225 : i32 to vector<1x256xi32>
    %1154 = arith.cmpi slt, %5, %1153 : vector<1x256xi32>
    %1155 = arith.andi %1152, %1154 : vector<1x256xi1>
    %c47_i32_226 = arith.constant 47 : i32
    %1156 = tpu.dynamic_rotate %1075 by %c47_i32_226 dim 1 : vector<2x256xf32>, i32 -> vector<2x256xf32>
    %1157 = vector.extract_strided_slice %1156 {offsets = [0, 0], sizes = [1, 256], strides = [1, 1]} : vector<2x256xf32> to vector<1x256xf32>
    %1158 = vector.broadcast %10 : f32 to vector<1x256xf32>
    %1159 = arith.mulf %1158, %1157 : vector<1x256xf32>
    %1160 = vector.extract_strided_slice %1156 {offsets = [1, 0], sizes = [1, 256], strides = [1, 1]} : vector<2x256xf32> to vector<1x256xf32>
    %1161 = vector.broadcast %59 : f32 to vector<1x256xf32>
    %1162 = arith.mulf %1161, %1160 : vector<1x256xf32>
    %1163 = arith.addf %1159, %1162 : vector<1x256xf32>
    %cst_227 = arith.constant 0.000000e+00 : f32
    %1164 = vector.broadcast %cst_227 : f32 to vector<1x256xf32>
    %1165 = arith.select %1155, %1163, %1164 : vector<1x256xi1>, vector<1x256xf32>
    %1166 = arith.addf %1149, %1165 : vector<1x256xf32>
    %c-2_i32_228 = arith.constant -2 : i32
    %1167 = vector.broadcast %c-2_i32_228 : i32 to vector<1x256xi32>
    %1168 = arith.cmpi sge, %5, %1167 : vector<1x256xi32>
    %1169 = arith.andi %1081, %1168 : vector<1x256xi1>
    %c14_i32_229 = arith.constant 14 : i32
    %1170 = vector.broadcast %c14_i32_229 : i32 to vector<1x256xi32>
    %1171 = arith.cmpi slt, %5, %1170 : vector<1x256xi32>
    %1172 = arith.andi %1169, %1171 : vector<1x256xi1>
    %c46_i32_230 = arith.constant 46 : i32
    %1173 = tpu.dynamic_rotate %1075 by %c46_i32_230 dim 1 : vector<2x256xf32>, i32 -> vector<2x256xf32>
    %1174 = vector.extract_strided_slice %1173 {offsets = [0, 0], sizes = [1, 256], strides = [1, 1]} : vector<2x256xf32> to vector<1x256xf32>
    %1175 = vector.broadcast %11 : f32 to vector<1x256xf32>
    %1176 = arith.mulf %1175, %1174 : vector<1x256xf32>
    %1177 = vector.extract_strided_slice %1173 {offsets = [1, 0], sizes = [1, 256], strides = [1, 1]} : vector<2x256xf32> to vector<1x256xf32>
    %1178 = vector.broadcast %60 : f32 to vector<1x256xf32>
    %1179 = arith.mulf %1178, %1177 : vector<1x256xf32>
    %1180 = arith.addf %1176, %1179 : vector<1x256xf32>
    %cst_231 = arith.constant 0.000000e+00 : f32
    %1181 = vector.broadcast %cst_231 : f32 to vector<1x256xf32>
    %1182 = arith.select %1172, %1180, %1181 : vector<1x256xi1>, vector<1x256xf32>
    %1183 = arith.addf %1166, %1182 : vector<1x256xf32>
    %c-3_i32_232 = arith.constant -3 : i32
    %1184 = vector.broadcast %c-3_i32_232 : i32 to vector<1x256xi32>
    %1185 = arith.cmpi sge, %5, %1184 : vector<1x256xi32>
    %1186 = arith.andi %1081, %1185 : vector<1x256xi1>
    %c13_i32_233 = arith.constant 13 : i32
    %1187 = vector.broadcast %c13_i32_233 : i32 to vector<1x256xi32>
    %1188 = arith.cmpi slt, %5, %1187 : vector<1x256xi32>
    %1189 = arith.andi %1186, %1188 : vector<1x256xi1>
    %c45_i32_234 = arith.constant 45 : i32
    %1190 = tpu.dynamic_rotate %1075 by %c45_i32_234 dim 1 : vector<2x256xf32>, i32 -> vector<2x256xf32>
    %1191 = vector.extract_strided_slice %1190 {offsets = [0, 0], sizes = [1, 256], strides = [1, 1]} : vector<2x256xf32> to vector<1x256xf32>
    %1192 = vector.broadcast %12 : f32 to vector<1x256xf32>
    %1193 = arith.mulf %1192, %1191 : vector<1x256xf32>
    %1194 = vector.extract_strided_slice %1190 {offsets = [1, 0], sizes = [1, 256], strides = [1, 1]} : vector<2x256xf32> to vector<1x256xf32>
    %1195 = vector.broadcast %61 : f32 to vector<1x256xf32>
    %1196 = arith.mulf %1195, %1194 : vector<1x256xf32>
    %1197 = arith.addf %1193, %1196 : vector<1x256xf32>
    %cst_235 = arith.constant 0.000000e+00 : f32
    %1198 = vector.broadcast %cst_235 : f32 to vector<1x256xf32>
    %1199 = arith.select %1189, %1197, %1198 : vector<1x256xi1>, vector<1x256xf32>
    %1200 = arith.addf %1183, %1199 : vector<1x256xf32>
    %c2_i32_236 = arith.constant 2 : i32
    %1201 = vector.broadcast %c2_i32_236 : i32 to vector<1x256xi32>
    %1202 = arith.cmpi sge, %4, %1201 : vector<1x256xi32>
    %c18_i32_237 = arith.constant 18 : i32
    %1203 = vector.broadcast %c18_i32_237 : i32 to vector<1x256xi32>
    %1204 = arith.cmpi slt, %4, %1203 : vector<1x256xi32>
    %1205 = arith.andi %1202, %1204 : vector<1x256xi1>
    %c3_i32_238 = arith.constant 3 : i32
    %1206 = vector.broadcast %c3_i32_238 : i32 to vector<1x256xi32>
    %1207 = arith.cmpi sge, %5, %1206 : vector<1x256xi32>
    %1208 = arith.andi %1205, %1207 : vector<1x256xi1>
    %c19_i32_239 = arith.constant 19 : i32
    %1209 = vector.broadcast %c19_i32_239 : i32 to vector<1x256xi32>
    %1210 = arith.cmpi slt, %5, %1209 : vector<1x256xi32>
    %1211 = arith.andi %1208, %1210 : vector<1x256xi1>
    %c35_i32_240 = arith.constant 35 : i32
    %1212 = tpu.dynamic_rotate %1075 by %c35_i32_240 dim 1 : vector<2x256xf32>, i32 -> vector<2x256xf32>
    %1213 = vector.extract_strided_slice %1212 {offsets = [0, 0], sizes = [1, 256], strides = [1, 1]} : vector<2x256xf32> to vector<1x256xf32>
    %1214 = vector.broadcast %13 : f32 to vector<1x256xf32>
    %1215 = arith.mulf %1214, %1213 : vector<1x256xf32>
    %1216 = vector.extract_strided_slice %1212 {offsets = [1, 0], sizes = [1, 256], strides = [1, 1]} : vector<2x256xf32> to vector<1x256xf32>
    %1217 = vector.broadcast %62 : f32 to vector<1x256xf32>
    %1218 = arith.mulf %1217, %1216 : vector<1x256xf32>
    %1219 = arith.addf %1215, %1218 : vector<1x256xf32>
    %cst_241 = arith.constant 0.000000e+00 : f32
    %1220 = vector.broadcast %cst_241 : f32 to vector<1x256xf32>
    %1221 = arith.select %1211, %1219, %1220 : vector<1x256xi1>, vector<1x256xf32>
    %1222 = arith.addf %1200, %1221 : vector<1x256xf32>
    %c2_i32_242 = arith.constant 2 : i32
    %1223 = vector.broadcast %c2_i32_242 : i32 to vector<1x256xi32>
    %1224 = arith.cmpi sge, %5, %1223 : vector<1x256xi32>
    %1225 = arith.andi %1205, %1224 : vector<1x256xi1>
    %c18_i32_243 = arith.constant 18 : i32
    %1226 = vector.broadcast %c18_i32_243 : i32 to vector<1x256xi32>
    %1227 = arith.cmpi slt, %5, %1226 : vector<1x256xi32>
    %1228 = arith.andi %1225, %1227 : vector<1x256xi1>
    %c34_i32_244 = arith.constant 34 : i32
    %1229 = tpu.dynamic_rotate %1075 by %c34_i32_244 dim 1 : vector<2x256xf32>, i32 -> vector<2x256xf32>
    %1230 = vector.extract_strided_slice %1229 {offsets = [0, 0], sizes = [1, 256], strides = [1, 1]} : vector<2x256xf32> to vector<1x256xf32>
    %1231 = vector.broadcast %14 : f32 to vector<1x256xf32>
    %1232 = arith.mulf %1231, %1230 : vector<1x256xf32>
    %1233 = vector.extract_strided_slice %1229 {offsets = [1, 0], sizes = [1, 256], strides = [1, 1]} : vector<2x256xf32> to vector<1x256xf32>
    %1234 = vector.broadcast %63 : f32 to vector<1x256xf32>
    %1235 = arith.mulf %1234, %1233 : vector<1x256xf32>
    %1236 = arith.addf %1232, %1235 : vector<1x256xf32>
    %cst_245 = arith.constant 0.000000e+00 : f32
    %1237 = vector.broadcast %cst_245 : f32 to vector<1x256xf32>
    %1238 = arith.select %1228, %1236, %1237 : vector<1x256xi1>, vector<1x256xf32>
    %1239 = arith.addf %1222, %1238 : vector<1x256xf32>
    %c1_i32_246 = arith.constant 1 : i32
    %1240 = vector.broadcast %c1_i32_246 : i32 to vector<1x256xi32>
    %1241 = arith.cmpi sge, %5, %1240 : vector<1x256xi32>
    %1242 = arith.andi %1205, %1241 : vector<1x256xi1>
    %c17_i32_247 = arith.constant 17 : i32
    %1243 = vector.broadcast %c17_i32_247 : i32 to vector<1x256xi32>
    %1244 = arith.cmpi slt, %5, %1243 : vector<1x256xi32>
    %1245 = arith.andi %1242, %1244 : vector<1x256xi1>
    %c33_i32_248 = arith.constant 33 : i32
    %1246 = tpu.dynamic_rotate %1075 by %c33_i32_248 dim 1 : vector<2x256xf32>, i32 -> vector<2x256xf32>
    %1247 = vector.extract_strided_slice %1246 {offsets = [0, 0], sizes = [1, 256], strides = [1, 1]} : vector<2x256xf32> to vector<1x256xf32>
    %1248 = vector.broadcast %15 : f32 to vector<1x256xf32>
    %1249 = arith.mulf %1248, %1247 : vector<1x256xf32>
    %1250 = vector.extract_strided_slice %1246 {offsets = [1, 0], sizes = [1, 256], strides = [1, 1]} : vector<2x256xf32> to vector<1x256xf32>
    %1251 = vector.broadcast %64 : f32 to vector<1x256xf32>
    %1252 = arith.mulf %1251, %1250 : vector<1x256xf32>
    %1253 = arith.addf %1249, %1252 : vector<1x256xf32>
    %cst_249 = arith.constant 0.000000e+00 : f32
    %1254 = vector.broadcast %cst_249 : f32 to vector<1x256xf32>
    %1255 = arith.select %1245, %1253, %1254 : vector<1x256xi1>, vector<1x256xf32>
    %1256 = arith.addf %1239, %1255 : vector<1x256xf32>
    %c0_i32_250 = arith.constant 0 : i32
    %1257 = vector.broadcast %c0_i32_250 : i32 to vector<1x256xi32>
    %1258 = arith.cmpi sge, %5, %1257 : vector<1x256xi32>
    %1259 = arith.andi %1205, %1258 : vector<1x256xi1>
    %c16_i32_251 = arith.constant 16 : i32
    %1260 = vector.broadcast %c16_i32_251 : i32 to vector<1x256xi32>
    %1261 = arith.cmpi slt, %5, %1260 : vector<1x256xi32>
    %1262 = arith.andi %1259, %1261 : vector<1x256xi1>
    %c32_i32_252 = arith.constant 32 : i32
    %1263 = tpu.dynamic_rotate %1075 by %c32_i32_252 dim 1 : vector<2x256xf32>, i32 -> vector<2x256xf32>
    %1264 = vector.extract_strided_slice %1263 {offsets = [0, 0], sizes = [1, 256], strides = [1, 1]} : vector<2x256xf32> to vector<1x256xf32>
    %1265 = vector.broadcast %16 : f32 to vector<1x256xf32>
    %1266 = arith.mulf %1265, %1264 : vector<1x256xf32>
    %1267 = vector.extract_strided_slice %1263 {offsets = [1, 0], sizes = [1, 256], strides = [1, 1]} : vector<2x256xf32> to vector<1x256xf32>
    %1268 = vector.broadcast %65 : f32 to vector<1x256xf32>
    %1269 = arith.mulf %1268, %1267 : vector<1x256xf32>
    %1270 = arith.addf %1266, %1269 : vector<1x256xf32>
    %cst_253 = arith.constant 0.000000e+00 : f32
    %1271 = vector.broadcast %cst_253 : f32 to vector<1x256xf32>
    %1272 = arith.select %1262, %1270, %1271 : vector<1x256xi1>, vector<1x256xf32>
    %1273 = arith.addf %1256, %1272 : vector<1x256xf32>
    %c-1_i32_254 = arith.constant -1 : i32
    %1274 = vector.broadcast %c-1_i32_254 : i32 to vector<1x256xi32>
    %1275 = arith.cmpi sge, %5, %1274 : vector<1x256xi32>
    %1276 = arith.andi %1205, %1275 : vector<1x256xi1>
    %c15_i32_255 = arith.constant 15 : i32
    %1277 = vector.broadcast %c15_i32_255 : i32 to vector<1x256xi32>
    %1278 = arith.cmpi slt, %5, %1277 : vector<1x256xi32>
    %1279 = arith.andi %1276, %1278 : vector<1x256xi1>
    %c31_i32_256 = arith.constant 31 : i32
    %1280 = tpu.dynamic_rotate %1075 by %c31_i32_256 dim 1 : vector<2x256xf32>, i32 -> vector<2x256xf32>
    %1281 = vector.extract_strided_slice %1280 {offsets = [0, 0], sizes = [1, 256], strides = [1, 1]} : vector<2x256xf32> to vector<1x256xf32>
    %1282 = vector.broadcast %17 : f32 to vector<1x256xf32>
    %1283 = arith.mulf %1282, %1281 : vector<1x256xf32>
    %1284 = vector.extract_strided_slice %1280 {offsets = [1, 0], sizes = [1, 256], strides = [1, 1]} : vector<2x256xf32> to vector<1x256xf32>
    %1285 = vector.broadcast %66 : f32 to vector<1x256xf32>
    %1286 = arith.mulf %1285, %1284 : vector<1x256xf32>
    %1287 = arith.addf %1283, %1286 : vector<1x256xf32>
    %cst_257 = arith.constant 0.000000e+00 : f32
    %1288 = vector.broadcast %cst_257 : f32 to vector<1x256xf32>
    %1289 = arith.select %1279, %1287, %1288 : vector<1x256xi1>, vector<1x256xf32>
    %1290 = arith.addf %1273, %1289 : vector<1x256xf32>
    %c-2_i32_258 = arith.constant -2 : i32
    %1291 = vector.broadcast %c-2_i32_258 : i32 to vector<1x256xi32>
    %1292 = arith.cmpi sge, %5, %1291 : vector<1x256xi32>
    %1293 = arith.andi %1205, %1292 : vector<1x256xi1>
    %c14_i32_259 = arith.constant 14 : i32
    %1294 = vector.broadcast %c14_i32_259 : i32 to vector<1x256xi32>
    %1295 = arith.cmpi slt, %5, %1294 : vector<1x256xi32>
    %1296 = arith.andi %1293, %1295 : vector<1x256xi1>
    %c30_i32_260 = arith.constant 30 : i32
    %1297 = tpu.dynamic_rotate %1075 by %c30_i32_260 dim 1 : vector<2x256xf32>, i32 -> vector<2x256xf32>
    %1298 = vector.extract_strided_slice %1297 {offsets = [0, 0], sizes = [1, 256], strides = [1, 1]} : vector<2x256xf32> to vector<1x256xf32>
    %1299 = vector.broadcast %18 : f32 to vector<1x256xf32>
    %1300 = arith.mulf %1299, %1298 : vector<1x256xf32>
    %1301 = vector.extract_strided_slice %1297 {offsets = [1, 0], sizes = [1, 256], strides = [1, 1]} : vector<2x256xf32> to vector<1x256xf32>
    %1302 = vector.broadcast %67 : f32 to vector<1x256xf32>
    %1303 = arith.mulf %1302, %1301 : vector<1x256xf32>
    %1304 = arith.addf %1300, %1303 : vector<1x256xf32>
    %cst_261 = arith.constant 0.000000e+00 : f32
    %1305 = vector.broadcast %cst_261 : f32 to vector<1x256xf32>
    %1306 = arith.select %1296, %1304, %1305 : vector<1x256xi1>, vector<1x256xf32>
    %1307 = arith.addf %1290, %1306 : vector<1x256xf32>
    %c-3_i32_262 = arith.constant -3 : i32
    %1308 = vector.broadcast %c-3_i32_262 : i32 to vector<1x256xi32>
    %1309 = arith.cmpi sge, %5, %1308 : vector<1x256xi32>
    %1310 = arith.andi %1205, %1309 : vector<1x256xi1>
    %c13_i32_263 = arith.constant 13 : i32
    %1311 = vector.broadcast %c13_i32_263 : i32 to vector<1x256xi32>
    %1312 = arith.cmpi slt, %5, %1311 : vector<1x256xi32>
    %1313 = arith.andi %1310, %1312 : vector<1x256xi1>
    %c29_i32_264 = arith.constant 29 : i32
    %1314 = tpu.dynamic_rotate %1075 by %c29_i32_264 dim 1 : vector<2x256xf32>, i32 -> vector<2x256xf32>
    %1315 = vector.extract_strided_slice %1314 {offsets = [0, 0], sizes = [1, 256], strides = [1, 1]} : vector<2x256xf32> to vector<1x256xf32>
    %1316 = vector.broadcast %19 : f32 to vector<1x256xf32>
    %1317 = arith.mulf %1316, %1315 : vector<1x256xf32>
    %1318 = vector.extract_strided_slice %1314 {offsets = [1, 0], sizes = [1, 256], strides = [1, 1]} : vector<2x256xf32> to vector<1x256xf32>
    %1319 = vector.broadcast %68 : f32 to vector<1x256xf32>
    %1320 = arith.mulf %1319, %1318 : vector<1x256xf32>
    %1321 = arith.addf %1317, %1320 : vector<1x256xf32>
    %cst_265 = arith.constant 0.000000e+00 : f32
    %1322 = vector.broadcast %cst_265 : f32 to vector<1x256xf32>
    %1323 = arith.select %1313, %1321, %1322 : vector<1x256xi1>, vector<1x256xf32>
    %1324 = arith.addf %1307, %1323 : vector<1x256xf32>
    %c1_i32_266 = arith.constant 1 : i32
    %1325 = vector.broadcast %c1_i32_266 : i32 to vector<1x256xi32>
    %1326 = arith.cmpi sge, %4, %1325 : vector<1x256xi32>
    %c17_i32_267 = arith.constant 17 : i32
    %1327 = vector.broadcast %c17_i32_267 : i32 to vector<1x256xi32>
    %1328 = arith.cmpi slt, %4, %1327 : vector<1x256xi32>
    %1329 = arith.andi %1326, %1328 : vector<1x256xi1>
    %c3_i32_268 = arith.constant 3 : i32
    %1330 = vector.broadcast %c3_i32_268 : i32 to vector<1x256xi32>
    %1331 = arith.cmpi sge, %5, %1330 : vector<1x256xi32>
    %1332 = arith.andi %1329, %1331 : vector<1x256xi1>
    %c19_i32_269 = arith.constant 19 : i32
    %1333 = vector.broadcast %c19_i32_269 : i32 to vector<1x256xi32>
    %1334 = arith.cmpi slt, %5, %1333 : vector<1x256xi32>
    %1335 = arith.andi %1332, %1334 : vector<1x256xi1>
    %c19_i32_270 = arith.constant 19 : i32
    %1336 = tpu.dynamic_rotate %1075 by %c19_i32_270 dim 1 : vector<2x256xf32>, i32 -> vector<2x256xf32>
    %1337 = vector.extract_strided_slice %1336 {offsets = [0, 0], sizes = [1, 256], strides = [1, 1]} : vector<2x256xf32> to vector<1x256xf32>
    %1338 = vector.broadcast %20 : f32 to vector<1x256xf32>
    %1339 = arith.mulf %1338, %1337 : vector<1x256xf32>
    %1340 = vector.extract_strided_slice %1336 {offsets = [1, 0], sizes = [1, 256], strides = [1, 1]} : vector<2x256xf32> to vector<1x256xf32>
    %1341 = vector.broadcast %69 : f32 to vector<1x256xf32>
    %1342 = arith.mulf %1341, %1340 : vector<1x256xf32>
    %1343 = arith.addf %1339, %1342 : vector<1x256xf32>
    %cst_271 = arith.constant 0.000000e+00 : f32
    %1344 = vector.broadcast %cst_271 : f32 to vector<1x256xf32>
    %1345 = arith.select %1335, %1343, %1344 : vector<1x256xi1>, vector<1x256xf32>
    %1346 = arith.addf %1324, %1345 : vector<1x256xf32>
    %c2_i32_272 = arith.constant 2 : i32
    %1347 = vector.broadcast %c2_i32_272 : i32 to vector<1x256xi32>
    %1348 = arith.cmpi sge, %5, %1347 : vector<1x256xi32>
    %1349 = arith.andi %1329, %1348 : vector<1x256xi1>
    %c18_i32_273 = arith.constant 18 : i32
    %1350 = vector.broadcast %c18_i32_273 : i32 to vector<1x256xi32>
    %1351 = arith.cmpi slt, %5, %1350 : vector<1x256xi32>
    %1352 = arith.andi %1349, %1351 : vector<1x256xi1>
    %c18_i32_274 = arith.constant 18 : i32
    %1353 = tpu.dynamic_rotate %1075 by %c18_i32_274 dim 1 : vector<2x256xf32>, i32 -> vector<2x256xf32>
    %1354 = vector.extract_strided_slice %1353 {offsets = [0, 0], sizes = [1, 256], strides = [1, 1]} : vector<2x256xf32> to vector<1x256xf32>
    %1355 = vector.broadcast %21 : f32 to vector<1x256xf32>
    %1356 = arith.mulf %1355, %1354 : vector<1x256xf32>
    %1357 = vector.extract_strided_slice %1353 {offsets = [1, 0], sizes = [1, 256], strides = [1, 1]} : vector<2x256xf32> to vector<1x256xf32>
    %1358 = vector.broadcast %70 : f32 to vector<1x256xf32>
    %1359 = arith.mulf %1358, %1357 : vector<1x256xf32>
    %1360 = arith.addf %1356, %1359 : vector<1x256xf32>
    %cst_275 = arith.constant 0.000000e+00 : f32
    %1361 = vector.broadcast %cst_275 : f32 to vector<1x256xf32>
    %1362 = arith.select %1352, %1360, %1361 : vector<1x256xi1>, vector<1x256xf32>
    %1363 = arith.addf %1346, %1362 : vector<1x256xf32>
    %c1_i32_276 = arith.constant 1 : i32
    %1364 = vector.broadcast %c1_i32_276 : i32 to vector<1x256xi32>
    %1365 = arith.cmpi sge, %5, %1364 : vector<1x256xi32>
    %1366 = arith.andi %1329, %1365 : vector<1x256xi1>
    %c17_i32_277 = arith.constant 17 : i32
    %1367 = vector.broadcast %c17_i32_277 : i32 to vector<1x256xi32>
    %1368 = arith.cmpi slt, %5, %1367 : vector<1x256xi32>
    %1369 = arith.andi %1366, %1368 : vector<1x256xi1>
    %c17_i32_278 = arith.constant 17 : i32
    %1370 = tpu.dynamic_rotate %1075 by %c17_i32_278 dim 1 : vector<2x256xf32>, i32 -> vector<2x256xf32>
    %1371 = vector.extract_strided_slice %1370 {offsets = [0, 0], sizes = [1, 256], strides = [1, 1]} : vector<2x256xf32> to vector<1x256xf32>
    %1372 = vector.broadcast %22 : f32 to vector<1x256xf32>
    %1373 = arith.mulf %1372, %1371 : vector<1x256xf32>
    %1374 = vector.extract_strided_slice %1370 {offsets = [1, 0], sizes = [1, 256], strides = [1, 1]} : vector<2x256xf32> to vector<1x256xf32>
    %1375 = vector.broadcast %71 : f32 to vector<1x256xf32>
    %1376 = arith.mulf %1375, %1374 : vector<1x256xf32>
    %1377 = arith.addf %1373, %1376 : vector<1x256xf32>
    %cst_279 = arith.constant 0.000000e+00 : f32
    %1378 = vector.broadcast %cst_279 : f32 to vector<1x256xf32>
    %1379 = arith.select %1369, %1377, %1378 : vector<1x256xi1>, vector<1x256xf32>
    %1380 = arith.addf %1363, %1379 : vector<1x256xf32>
    %c0_i32_280 = arith.constant 0 : i32
    %1381 = vector.broadcast %c0_i32_280 : i32 to vector<1x256xi32>
    %1382 = arith.cmpi sge, %5, %1381 : vector<1x256xi32>
    %1383 = arith.andi %1329, %1382 : vector<1x256xi1>
    %c16_i32_281 = arith.constant 16 : i32
    %1384 = vector.broadcast %c16_i32_281 : i32 to vector<1x256xi32>
    %1385 = arith.cmpi slt, %5, %1384 : vector<1x256xi32>
    %1386 = arith.andi %1383, %1385 : vector<1x256xi1>
    %c16_i32_282 = arith.constant 16 : i32
    %1387 = tpu.dynamic_rotate %1075 by %c16_i32_282 dim 1 : vector<2x256xf32>, i32 -> vector<2x256xf32>
    %1388 = vector.extract_strided_slice %1387 {offsets = [0, 0], sizes = [1, 256], strides = [1, 1]} : vector<2x256xf32> to vector<1x256xf32>
    %1389 = vector.broadcast %23 : f32 to vector<1x256xf32>
    %1390 = arith.mulf %1389, %1388 : vector<1x256xf32>
    %1391 = vector.extract_strided_slice %1387 {offsets = [1, 0], sizes = [1, 256], strides = [1, 1]} : vector<2x256xf32> to vector<1x256xf32>
    %1392 = vector.broadcast %72 : f32 to vector<1x256xf32>
    %1393 = arith.mulf %1392, %1391 : vector<1x256xf32>
    %1394 = arith.addf %1390, %1393 : vector<1x256xf32>
    %cst_283 = arith.constant 0.000000e+00 : f32
    %1395 = vector.broadcast %cst_283 : f32 to vector<1x256xf32>
    %1396 = arith.select %1386, %1394, %1395 : vector<1x256xi1>, vector<1x256xf32>
    %1397 = arith.addf %1380, %1396 : vector<1x256xf32>
    %c-1_i32_284 = arith.constant -1 : i32
    %1398 = vector.broadcast %c-1_i32_284 : i32 to vector<1x256xi32>
    %1399 = arith.cmpi sge, %5, %1398 : vector<1x256xi32>
    %1400 = arith.andi %1329, %1399 : vector<1x256xi1>
    %c15_i32_285 = arith.constant 15 : i32
    %1401 = vector.broadcast %c15_i32_285 : i32 to vector<1x256xi32>
    %1402 = arith.cmpi slt, %5, %1401 : vector<1x256xi32>
    %1403 = arith.andi %1400, %1402 : vector<1x256xi1>
    %c15_i32_286 = arith.constant 15 : i32
    %1404 = tpu.dynamic_rotate %1075 by %c15_i32_286 dim 1 : vector<2x256xf32>, i32 -> vector<2x256xf32>
    %1405 = vector.extract_strided_slice %1404 {offsets = [0, 0], sizes = [1, 256], strides = [1, 1]} : vector<2x256xf32> to vector<1x256xf32>
    %1406 = vector.broadcast %24 : f32 to vector<1x256xf32>
    %1407 = arith.mulf %1406, %1405 : vector<1x256xf32>
    %1408 = vector.extract_strided_slice %1404 {offsets = [1, 0], sizes = [1, 256], strides = [1, 1]} : vector<2x256xf32> to vector<1x256xf32>
    %1409 = vector.broadcast %73 : f32 to vector<1x256xf32>
    %1410 = arith.mulf %1409, %1408 : vector<1x256xf32>
    %1411 = arith.addf %1407, %1410 : vector<1x256xf32>
    %cst_287 = arith.constant 0.000000e+00 : f32
    %1412 = vector.broadcast %cst_287 : f32 to vector<1x256xf32>
    %1413 = arith.select %1403, %1411, %1412 : vector<1x256xi1>, vector<1x256xf32>
    %1414 = arith.addf %1397, %1413 : vector<1x256xf32>
    %c-2_i32_288 = arith.constant -2 : i32
    %1415 = vector.broadcast %c-2_i32_288 : i32 to vector<1x256xi32>
    %1416 = arith.cmpi sge, %5, %1415 : vector<1x256xi32>
    %1417 = arith.andi %1329, %1416 : vector<1x256xi1>
    %c14_i32_289 = arith.constant 14 : i32
    %1418 = vector.broadcast %c14_i32_289 : i32 to vector<1x256xi32>
    %1419 = arith.cmpi slt, %5, %1418 : vector<1x256xi32>
    %1420 = arith.andi %1417, %1419 : vector<1x256xi1>
    %c14_i32_290 = arith.constant 14 : i32
    %1421 = tpu.dynamic_rotate %1075 by %c14_i32_290 dim 1 : vector<2x256xf32>, i32 -> vector<2x256xf32>
    %1422 = vector.extract_strided_slice %1421 {offsets = [0, 0], sizes = [1, 256], strides = [1, 1]} : vector<2x256xf32> to vector<1x256xf32>
    %1423 = vector.broadcast %25 : f32 to vector<1x256xf32>
    %1424 = arith.mulf %1423, %1422 : vector<1x256xf32>
    %1425 = vector.extract_strided_slice %1421 {offsets = [1, 0], sizes = [1, 256], strides = [1, 1]} : vector<2x256xf32> to vector<1x256xf32>
    %1426 = vector.broadcast %74 : f32 to vector<1x256xf32>
    %1427 = arith.mulf %1426, %1425 : vector<1x256xf32>
    %1428 = arith.addf %1424, %1427 : vector<1x256xf32>
    %cst_291 = arith.constant 0.000000e+00 : f32
    %1429 = vector.broadcast %cst_291 : f32 to vector<1x256xf32>
    %1430 = arith.select %1420, %1428, %1429 : vector<1x256xi1>, vector<1x256xf32>
    %1431 = arith.addf %1414, %1430 : vector<1x256xf32>
    %c-3_i32_292 = arith.constant -3 : i32
    %1432 = vector.broadcast %c-3_i32_292 : i32 to vector<1x256xi32>
    %1433 = arith.cmpi sge, %5, %1432 : vector<1x256xi32>
    %1434 = arith.andi %1329, %1433 : vector<1x256xi1>
    %c13_i32_293 = arith.constant 13 : i32
    %1435 = vector.broadcast %c13_i32_293 : i32 to vector<1x256xi32>
    %1436 = arith.cmpi slt, %5, %1435 : vector<1x256xi32>
    %1437 = arith.andi %1434, %1436 : vector<1x256xi1>
    %c13_i32_294 = arith.constant 13 : i32
    %1438 = tpu.dynamic_rotate %1075 by %c13_i32_294 dim 1 : vector<2x256xf32>, i32 -> vector<2x256xf32>
    %1439 = vector.extract_strided_slice %1438 {offsets = [0, 0], sizes = [1, 256], strides = [1, 1]} : vector<2x256xf32> to vector<1x256xf32>
    %1440 = vector.broadcast %26 : f32 to vector<1x256xf32>
    %1441 = arith.mulf %1440, %1439 : vector<1x256xf32>
    %1442 = vector.extract_strided_slice %1438 {offsets = [1, 0], sizes = [1, 256], strides = [1, 1]} : vector<2x256xf32> to vector<1x256xf32>
    %1443 = vector.broadcast %75 : f32 to vector<1x256xf32>
    %1444 = arith.mulf %1443, %1442 : vector<1x256xf32>
    %1445 = arith.addf %1441, %1444 : vector<1x256xf32>
    %cst_295 = arith.constant 0.000000e+00 : f32
    %1446 = vector.broadcast %cst_295 : f32 to vector<1x256xf32>
    %1447 = arith.select %1437, %1445, %1446 : vector<1x256xi1>, vector<1x256xf32>
    %1448 = arith.addf %1431, %1447 : vector<1x256xf32>
    %c0_i32_296 = arith.constant 0 : i32
    %1449 = vector.broadcast %c0_i32_296 : i32 to vector<1x256xi32>
    %1450 = arith.cmpi sge, %4, %1449 : vector<1x256xi32>
    %c16_i32_297 = arith.constant 16 : i32
    %1451 = vector.broadcast %c16_i32_297 : i32 to vector<1x256xi32>
    %1452 = arith.cmpi slt, %4, %1451 : vector<1x256xi32>
    %1453 = arith.andi %1450, %1452 : vector<1x256xi1>
    %c3_i32_298 = arith.constant 3 : i32
    %1454 = vector.broadcast %c3_i32_298 : i32 to vector<1x256xi32>
    %1455 = arith.cmpi sge, %5, %1454 : vector<1x256xi32>
    %1456 = arith.andi %1453, %1455 : vector<1x256xi1>
    %c19_i32_299 = arith.constant 19 : i32
    %1457 = vector.broadcast %c19_i32_299 : i32 to vector<1x256xi32>
    %1458 = arith.cmpi slt, %5, %1457 : vector<1x256xi32>
    %1459 = arith.andi %1456, %1458 : vector<1x256xi1>
    %c3_i32_300 = arith.constant 3 : i32
    %1460 = tpu.dynamic_rotate %1075 by %c3_i32_300 dim 1 : vector<2x256xf32>, i32 -> vector<2x256xf32>
    %1461 = vector.extract_strided_slice %1460 {offsets = [0, 0], sizes = [1, 256], strides = [1, 1]} : vector<2x256xf32> to vector<1x256xf32>
    %1462 = vector.broadcast %27 : f32 to vector<1x256xf32>
    %1463 = arith.mulf %1462, %1461 : vector<1x256xf32>
    %1464 = vector.extract_strided_slice %1460 {offsets = [1, 0], sizes = [1, 256], strides = [1, 1]} : vector<2x256xf32> to vector<1x256xf32>
    %1465 = vector.broadcast %76 : f32 to vector<1x256xf32>
    %1466 = arith.mulf %1465, %1464 : vector<1x256xf32>
    %1467 = arith.addf %1463, %1466 : vector<1x256xf32>
    %cst_301 = arith.constant 0.000000e+00 : f32
    %1468 = vector.broadcast %cst_301 : f32 to vector<1x256xf32>
    %1469 = arith.select %1459, %1467, %1468 : vector<1x256xi1>, vector<1x256xf32>
    %1470 = arith.addf %1448, %1469 : vector<1x256xf32>
    %c2_i32_302 = arith.constant 2 : i32
    %1471 = vector.broadcast %c2_i32_302 : i32 to vector<1x256xi32>
    %1472 = arith.cmpi sge, %5, %1471 : vector<1x256xi32>
    %1473 = arith.andi %1453, %1472 : vector<1x256xi1>
    %c18_i32_303 = arith.constant 18 : i32
    %1474 = vector.broadcast %c18_i32_303 : i32 to vector<1x256xi32>
    %1475 = arith.cmpi slt, %5, %1474 : vector<1x256xi32>
    %1476 = arith.andi %1473, %1475 : vector<1x256xi1>
    %c2_i32_304 = arith.constant 2 : i32
    %1477 = tpu.dynamic_rotate %1075 by %c2_i32_304 dim 1 : vector<2x256xf32>, i32 -> vector<2x256xf32>
    %1478 = vector.extract_strided_slice %1477 {offsets = [0, 0], sizes = [1, 256], strides = [1, 1]} : vector<2x256xf32> to vector<1x256xf32>
    %1479 = vector.broadcast %28 : f32 to vector<1x256xf32>
    %1480 = arith.mulf %1479, %1478 : vector<1x256xf32>
    %1481 = vector.extract_strided_slice %1477 {offsets = [1, 0], sizes = [1, 256], strides = [1, 1]} : vector<2x256xf32> to vector<1x256xf32>
    %1482 = vector.broadcast %77 : f32 to vector<1x256xf32>
    %1483 = arith.mulf %1482, %1481 : vector<1x256xf32>
    %1484 = arith.addf %1480, %1483 : vector<1x256xf32>
    %cst_305 = arith.constant 0.000000e+00 : f32
    %1485 = vector.broadcast %cst_305 : f32 to vector<1x256xf32>
    %1486 = arith.select %1476, %1484, %1485 : vector<1x256xi1>, vector<1x256xf32>
    %1487 = arith.addf %1470, %1486 : vector<1x256xf32>
    %c1_i32_306 = arith.constant 1 : i32
    %1488 = vector.broadcast %c1_i32_306 : i32 to vector<1x256xi32>
    %1489 = arith.cmpi sge, %5, %1488 : vector<1x256xi32>
    %1490 = arith.andi %1453, %1489 : vector<1x256xi1>
    %c17_i32_307 = arith.constant 17 : i32
    %1491 = vector.broadcast %c17_i32_307 : i32 to vector<1x256xi32>
    %1492 = arith.cmpi slt, %5, %1491 : vector<1x256xi32>
    %1493 = arith.andi %1490, %1492 : vector<1x256xi1>
    %c1_i32_308 = arith.constant 1 : i32
    %1494 = tpu.dynamic_rotate %1075 by %c1_i32_308 dim 1 : vector<2x256xf32>, i32 -> vector<2x256xf32>
    %1495 = vector.extract_strided_slice %1494 {offsets = [0, 0], sizes = [1, 256], strides = [1, 1]} : vector<2x256xf32> to vector<1x256xf32>
    %1496 = vector.broadcast %29 : f32 to vector<1x256xf32>
    %1497 = arith.mulf %1496, %1495 : vector<1x256xf32>
    %1498 = vector.extract_strided_slice %1494 {offsets = [1, 0], sizes = [1, 256], strides = [1, 1]} : vector<2x256xf32> to vector<1x256xf32>
    %1499 = vector.broadcast %78 : f32 to vector<1x256xf32>
    %1500 = arith.mulf %1499, %1498 : vector<1x256xf32>
    %1501 = arith.addf %1497, %1500 : vector<1x256xf32>
    %cst_309 = arith.constant 0.000000e+00 : f32
    %1502 = vector.broadcast %cst_309 : f32 to vector<1x256xf32>
    %1503 = arith.select %1493, %1501, %1502 : vector<1x256xi1>, vector<1x256xf32>
    %1504 = arith.addf %1487, %1503 : vector<1x256xf32>
    %c0_i32_310 = arith.constant 0 : i32
    %1505 = vector.broadcast %c0_i32_310 : i32 to vector<1x256xi32>
    %1506 = arith.cmpi sge, %5, %1505 : vector<1x256xi32>
    %1507 = arith.andi %1453, %1506 : vector<1x256xi1>
    %c16_i32_311 = arith.constant 16 : i32
    %1508 = vector.broadcast %c16_i32_311 : i32 to vector<1x256xi32>
    %1509 = arith.cmpi slt, %5, %1508 : vector<1x256xi32>
    %1510 = arith.andi %1507, %1509 : vector<1x256xi1>
    %1511 = vector.extract_strided_slice %1075 {offsets = [0, 0], sizes = [1, 256], strides = [1, 1]} : vector<2x256xf32> to vector<1x256xf32>
    %1512 = vector.broadcast %30 : f32 to vector<1x256xf32>
    %1513 = arith.mulf %1512, %1511 : vector<1x256xf32>
    %1514 = vector.extract_strided_slice %1075 {offsets = [1, 0], sizes = [1, 256], strides = [1, 1]} : vector<2x256xf32> to vector<1x256xf32>
    %1515 = vector.broadcast %79 : f32 to vector<1x256xf32>
    %1516 = arith.mulf %1515, %1514 : vector<1x256xf32>
    %1517 = arith.addf %1513, %1516 : vector<1x256xf32>
    %cst_312 = arith.constant 0.000000e+00 : f32
    %1518 = vector.broadcast %cst_312 : f32 to vector<1x256xf32>
    %1519 = arith.select %1510, %1517, %1518 : vector<1x256xi1>, vector<1x256xf32>
    %1520 = arith.addf %1504, %1519 : vector<1x256xf32>
    %c-1_i32_313 = arith.constant -1 : i32
    %1521 = vector.broadcast %c-1_i32_313 : i32 to vector<1x256xi32>
    %1522 = arith.cmpi sge, %5, %1521 : vector<1x256xi32>
    %1523 = arith.andi %1453, %1522 : vector<1x256xi1>
    %c15_i32_314 = arith.constant 15 : i32
    %1524 = vector.broadcast %c15_i32_314 : i32 to vector<1x256xi32>
    %1525 = arith.cmpi slt, %5, %1524 : vector<1x256xi32>
    %1526 = arith.andi %1523, %1525 : vector<1x256xi1>
    %c255_i32_315 = arith.constant 255 : i32
    %1527 = tpu.dynamic_rotate %1075 by %c255_i32_315 dim 1 : vector<2x256xf32>, i32 -> vector<2x256xf32>
    %1528 = vector.extract_strided_slice %1527 {offsets = [0, 0], sizes = [1, 256], strides = [1, 1]} : vector<2x256xf32> to vector<1x256xf32>
    %1529 = vector.broadcast %31 : f32 to vector<1x256xf32>
    %1530 = arith.mulf %1529, %1528 : vector<1x256xf32>
    %1531 = vector.extract_strided_slice %1527 {offsets = [1, 0], sizes = [1, 256], strides = [1, 1]} : vector<2x256xf32> to vector<1x256xf32>
    %1532 = vector.broadcast %80 : f32 to vector<1x256xf32>
    %1533 = arith.mulf %1532, %1531 : vector<1x256xf32>
    %1534 = arith.addf %1530, %1533 : vector<1x256xf32>
    %cst_316 = arith.constant 0.000000e+00 : f32
    %1535 = vector.broadcast %cst_316 : f32 to vector<1x256xf32>
    %1536 = arith.select %1526, %1534, %1535 : vector<1x256xi1>, vector<1x256xf32>
    %1537 = arith.addf %1520, %1536 : vector<1x256xf32>
    %c-2_i32_317 = arith.constant -2 : i32
    %1538 = vector.broadcast %c-2_i32_317 : i32 to vector<1x256xi32>
    %1539 = arith.cmpi sge, %5, %1538 : vector<1x256xi32>
    %1540 = arith.andi %1453, %1539 : vector<1x256xi1>
    %c14_i32_318 = arith.constant 14 : i32
    %1541 = vector.broadcast %c14_i32_318 : i32 to vector<1x256xi32>
    %1542 = arith.cmpi slt, %5, %1541 : vector<1x256xi32>
    %1543 = arith.andi %1540, %1542 : vector<1x256xi1>
    %c254_i32_319 = arith.constant 254 : i32
    %1544 = tpu.dynamic_rotate %1075 by %c254_i32_319 dim 1 : vector<2x256xf32>, i32 -> vector<2x256xf32>
    %1545 = vector.extract_strided_slice %1544 {offsets = [0, 0], sizes = [1, 256], strides = [1, 1]} : vector<2x256xf32> to vector<1x256xf32>
    %1546 = vector.broadcast %32 : f32 to vector<1x256xf32>
    %1547 = arith.mulf %1546, %1545 : vector<1x256xf32>
    %1548 = vector.extract_strided_slice %1544 {offsets = [1, 0], sizes = [1, 256], strides = [1, 1]} : vector<2x256xf32> to vector<1x256xf32>
    %1549 = vector.broadcast %81 : f32 to vector<1x256xf32>
    %1550 = arith.mulf %1549, %1548 : vector<1x256xf32>
    %1551 = arith.addf %1547, %1550 : vector<1x256xf32>
    %cst_320 = arith.constant 0.000000e+00 : f32
    %1552 = vector.broadcast %cst_320 : f32 to vector<1x256xf32>
    %1553 = arith.select %1543, %1551, %1552 : vector<1x256xi1>, vector<1x256xf32>
    %1554 = arith.addf %1537, %1553 : vector<1x256xf32>
    %c-3_i32_321 = arith.constant -3 : i32
    %1555 = vector.broadcast %c-3_i32_321 : i32 to vector<1x256xi32>
    %1556 = arith.cmpi sge, %5, %1555 : vector<1x256xi32>
    %1557 = arith.andi %1453, %1556 : vector<1x256xi1>
    %c13_i32_322 = arith.constant 13 : i32
    %1558 = vector.broadcast %c13_i32_322 : i32 to vector<1x256xi32>
    %1559 = arith.cmpi slt, %5, %1558 : vector<1x256xi32>
    %1560 = arith.andi %1557, %1559 : vector<1x256xi1>
    %c253_i32_323 = arith.constant 253 : i32
    %1561 = tpu.dynamic_rotate %1075 by %c253_i32_323 dim 1 : vector<2x256xf32>, i32 -> vector<2x256xf32>
    %1562 = vector.extract_strided_slice %1561 {offsets = [0, 0], sizes = [1, 256], strides = [1, 1]} : vector<2x256xf32> to vector<1x256xf32>
    %1563 = vector.broadcast %33 : f32 to vector<1x256xf32>
    %1564 = arith.mulf %1563, %1562 : vector<1x256xf32>
    %1565 = vector.extract_strided_slice %1561 {offsets = [1, 0], sizes = [1, 256], strides = [1, 1]} : vector<2x256xf32> to vector<1x256xf32>
    %1566 = vector.broadcast %82 : f32 to vector<1x256xf32>
    %1567 = arith.mulf %1566, %1565 : vector<1x256xf32>
    %1568 = arith.addf %1564, %1567 : vector<1x256xf32>
    %cst_324 = arith.constant 0.000000e+00 : f32
    %1569 = vector.broadcast %cst_324 : f32 to vector<1x256xf32>
    %1570 = arith.select %1560, %1568, %1569 : vector<1x256xi1>, vector<1x256xf32>
    %1571 = arith.addf %1554, %1570 : vector<1x256xf32>
    %c-1_i32_325 = arith.constant -1 : i32
    %1572 = vector.broadcast %c-1_i32_325 : i32 to vector<1x256xi32>
    %1573 = arith.cmpi sge, %4, %1572 : vector<1x256xi32>
    %c15_i32_326 = arith.constant 15 : i32
    %1574 = vector.broadcast %c15_i32_326 : i32 to vector<1x256xi32>
    %1575 = arith.cmpi slt, %4, %1574 : vector<1x256xi32>
    %1576 = arith.andi %1573, %1575 : vector<1x256xi1>
    %c3_i32_327 = arith.constant 3 : i32
    %1577 = vector.broadcast %c3_i32_327 : i32 to vector<1x256xi32>
    %1578 = arith.cmpi sge, %5, %1577 : vector<1x256xi32>
    %1579 = arith.andi %1576, %1578 : vector<1x256xi1>
    %c19_i32_328 = arith.constant 19 : i32
    %1580 = vector.broadcast %c19_i32_328 : i32 to vector<1x256xi32>
    %1581 = arith.cmpi slt, %5, %1580 : vector<1x256xi32>
    %1582 = arith.andi %1579, %1581 : vector<1x256xi1>
    %c243_i32_329 = arith.constant 243 : i32
    %1583 = tpu.dynamic_rotate %1075 by %c243_i32_329 dim 1 : vector<2x256xf32>, i32 -> vector<2x256xf32>
    %1584 = vector.extract_strided_slice %1583 {offsets = [0, 0], sizes = [1, 256], strides = [1, 1]} : vector<2x256xf32> to vector<1x256xf32>
    %1585 = vector.broadcast %34 : f32 to vector<1x256xf32>
    %1586 = arith.mulf %1585, %1584 : vector<1x256xf32>
    %1587 = vector.extract_strided_slice %1583 {offsets = [1, 0], sizes = [1, 256], strides = [1, 1]} : vector<2x256xf32> to vector<1x256xf32>
    %1588 = vector.broadcast %83 : f32 to vector<1x256xf32>
    %1589 = arith.mulf %1588, %1587 : vector<1x256xf32>
    %1590 = arith.addf %1586, %1589 : vector<1x256xf32>
    %cst_330 = arith.constant 0.000000e+00 : f32
    %1591 = vector.broadcast %cst_330 : f32 to vector<1x256xf32>
    %1592 = arith.select %1582, %1590, %1591 : vector<1x256xi1>, vector<1x256xf32>
    %1593 = arith.addf %1571, %1592 : vector<1x256xf32>
    %c2_i32_331 = arith.constant 2 : i32
    %1594 = vector.broadcast %c2_i32_331 : i32 to vector<1x256xi32>
    %1595 = arith.cmpi sge, %5, %1594 : vector<1x256xi32>
    %1596 = arith.andi %1576, %1595 : vector<1x256xi1>
    %c18_i32_332 = arith.constant 18 : i32
    %1597 = vector.broadcast %c18_i32_332 : i32 to vector<1x256xi32>
    %1598 = arith.cmpi slt, %5, %1597 : vector<1x256xi32>
    %1599 = arith.andi %1596, %1598 : vector<1x256xi1>
    %c242_i32_333 = arith.constant 242 : i32
    %1600 = tpu.dynamic_rotate %1075 by %c242_i32_333 dim 1 : vector<2x256xf32>, i32 -> vector<2x256xf32>
    %1601 = vector.extract_strided_slice %1600 {offsets = [0, 0], sizes = [1, 256], strides = [1, 1]} : vector<2x256xf32> to vector<1x256xf32>
    %1602 = vector.broadcast %35 : f32 to vector<1x256xf32>
    %1603 = arith.mulf %1602, %1601 : vector<1x256xf32>
    %1604 = vector.extract_strided_slice %1600 {offsets = [1, 0], sizes = [1, 256], strides = [1, 1]} : vector<2x256xf32> to vector<1x256xf32>
    %1605 = vector.broadcast %84 : f32 to vector<1x256xf32>
    %1606 = arith.mulf %1605, %1604 : vector<1x256xf32>
    %1607 = arith.addf %1603, %1606 : vector<1x256xf32>
    %cst_334 = arith.constant 0.000000e+00 : f32
    %1608 = vector.broadcast %cst_334 : f32 to vector<1x256xf32>
    %1609 = arith.select %1599, %1607, %1608 : vector<1x256xi1>, vector<1x256xf32>
    %1610 = arith.addf %1593, %1609 : vector<1x256xf32>
    %c1_i32_335 = arith.constant 1 : i32
    %1611 = vector.broadcast %c1_i32_335 : i32 to vector<1x256xi32>
    %1612 = arith.cmpi sge, %5, %1611 : vector<1x256xi32>
    %1613 = arith.andi %1576, %1612 : vector<1x256xi1>
    %c17_i32_336 = arith.constant 17 : i32
    %1614 = vector.broadcast %c17_i32_336 : i32 to vector<1x256xi32>
    %1615 = arith.cmpi slt, %5, %1614 : vector<1x256xi32>
    %1616 = arith.andi %1613, %1615 : vector<1x256xi1>
    %c241_i32_337 = arith.constant 241 : i32
    %1617 = tpu.dynamic_rotate %1075 by %c241_i32_337 dim 1 : vector<2x256xf32>, i32 -> vector<2x256xf32>
    %1618 = vector.extract_strided_slice %1617 {offsets = [0, 0], sizes = [1, 256], strides = [1, 1]} : vector<2x256xf32> to vector<1x256xf32>
    %1619 = vector.broadcast %36 : f32 to vector<1x256xf32>
    %1620 = arith.mulf %1619, %1618 : vector<1x256xf32>
    %1621 = vector.extract_strided_slice %1617 {offsets = [1, 0], sizes = [1, 256], strides = [1, 1]} : vector<2x256xf32> to vector<1x256xf32>
    %1622 = vector.broadcast %85 : f32 to vector<1x256xf32>
    %1623 = arith.mulf %1622, %1621 : vector<1x256xf32>
    %1624 = arith.addf %1620, %1623 : vector<1x256xf32>
    %cst_338 = arith.constant 0.000000e+00 : f32
    %1625 = vector.broadcast %cst_338 : f32 to vector<1x256xf32>
    %1626 = arith.select %1616, %1624, %1625 : vector<1x256xi1>, vector<1x256xf32>
    %1627 = arith.addf %1610, %1626 : vector<1x256xf32>
    %c0_i32_339 = arith.constant 0 : i32
    %1628 = vector.broadcast %c0_i32_339 : i32 to vector<1x256xi32>
    %1629 = arith.cmpi sge, %5, %1628 : vector<1x256xi32>
    %1630 = arith.andi %1576, %1629 : vector<1x256xi1>
    %c16_i32_340 = arith.constant 16 : i32
    %1631 = vector.broadcast %c16_i32_340 : i32 to vector<1x256xi32>
    %1632 = arith.cmpi slt, %5, %1631 : vector<1x256xi32>
    %1633 = arith.andi %1630, %1632 : vector<1x256xi1>
    %c240_i32_341 = arith.constant 240 : i32
    %1634 = tpu.dynamic_rotate %1075 by %c240_i32_341 dim 1 : vector<2x256xf32>, i32 -> vector<2x256xf32>
    %1635 = vector.extract_strided_slice %1634 {offsets = [0, 0], sizes = [1, 256], strides = [1, 1]} : vector<2x256xf32> to vector<1x256xf32>
    %1636 = vector.broadcast %37 : f32 to vector<1x256xf32>
    %1637 = arith.mulf %1636, %1635 : vector<1x256xf32>
    %1638 = vector.extract_strided_slice %1634 {offsets = [1, 0], sizes = [1, 256], strides = [1, 1]} : vector<2x256xf32> to vector<1x256xf32>
    %1639 = vector.broadcast %86 : f32 to vector<1x256xf32>
    %1640 = arith.mulf %1639, %1638 : vector<1x256xf32>
    %1641 = arith.addf %1637, %1640 : vector<1x256xf32>
    %cst_342 = arith.constant 0.000000e+00 : f32
    %1642 = vector.broadcast %cst_342 : f32 to vector<1x256xf32>
    %1643 = arith.select %1633, %1641, %1642 : vector<1x256xi1>, vector<1x256xf32>
    %1644 = arith.addf %1627, %1643 : vector<1x256xf32>
    %c-1_i32_343 = arith.constant -1 : i32
    %1645 = vector.broadcast %c-1_i32_343 : i32 to vector<1x256xi32>
    %1646 = arith.cmpi sge, %5, %1645 : vector<1x256xi32>
    %1647 = arith.andi %1576, %1646 : vector<1x256xi1>
    %c15_i32_344 = arith.constant 15 : i32
    %1648 = vector.broadcast %c15_i32_344 : i32 to vector<1x256xi32>
    %1649 = arith.cmpi slt, %5, %1648 : vector<1x256xi32>
    %1650 = arith.andi %1647, %1649 : vector<1x256xi1>
    %c239_i32_345 = arith.constant 239 : i32
    %1651 = tpu.dynamic_rotate %1075 by %c239_i32_345 dim 1 : vector<2x256xf32>, i32 -> vector<2x256xf32>
    %1652 = vector.extract_strided_slice %1651 {offsets = [0, 0], sizes = [1, 256], strides = [1, 1]} : vector<2x256xf32> to vector<1x256xf32>
    %1653 = vector.broadcast %38 : f32 to vector<1x256xf32>
    %1654 = arith.mulf %1653, %1652 : vector<1x256xf32>
    %1655 = vector.extract_strided_slice %1651 {offsets = [1, 0], sizes = [1, 256], strides = [1, 1]} : vector<2x256xf32> to vector<1x256xf32>
    %1656 = vector.broadcast %87 : f32 to vector<1x256xf32>
    %1657 = arith.mulf %1656, %1655 : vector<1x256xf32>
    %1658 = arith.addf %1654, %1657 : vector<1x256xf32>
    %cst_346 = arith.constant 0.000000e+00 : f32
    %1659 = vector.broadcast %cst_346 : f32 to vector<1x256xf32>
    %1660 = arith.select %1650, %1658, %1659 : vector<1x256xi1>, vector<1x256xf32>
    %1661 = arith.addf %1644, %1660 : vector<1x256xf32>
    %c-2_i32_347 = arith.constant -2 : i32
    %1662 = vector.broadcast %c-2_i32_347 : i32 to vector<1x256xi32>
    %1663 = arith.cmpi sge, %5, %1662 : vector<1x256xi32>
    %1664 = arith.andi %1576, %1663 : vector<1x256xi1>
    %c14_i32_348 = arith.constant 14 : i32
    %1665 = vector.broadcast %c14_i32_348 : i32 to vector<1x256xi32>
    %1666 = arith.cmpi slt, %5, %1665 : vector<1x256xi32>
    %1667 = arith.andi %1664, %1666 : vector<1x256xi1>
    %c238_i32_349 = arith.constant 238 : i32
    %1668 = tpu.dynamic_rotate %1075 by %c238_i32_349 dim 1 : vector<2x256xf32>, i32 -> vector<2x256xf32>
    %1669 = vector.extract_strided_slice %1668 {offsets = [0, 0], sizes = [1, 256], strides = [1, 1]} : vector<2x256xf32> to vector<1x256xf32>
    %1670 = vector.broadcast %39 : f32 to vector<1x256xf32>
    %1671 = arith.mulf %1670, %1669 : vector<1x256xf32>
    %1672 = vector.extract_strided_slice %1668 {offsets = [1, 0], sizes = [1, 256], strides = [1, 1]} : vector<2x256xf32> to vector<1x256xf32>
    %1673 = vector.broadcast %88 : f32 to vector<1x256xf32>
    %1674 = arith.mulf %1673, %1672 : vector<1x256xf32>
    %1675 = arith.addf %1671, %1674 : vector<1x256xf32>
    %cst_350 = arith.constant 0.000000e+00 : f32
    %1676 = vector.broadcast %cst_350 : f32 to vector<1x256xf32>
    %1677 = arith.select %1667, %1675, %1676 : vector<1x256xi1>, vector<1x256xf32>
    %1678 = arith.addf %1661, %1677 : vector<1x256xf32>
    %c-3_i32_351 = arith.constant -3 : i32
    %1679 = vector.broadcast %c-3_i32_351 : i32 to vector<1x256xi32>
    %1680 = arith.cmpi sge, %5, %1679 : vector<1x256xi32>
    %1681 = arith.andi %1576, %1680 : vector<1x256xi1>
    %c13_i32_352 = arith.constant 13 : i32
    %1682 = vector.broadcast %c13_i32_352 : i32 to vector<1x256xi32>
    %1683 = arith.cmpi slt, %5, %1682 : vector<1x256xi32>
    %1684 = arith.andi %1681, %1683 : vector<1x256xi1>
    %c237_i32_353 = arith.constant 237 : i32
    %1685 = tpu.dynamic_rotate %1075 by %c237_i32_353 dim 1 : vector<2x256xf32>, i32 -> vector<2x256xf32>
    %1686 = vector.extract_strided_slice %1685 {offsets = [0, 0], sizes = [1, 256], strides = [1, 1]} : vector<2x256xf32> to vector<1x256xf32>
    %1687 = vector.broadcast %40 : f32 to vector<1x256xf32>
    %1688 = arith.mulf %1687, %1686 : vector<1x256xf32>
    %1689 = vector.extract_strided_slice %1685 {offsets = [1, 0], sizes = [1, 256], strides = [1, 1]} : vector<2x256xf32> to vector<1x256xf32>
    %1690 = vector.broadcast %89 : f32 to vector<1x256xf32>
    %1691 = arith.mulf %1690, %1689 : vector<1x256xf32>
    %1692 = arith.addf %1688, %1691 : vector<1x256xf32>
    %cst_354 = arith.constant 0.000000e+00 : f32
    %1693 = vector.broadcast %cst_354 : f32 to vector<1x256xf32>
    %1694 = arith.select %1684, %1692, %1693 : vector<1x256xi1>, vector<1x256xf32>
    %1695 = arith.addf %1678, %1694 : vector<1x256xf32>
    %c-2_i32_355 = arith.constant -2 : i32
    %1696 = vector.broadcast %c-2_i32_355 : i32 to vector<1x256xi32>
    %1697 = arith.cmpi sge, %4, %1696 : vector<1x256xi32>
    %c14_i32_356 = arith.constant 14 : i32
    %1698 = vector.broadcast %c14_i32_356 : i32 to vector<1x256xi32>
    %1699 = arith.cmpi slt, %4, %1698 : vector<1x256xi32>
    %1700 = arith.andi %1697, %1699 : vector<1x256xi1>
    %c3_i32_357 = arith.constant 3 : i32
    %1701 = vector.broadcast %c3_i32_357 : i32 to vector<1x256xi32>
    %1702 = arith.cmpi sge, %5, %1701 : vector<1x256xi32>
    %1703 = arith.andi %1700, %1702 : vector<1x256xi1>
    %c19_i32_358 = arith.constant 19 : i32
    %1704 = vector.broadcast %c19_i32_358 : i32 to vector<1x256xi32>
    %1705 = arith.cmpi slt, %5, %1704 : vector<1x256xi32>
    %1706 = arith.andi %1703, %1705 : vector<1x256xi1>
    %c227_i32_359 = arith.constant 227 : i32
    %1707 = tpu.dynamic_rotate %1075 by %c227_i32_359 dim 1 : vector<2x256xf32>, i32 -> vector<2x256xf32>
    %1708 = vector.extract_strided_slice %1707 {offsets = [0, 0], sizes = [1, 256], strides = [1, 1]} : vector<2x256xf32> to vector<1x256xf32>
    %1709 = vector.broadcast %41 : f32 to vector<1x256xf32>
    %1710 = arith.mulf %1709, %1708 : vector<1x256xf32>
    %1711 = vector.extract_strided_slice %1707 {offsets = [1, 0], sizes = [1, 256], strides = [1, 1]} : vector<2x256xf32> to vector<1x256xf32>
    %1712 = vector.broadcast %90 : f32 to vector<1x256xf32>
    %1713 = arith.mulf %1712, %1711 : vector<1x256xf32>
    %1714 = arith.addf %1710, %1713 : vector<1x256xf32>
    %cst_360 = arith.constant 0.000000e+00 : f32
    %1715 = vector.broadcast %cst_360 : f32 to vector<1x256xf32>
    %1716 = arith.select %1706, %1714, %1715 : vector<1x256xi1>, vector<1x256xf32>
    %1717 = arith.addf %1695, %1716 : vector<1x256xf32>
    %c2_i32_361 = arith.constant 2 : i32
    %1718 = vector.broadcast %c2_i32_361 : i32 to vector<1x256xi32>
    %1719 = arith.cmpi sge, %5, %1718 : vector<1x256xi32>
    %1720 = arith.andi %1700, %1719 : vector<1x256xi1>
    %c18_i32_362 = arith.constant 18 : i32
    %1721 = vector.broadcast %c18_i32_362 : i32 to vector<1x256xi32>
    %1722 = arith.cmpi slt, %5, %1721 : vector<1x256xi32>
    %1723 = arith.andi %1720, %1722 : vector<1x256xi1>
    %c226_i32_363 = arith.constant 226 : i32
    %1724 = tpu.dynamic_rotate %1075 by %c226_i32_363 dim 1 : vector<2x256xf32>, i32 -> vector<2x256xf32>
    %1725 = vector.extract_strided_slice %1724 {offsets = [0, 0], sizes = [1, 256], strides = [1, 1]} : vector<2x256xf32> to vector<1x256xf32>
    %1726 = vector.broadcast %42 : f32 to vector<1x256xf32>
    %1727 = arith.mulf %1726, %1725 : vector<1x256xf32>
    %1728 = vector.extract_strided_slice %1724 {offsets = [1, 0], sizes = [1, 256], strides = [1, 1]} : vector<2x256xf32> to vector<1x256xf32>
    %1729 = vector.broadcast %91 : f32 to vector<1x256xf32>
    %1730 = arith.mulf %1729, %1728 : vector<1x256xf32>
    %1731 = arith.addf %1727, %1730 : vector<1x256xf32>
    %cst_364 = arith.constant 0.000000e+00 : f32
    %1732 = vector.broadcast %cst_364 : f32 to vector<1x256xf32>
    %1733 = arith.select %1723, %1731, %1732 : vector<1x256xi1>, vector<1x256xf32>
    %1734 = arith.addf %1717, %1733 : vector<1x256xf32>
    %c1_i32_365 = arith.constant 1 : i32
    %1735 = vector.broadcast %c1_i32_365 : i32 to vector<1x256xi32>
    %1736 = arith.cmpi sge, %5, %1735 : vector<1x256xi32>
    %1737 = arith.andi %1700, %1736 : vector<1x256xi1>
    %c17_i32_366 = arith.constant 17 : i32
    %1738 = vector.broadcast %c17_i32_366 : i32 to vector<1x256xi32>
    %1739 = arith.cmpi slt, %5, %1738 : vector<1x256xi32>
    %1740 = arith.andi %1737, %1739 : vector<1x256xi1>
    %c225_i32_367 = arith.constant 225 : i32
    %1741 = tpu.dynamic_rotate %1075 by %c225_i32_367 dim 1 : vector<2x256xf32>, i32 -> vector<2x256xf32>
    %1742 = vector.extract_strided_slice %1741 {offsets = [0, 0], sizes = [1, 256], strides = [1, 1]} : vector<2x256xf32> to vector<1x256xf32>
    %1743 = vector.broadcast %43 : f32 to vector<1x256xf32>
    %1744 = arith.mulf %1743, %1742 : vector<1x256xf32>
    %1745 = vector.extract_strided_slice %1741 {offsets = [1, 0], sizes = [1, 256], strides = [1, 1]} : vector<2x256xf32> to vector<1x256xf32>
    %1746 = vector.broadcast %92 : f32 to vector<1x256xf32>
    %1747 = arith.mulf %1746, %1745 : vector<1x256xf32>
    %1748 = arith.addf %1744, %1747 : vector<1x256xf32>
    %cst_368 = arith.constant 0.000000e+00 : f32
    %1749 = vector.broadcast %cst_368 : f32 to vector<1x256xf32>
    %1750 = arith.select %1740, %1748, %1749 : vector<1x256xi1>, vector<1x256xf32>
    %1751 = arith.addf %1734, %1750 : vector<1x256xf32>
    %c0_i32_369 = arith.constant 0 : i32
    %1752 = vector.broadcast %c0_i32_369 : i32 to vector<1x256xi32>
    %1753 = arith.cmpi sge, %5, %1752 : vector<1x256xi32>
    %1754 = arith.andi %1700, %1753 : vector<1x256xi1>
    %c16_i32_370 = arith.constant 16 : i32
    %1755 = vector.broadcast %c16_i32_370 : i32 to vector<1x256xi32>
    %1756 = arith.cmpi slt, %5, %1755 : vector<1x256xi32>
    %1757 = arith.andi %1754, %1756 : vector<1x256xi1>
    %c224_i32_371 = arith.constant 224 : i32
    %1758 = tpu.dynamic_rotate %1075 by %c224_i32_371 dim 1 : vector<2x256xf32>, i32 -> vector<2x256xf32>
    %1759 = vector.extract_strided_slice %1758 {offsets = [0, 0], sizes = [1, 256], strides = [1, 1]} : vector<2x256xf32> to vector<1x256xf32>
    %1760 = vector.broadcast %44 : f32 to vector<1x256xf32>
    %1761 = arith.mulf %1760, %1759 : vector<1x256xf32>
    %1762 = vector.extract_strided_slice %1758 {offsets = [1, 0], sizes = [1, 256], strides = [1, 1]} : vector<2x256xf32> to vector<1x256xf32>
    %1763 = vector.broadcast %93 : f32 to vector<1x256xf32>
    %1764 = arith.mulf %1763, %1762 : vector<1x256xf32>
    %1765 = arith.addf %1761, %1764 : vector<1x256xf32>
    %cst_372 = arith.constant 0.000000e+00 : f32
    %1766 = vector.broadcast %cst_372 : f32 to vector<1x256xf32>
    %1767 = arith.select %1757, %1765, %1766 : vector<1x256xi1>, vector<1x256xf32>
    %1768 = arith.addf %1751, %1767 : vector<1x256xf32>
    %c-1_i32_373 = arith.constant -1 : i32
    %1769 = vector.broadcast %c-1_i32_373 : i32 to vector<1x256xi32>
    %1770 = arith.cmpi sge, %5, %1769 : vector<1x256xi32>
    %1771 = arith.andi %1700, %1770 : vector<1x256xi1>
    %c15_i32_374 = arith.constant 15 : i32
    %1772 = vector.broadcast %c15_i32_374 : i32 to vector<1x256xi32>
    %1773 = arith.cmpi slt, %5, %1772 : vector<1x256xi32>
    %1774 = arith.andi %1771, %1773 : vector<1x256xi1>
    %c223_i32_375 = arith.constant 223 : i32
    %1775 = tpu.dynamic_rotate %1075 by %c223_i32_375 dim 1 : vector<2x256xf32>, i32 -> vector<2x256xf32>
    %1776 = vector.extract_strided_slice %1775 {offsets = [0, 0], sizes = [1, 256], strides = [1, 1]} : vector<2x256xf32> to vector<1x256xf32>
    %1777 = vector.broadcast %45 : f32 to vector<1x256xf32>
    %1778 = arith.mulf %1777, %1776 : vector<1x256xf32>
    %1779 = vector.extract_strided_slice %1775 {offsets = [1, 0], sizes = [1, 256], strides = [1, 1]} : vector<2x256xf32> to vector<1x256xf32>
    %1780 = vector.broadcast %94 : f32 to vector<1x256xf32>
    %1781 = arith.mulf %1780, %1779 : vector<1x256xf32>
    %1782 = arith.addf %1778, %1781 : vector<1x256xf32>
    %cst_376 = arith.constant 0.000000e+00 : f32
    %1783 = vector.broadcast %cst_376 : f32 to vector<1x256xf32>
    %1784 = arith.select %1774, %1782, %1783 : vector<1x256xi1>, vector<1x256xf32>
    %1785 = arith.addf %1768, %1784 : vector<1x256xf32>
    %c-2_i32_377 = arith.constant -2 : i32
    %1786 = vector.broadcast %c-2_i32_377 : i32 to vector<1x256xi32>
    %1787 = arith.cmpi sge, %5, %1786 : vector<1x256xi32>
    %1788 = arith.andi %1700, %1787 : vector<1x256xi1>
    %c14_i32_378 = arith.constant 14 : i32
    %1789 = vector.broadcast %c14_i32_378 : i32 to vector<1x256xi32>
    %1790 = arith.cmpi slt, %5, %1789 : vector<1x256xi32>
    %1791 = arith.andi %1788, %1790 : vector<1x256xi1>
    %c222_i32_379 = arith.constant 222 : i32
    %1792 = tpu.dynamic_rotate %1075 by %c222_i32_379 dim 1 : vector<2x256xf32>, i32 -> vector<2x256xf32>
    %1793 = vector.extract_strided_slice %1792 {offsets = [0, 0], sizes = [1, 256], strides = [1, 1]} : vector<2x256xf32> to vector<1x256xf32>
    %1794 = vector.broadcast %46 : f32 to vector<1x256xf32>
    %1795 = arith.mulf %1794, %1793 : vector<1x256xf32>
    %1796 = vector.extract_strided_slice %1792 {offsets = [1, 0], sizes = [1, 256], strides = [1, 1]} : vector<2x256xf32> to vector<1x256xf32>
    %1797 = vector.broadcast %95 : f32 to vector<1x256xf32>
    %1798 = arith.mulf %1797, %1796 : vector<1x256xf32>
    %1799 = arith.addf %1795, %1798 : vector<1x256xf32>
    %cst_380 = arith.constant 0.000000e+00 : f32
    %1800 = vector.broadcast %cst_380 : f32 to vector<1x256xf32>
    %1801 = arith.select %1791, %1799, %1800 : vector<1x256xi1>, vector<1x256xf32>
    %1802 = arith.addf %1785, %1801 : vector<1x256xf32>
    %c-3_i32_381 = arith.constant -3 : i32
    %1803 = vector.broadcast %c-3_i32_381 : i32 to vector<1x256xi32>
    %1804 = arith.cmpi sge, %5, %1803 : vector<1x256xi32>
    %1805 = arith.andi %1700, %1804 : vector<1x256xi1>
    %c13_i32_382 = arith.constant 13 : i32
    %1806 = vector.broadcast %c13_i32_382 : i32 to vector<1x256xi32>
    %1807 = arith.cmpi slt, %5, %1806 : vector<1x256xi32>
    %1808 = arith.andi %1805, %1807 : vector<1x256xi1>
    %c221_i32_383 = arith.constant 221 : i32
    %1809 = tpu.dynamic_rotate %1075 by %c221_i32_383 dim 1 : vector<2x256xf32>, i32 -> vector<2x256xf32>
    %1810 = vector.extract_strided_slice %1809 {offsets = [0, 0], sizes = [1, 256], strides = [1, 1]} : vector<2x256xf32> to vector<1x256xf32>
    %1811 = vector.broadcast %47 : f32 to vector<1x256xf32>
    %1812 = arith.mulf %1811, %1810 : vector<1x256xf32>
    %1813 = vector.extract_strided_slice %1809 {offsets = [1, 0], sizes = [1, 256], strides = [1, 1]} : vector<2x256xf32> to vector<1x256xf32>
    %1814 = vector.broadcast %96 : f32 to vector<1x256xf32>
    %1815 = arith.mulf %1814, %1813 : vector<1x256xf32>
    %1816 = arith.addf %1812, %1815 : vector<1x256xf32>
    %cst_384 = arith.constant 0.000000e+00 : f32
    %1817 = vector.broadcast %cst_384 : f32 to vector<1x256xf32>
    %1818 = arith.select %1808, %1816, %1817 : vector<1x256xi1>, vector<1x256xf32>
    %1819 = arith.addf %1802, %1818 : vector<1x256xf32>
    %c-3_i32_385 = arith.constant -3 : i32
    %1820 = vector.broadcast %c-3_i32_385 : i32 to vector<1x256xi32>
    %1821 = arith.cmpi sge, %4, %1820 : vector<1x256xi32>
    %c13_i32_386 = arith.constant 13 : i32
    %1822 = vector.broadcast %c13_i32_386 : i32 to vector<1x256xi32>
    %1823 = arith.cmpi slt, %4, %1822 : vector<1x256xi32>
    %1824 = arith.andi %1821, %1823 : vector<1x256xi1>
    %c3_i32_387 = arith.constant 3 : i32
    %1825 = vector.broadcast %c3_i32_387 : i32 to vector<1x256xi32>
    %1826 = arith.cmpi sge, %5, %1825 : vector<1x256xi32>
    %1827 = arith.andi %1824, %1826 : vector<1x256xi1>
    %c19_i32_388 = arith.constant 19 : i32
    %1828 = vector.broadcast %c19_i32_388 : i32 to vector<1x256xi32>
    %1829 = arith.cmpi slt, %5, %1828 : vector<1x256xi32>
    %1830 = arith.andi %1827, %1829 : vector<1x256xi1>
    %c211_i32_389 = arith.constant 211 : i32
    %1831 = tpu.dynamic_rotate %1075 by %c211_i32_389 dim 1 : vector<2x256xf32>, i32 -> vector<2x256xf32>
    %1832 = vector.extract_strided_slice %1831 {offsets = [0, 0], sizes = [1, 256], strides = [1, 1]} : vector<2x256xf32> to vector<1x256xf32>
    %1833 = vector.broadcast %48 : f32 to vector<1x256xf32>
    %1834 = arith.mulf %1833, %1832 : vector<1x256xf32>
    %1835 = vector.extract_strided_slice %1831 {offsets = [1, 0], sizes = [1, 256], strides = [1, 1]} : vector<2x256xf32> to vector<1x256xf32>
    %1836 = vector.broadcast %97 : f32 to vector<1x256xf32>
    %1837 = arith.mulf %1836, %1835 : vector<1x256xf32>
    %1838 = arith.addf %1834, %1837 : vector<1x256xf32>
    %cst_390 = arith.constant 0.000000e+00 : f32
    %1839 = vector.broadcast %cst_390 : f32 to vector<1x256xf32>
    %1840 = arith.select %1830, %1838, %1839 : vector<1x256xi1>, vector<1x256xf32>
    %1841 = arith.addf %1819, %1840 : vector<1x256xf32>
    %c2_i32_391 = arith.constant 2 : i32
    %1842 = vector.broadcast %c2_i32_391 : i32 to vector<1x256xi32>
    %1843 = arith.cmpi sge, %5, %1842 : vector<1x256xi32>
    %1844 = arith.andi %1824, %1843 : vector<1x256xi1>
    %c18_i32_392 = arith.constant 18 : i32
    %1845 = vector.broadcast %c18_i32_392 : i32 to vector<1x256xi32>
    %1846 = arith.cmpi slt, %5, %1845 : vector<1x256xi32>
    %1847 = arith.andi %1844, %1846 : vector<1x256xi1>
    %c210_i32_393 = arith.constant 210 : i32
    %1848 = tpu.dynamic_rotate %1075 by %c210_i32_393 dim 1 : vector<2x256xf32>, i32 -> vector<2x256xf32>
    %1849 = vector.extract_strided_slice %1848 {offsets = [0, 0], sizes = [1, 256], strides = [1, 1]} : vector<2x256xf32> to vector<1x256xf32>
    %1850 = vector.broadcast %49 : f32 to vector<1x256xf32>
    %1851 = arith.mulf %1850, %1849 : vector<1x256xf32>
    %1852 = vector.extract_strided_slice %1848 {offsets = [1, 0], sizes = [1, 256], strides = [1, 1]} : vector<2x256xf32> to vector<1x256xf32>
    %1853 = vector.broadcast %98 : f32 to vector<1x256xf32>
    %1854 = arith.mulf %1853, %1852 : vector<1x256xf32>
    %1855 = arith.addf %1851, %1854 : vector<1x256xf32>
    %cst_394 = arith.constant 0.000000e+00 : f32
    %1856 = vector.broadcast %cst_394 : f32 to vector<1x256xf32>
    %1857 = arith.select %1847, %1855, %1856 : vector<1x256xi1>, vector<1x256xf32>
    %1858 = arith.addf %1841, %1857 : vector<1x256xf32>
    %c1_i32_395 = arith.constant 1 : i32
    %1859 = vector.broadcast %c1_i32_395 : i32 to vector<1x256xi32>
    %1860 = arith.cmpi sge, %5, %1859 : vector<1x256xi32>
    %1861 = arith.andi %1824, %1860 : vector<1x256xi1>
    %c17_i32_396 = arith.constant 17 : i32
    %1862 = vector.broadcast %c17_i32_396 : i32 to vector<1x256xi32>
    %1863 = arith.cmpi slt, %5, %1862 : vector<1x256xi32>
    %1864 = arith.andi %1861, %1863 : vector<1x256xi1>
    %c209_i32_397 = arith.constant 209 : i32
    %1865 = tpu.dynamic_rotate %1075 by %c209_i32_397 dim 1 : vector<2x256xf32>, i32 -> vector<2x256xf32>
    %1866 = vector.extract_strided_slice %1865 {offsets = [0, 0], sizes = [1, 256], strides = [1, 1]} : vector<2x256xf32> to vector<1x256xf32>
    %1867 = vector.broadcast %50 : f32 to vector<1x256xf32>
    %1868 = arith.mulf %1867, %1866 : vector<1x256xf32>
    %1869 = vector.extract_strided_slice %1865 {offsets = [1, 0], sizes = [1, 256], strides = [1, 1]} : vector<2x256xf32> to vector<1x256xf32>
    %1870 = vector.broadcast %99 : f32 to vector<1x256xf32>
    %1871 = arith.mulf %1870, %1869 : vector<1x256xf32>
    %1872 = arith.addf %1868, %1871 : vector<1x256xf32>
    %cst_398 = arith.constant 0.000000e+00 : f32
    %1873 = vector.broadcast %cst_398 : f32 to vector<1x256xf32>
    %1874 = arith.select %1864, %1872, %1873 : vector<1x256xi1>, vector<1x256xf32>
    %1875 = arith.addf %1858, %1874 : vector<1x256xf32>
    %c0_i32_399 = arith.constant 0 : i32
    %1876 = vector.broadcast %c0_i32_399 : i32 to vector<1x256xi32>
    %1877 = arith.cmpi sge, %5, %1876 : vector<1x256xi32>
    %1878 = arith.andi %1824, %1877 : vector<1x256xi1>
    %c16_i32_400 = arith.constant 16 : i32
    %1879 = vector.broadcast %c16_i32_400 : i32 to vector<1x256xi32>
    %1880 = arith.cmpi slt, %5, %1879 : vector<1x256xi32>
    %1881 = arith.andi %1878, %1880 : vector<1x256xi1>
    %c208_i32_401 = arith.constant 208 : i32
    %1882 = tpu.dynamic_rotate %1075 by %c208_i32_401 dim 1 : vector<2x256xf32>, i32 -> vector<2x256xf32>
    %1883 = vector.extract_strided_slice %1882 {offsets = [0, 0], sizes = [1, 256], strides = [1, 1]} : vector<2x256xf32> to vector<1x256xf32>
    %1884 = vector.broadcast %51 : f32 to vector<1x256xf32>
    %1885 = arith.mulf %1884, %1883 : vector<1x256xf32>
    %1886 = vector.extract_strided_slice %1882 {offsets = [1, 0], sizes = [1, 256], strides = [1, 1]} : vector<2x256xf32> to vector<1x256xf32>
    %1887 = vector.broadcast %100 : f32 to vector<1x256xf32>
    %1888 = arith.mulf %1887, %1886 : vector<1x256xf32>
    %1889 = arith.addf %1885, %1888 : vector<1x256xf32>
    %cst_402 = arith.constant 0.000000e+00 : f32
    %1890 = vector.broadcast %cst_402 : f32 to vector<1x256xf32>
    %1891 = arith.select %1881, %1889, %1890 : vector<1x256xi1>, vector<1x256xf32>
    %1892 = arith.addf %1875, %1891 : vector<1x256xf32>
    %c-1_i32_403 = arith.constant -1 : i32
    %1893 = vector.broadcast %c-1_i32_403 : i32 to vector<1x256xi32>
    %1894 = arith.cmpi sge, %5, %1893 : vector<1x256xi32>
    %1895 = arith.andi %1824, %1894 : vector<1x256xi1>
    %c15_i32_404 = arith.constant 15 : i32
    %1896 = vector.broadcast %c15_i32_404 : i32 to vector<1x256xi32>
    %1897 = arith.cmpi slt, %5, %1896 : vector<1x256xi32>
    %1898 = arith.andi %1895, %1897 : vector<1x256xi1>
    %c207_i32_405 = arith.constant 207 : i32
    %1899 = tpu.dynamic_rotate %1075 by %c207_i32_405 dim 1 : vector<2x256xf32>, i32 -> vector<2x256xf32>
    %1900 = vector.extract_strided_slice %1899 {offsets = [0, 0], sizes = [1, 256], strides = [1, 1]} : vector<2x256xf32> to vector<1x256xf32>
    %1901 = vector.broadcast %52 : f32 to vector<1x256xf32>
    %1902 = arith.mulf %1901, %1900 : vector<1x256xf32>
    %1903 = vector.extract_strided_slice %1899 {offsets = [1, 0], sizes = [1, 256], strides = [1, 1]} : vector<2x256xf32> to vector<1x256xf32>
    %1904 = vector.broadcast %101 : f32 to vector<1x256xf32>
    %1905 = arith.mulf %1904, %1903 : vector<1x256xf32>
    %1906 = arith.addf %1902, %1905 : vector<1x256xf32>
    %cst_406 = arith.constant 0.000000e+00 : f32
    %1907 = vector.broadcast %cst_406 : f32 to vector<1x256xf32>
    %1908 = arith.select %1898, %1906, %1907 : vector<1x256xi1>, vector<1x256xf32>
    %1909 = arith.addf %1892, %1908 : vector<1x256xf32>
    %c-2_i32_407 = arith.constant -2 : i32
    %1910 = vector.broadcast %c-2_i32_407 : i32 to vector<1x256xi32>
    %1911 = arith.cmpi sge, %5, %1910 : vector<1x256xi32>
    %1912 = arith.andi %1824, %1911 : vector<1x256xi1>
    %c14_i32_408 = arith.constant 14 : i32
    %1913 = vector.broadcast %c14_i32_408 : i32 to vector<1x256xi32>
    %1914 = arith.cmpi slt, %5, %1913 : vector<1x256xi32>
    %1915 = arith.andi %1912, %1914 : vector<1x256xi1>
    %c206_i32_409 = arith.constant 206 : i32
    %1916 = tpu.dynamic_rotate %1075 by %c206_i32_409 dim 1 : vector<2x256xf32>, i32 -> vector<2x256xf32>
    %1917 = vector.extract_strided_slice %1916 {offsets = [0, 0], sizes = [1, 256], strides = [1, 1]} : vector<2x256xf32> to vector<1x256xf32>
    %1918 = vector.broadcast %53 : f32 to vector<1x256xf32>
    %1919 = arith.mulf %1918, %1917 : vector<1x256xf32>
    %1920 = vector.extract_strided_slice %1916 {offsets = [1, 0], sizes = [1, 256], strides = [1, 1]} : vector<2x256xf32> to vector<1x256xf32>
    %1921 = vector.broadcast %102 : f32 to vector<1x256xf32>
    %1922 = arith.mulf %1921, %1920 : vector<1x256xf32>
    %1923 = arith.addf %1919, %1922 : vector<1x256xf32>
    %cst_410 = arith.constant 0.000000e+00 : f32
    %1924 = vector.broadcast %cst_410 : f32 to vector<1x256xf32>
    %1925 = arith.select %1915, %1923, %1924 : vector<1x256xi1>, vector<1x256xf32>
    %1926 = arith.addf %1909, %1925 : vector<1x256xf32>
    %c-3_i32_411 = arith.constant -3 : i32
    %1927 = vector.broadcast %c-3_i32_411 : i32 to vector<1x256xi32>
    %1928 = arith.cmpi sge, %5, %1927 : vector<1x256xi32>
    %1929 = arith.andi %1824, %1928 : vector<1x256xi1>
    %c13_i32_412 = arith.constant 13 : i32
    %1930 = vector.broadcast %c13_i32_412 : i32 to vector<1x256xi32>
    %1931 = arith.cmpi slt, %5, %1930 : vector<1x256xi32>
    %1932 = arith.andi %1929, %1931 : vector<1x256xi1>
    %c205_i32_413 = arith.constant 205 : i32
    %1933 = tpu.dynamic_rotate %1075 by %c205_i32_413 dim 1 : vector<2x256xf32>, i32 -> vector<2x256xf32>
    %1934 = vector.extract_strided_slice %1933 {offsets = [0, 0], sizes = [1, 256], strides = [1, 1]} : vector<2x256xf32> to vector<1x256xf32>
    %1935 = vector.broadcast %54 : f32 to vector<1x256xf32>
    %1936 = arith.mulf %1935, %1934 : vector<1x256xf32>
    %1937 = vector.extract_strided_slice %1933 {offsets = [1, 0], sizes = [1, 256], strides = [1, 1]} : vector<2x256xf32> to vector<1x256xf32>
    %1938 = vector.broadcast %103 : f32 to vector<1x256xf32>
    %1939 = arith.mulf %1938, %1937 : vector<1x256xf32>
    %1940 = arith.addf %1936, %1939 : vector<1x256xf32>
    %cst_414 = arith.constant 0.000000e+00 : f32
    %1941 = vector.broadcast %cst_414 : f32 to vector<1x256xf32>
    %1942 = arith.select %1932, %1940, %1941 : vector<1x256xi1>, vector<1x256xf32>
    %1943 = arith.addf %1926, %1942 : vector<1x256xf32>
    %1944 = arith.negf %1943 : vector<1x256xf32>
    %1945 = math.exp %1944 : vector<1x256xf32>
    %cst_415 = arith.constant 1.000000e+00 : f32
    %1946 = vector.broadcast %cst_415 : f32 to vector<1x256xf32>
    %1947 = arith.addf %1946, %1945 : vector<1x256xf32>
    %1948 = arith.divf %1946, %1947 : vector<1x256xf32>
    %1949 = vector.broadcast %1948 : vector<1x256xf32> to vector<4x256xf32>
    %1950 = arith.mulf %1068, %1949 : vector<4x256xf32>
    %c1_416 = arith.constant 1 : index
    %c0_417 = arith.constant 0 : index
    %c0_418 = arith.constant 0 : index
    %1951 = vector.load %arg9[%c1_416, %c0_417, %c0_418] : memref<2x4x256xf32, #tpu.memory_space<vmem>>, vector<1x4x256xf32>
    %1952 = vector.shape_cast %1951 : vector<1x4x256xf32> to vector<4x256xf32>
    %1953 = vector.shape_cast %1950 : vector<4x256xf32> to vector<1x4x256xf32>
    tpu.vector_store %arg9[%c1_416, %c0_417, %c0_418], %1953 {strides = array<i32>} : memref<2x4x256xf32, #tpu.memory_space<vmem>>, vector<1x4x256xf32>,
    return
  }
  func.func @transform_0(%arg0: i32) -> (i32, i32, i32) {
    %c0_i32 = arith.constant 0 : i32
    %c0_i32_0 = arith.constant 0 : i32
    %c0_i32_1 = arith.constant 0 : i32
    return %arg0, %c0_i32, %c0_i32_0 : i32, i32, i32
  }
  func.func @transform_1(%arg0: i32) -> (i32, i32) {
    %c0_i32 = arith.constant 0 : i32
    %c0_i32_0 = arith.constant 0 : i32
    %c0_i32_1 = arith.constant 0 : i32
    return %c0_i32, %c0_i32_0 : i32, i32
  }
  func.func @transform_2(%arg0: i32) -> (i32, i32) {
    %c0_i32 = arith.constant 0 : i32
    %c0_i32_0 = arith.constant 0 : i32
    %c0_i32_1 = arith.constant 0 : i32
    return %c0_i32, %c0_i32_0 : i32, i32
  }
  func.func @transform_3(%arg0: i32) -> (i32, i32) {
    %c0_i32 = arith.constant 0 : i32
    %c0_i32_0 = arith.constant 0 : i32
    %c0_i32_1 = arith.constant 0 : i32
    return %c0_i32, %c0_i32_0 : i32, i32
  }
  func.func @transform_4(%arg0: i32) -> (i32, i32) {
    %c0_i32 = arith.constant 0 : i32
    %c0_i32_0 = arith.constant 0 : i32
    %c0_i32_1 = arith.constant 0 : i32
    return %c0_i32, %c0_i32_0 : i32, i32
  }
  func.func @transform_5(%arg0: i32) -> (i32, i32) {
    %c0_i32 = arith.constant 0 : i32
    %c0_i32_0 = arith.constant 0 : i32
    %c0_i32_1 = arith.constant 0 : i32
    return %c0_i32, %c0_i32_0 : i32, i32
  }
  func.func @transform_6(%arg0: i32) -> (i32, i32) {
    %c0_i32 = arith.constant 0 : i32
    %c0_i32_0 = arith.constant 0 : i32
    %c0_i32_1 = arith.constant 0 : i32
    return %c0_i32, %c0_i32_0 : i32, i32
  }
  func.func @transform_7(%arg0: i32) -> i32 {
    %c0_i32 = arith.constant 0 : i32
    %c0_i32_0 = arith.constant 0 : i32
    return %c0_i32 : i32
  }
  func.func @transform_8(%arg0: i32) -> (i32, i32, i32) {
    %c0_i32 = arith.constant 0 : i32
    %c0_i32_0 = arith.constant 0 : i32
    %c0_i32_1 = arith.constant 0 : i32
    return %arg0, %c0_i32, %c0_i32_0 : i32, i32, i32
  }
}

</mosaic_0001>

<llo_original>
// kernel: tpu_custom_call.1
$region0: #{tpu_custom_call.1}
  #allocation0 [shape = 'u32[]', space=smem, size = 0x4, offset = 0x4, fixed_abs, tag = 'smem constant byte address 0x4 - core index']
  #allocation1 [shape = 'u32[144,128]{1,0:T(1,128)}', space=vmem, size = 0x12000, scoped, tag = 'internal scratch']
  %s0 = inlined_call_operand.hbm [shape: f32[2,4,256], index: 0, kind: input, shape index: {}]
  %s1 = inlined_call_operand.vmem [shape: f32[4,4], index: 1, kind: input, shape index: {}]
  %s2 = inlined_call_operand.hbm [shape: f32[1,4], index: 2, kind: input, shape index: {}]
  %s3 = inlined_call_operand.vmem [shape: f32[4,4], index: 3, kind: input, shape index: {}]
  %s4 = inlined_call_operand.vmem [shape: f32[4,1], index: 4, kind: input, shape index: {}]
  %s5 = inlined_call_operand.vmem [shape: s32[1,256], index: 5, kind: input, shape index: {}]
  %s6 = inlined_call_operand.vmem [shape: s32[1,256], index: 6, kind: input, shape index: {}]
  %s7 = inlined_call_operand.vmem [shape: f32[98], index: 7, kind: input, shape index: {}]
  %s8 = inlined_call_operand.hbm [shape: f32[2,4,256], index: 8, kind: output, shape index: {}]
  %s9 = sld [smem:[#allocation0]]
  $region54: #{tpu_custom_call.1} parent=0
    _
  %s11 = ssub.s32 1, %s9
  %s12 = scalar_select 0, %s11, %s9
  $region1: #{tpu_custom_call.1} parent=0
    #allocation2 [shape = 'u8[8192]{0}', space=vmem, size = 0x2000, scoped, tag = 'input window, operand 0, single buffered']
    #allocation3 [shape = 's32[1]{0}', space=sflag, size = 0x4, scoped, tag = 'scoped memory for tpu_custom_call.1']
    #allocation4 [shape = 's32[1]{0}', space=sflag, size = 0x4, scoped, tag = 'scoped memory for tpu_custom_call.1']
    #allocation5 [shape = 's32[1]{0}', space=sflag, size = 0x4, scoped, tag = 'scoped memory for tpu_custom_call.1']
    #allocation6 [shape = 'u8[512]{0}', space=vmem, size = 0x400, scoped, tag = 'input window, operand 2, single buffered']
    #allocation7 [shape = 's32[1]{0}', space=sflag, size = 0x4, scoped, tag = 'scoped memory for tpu_custom_call.1']
    #allocation8 [shape = 'u8[512]{0}', space=smem, size = 0x200, scoped, tag = 'input window, operand 7, single buffered']
    #allocation9 [shape = 'u8[8192]{0}', space=vmem, size = 0x2000, scoped, tag = 'output window, operand 0, single buffered']
    %13 = vsyncpa [#allocation3], 0
    %14 = vsyncpa [#allocation7], 0
    %15 = vsyncpa [#allocation5], 0
    %16 = vsyncpa [#allocation4], 0
    // Predicated region
    $region2: #{tpu_custom_call.1} parent=1 // pred_check
      _
    $region3: #{tpu_custom_call.1} parent=1 // pred_check_branch
      %18 = sbr.rel (0) target = $region5
    $region4: #{tpu_custom_call.1} parent=1 // pred_region
      %s20 = ssub.s32 256, 256
      %21 = vsyncadd [#allocation3], %s20
      %s22 = sshll.u32 [#allocation2], 4
      %s23 = int_to_ptr.vmem [resolvable:$true] %s22
      %28 = dma.hbm_to_vmem [thread:$0]  %s0, 256, %s23, [#allocation3], 128, 128, 8
    $region5: #{tpu_custom_call.1} parent=1 // pred_fallthru
      _
    // Predicated region
    $region6: #{tpu_custom_call.1} parent=1 // pred_check
      _
    $region7: #{tpu_custom_call.1} parent=1 // pred_check_branch
      %30 = sbr.rel (0) target = $region9
    $region8: #{tpu_custom_call.1} parent=1 // pred_region
      _
    $region9: #{tpu_custom_call.1} parent=1 // pred_fallthru
      _
    // Predicated region
    $region10: #{tpu_custom_call.1} parent=1 // pred_check
      _
    $region11: #{tpu_custom_call.1} parent=1 // pred_check_branch
      %32 = sbr.rel (0) target = $region13
    $region12: #{tpu_custom_call.1} parent=1 // pred_region
      %s34 = ssub.s32 16, 16
      %35 = vsyncadd [#allocation7], %s34
      %s37 = sshll.u32 [#allocation6], 4
      %s38 = int_to_ptr.vmem [resolvable:$true] %s37
      %40 = dma.hbm_to_vmem [thread:$0]  %s2, 16, %s38, [#allocation7]
    $region13: #{tpu_custom_call.1} parent=1 // pred_fallthru
      _
    // Predicated region
    $region14: #{tpu_custom_call.1} parent=1 // pred_check
      _
    $region15: #{tpu_custom_call.1} parent=1 // pred_check_branch
      %42 = sbr.rel (0) target = $region17
    $region16: #{tpu_custom_call.1} parent=1 // pred_region
      _
    $region17: #{tpu_custom_call.1} parent=1 // pred_fallthru
      _
    // Predicated region
    $region18: #{tpu_custom_call.1} parent=1 // pred_check
      _
    $region19: #{tpu_custom_call.1} parent=1 // pred_check_branch
      %44 = sbr.rel (0) target = $region21
    $region20: #{tpu_custom_call.1} parent=1 // pred_region
      _
    $region21: #{tpu_custom_call.1} parent=1 // pred_fallthru
      _
    // Predicated region
    $region22: #{tpu_custom_call.1} parent=1 // pred_check
      _
    $region23: #{tpu_custom_call.1} parent=1 // pred_check_branch
      %46 = sbr.rel (0) target = $region25
    $region24: #{tpu_custom_call.1} parent=1 // pred_region
      _
    $region25: #{tpu_custom_call.1} parent=1 // pred_fallthru
      _
    // Predicated region
    $region26: #{tpu_custom_call.1} parent=1 // pred_check
      _
    $region27: #{tpu_custom_call.1} parent=1 // pred_check_branch
      %48 = sbr.rel (0) target = $region29
    $region28: #{tpu_custom_call.1} parent=1 // pred_region
      _
    $region29: #{tpu_custom_call.1} parent=1 // pred_fallthru
      _
    // Predicated region
    $region30: #{tpu_custom_call.1} parent=1 // pred_check
      _
    $region31: #{tpu_custom_call.1} parent=1 // pred_check_branch
      %50 = sbr.rel (0) target = $region33
    $region32: #{tpu_custom_call.1} parent=1 // pred_region
      %s52 = ssub.s32 16, 16
      %53 = vsyncadd [#allocation5], %s52
      %s55 = sshll.u32 %s7, 4
      %s56 = int_to_ptr.vmem [resolvable:$true] %s55
      %58 = dma.vmem_to_smem %s56, 16, [#allocation8], [#allocation5]
    $region33: #{tpu_custom_call.1} parent=1 // pred_fallthru
      _
    // Predicated region
    $region34: #{tpu_custom_call.1} parent=1 // pred_check
      _
    $region35: #{tpu_custom_call.1} parent=1 // pred_check_branch
      %60 = sbr.rel (0) target = $region37
    $region36: #{tpu_custom_call.1} parent=1 // pred_region
      %61 = dma.done [#allocation3], 256
    $region37: #{tpu_custom_call.1} parent=1 // pred_fallthru
      _
    // Predicated region
    $region38: #{tpu_custom_call.1} parent=1 // pred_check
      _
    $region39: #{tpu_custom_call.1} parent=1 // pred_check_branch
      %63 = sbr.rel (0) target = $region41
    $region40: #{tpu_custom_call.1} parent=1 // pred_region
      %64 = dma.done [#allocation7], 16
    $region41: #{tpu_custom_call.1} parent=1 // pred_fallthru
      _
    // Predicated region
    $region42: #{tpu_custom_call.1} parent=1 // pred_check
      _
    $region43: #{tpu_custom_call.1} parent=1 // pred_check_branch
      %66 = sbr.rel (0) target = $region45
    $region44: #{tpu_custom_call.1} parent=1 // pred_region
      %67 = dma.done [#allocation5], 16
    $region45: #{tpu_custom_call.1} parent=1 // pred_fallthru
      _
    %68 = sfence
    %v69 = vld [vmem:[%s1] sm:$0xf]
    %v70 = vld [vmem:[%s3] sm:$0xf]
    %v71 = vld [vmem:[#allocation6] sm:$0x1]
    %v72 = vld [vmem:[%s4] sm:$0xf]
    %v73 = vld [vmem:[%s5] sm:$0x3]
    %v74 = vld [vmem:[%s6] sm:$0x3]
    %s75 = sld [smem:[#allocation8]]
    %s76 = sld [smem:[#allocation8 + $0x1]]
    %s77 = sld [smem:[#allocation8 + $0x2]]
    %s78 = sld [smem:[#allocation8 + $0x3]]
    %s79 = sld [smem:[#allocation8 + $0x4]]
    %s80 = sld [smem:[#allocation8 + $0x5]]
    %s81 = sld [smem:[#allocation8 + $0x6]]
    %s82 = sld [smem:[#allocation8 + $0x7]]
    %s83 = sld [smem:[#allocation8 + $0x8]]
    %s84 = sld [smem:[#allocation8 + $0x9]]
    %s85 = sld [smem:[#allocation8 + $0xa]]
    %s86 = sld [smem:[#allocation8 + $0xb]]
    %s87 = sld [smem:[#allocation8 + $0xc]]
    %s88 = sld [smem:[#allocation8 + $0xd]]
    %s89 = sld [smem:[#allocation8 + $0xe]]
    %s90 = sld [smem:[#allocation8 + $0xf]]
    %s91 = sld [smem:[#allocation8 + $0x10]]
    %s92 = sld [smem:[#allocation8 + $0x11]]
    %s93 = sld [smem:[#allocation8 + $0x12]]
    %s94 = sld [smem:[#allocation8 + $0x13]]
    %s95 = sld [smem:[#allocation8 + $0x14]]
    %s96 = sld [smem:[#allocation8 + $0x15]]
    %s97 = sld [smem:[#allocation8 + $0x16]]
    %s98 = sld [smem:[#allocation8 + $0x17]]
    %s99 = sld [smem:[#allocation8 + $0x18]]
    %s100 = sld [smem:[#allocation8 + $0x19]]
    %s101 = sld [smem:[#allocation8 + $0x1a]]
    %s102 = sld [smem:[#allocation8 + $0x1b]]
    %s103 = sld [smem:[#allocation8 + $0x1c]]
    %s104 = sld [smem:[#allocation8 + $0x1d]]
    %s105 = sld [smem:[#allocation8 + $0x1e]]
    %s106 = sld [smem:[#allocation8 + $0x1f]]
    %s107 = sld [smem:[#allocation8 + $0x20]]
    %s108 = sld [smem:[#allocation8 + $0x21]]
    %s109 = sld [smem:[#allocation8 + $0x22]]
    %s110 = sld [smem:[#allocation8 + $0x23]]
    %s111 = sld [smem:[#allocation8 + $0x24]]
    %s112 = sld [smem:[#allocation8 + $0x25]]
    %s113 = sld [smem:[#allocation8 + $0x26]]
    %s114 = sld [smem:[#allocation8 + $0x27]]
    %s115 = sld [smem:[#allocation8 + $0x28]]
    %s116 = sld [smem:[#allocation8 + $0x29]]
    %s117 = sld [smem:[#allocation8 + $0x2a]]
    %s118 = sld [smem:[#allocation8 + $0x2b]]
    %s119 = sld [smem:[#allocation8 + $0x2c]]
    %s120 = sld [smem:[#allocation8 + $0x2d]]
    %s121 = sld [smem:[#allocation8 + $0x2e]]
    %s122 = sld [smem:[#allocation8 + $0x2f]]
    %s123 = sld [smem:[#allocation8 + $0x30]]
    %s124 = sld [smem:[#allocation8 + $0x31]]
    %s125 = sld [smem:[#allocation8 + $0x32]]
    %s126 = sld [smem:[#allocation8 + $0x33]]
    %s127 = sld [smem:[#allocation8 + $0x34]]
    %s128 = sld [smem:[#allocation8 + $0x35]]
    %s129 = sld [smem:[#allocation8 + $0x36]]
    %s130 = sld [smem:[#allocation8 + $0x37]]
    %s131 = sld [smem:[#allocation8 + $0x38]]
    %s132 = sld [smem:[#allocation8 + $0x39]]
    %s133 = sld [smem:[#allocation8 + $0x3a]]
    %s134 = sld [smem:[#allocation8 + $0x3b]]
    %s135 = sld [smem:[#allocation8 + $0x3c]]
    %s136 = sld [smem:[#allocation8 + $0x3d]]
    %s137 = sld [smem:[#allocation8 + $0x3e]]
    %s138 = sld [smem:[#allocation8 + $0x3f]]
    %s139 = sld [smem:[#allocation8 + $0x40]]
    %s140 = sld [smem:[#allocation8 + $0x41]]
    %s141 = sld [smem:[#allocation8 + $0x42]]
    %s142 = sld [smem:[#allocation8 + $0x43]]
    %s143 = sld [smem:[#allocation8 + $0x44]]
    %s144 = sld [smem:[#allocation8 + $0x45]]
    %s145 = sld [smem:[#allocation8 + $0x46]]
    %s146 = sld [smem:[#allocation8 + $0x47]]
    %s147 = sld [smem:[#allocation8 + $0x48]]
    %s148 = sld [smem:[#allocation8 + $0x49]]
    %s149 = sld [smem:[#allocation8 + $0x4a]]
    %s150 = sld [smem:[#allocation8 + $0x4b]]
    %s151 = sld [smem:[#allocation8 + $0x4c]]
    %s152 = sld [smem:[#allocation8 + $0x4d]]
    %s153 = sld [smem:[#allocation8 + $0x4e]]
    %s154 = sld [smem:[#allocation8 + $0x4f]]
    %s155 = sld [smem:[#allocation8 + $0x50]]
    %s156 = sld [smem:[#allocation8 + $0x51]]
    %s157 = sld [smem:[#allocation8 + $0x52]]
    %s158 = sld [smem:[#allocation8 + $0x53]]
    %s159 = sld [smem:[#allocation8 + $0x54]]
    %s160 = sld [smem:[#allocation8 + $0x55]]
    %s161 = sld [smem:[#allocation8 + $0x56]]
    %s162 = sld [smem:[#allocation8 + $0x57]]
    %s163 = sld [smem:[#allocation8 + $0x58]]
    %s164 = sld [smem:[#allocation8 + $0x59]]
    %s165 = sld [smem:[#allocation8 + $0x5a]]
    %s166 = sld [smem:[#allocation8 + $0x5b]]
    %s167 = sld [smem:[#allocation8 + $0x5c]]
    %s168 = sld [smem:[#allocation8 + $0x5d]]
    %s169 = sld [smem:[#allocation8 + $0x5e]]
    %s170 = sld [smem:[#allocation8 + $0x5f]]
    %s171 = sld [smem:[#allocation8 + $0x60]]
    %s172 = sld [smem:[#allocation8 + $0x61]]
    %v173 = vld [vmem:[#allocation2] sm:$0xff]
    %v175 = vcombine.high %v173, %v173
    %vm177 = vcmask 1043456
    %v178 = vsel %vm177, %v173, -inf
    %v179 = vsel %vm177, %v175, -inf
    %v180 = vmax.f32 %v178, %v179
    %181 = vmax.xlane.f32.xlu0 %v180
    %v182 = vpop.xlane.xlu0 %181
    %v183 = vsel %vm177, %v173, 0.0
    %v184 = vsel %vm177, %v175, 0.0
    %v185 = vadd.f32 %v183, %v184
    %186 = vadd.xlane.f32.xlu0 %v185
    %v187 = vpop.xlane.xlu0 %186
    %v188 = vmul.f32 %v187, 0.00390625
    %v189 = vmul.f32 %v69, %v182
    %vm190 = vcmask 27648
    %v191 = vsel %vm190, %v189, 0.0
    %v192 = vrot.slane %v191, 4
    %v193 = vadd.f32 %v191, %v192
    %v194 = vrot.slane %v193, 2
    %v195 = vadd.f32 %v193, %v194
    %v196 = vrot.slane %v195, 1
    %v197 = vadd.f32 %v195, %v196
    %v198 = vadd.f32 %v197, %v71
    %v199 = vmax.f32 %v198, 0.0
    %v200 = vmul.f32 %v69, %v188
    %v201 = vsel %vm190, %v200, 0.0
    %v202 = vrot.slane %v201, 4
    %v203 = vadd.f32 %v201, %v202
    %v204 = vrot.slane %v203, 2
    %v205 = vadd.f32 %v203, %v204
    %v206 = vrot.slane %v205, 1
    %v207 = vadd.f32 %v205, %v206
    %v208 = vadd.f32 %v207, %v71
    %v209 = vmax.f32 %v208, 0.0
    %v210 = vlaneseq
    %v211 = vshrl.u32 %v210, 7
    %v212 = vsub.s32 0, %v211
    %v213 = vrot.slane %v199, %v212
    %v214 = vmul.f32 %v70, %v213
    %v215 = vsel %vm190, %v214, 0.0
    %216 = vadd.xlane.f32.xlu0 %v215
    %v217 = vpop.xlane.xlu0 %216
    %v218 = vadd.f32 %v217, %v72
    %v219 = vlaneseq
    %v220 = vshrl.u32 %v219, 7
    %v221 = vsub.s32 0, %v220
    %v222 = vrot.slane %v209, %v221
    %v223 = vmul.f32 %v70, %v222
    %v224 = vsel %vm190, %v223, 0.0
    %225 = vadd.xlane.f32.xlu0 %v224
    %v226 = vpop.xlane.xlu0 %225
    %v227 = vadd.f32 %v226, %v72
    %v228 = vadd.f32 %v218, %v227
    %v229 = vxor.u32 %v228, 2147483648
    %v230 = vmul.f32 %v229, 1.442695
    %v231 = vpow.pop %v230
    %v232 = vadd.f32 %v231, 1.0
    %v233 = vrcp.pop %v232
    %v234 = vmul.f32 1.0, %v233
    %236 = vset.pattern.permute.xlu0 0
    %237 = vperm.xlu0 %236, %v234
    %v238 = vpop.permute.xlu0 %237
    %v240 = vunpack.c.l.s4 839922192
    %v241 = vunpack.c.0.s8 %v240
    %v242 = vlaneseq
    %v243 = vshrl.u32 %v242, 7
    %v244 = vsub.s32 %v241, %v243
    %v245 = vrot.slane %v238, %v244
    %v247 = vmul.f32 %v173, %v245
    %v249 = vcombine.high %v247, %v247
    %v251 = vsel %vm177, %v247, -inf
    %v252 = vrot.slane %v251, 4
    %v253 = vmax.f32 %v251, %v252
    %v254 = vrot.slane %v253, 2
    %v255 = vmax.f32 %v253, %v254
    %v256 = vrot.slane %v255, 1
    %v257 = vmax.f32 %v255, %v256
    %v258 = vsel %vm177, %v249, -inf
    %v259 = vrot.slane %v258, 4
    %v260 = vmax.f32 %v258, %v259
    %v261 = vrot.slane %v260, 2
    %v262 = vmax.f32 %v260, %v261
    %v263 = vrot.slane %v262, 1
    %v264 = vmax.f32 %v262, %v263
    %v265 = vsel %vm177, %v247, 0.0
    %v266 = vrot.slane %v265, 4
    %v267 = vadd.f32 %v265, %v266
    %v268 = vrot.slane %v267, 2
    %v269 = vadd.f32 %v267, %v268
    %v270 = vrot.slane %v269, 1
    %v271 = vadd.f32 %v269, %v270
    %v272 = vsel %vm177, %v249, 0.0
    %v273 = vrot.slane %v272, 4
    %v274 = vadd.f32 %v272, %v273
    %v275 = vrot.slane %v274, 2
    %v276 = vadd.f32 %v274, %v275
    %v277 = vrot.slane %v276, 1
    %v278 = vadd.f32 %v276, %v277
    %v279 = vmul.f32 %v271, 0.25
    %v280 = vmul.f32 %v278, 0.25
    %vm281 = vcmask 1040384
    %v282 = vsel %vm281, %v257, %v279
    %v283 = vsel %vm281, %v264, %v280
    %vm284 = vcmp.ge.s32.totalorder %v73, 3
    %vm285 = vcmp.lt.s32.totalorder %v73, 19
    %vm286 = vmand %vm284, %vm285
    %vm287 = vcmp.ge.s32.totalorder %v74, 3
    %vm288 = vmand %vm286, %vm287
    %vm289 = vcmp.lt.s32.totalorder %v74, 19
    %vm290 = vmand %vm288, %vm289
    %291 = vrot.lane.b32.xlu0 %v282, 51
    %v292 = vpop.permute.xlu0 %291
    %293 = vrot.lane.b32.xlu0 %v283, 51
    %v294 = vpop.permute.xlu0 %293
    %v295 = vlaneseq
    %v296 = vand.u32 %v295, 127
    %vm297 = vcmp.lt.s32.totalorder %v296, 51
    %v298 = vsel %vm297, %v292, %v294
    %v299 = vsel %vm297, %v294, %v292
    %v300 = vstv %s75
    %v301 = vmul.f32 %v300, %v299
    %v302 = vmul.f32 %v300, %v298
    %v303 = vstv %s124
    %v304 = vmul.f32 %v303, %v299
    %v305 = vmul.f32 %v303, %v298
    %v308 = vrot.slane %v304, 1
    %v309 = vrot.slane %v305, 1
    %v312 = vadd.f32 %v301, %v308
    %v313 = vadd.f32 %v302, %v309
    %v316 = vcombine.low %v312, %v313
    %v318 = vunpack.c.l.s4 1966171168
    %v319 = vunpack.c.0.s8 %v318
    %v320 = vlaneseq
    %v321 = vshrl.u32 %v320, 7
    %v322 = vsub.s32 %v319, %v321
    %v323 = vrot.slane %v316, %v322
    %v325 = vunpack.c.l.s4 1966171168
    %v326 = vunpack.c.0.s8 %v325
    %v327 = vlaneseq
    %v328 = vshrl.u32 %v327, 7
    %v329 = vsub.s32 %v326, %v328
    %v330 = vrot.slane %v323, %v329
    %v332 = vsel %vm290, %v330, 0.0
    %v333 = vadd.f32 %v332, 0.0
    %vm334 = vcmp.ge.s32.totalorder %v74, 2
    %vm335 = vmand %vm286, %vm334
    %vm336 = vcmp.lt.s32.totalorder %v74, 18
    %vm337 = vmand %vm335, %vm336
    %338 = vrot.lane.b32.xlu0 %v282, 50
    %v339 = vpop.permute.xlu0 %338
    %340 = vrot.lane.b32.xlu0 %v283, 50
    %v341 = vpop.permute.xlu0 %340
    %vm342 = vcmp.lt.s32.totalorder %v296, 50
    %v343 = vsel %vm342, %v339, %v341
    %v344 = vsel %vm342, %v341, %v339
    %v345 = vstv %s76
    %v346 = vmul.f32 %v345, %v344
    %v347 = vmul.f32 %v345, %v343
    %v348 = vstv %s125
    %v349 = vmul.f32 %v348, %v344
    %v350 = vmul.f32 %v348, %v343
    %v353 = vrot.slane %v349, 1
    %v354 = vrot.slane %v350, 1
    %v357 = vadd.f32 %v346, %v353
    %v358 = vadd.f32 %v347, %v354
    %v361 = vcombine.low %v357, %v358
    %v363 = vunpack.c.l.s4 1966171168
    %v364 = vunpack.c.0.s8 %v363
    %v365 = vlaneseq
    %v366 = vshrl.u32 %v365, 7
    %v367 = vsub.s32 %v364, %v366
    %v368 = vrot.slane %v361, %v367
    %v370 = vunpack.c.l.s4 1966171168
    %v371 = vunpack.c.0.s8 %v370
    %v372 = vlaneseq
    %v373 = vshrl.u32 %v372, 7
    %v374 = vsub.s32 %v371, %v373
    %v375 = vrot.slane %v368, %v374
    %v377 = vsel %vm337, %v375, 0.0
    %v378 = vadd.f32 %v333, %v377
    %vm379 = vcmp.ge.s32.totalorder %v74, 1
    %vm380 = vmand %vm286, %vm379
    %vm381 = vcmp.lt.s32.totalorder %v74, 17
    %vm382 = vmand %vm380, %vm381
    %383 = vrot.lane.b32.xlu0 %v282, 49
    %v384 = vpop.permute.xlu0 %383
    %385 = vrot.lane.b32.xlu0 %v283, 49
    %v386 = vpop.permute.xlu0 %385
    %vm387 = vcmp.lt.s32.totalorder %v296, 49
    %v388 = vsel %vm387, %v384, %v386
    %v389 = vsel %vm387, %v386, %v384
    %v390 = vstv %s77
    %v391 = vmul.f32 %v390, %v389
    %v392 = vmul.f32 %v390, %v388
    %v393 = vstv %s126
    %v394 = vmul.f32 %v393, %v389
    %v395 = vmul.f32 %v393, %v388
    %v398 = vrot.slane %v394, 1
    %v399 = vrot.slane %v395, 1
    %v402 = vadd.f32 %v391, %v398
    %v403 = vadd.f32 %v392, %v399
    %v406 = vcombine.low %v402, %v403
    %v408 = vunpack.c.l.s4 1966171168
    %v409 = vunpack.c.0.s8 %v408
    %v410 = vlaneseq
    %v411 = vshrl.u32 %v410, 7
    %v412 = vsub.s32 %v409, %v411
    %v413 = vrot.slane %v406, %v412
    %v415 = vunpack.c.l.s4 1966171168
    %v416 = vunpack.c.0.s8 %v415
    %v417 = vlaneseq
    %v418 = vshrl.u32 %v417, 7
    %v419 = vsub.s32 %v416, %v418
    %v420 = vrot.slane %v413, %v419
    %v422 = vsel %vm382, %v420, 0.0
    %v423 = vadd.f32 %v378, %v422
    %vm424 = vcmp.ge.s32.totalorder %v74, 0
    %vm425 = vmand %vm286, %vm424
    %vm426 = vcmp.lt.s32.totalorder %v74, 16
    %vm427 = vmand %vm425, %vm426
    %428 = vrot.lane.b32.xlu0 %v282, 48
    %v429 = vpop.permute.xlu0 %428
    %430 = vrot.lane.b32.xlu0 %v283, 48
    %v431 = vpop.permute.xlu0 %430
    %vm432 = vcmp.lt.s32.totalorder %v296, 48
    %v433 = vsel %vm432, %v429, %v431
    %v434 = vsel %vm432, %v431, %v429
    %v435 = vstv %s78
    %v436 = vmul.f32 %v435, %v434
    %v437 = vmul.f32 %v435, %v433
    %v438 = vstv %s127
    %v439 = vmul.f32 %v438, %v434
    %v440 = vmul.f32 %v438, %v433
    %v443 = vrot.slane %v439, 1
    %v444 = vrot.slane %v440, 1
    %v447 = vadd.f32 %v436, %v443
    %v448 = vadd.f32 %v437, %v444
    %v451 = vcombine.low %v447, %v448
    %v453 = vunpack.c.l.s4 1966171168
    %v454 = vunpack.c.0.s8 %v453
    %v455 = vlaneseq
    %v456 = vshrl.u32 %v455, 7
    %v457 = vsub.s32 %v454, %v456
    %v458 = vrot.slane %v451, %v457
    %v460 = vunpack.c.l.s4 1966171168
    %v461 = vunpack.c.0.s8 %v460
    %v462 = vlaneseq
    %v463 = vshrl.u32 %v462, 7
    %v464 = vsub.s32 %v461, %v463
    %v465 = vrot.slane %v458, %v464
    %v467 = vsel %vm427, %v465, 0.0
    %v468 = vadd.f32 %v423, %v467
    %vm469 = vcmp.ge.s32.totalorder %v74, 4294967295
    %vm470 = vmand %vm286, %vm469
    %vm471 = vcmp.lt.s32.totalorder %v74, 15
    %vm472 = vmand %vm470, %vm471
    %473 = vrot.lane.b32.xlu0 %v282, 47
    %v474 = vpop.permute.xlu0 %473
    %475 = vrot.lane.b32.xlu0 %v283, 47
    %v476 = vpop.permute.xlu0 %475
    %vm477 = vcmp.lt.s32.totalorder %v296, 47
    %v478 = vsel %vm477, %v474, %v476
    %v479 = vsel %vm477, %v476, %v474
    %v480 = vstv %s79
    %v481 = vmul.f32 %v480, %v479
    %v482 = vmul.f32 %v480, %v478
    %v483 = vstv %s128
    %v484 = vmul.f32 %v483, %v479
    %v485 = vmul.f32 %v483, %v478
    %v488 = vrot.slane %v484, 1
    %v489 = vrot.slane %v485, 1
    %v492 = vadd.f32 %v481, %v488
    %v493 = vadd.f32 %v482, %v489
    %v496 = vcombine.low %v492, %v493
    %v498 = vunpack.c.l.s4 1966171168
    %v499 = vunpack.c.0.s8 %v498
    %v500 = vlaneseq
    %v501 = vshrl.u32 %v500, 7
    %v502 = vsub.s32 %v499, %v501
    %v503 = vrot.slane %v496, %v502
    %v505 = vunpack.c.l.s4 1966171168
    %v506 = vunpack.c.0.s8 %v505
    %v507 = vlaneseq
    %v508 = vshrl.u32 %v507, 7
    %v509 = vsub.s32 %v506, %v508
    %v510 = vrot.slane %v503, %v509
    %v512 = vsel %vm472, %v510, 0.0
    %v513 = vadd.f32 %v468, %v512
    %vm514 = vcmp.ge.s32.totalorder %v74, 4294967294
    %vm515 = vmand %vm286, %vm514
    %vm516 = vcmp.lt.s32.totalorder %v74, 14
    %vm517 = vmand %vm515, %vm516
    %518 = vrot.lane.b32.xlu0 %v282, 46
    %v519 = vpop.permute.xlu0 %518
    %520 = vrot.lane.b32.xlu0 %v283, 46
    %v521 = vpop.permute.xlu0 %520
    %vm522 = vcmp.lt.s32.totalorder %v296, 46
    %v523 = vsel %vm522, %v519, %v521
    %v524 = vsel %vm522, %v521, %v519
    %v525 = vstv %s80
    %v526 = vmul.f32 %v525, %v524
    %v527 = vmul.f32 %v525, %v523
    %v528 = vstv %s129
    %v529 = vmul.f32 %v528, %v524
    %v530 = vmul.f32 %v528, %v523
    %v533 = vrot.slane %v529, 1
    %v534 = vrot.slane %v530, 1
    %v537 = vadd.f32 %v526, %v533
    %v538 = vadd.f32 %v527, %v534
    %v541 = vcombine.low %v537, %v538
    %v543 = vunpack.c.l.s4 1966171168
    %v544 = vunpack.c.0.s8 %v543
    %v545 = vlaneseq
    %v546 = vshrl.u32 %v545, 7
    %v547 = vsub.s32 %v544, %v546
    %v548 = vrot.slane %v541, %v547
    %v550 = vunpack.c.l.s4 1966171168
    %v551 = vunpack.c.0.s8 %v550
    %v552 = vlaneseq
    %v553 = vshrl.u32 %v552, 7
    %v554 = vsub.s32 %v551, %v553
    %v555 = vrot.slane %v548, %v554
    %v557 = vsel %vm517, %v555, 0.0
    %v558 = vadd.f32 %v513, %v557
    %vm559 = vcmp.ge.s32.totalorder %v74, 4294967293
    %vm560 = vmand %vm286, %vm559
    %vm561 = vcmp.lt.s32.totalorder %v74, 13
    %vm562 = vmand %vm560, %vm561
    %563 = vrot.lane.b32.xlu0 %v282, 45
    %v564 = vpop.permute.xlu0 %563
    %565 = vrot.lane.b32.xlu0 %v283, 45
    %v566 = vpop.permute.xlu0 %565
    %vm567 = vcmp.lt.s32.totalorder %v296, 45
    %v568 = vsel %vm567, %v564, %v566
    %v569 = vsel %vm567, %v566, %v564
    %v570 = vstv %s81
    %v571 = vmul.f32 %v570, %v569
    %v572 = vmul.f32 %v570, %v568
    %v573 = vstv %s130
    %v574 = vmul.f32 %v573, %v569
    %v575 = vmul.f32 %v573, %v568
    %v578 = vrot.slane %v574, 1
    %v579 = vrot.slane %v575, 1
    %v582 = vadd.f32 %v571, %v578
    %v583 = vadd.f32 %v572, %v579
    %v586 = vcombine.low %v582, %v583
    %v588 = vunpack.c.l.s4 1966171168
    %v589 = vunpack.c.0.s8 %v588
    %v590 = vlaneseq
    %v591 = vshrl.u32 %v590, 7
    %v592 = vsub.s32 %v589, %v591
    %v593 = vrot.slane %v586, %v592
    %v595 = vunpack.c.l.s4 1966171168
    %v596 = vunpack.c.0.s8 %v595
    %v597 = vlaneseq
    %v598 = vshrl.u32 %v597, 7
    %v599 = vsub.s32 %v596, %v598
    %v600 = vrot.slane %v593, %v599
    %v602 = vsel %vm562, %v600, 0.0
    %v603 = vadd.f32 %v558, %v602
    %vm604 = vcmp.ge.s32.totalorder %v73, 2
    %vm605 = vcmp.lt.s32.totalorder %v73, 18
    %vm606 = vmand %vm604, %vm605
    %vm607 = vmand %vm606, %vm287
    %vm608 = vmand %vm607, %vm289
    %609 = vrot.lane.b32.xlu0 %v282, 35
    %v610 = vpop.permute.xlu0 %609
    %611 = vrot.lane.b32.xlu0 %v283, 35
    %v612 = vpop.permute.xlu0 %611
    %vm613 = vcmp.lt.s32.totalorder %v296, 35
    %v614 = vsel %vm613, %v610, %v612
    %v615 = vsel %vm613, %v612, %v610
    %v616 = vstv %s82
    %v617 = vmul.f32 %v616, %v615
    %v618 = vmul.f32 %v616, %v614
    %v619 = vstv %s131
    %v620 = vmul.f32 %v619, %v615
    %v621 = vmul.f32 %v619, %v614
    %v624 = vrot.slane %v620, 1
    %v625 = vrot.slane %v621, 1
    %v628 = vadd.f32 %v617, %v624
    %v629 = vadd.f32 %v618, %v625
    %v632 = vcombine.low %v628, %v629
    %v634 = vunpack.c.l.s4 1966171168
    %v635 = vunpack.c.0.s8 %v634
    %v636 = vlaneseq
    %v637 = vshrl.u32 %v636, 7
    %v638 = vsub.s32 %v635, %v637
    %v639 = vrot.slane %v632, %v638
    %v641 = vunpack.c.l.s4 1966171168
    %v642 = vunpack.c.0.s8 %v641
    %v643 = vlaneseq
    %v644 = vshrl.u32 %v643, 7
    %v645 = vsub.s32 %v642, %v644
    %v646 = vrot.slane %v639, %v645
    %v648 = vsel %vm608, %v646, 0.0
    %v649 = vadd.f32 %v603, %v648
    %vm650 = vmand %vm606, %vm334
    %vm651 = vmand %vm650, %vm336
    %652 = vrot.lane.b32.xlu0 %v282, 34
    %v653 = vpop.permute.xlu0 %652
    %654 = vrot.lane.b32.xlu0 %v283, 34
    %v655 = vpop.permute.xlu0 %654
    %vm656 = vcmp.lt.s32.totalorder %v296, 34
    %v657 = vsel %vm656, %v653, %v655
    %v658 = vsel %vm656, %v655, %v653
    %v659 = vstv %s83
    %v660 = vmul.f32 %v659, %v658
    %v661 = vmul.f32 %v659, %v657
    %v662 = vstv %s132
    %v663 = vmul.f32 %v662, %v658
    %v664 = vmul.f32 %v662, %v657
    %v667 = vrot.slane %v663, 1
    %v668 = vrot.slane %v664, 1
    %v671 = vadd.f32 %v660, %v667
    %v672 = vadd.f32 %v661, %v668
    %v675 = vcombine.low %v671, %v672
    %v677 = vunpack.c.l.s4 1966171168
    %v678 = vunpack.c.0.s8 %v677
    %v679 = vlaneseq
    %v680 = vshrl.u32 %v679, 7
    %v681 = vsub.s32 %v678, %v680
    %v682 = vrot.slane %v675, %v681
    %v684 = vunpack.c.l.s4 1966171168
    %v685 = vunpack.c.0.s8 %v684
    %v686 = vlaneseq
    %v687 = vshrl.u32 %v686, 7
    %v688 = vsub.s32 %v685, %v687
    %v689 = vrot.slane %v682, %v688
    %v691 = vsel %vm651, %v689, 0.0
    %v692 = vadd.f32 %v649, %v691
    %vm693 = vmand %vm606, %vm379
    %vm694 = vmand %vm693, %vm381
    %695 = vrot.lane.b32.xlu0 %v282, 33
    %v696 = vpop.permute.xlu0 %695
    %697 = vrot.lane.b32.xlu0 %v283, 33
    %v698 = vpop.permute.xlu0 %697
    %vm699 = vcmp.lt.s32.totalorder %v296, 33
    %v700 = vsel %vm699, %v696, %v698
    %v701 = vsel %vm699, %v698, %v696
    %v702 = vstv %s84
    %v703 = vmul.f32 %v702, %v701
    %v704 = vmul.f32 %v702, %v700
    %v705 = vstv %s133
    %v706 = vmul.f32 %v705, %v701
    %v707 = vmul.f32 %v705, %v700
    %v710 = vrot.slane %v706, 1
    %v711 = vrot.slane %v707, 1
    %v714 = vadd.f32 %v703, %v710
    %v715 = vadd.f32 %v704, %v711
    %v718 = vcombine.low %v714, %v715
    %v720 = vunpack.c.l.s4 1966171168
    %v721 = vunpack.c.0.s8 %v720
    %v722 = vlaneseq
    %v723 = vshrl.u32 %v722, 7
    %v724 = vsub.s32 %v721, %v723
    %v725 = vrot.slane %v718, %v724
    %v727 = vunpack.c.l.s4 1966171168
    %v728 = vunpack.c.0.s8 %v727
    %v729 = vlaneseq
    %v730 = vshrl.u32 %v729, 7
    %v731 = vsub.s32 %v728, %v730
    %v732 = vrot.slane %v725, %v731
    %v734 = vsel %vm694, %v732, 0.0
    %v735 = vadd.f32 %v692, %v734
    %vm736 = vmand %vm606, %vm424
    %vm737 = vmand %vm736, %vm426
    %738 = vrot.lane.b32.xlu0 %v282, 32
    %v739 = vpop.permute.xlu0 %738
    %740 = vrot.lane.b32.xlu0 %v283, 32
    %v741 = vpop.permute.xlu0 %740
    %vm742 = vcmp.lt.s32.totalorder %v296, 32
    %v743 = vsel %vm742, %v739, %v741
    %v744 = vsel %vm742, %v741, %v739
    %v745 = vstv %s85
    %v746 = vmul.f32 %v745, %v744
    %v747 = vmul.f32 %v745, %v743
    %v748 = vstv %s134
    %v749 = vmul.f32 %v748, %v744
    %v750 = vmul.f32 %v748, %v743
    %v753 = vrot.slane %v749, 1
    %v754 = vrot.slane %v750, 1
    %v757 = vadd.f32 %v746, %v753
    %v758 = vadd.f32 %v747, %v754
    %v761 = vcombine.low %v757, %v758
    %v763 = vunpack.c.l.s4 1966171168
    %v764 = vunpack.c.0.s8 %v763
    %v765 = vlaneseq
    %v766 = vshrl.u32 %v765, 7
    %v767 = vsub.s32 %v764, %v766
    %v768 = vrot.slane %v761, %v767
    %v770 = vunpack.c.l.s4 1966171168
    %v771 = vunpack.c.0.s8 %v770
    %v772 = vlaneseq
    %v773 = vshrl.u32 %v772, 7
    %v774 = vsub.s32 %v771, %v773
    %v775 = vrot.slane %v768, %v774
    %v777 = vsel %vm737, %v775, 0.0
    %v778 = vadd.f32 %v735, %v777
    %vm779 = vmand %vm606, %vm469
    %vm780 = vmand %vm779, %vm471
    %781 = vrot.lane.b32.xlu0 %v282, 31
    %v782 = vpop.permute.xlu0 %781
    %783 = vrot.lane.b32.xlu0 %v283, 31
    %v784 = vpop.permute.xlu0 %783
    %vm785 = vcmp.lt.s32.totalorder %v296, 31
    %v786 = vsel %vm785, %v782, %v784
    %v787 = vsel %vm785, %v784, %v782
    %v788 = vstv %s86
    %v789 = vmul.f32 %v788, %v787
    %v790 = vmul.f32 %v788, %v786
    %v791 = vstv %s135
    %v792 = vmul.f32 %v791, %v787
    %v793 = vmul.f32 %v791, %v786
    %v796 = vrot.slane %v792, 1
    %v797 = vrot.slane %v793, 1
    %v800 = vadd.f32 %v789, %v796
    %v801 = vadd.f32 %v790, %v797
    %v804 = vcombine.low %v800, %v801
    %v806 = vunpack.c.l.s4 1966171168
    %v807 = vunpack.c.0.s8 %v806
    %v808 = vlaneseq
    %v809 = vshrl.u32 %v808, 7
    %v810 = vsub.s32 %v807, %v809
    %v811 = vrot.slane %v804, %v810
    %v813 = vunpack.c.l.s4 1966171168
    %v814 = vunpack.c.0.s8 %v813
    %v815 = vlaneseq
    %v816 = vshrl.u32 %v815, 7
    %v817 = vsub.s32 %v814, %v816
    %v818 = vrot.slane %v811, %v817
    %v820 = vsel %vm780, %v818, 0.0
    %v821 = vadd.f32 %v778, %v820
    %vm822 = vmand %vm606, %vm514
    %vm823 = vmand %vm822, %vm516
    %824 = vrot.lane.b32.xlu0 %v282, 30
    %v825 = vpop.permute.xlu0 %824
    %826 = vrot.lane.b32.xlu0 %v283, 30
    %v827 = vpop.permute.xlu0 %826
    %vm828 = vcmp.lt.s32.totalorder %v296, 30
    %v829 = vsel %vm828, %v825, %v827
    %v830 = vsel %vm828, %v827, %v825
    %v831 = vstv %s87
    %v832 = vmul.f32 %v831, %v830
    %v833 = vmul.f32 %v831, %v829
    %v834 = vstv %s136
    %v835 = vmul.f32 %v834, %v830
    %v836 = vmul.f32 %v834, %v829
    %v839 = vrot.slane %v835, 1
    %v840 = vrot.slane %v836, 1
    %v843 = vadd.f32 %v832, %v839
    %v844 = vadd.f32 %v833, %v840
    %v847 = vcombine.low %v843, %v844
    %v849 = vunpack.c.l.s4 1966171168
    %v850 = vunpack.c.0.s8 %v849
    %v851 = vlaneseq
    %v852 = vshrl.u32 %v851, 7
    %v853 = vsub.s32 %v850, %v852
    %v854 = vrot.slane %v847, %v853
    %v856 = vunpack.c.l.s4 1966171168
    %v857 = vunpack.c.0.s8 %v856
    %v858 = vlaneseq
    %v859 = vshrl.u32 %v858, 7
    %v860 = vsub.s32 %v857, %v859
    %v861 = vrot.slane %v854, %v860
    %v863 = vsel %vm823, %v861, 0.0
    %v864 = vadd.f32 %v821, %v863
    %vm865 = vmand %vm606, %vm559
    %vm866 = vmand %vm865, %vm561
    %867 = vrot.lane.b32.xlu0 %v282, 29
    %v868 = vpop.permute.xlu0 %867
    %869 = vrot.lane.b32.xlu0 %v283, 29
    %v870 = vpop.permute.xlu0 %869
    %vm871 = vcmp.lt.s32.totalorder %v296, 29
    %v872 = vsel %vm871, %v868, %v870
    %v873 = vsel %vm871, %v870, %v868
    %v874 = vstv %s88
    %v875 = vmul.f32 %v874, %v873
    %v876 = vmul.f32 %v874, %v872
    %v877 = vstv %s137
    %v878 = vmul.f32 %v877, %v873
    %v879 = vmul.f32 %v877, %v872
    %v882 = vrot.slane %v878, 1
    %v883 = vrot.slane %v879, 1
    %v886 = vadd.f32 %v875, %v882
    %v887 = vadd.f32 %v876, %v883
    %v890 = vcombine.low %v886, %v887
    %v892 = vunpack.c.l.s4 1966171168
    %v893 = vunpack.c.0.s8 %v892
    %v894 = vlaneseq
    %v895 = vshrl.u32 %v894, 7
    %v896 = vsub.s32 %v893, %v895
    %v897 = vrot.slane %v890, %v896
    %v899 = vunpack.c.l.s4 1966171168
    %v900 = vunpack.c.0.s8 %v899
    %v901 = vlaneseq
    %v902 = vshrl.u32 %v901, 7
    %v903 = vsub.s32 %v900, %v902
    %v904 = vrot.slane %v897, %v903
    %v906 = vsel %vm866, %v904, 0.0
    %v907 = vadd.f32 %v864, %v906
    %vm908 = vcmp.ge.s32.totalorder %v73, 1
    %vm909 = vcmp.lt.s32.totalorder %v73, 17
    %vm910 = vmand %vm908, %vm909
    %vm911 = vmand %vm910, %vm287
    %vm912 = vmand %vm911, %vm289
    %913 = vrot.lane.b32.xlu0 %v282, 19
    %v914 = vpop.permute.xlu0 %913
    %915 = vrot.lane.b32.xlu0 %v283, 19
    %v916 = vpop.permute.xlu0 %915
    %vm917 = vcmp.lt.s32.totalorder %v296, 19
    %v918 = vsel %vm917, %v914, %v916
    %v919 = vsel %vm917, %v916, %v914
    %v920 = vstv %s89
    %v921 = vmul.f32 %v920, %v919
    %v922 = vmul.f32 %v920, %v918
    %v923 = vstv %s138
    %v924 = vmul.f32 %v923, %v919
    %v925 = vmul.f32 %v923, %v918
    %v928 = vrot.slane %v924, 1
    %v929 = vrot.slane %v925, 1
    %v932 = vadd.f32 %v921, %v928
    %v933 = vadd.f32 %v922, %v929
    %v936 = vcombine.low %v932, %v933
    %v938 = vunpack.c.l.s4 1966171168
    %v939 = vunpack.c.0.s8 %v938
    %v940 = vlaneseq
    %v941 = vshrl.u32 %v940, 7
    %v942 = vsub.s32 %v939, %v941
    %v943 = vrot.slane %v936, %v942
    %v945 = vunpack.c.l.s4 1966171168
    %v946 = vunpack.c.0.s8 %v945
    %v947 = vlaneseq
    %v948 = vshrl.u32 %v947, 7
    %v949 = vsub.s32 %v946, %v948
    %v950 = vrot.slane %v943, %v949
    %v952 = vsel %vm912, %v950, 0.0
    %v953 = vadd.f32 %v907, %v952
    %vm954 = vmand %vm910, %vm334
    %vm955 = vmand %vm954, %vm336
    %956 = vrot.lane.b32.xlu0 %v282, 18
    %v957 = vpop.permute.xlu0 %956
    %958 = vrot.lane.b32.xlu0 %v283, 18
    %v959 = vpop.permute.xlu0 %958
    %vm960 = vcmp.lt.s32.totalorder %v296, 18
    %v961 = vsel %vm960, %v957, %v959
    %v962 = vsel %vm960, %v959, %v957
    %v963 = vstv %s90
    %v964 = vmul.f32 %v963, %v962
    %v965 = vmul.f32 %v963, %v961
    %v966 = vstv %s139
    %v967 = vmul.f32 %v966, %v962
    %v968 = vmul.f32 %v966, %v961
    %v971 = vrot.slane %v967, 1
    %v972 = vrot.slane %v968, 1
    %v975 = vadd.f32 %v964, %v971
    %v976 = vadd.f32 %v965, %v972
    %v979 = vcombine.low %v975, %v976
    %v981 = vunpack.c.l.s4 1966171168
    %v982 = vunpack.c.0.s8 %v981
    %v983 = vlaneseq
    %v984 = vshrl.u32 %v983, 7
    %v985 = vsub.s32 %v982, %v984
    %v986 = vrot.slane %v979, %v985
    %v988 = vunpack.c.l.s4 1966171168
    %v989 = vunpack.c.0.s8 %v988
    %v990 = vlaneseq
    %v991 = vshrl.u32 %v990, 7
    %v992 = vsub.s32 %v989, %v991
    %v993 = vrot.slane %v986, %v992
    %v995 = vsel %vm955, %v993, 0.0
    %v996 = vadd.f32 %v953, %v995
    %vm997 = vmand %vm910, %vm379
    %vm998 = vmand %vm997, %vm381
    %999 = vrot.lane.b32.xlu0 %v282, 17
    %v1000 = vpop.permute.xlu0 %999
    %1001 = vrot.lane.b32.xlu0 %v283, 17
    %v1002 = vpop.permute.xlu0 %1001
    %vm1003 = vcmp.lt.s32.totalorder %v296, 17
    %v1004 = vsel %vm1003, %v1000, %v1002
    %v1005 = vsel %vm1003, %v1002, %v1000
    %v1006 = vstv %s91
    %v1007 = vmul.f32 %v1006, %v1005
    %v1008 = vmul.f32 %v1006, %v1004
    %v1009 = vstv %s140
    %v1010 = vmul.f32 %v1009, %v1005
    %v1011 = vmul.f32 %v1009, %v1004
    %v1014 = vrot.slane %v1010, 1
    %v1015 = vrot.slane %v1011, 1
    %v1018 = vadd.f32 %v1007, %v1014
    %v1019 = vadd.f32 %v1008, %v1015
    %v1022 = vcombine.low %v1018, %v1019
    %v1024 = vunpack.c.l.s4 1966171168
    %v1025 = vunpack.c.0.s8 %v1024
    %v1026 = vlaneseq
    %v1027 = vshrl.u32 %v1026, 7
    %v1028 = vsub.s32 %v1025, %v1027
    %v1029 = vrot.slane %v1022, %v1028
    %v1031 = vunpack.c.l.s4 1966171168
    %v1032 = vunpack.c.0.s8 %v1031
    %v1033 = vlaneseq
    %v1034 = vshrl.u32 %v1033, 7
    %v1035 = vsub.s32 %v1032, %v1034
    %v1036 = vrot.slane %v1029, %v1035
    %v1038 = vsel %vm998, %v1036, 0.0
    %v1039 = vadd.f32 %v996, %v1038
    %vm1040 = vmand %vm910, %vm424
    %vm1041 = vmand %vm1040, %vm426
    %1042 = vrot.lane.b32.xlu0 %v282, 16
    %v1043 = vpop.permute.xlu0 %1042
    %1044 = vrot.lane.b32.xlu0 %v283, 16
    %v1045 = vpop.permute.xlu0 %1044
    %vm1046 = vcmp.lt.s32.totalorder %v296, 16
    %v1047 = vsel %vm1046, %v1043, %v1045
    %v1048 = vsel %vm1046, %v1045, %v1043
    %v1049 = vstv %s92
    %v1050 = vmul.f32 %v1049, %v1048
    %v1051 = vmul.f32 %v1049, %v1047
    %v1052 = vstv %s141
    %v1053 = vmul.f32 %v1052, %v1048
    %v1054 = vmul.f32 %v1052, %v1047
    %v1057 = vrot.slane %v1053, 1
    %v1058 = vrot.slane %v1054, 1
    %v1061 = vadd.f32 %v1050, %v1057
    %v1062 = vadd.f32 %v1051, %v1058
    %v1065 = vcombine.low %v1061, %v1062
    %v1067 = vunpack.c.l.s4 1966171168
    %v1068 = vunpack.c.0.s8 %v1067
    %v1069 = vlaneseq
    %v1070 = vshrl.u32 %v1069, 7
    %v1071 = vsub.s32 %v1068, %v1070
    %v1072 = vrot.slane %v1065, %v1071
    %v1074 = vunpack.c.l.s4 1966171168
    %v1075 = vunpack.c.0.s8 %v1074
    %v1076 = vlaneseq
    %v1077 = vshrl.u32 %v1076, 7
    %v1078 = vsub.s32 %v1075, %v1077
    %v1079 = vrot.slane %v1072, %v1078
    %v1081 = vsel %vm1041, %v1079, 0.0
    %v1082 = vadd.f32 %v1039, %v1081
    %vm1083 = vmand %vm910, %vm469
    %vm1084 = vmand %vm1083, %vm471
    %1085 = vrot.lane.b32.xlu0 %v282, 15
    %v1086 = vpop.permute.xlu0 %1085
    %1087 = vrot.lane.b32.xlu0 %v283, 15
    %v1088 = vpop.permute.xlu0 %1087
    %vm1089 = vcmp.lt.s32.totalorder %v296, 15
    %v1090 = vsel %vm1089, %v1086, %v1088
    %v1091 = vsel %vm1089, %v1088, %v1086
    %v1092 = vstv %s93
    %v1093 = vmul.f32 %v1092, %v1091
    %v1094 = vmul.f32 %v1092, %v1090
    %v1095 = vstv %s142
    %v1096 = vmul.f32 %v1095, %v1091
    %v1097 = vmul.f32 %v1095, %v1090
    %v1100 = vrot.slane %v1096, 1
    %v1101 = vrot.slane %v1097, 1
    %v1104 = vadd.f32 %v1093, %v1100
    %v1105 = vadd.f32 %v1094, %v1101
    %v1108 = vcombine.low %v1104, %v1105
    %v1110 = vunpack.c.l.s4 1966171168
    %v1111 = vunpack.c.0.s8 %v1110
    %v1112 = vlaneseq
    %v1113 = vshrl.u32 %v1112, 7
    %v1114 = vsub.s32 %v1111, %v1113
    %v1115 = vrot.slane %v1108, %v1114
    %v1117 = vunpack.c.l.s4 1966171168
    %v1118 = vunpack.c.0.s8 %v1117
    %v1119 = vlaneseq
    %v1120 = vshrl.u32 %v1119, 7
    %v1121 = vsub.s32 %v1118, %v1120
    %v1122 = vrot.slane %v1115, %v1121
    %v1124 = vsel %vm1084, %v1122, 0.0
    %v1125 = vadd.f32 %v1082, %v1124
    %vm1126 = vmand %vm910, %vm514
    %vm1127 = vmand %vm1126, %vm516
    %1128 = vrot.lane.b32.xlu0 %v282, 14
    %v1129 = vpop.permute.xlu0 %1128
    %1130 = vrot.lane.b32.xlu0 %v283, 14
    %v1131 = vpop.permute.xlu0 %1130
    %vm1132 = vcmp.lt.s32.totalorder %v296, 14
    %v1133 = vsel %vm1132, %v1129, %v1131
    %v1134 = vsel %vm1132, %v1131, %v1129
    %v1135 = vstv %s94
    %v1136 = vmul.f32 %v1135, %v1134
    %v1137 = vmul.f32 %v1135, %v1133
    %v1138 = vstv %s143
    %v1139 = vmul.f32 %v1138, %v1134
    %v1140 = vmul.f32 %v1138, %v1133
    %v1143 = vrot.slane %v1139, 1
    %v1144 = vrot.slane %v1140, 1
    %v1147 = vadd.f32 %v1136, %v1143
    %v1148 = vadd.f32 %v1137, %v1144
    %v1151 = vcombine.low %v1147, %v1148
    %v1153 = vunpack.c.l.s4 1966171168
    %v1154 = vunpack.c.0.s8 %v1153
    %v1155 = vlaneseq
    %v1156 = vshrl.u32 %v1155, 7
    %v1157 = vsub.s32 %v1154, %v1156
    %v1158 = vrot.slane %v1151, %v1157
    %v1160 = vunpack.c.l.s4 1966171168
    %v1161 = vunpack.c.0.s8 %v1160
    %v1162 = vlaneseq
    %v1163 = vshrl.u32 %v1162, 7
    %v1164 = vsub.s32 %v1161, %v1163
    %v1165 = vrot.slane %v1158, %v1164
    %v1167 = vsel %vm1127, %v1165, 0.0
    %v1168 = vadd.f32 %v1125, %v1167
    %vm1169 = vmand %vm910, %vm559
    %vm1170 = vmand %vm1169, %vm561
    %1171 = vrot.lane.b32.xlu0 %v282, 13
    %v1172 = vpop.permute.xlu0 %1171
    %1173 = vrot.lane.b32.xlu0 %v283, 13
    %v1174 = vpop.permute.xlu0 %1173
    %vm1175 = vcmp.lt.s32.totalorder %v296, 13
    %v1176 = vsel %vm1175, %v1172, %v1174
    %v1177 = vsel %vm1175, %v1174, %v1172
    %v1178 = vstv %s95
    %v1179 = vmul.f32 %v1178, %v1177
    %v1180 = vmul.f32 %v1178, %v1176
    %v1181 = vstv %s144
    %v1182 = vmul.f32 %v1181, %v1177
    %v1183 = vmul.f32 %v1181, %v1176
    %v1186 = vrot.slane %v1182, 1
    %v1187 = vrot.slane %v1183, 1
    %v1190 = vadd.f32 %v1179, %v1186
    %v1191 = vadd.f32 %v1180, %v1187
    %v1194 = vcombine.low %v1190, %v1191
    %v1196 = vunpack.c.l.s4 1966171168
    %v1197 = vunpack.c.0.s8 %v1196
    %v1198 = vlaneseq
    %v1199 = vshrl.u32 %v1198, 7
    %v1200 = vsub.s32 %v1197, %v1199
    %v1201 = vrot.slane %v1194, %v1200
    %v1203 = vunpack.c.l.s4 1966171168
    %v1204 = vunpack.c.0.s8 %v1203
    %v1205 = vlaneseq
    %v1206 = vshrl.u32 %v1205, 7
    %v1207 = vsub.s32 %v1204, %v1206
    %v1208 = vrot.slane %v1201, %v1207
    %v1210 = vsel %vm1170, %v1208, 0.0
    %v1211 = vadd.f32 %v1168, %v1210
    %vm1212 = vcmp.ge.s32.totalorder %v73, 0
    %vm1213 = vcmp.lt.s32.totalorder %v73, 16
    %vm1214 = vmand %vm1212, %vm1213
    %vm1215 = vmand %vm1214, %vm287
    %vm1216 = vmand %vm1215, %vm289
    %1217 = vrot.lane.b32.xlu0 %v282, 3
    %v1218 = vpop.permute.xlu0 %1217
    %1219 = vrot.lane.b32.xlu0 %v283, 3
    %v1220 = vpop.permute.xlu0 %1219
    %vm1221 = vcmp.lt.s32.totalorder %v296, 3
    %v1222 = vsel %vm1221, %v1218, %v1220
    %v1223 = vsel %vm1221, %v1220, %v1218
    %v1224 = vstv %s96
    %v1225 = vmul.f32 %v1224, %v1223
    %v1226 = vmul.f32 %v1224, %v1222
    %v1227 = vstv %s145
    %v1228 = vmul.f32 %v1227, %v1223
    %v1229 = vmul.f32 %v1227, %v1222
    %v1232 = vrot.slane %v1228, 1
    %v1233 = vrot.slane %v1229, 1
    %v1236 = vadd.f32 %v1225, %v1232
    %v1237 = vadd.f32 %v1226, %v1233
    %v1240 = vcombine.low %v1236, %v1237
    %v1242 = vunpack.c.l.s4 1966171168
    %v1243 = vunpack.c.0.s8 %v1242
    %v1244 = vlaneseq
    %v1245 = vshrl.u32 %v1244, 7
    %v1246 = vsub.s32 %v1243, %v1245
    %v1247 = vrot.slane %v1240, %v1246
    %v1249 = vunpack.c.l.s4 1966171168
    %v1250 = vunpack.c.0.s8 %v1249
    %v1251 = vlaneseq
    %v1252 = vshrl.u32 %v1251, 7
    %v1253 = vsub.s32 %v1250, %v1252
    %v1254 = vrot.slane %v1247, %v1253
    %v1256 = vsel %vm1216, %v1254, 0.0
    %v1257 = vadd.f32 %v1211, %v1256
    %vm1258 = vmand %vm1214, %vm334
    %vm1259 = vmand %vm1258, %vm336
    %1260 = vrot.lane.b32.xlu0 %v282, 2
    %v1261 = vpop.permute.xlu0 %1260
    %1262 = vrot.lane.b32.xlu0 %v283, 2
    %v1263 = vpop.permute.xlu0 %1262
    %vm1264 = vcmp.lt.s32.totalorder %v296, 2
    %v1265 = vsel %vm1264, %v1261, %v1263
    %v1266 = vsel %vm1264, %v1263, %v1261
    %v1267 = vstv %s97
    %v1268 = vmul.f32 %v1267, %v1266
    %v1269 = vmul.f32 %v1267, %v1265
    %v1270 = vstv %s146
    %v1271 = vmul.f32 %v1270, %v1266
    %v1272 = vmul.f32 %v1270, %v1265
    %v1275 = vrot.slane %v1271, 1
    %v1276 = vrot.slane %v1272, 1
    %v1279 = vadd.f32 %v1268, %v1275
    %v1280 = vadd.f32 %v1269, %v1276
    %v1283 = vcombine.low %v1279, %v1280
    %v1285 = vunpack.c.l.s4 1966171168
    %v1286 = vunpack.c.0.s8 %v1285
    %v1287 = vlaneseq
    %v1288 = vshrl.u32 %v1287, 7
    %v1289 = vsub.s32 %v1286, %v1288
    %v1290 = vrot.slane %v1283, %v1289
    %v1292 = vunpack.c.l.s4 1966171168
    %v1293 = vunpack.c.0.s8 %v1292
    %v1294 = vlaneseq
    %v1295 = vshrl.u32 %v1294, 7
    %v1296 = vsub.s32 %v1293, %v1295
    %v1297 = vrot.slane %v1290, %v1296
    %v1299 = vsel %vm1259, %v1297, 0.0
    %v1300 = vadd.f32 %v1257, %v1299
    %vm1301 = vmand %vm1214, %vm379
    %vm1302 = vmand %vm1301, %vm381
    %1303 = vrot.lane.b32.xlu0 %v282, 1
    %v1304 = vpop.permute.xlu0 %1303
    %1305 = vrot.lane.b32.xlu0 %v283, 1
    %v1306 = vpop.permute.xlu0 %1305
    %vm1307 = vcmp.lt.s32.totalorder %v296, 1
    %v1308 = vsel %vm1307, %v1304, %v1306
    %v1309 = vsel %vm1307, %v1306, %v1304
    %v1310 = vstv %s98
    %v1311 = vmul.f32 %v1310, %v1309
    %v1312 = vmul.f32 %v1310, %v1308
    %v1313 = vstv %s147
    %v1314 = vmul.f32 %v1313, %v1309
    %v1315 = vmul.f32 %v1313, %v1308
    %v1318 = vrot.slane %v1314, 1
    %v1319 = vrot.slane %v1315, 1
    %v1322 = vadd.f32 %v1311, %v1318
    %v1323 = vadd.f32 %v1312, %v1319
    %v1326 = vcombine.low %v1322, %v1323
    %v1328 = vunpack.c.l.s4 1966171168
    %v1329 = vunpack.c.0.s8 %v1328
    %v1330 = vlaneseq
    %v1331 = vshrl.u32 %v1330, 7
    %v1332 = vsub.s32 %v1329, %v1331
    %v1333 = vrot.slane %v1326, %v1332
    %v1335 = vunpack.c.l.s4 1966171168
    %v1336 = vunpack.c.0.s8 %v1335
    %v1337 = vlaneseq
    %v1338 = vshrl.u32 %v1337, 7
    %v1339 = vsub.s32 %v1336, %v1338
    %v1340 = vrot.slane %v1333, %v1339
    %v1342 = vsel %vm1302, %v1340, 0.0
    %v1343 = vadd.f32 %v1300, %v1342
    %vm1344 = vmand %vm1214, %vm424
    %vm1345 = vmand %vm1344, %vm426
    %v1346 = vstv %s99
    %v1347 = vmul.f32 %v1346, %v282
    %v1348 = vmul.f32 %v1346, %v283
    %v1349 = vstv %s148
    %v1350 = vmul.f32 %v1349, %v282
    %v1351 = vmul.f32 %v1349, %v283
    %v1354 = vrot.slane %v1350, 1
    %v1355 = vrot.slane %v1351, 1
    %v1358 = vadd.f32 %v1347, %v1354
    %v1359 = vadd.f32 %v1348, %v1355
    %v1362 = vcombine.low %v1358, %v1359
    %v1364 = vunpack.c.l.s4 1966171168
    %v1365 = vunpack.c.0.s8 %v1364
    %v1366 = vlaneseq
    %v1367 = vshrl.u32 %v1366, 7
    %v1368 = vsub.s32 %v1365, %v1367
    %v1369 = vrot.slane %v1362, %v1368
    %v1371 = vunpack.c.l.s4 1966171168
    %v1372 = vunpack.c.0.s8 %v1371
    %v1373 = vlaneseq
    %v1374 = vshrl.u32 %v1373, 7
    %v1375 = vsub.s32 %v1372, %v1374
    %v1376 = vrot.slane %v1369, %v1375
    %v1378 = vsel %vm1345, %v1376, 0.0
    %v1379 = vadd.f32 %v1343, %v1378
    %vm1380 = vmand %vm1214, %vm469
    %vm1381 = vmand %vm1380, %vm471
    %1382 = vrot.lane.b32.xlu0 %v282, 127
    %v1383 = vpop.permute.xlu0 %1382
    %1384 = vrot.lane.b32.xlu0 %v283, 127
    %v1385 = vpop.permute.xlu0 %1384
    %vm1386 = vcmp.lt.s32.totalorder %v296, 127
    %v1387 = vsel %vm1386, %v1383, %v1385
    %v1388 = vsel %vm1386, %v1385, %v1383
    %v1389 = vstv %s100
    %v1390 = vmul.f32 %v1389, %v1387
    %v1391 = vmul.f32 %v1389, %v1388
    %v1392 = vstv %s149
    %v1393 = vmul.f32 %v1392, %v1387
    %v1394 = vmul.f32 %v1392, %v1388
    %v1397 = vrot.slane %v1393, 1
    %v1398 = vrot.slane %v1394, 1
    %v1401 = vadd.f32 %v1390, %v1397
    %v1402 = vadd.f32 %v1391, %v1398
    %v1405 = vcombine.low %v1401, %v1402
    %v1407 = vunpack.c.l.s4 1966171168
    %v1408 = vunpack.c.0.s8 %v1407
    %v1409 = vlaneseq
    %v1410 = vshrl.u32 %v1409, 7
    %v1411 = vsub.s32 %v1408, %v1410
    %v1412 = vrot.slane %v1405, %v1411
    %v1414 = vunpack.c.l.s4 1966171168
    %v1415 = vunpack.c.0.s8 %v1414
    %v1416 = vlaneseq
    %v1417 = vshrl.u32 %v1416, 7
    %v1418 = vsub.s32 %v1415, %v1417
    %v1419 = vrot.slane %v1412, %v1418
    %v1421 = vsel %vm1381, %v1419, 0.0
    %v1422 = vadd.f32 %v1379, %v1421
    %vm1423 = vmand %vm1214, %vm514
    %vm1424 = vmand %vm1423, %vm516
    %1425 = vrot.lane.b32.xlu0 %v282, 126
    %v1426 = vpop.permute.xlu0 %1425
    %1427 = vrot.lane.b32.xlu0 %v283, 126
    %v1428 = vpop.permute.xlu0 %1427
    %vm1429 = vcmp.lt.s32.totalorder %v296, 126
    %v1430 = vsel %vm1429, %v1426, %v1428
    %v1431 = vsel %vm1429, %v1428, %v1426
    %v1432 = vstv %s101
    %v1433 = vmul.f32 %v1432, %v1430
    %v1434 = vmul.f32 %v1432, %v1431
    %v1435 = vstv %s150
    %v1436 = vmul.f32 %v1435, %v1430
    %v1437 = vmul.f32 %v1435, %v1431
    %v1440 = vrot.slane %v1436, 1
    %v1441 = vrot.slane %v1437, 1
    %v1444 = vadd.f32 %v1433, %v1440
    %v1445 = vadd.f32 %v1434, %v1441
    %v1448 = vcombine.low %v1444, %v1445
    %v1450 = vunpack.c.l.s4 1966171168
    %v1451 = vunpack.c.0.s8 %v1450
    %v1452 = vlaneseq
    %v1453 = vshrl.u32 %v1452, 7
    %v1454 = vsub.s32 %v1451, %v1453
    %v1455 = vrot.slane %v1448, %v1454
    %v1457 = vunpack.c.l.s4 1966171168
    %v1458 = vunpack.c.0.s8 %v1457
    %v1459 = vlaneseq
    %v1460 = vshrl.u32 %v1459, 7
    %v1461 = vsub.s32 %v1458, %v1460
    %v1462 = vrot.slane %v1455, %v1461
    %v1464 = vsel %vm1424, %v1462, 0.0
    %v1465 = vadd.f32 %v1422, %v1464
    %vm1466 = vmand %vm1214, %vm559
    %vm1467 = vmand %vm1466, %vm561
    %1468 = vrot.lane.b32.xlu0 %v282, 125
    %v1469 = vpop.permute.xlu0 %1468
    %1470 = vrot.lane.b32.xlu0 %v283, 125
    %v1471 = vpop.permute.xlu0 %1470
    %vm1472 = vcmp.lt.s32.totalorder %v296, 125
    %v1473 = vsel %vm1472, %v1469, %v1471
    %v1474 = vsel %vm1472, %v1471, %v1469
    %v1475 = vstv %s102
    %v1476 = vmul.f32 %v1475, %v1473
    %v1477 = vmul.f32 %v1475, %v1474
    %v1478 = vstv %s151
    %v1479 = vmul.f32 %v1478, %v1473
    %v1480 = vmul.f32 %v1478, %v1474
    %v1483 = vrot.slane %v1479, 1
    %v1484 = vrot.slane %v1480, 1
    %v1487 = vadd.f32 %v1476, %v1483
    %v1488 = vadd.f32 %v1477, %v1484
    %v1491 = vcombine.low %v1487, %v1488
    %v1493 = vunpack.c.l.s4 1966171168
    %v1494 = vunpack.c.0.s8 %v1493
    %v1495 = vlaneseq
    %v1496 = vshrl.u32 %v1495, 7
    %v1497 = vsub.s32 %v1494, %v1496
    %v1498 = vrot.slane %v1491, %v1497
    %v1500 = vunpack.c.l.s4 1966171168
    %v1501 = vunpack.c.0.s8 %v1500
    %v1502 = vlaneseq
    %v1503 = vshrl.u32 %v1502, 7
    %v1504 = vsub.s32 %v1501, %v1503
    %v1505 = vrot.slane %v1498, %v1504
    %v1507 = vsel %vm1467, %v1505, 0.0
    %v1508 = vadd.f32 %v1465, %v1507
    %vm1509 = vcmp.ge.s32.totalorder %v73, 4294967295
    %vm1510 = vcmp.lt.s32.totalorder %v73, 15
    %vm1511 = vmand %vm1509, %vm1510
    %vm1512 = vmand %vm1511, %vm287
    %vm1513 = vmand %vm1512, %vm289
    %1514 = vrot.lane.b32.xlu0 %v282, 115
    %v1515 = vpop.permute.xlu0 %1514
    %1516 = vrot.lane.b32.xlu0 %v283, 115
    %v1517 = vpop.permute.xlu0 %1516
    %vm1518 = vcmp.lt.s32.totalorder %v296, 115
    %v1519 = vsel %vm1518, %v1515, %v1517
    %v1520 = vsel %vm1518, %v1517, %v1515
    %v1521 = vstv %s103
    %v1522 = vmul.f32 %v1521, %v1519
    %v1523 = vmul.f32 %v1521, %v1520
    %v1524 = vstv %s152
    %v1525 = vmul.f32 %v1524, %v1519
    %v1526 = vmul.f32 %v1524, %v1520
    %v1529 = vrot.slane %v1525, 1
    %v1530 = vrot.slane %v1526, 1
    %v1533 = vadd.f32 %v1522, %v1529
    %v1534 = vadd.f32 %v1523, %v1530
    %v1537 = vcombine.low %v1533, %v1534
    %v1539 = vunpack.c.l.s4 1966171168
    %v1540 = vunpack.c.0.s8 %v1539
    %v1541 = vlaneseq
    %v1542 = vshrl.u32 %v1541, 7
    %v1543 = vsub.s32 %v1540, %v1542
    %v1544 = vrot.slane %v1537, %v1543
    %v1546 = vunpack.c.l.s4 1966171168
    %v1547 = vunpack.c.0.s8 %v1546
    %v1548 = vlaneseq
    %v1549 = vshrl.u32 %v1548, 7
    %v1550 = vsub.s32 %v1547, %v1549
    %v1551 = vrot.slane %v1544, %v1550
    %v1553 = vsel %vm1513, %v1551, 0.0
    %v1554 = vadd.f32 %v1508, %v1553
    %vm1555 = vmand %vm1511, %vm334
    %vm1556 = vmand %vm1555, %vm336
    %1557 = vrot.lane.b32.xlu0 %v282, 114
    %v1558 = vpop.permute.xlu0 %1557
    %1559 = vrot.lane.b32.xlu0 %v283, 114
    %v1560 = vpop.permute.xlu0 %1559
    %vm1561 = vcmp.lt.s32.totalorder %v296, 114
    %v1562 = vsel %vm1561, %v1558, %v1560
    %v1563 = vsel %vm1561, %v1560, %v1558
    %v1564 = vstv %s104
    %v1565 = vmul.f32 %v1564, %v1562
    %v1566 = vmul.f32 %v1564, %v1563
    %v1567 = vstv %s153
    %v1568 = vmul.f32 %v1567, %v1562
    %v1569 = vmul.f32 %v1567, %v1563
    %v1572 = vrot.slane %v1568, 1
    %v1573 = vrot.slane %v1569, 1
    %v1576 = vadd.f32 %v1565, %v1572
    %v1577 = vadd.f32 %v1566, %v1573
    %v1580 = vcombine.low %v1576, %v1577
    %v1582 = vunpack.c.l.s4 1966171168
    %v1583 = vunpack.c.0.s8 %v1582
    %v1584 = vlaneseq
    %v1585 = vshrl.u32 %v1584, 7
    %v1586 = vsub.s32 %v1583, %v1585
    %v1587 = vrot.slane %v1580, %v1586
    %v1589 = vunpack.c.l.s4 1966171168
    %v1590 = vunpack.c.0.s8 %v1589
    %v1591 = vlaneseq
    %v1592 = vshrl.u32 %v1591, 7
    %v1593 = vsub.s32 %v1590, %v1592
    %v1594 = vrot.slane %v1587, %v1593
    %v1596 = vsel %vm1556, %v1594, 0.0
    %v1597 = vadd.f32 %v1554, %v1596
    %vm1598 = vmand %vm1511, %vm379
    %vm1599 = vmand %vm1598, %vm381
    %1600 = vrot.lane.b32.xlu0 %v282, 113
    %v1601 = vpop.permute.xlu0 %1600
    %1602 = vrot.lane.b32.xlu0 %v283, 113
    %v1603 = vpop.permute.xlu0 %1602
    %vm1604 = vcmp.lt.s32.totalorder %v296, 113
    %v1605 = vsel %vm1604, %v1601, %v1603
    %v1606 = vsel %vm1604, %v1603, %v1601
    %v1607 = vstv %s105
    %v1608 = vmul.f32 %v1607, %v1605
    %v1609 = vmul.f32 %v1607, %v1606
    %v1610 = vstv %s154
    %v1611 = vmul.f32 %v1610, %v1605
    %v1612 = vmul.f32 %v1610, %v1606
    %v1615 = vrot.slane %v1611, 1
    %v1616 = vrot.slane %v1612, 1
    %v1619 = vadd.f32 %v1608, %v1615
    %v1620 = vadd.f32 %v1609, %v1616
    %v1623 = vcombine.low %v1619, %v1620
    %v1625 = vunpack.c.l.s4 1966171168
    %v1626 = vunpack.c.0.s8 %v1625
    %v1627 = vlaneseq
    %v1628 = vshrl.u32 %v1627, 7
    %v1629 = vsub.s32 %v1626, %v1628
    %v1630 = vrot.slane %v1623, %v1629
    %v1632 = vunpack.c.l.s4 1966171168
    %v1633 = vunpack.c.0.s8 %v1632
    %v1634 = vlaneseq
    %v1635 = vshrl.u32 %v1634, 7
    %v1636 = vsub.s32 %v1633, %v1635
    %v1637 = vrot.slane %v1630, %v1636
    %v1639 = vsel %vm1599, %v1637, 0.0
    %v1640 = vadd.f32 %v1597, %v1639
    %vm1641 = vmand %vm1511, %vm424
    %vm1642 = vmand %vm1641, %vm426
    %1643 = vrot.lane.b32.xlu0 %v282, 112
    %v1644 = vpop.permute.xlu0 %1643
    %1645 = vrot.lane.b32.xlu0 %v283, 112
    %v1646 = vpop.permute.xlu0 %1645
    %vm1647 = vcmp.lt.s32.totalorder %v296, 112
    %v1648 = vsel %vm1647, %v1644, %v1646
    %v1649 = vsel %vm1647, %v1646, %v1644
    %v1650 = vstv %s106
    %v1651 = vmul.f32 %v1650, %v1648
    %v1652 = vmul.f32 %v1650, %v1649
    %v1653 = vstv %s155
    %v1654 = vmul.f32 %v1653, %v1648
    %v1655 = vmul.f32 %v1653, %v1649
    %v1658 = vrot.slane %v1654, 1
    %v1659 = vrot.slane %v1655, 1
    %v1662 = vadd.f32 %v1651, %v1658
    %v1663 = vadd.f32 %v1652, %v1659
    %v1666 = vcombine.low %v1662, %v1663
    %v1668 = vunpack.c.l.s4 1966171168
    %v1669 = vunpack.c.0.s8 %v1668
    %v1670 = vlaneseq
    %v1671 = vshrl.u32 %v1670, 7
    %v1672 = vsub.s32 %v1669, %v1671
    %v1673 = vrot.slane %v1666, %v1672
    %v1675 = vunpack.c.l.s4 1966171168
    %v1676 = vunpack.c.0.s8 %v1675
    %v1677 = vlaneseq
    %v1678 = vshrl.u32 %v1677, 7
    %v1679 = vsub.s32 %v1676, %v1678
    %v1680 = vrot.slane %v1673, %v1679
    %v1682 = vsel %vm1642, %v1680, 0.0
    %v1683 = vadd.f32 %v1640, %v1682
    %vm1684 = vmand %vm1511, %vm469
    %vm1685 = vmand %vm1684, %vm471
    %1686 = vrot.lane.b32.xlu0 %v282, 111
    %v1687 = vpop.permute.xlu0 %1686
    %1688 = vrot.lane.b32.xlu0 %v283, 111
    %v1689 = vpop.permute.xlu0 %1688
    %vm1690 = vcmp.lt.s32.totalorder %v296, 111
    %v1691 = vsel %vm1690, %v1687, %v1689
    %v1692 = vsel %vm1690, %v1689, %v1687
    %v1693 = vstv %s107
    %v1694 = vmul.f32 %v1693, %v1691
    %v1695 = vmul.f32 %v1693, %v1692
    %v1696 = vstv %s156
    %v1697 = vmul.f32 %v1696, %v1691
    %v1698 = vmul.f32 %v1696, %v1692
    %v1701 = vrot.slane %v1697, 1
    %v1702 = vrot.slane %v1698, 1
    %v1705 = vadd.f32 %v1694, %v1701
    %v1706 = vadd.f32 %v1695, %v1702
    %v1709 = vcombine.low %v1705, %v1706
    %v1711 = vunpack.c.l.s4 1966171168
    %v1712 = vunpack.c.0.s8 %v1711
    %v1713 = vlaneseq
    %v1714 = vshrl.u32 %v1713, 7
    %v1715 = vsub.s32 %v1712, %v1714
    %v1716 = vrot.slane %v1709, %v1715
    %v1718 = vunpack.c.l.s4 1966171168
    %v1719 = vunpack.c.0.s8 %v1718
    %v1720 = vlaneseq
    %v1721 = vshrl.u32 %v1720, 7
    %v1722 = vsub.s32 %v1719, %v1721
    %v1723 = vrot.slane %v1716, %v1722
    %v1725 = vsel %vm1685, %v1723, 0.0
    %v1726 = vadd.f32 %v1683, %v1725
    %vm1727 = vmand %vm1511, %vm514
    %vm1728 = vmand %vm1727, %vm516
    %1729 = vrot.lane.b32.xlu0 %v282, 110
    %v1730 = vpop.permute.xlu0 %1729
    %1731 = vrot.lane.b32.xlu0 %v283, 110
    %v1732 = vpop.permute.xlu0 %1731
    %vm1733 = vcmp.lt.s32.totalorder %v296, 110
    %v1734 = vsel %vm1733, %v1730, %v1732
    %v1735 = vsel %vm1733, %v1732, %v1730
    %v1736 = vstv %s108
    %v1737 = vmul.f32 %v1736, %v1734
    %v1738 = vmul.f32 %v1736, %v1735
    %v1739 = vstv %s157
    %v1740 = vmul.f32 %v1739, %v1734
    %v1741 = vmul.f32 %v1739, %v1735
    %v1744 = vrot.slane %v1740, 1
    %v1745 = vrot.slane %v1741, 1
    %v1748 = vadd.f32 %v1737, %v1744
    %v1749 = vadd.f32 %v1738, %v1745
    %v1752 = vcombine.low %v1748, %v1749
    %v1754 = vunpack.c.l.s4 1966171168
    %v1755 = vunpack.c.0.s8 %v1754
    %v1756 = vlaneseq
    %v1757 = vshrl.u32 %v1756, 7
    %v1758 = vsub.s32 %v1755, %v1757
    %v1759 = vrot.slane %v1752, %v1758
    %v1761 = vunpack.c.l.s4 1966171168
    %v1762 = vunpack.c.0.s8 %v1761
    %v1763 = vlaneseq
    %v1764 = vshrl.u32 %v1763, 7
    %v1765 = vsub.s32 %v1762, %v1764
    %v1766 = vrot.slane %v1759, %v1765
    %v1768 = vsel %vm1728, %v1766, 0.0
    %v1769 = vadd.f32 %v1726, %v1768
    %vm1770 = vmand %vm1511, %vm559
    %vm1771 = vmand %vm1770, %vm561
    %1772 = vrot.lane.b32.xlu0 %v282, 109
    %v1773 = vpop.permute.xlu0 %1772
    %1774 = vrot.lane.b32.xlu0 %v283, 109
    %v1775 = vpop.permute.xlu0 %1774
    %vm1776 = vcmp.lt.s32.totalorder %v296, 109
    %v1777 = vsel %vm1776, %v1773, %v1775
    %v1778 = vsel %vm1776, %v1775, %v1773
    %v1779 = vstv %s109
    %v1780 = vmul.f32 %v1779, %v1777
    %v1781 = vmul.f32 %v1779, %v1778
    %v1782 = vstv %s158
    %v1783 = vmul.f32 %v1782, %v1777
    %v1784 = vmul.f32 %v1782, %v1778
    %v1787 = vrot.slane %v1783, 1
    %v1788 = vrot.slane %v1784, 1
    %v1791 = vadd.f32 %v1780, %v1787
    %v1792 = vadd.f32 %v1781, %v1788
    %v1795 = vcombine.low %v1791, %v1792
    %v1797 = vunpack.c.l.s4 1966171168
    %v1798 = vunpack.c.0.s8 %v1797
    %v1799 = vlaneseq
    %v1800 = vshrl.u32 %v1799, 7
    %v1801 = vsub.s32 %v1798, %v1800
    %v1802 = vrot.slane %v1795, %v1801
    %v1804 = vunpack.c.l.s4 1966171168
    %v1805 = vunpack.c.0.s8 %v1804
    %v1806 = vlaneseq
    %v1807 = vshrl.u32 %v1806, 7
    %v1808 = vsub.s32 %v1805, %v1807
    %v1809 = vrot.slane %v1802, %v1808
    %v1811 = vsel %vm1771, %v1809, 0.0
    %v1812 = vadd.f32 %v1769, %v1811
    %vm1813 = vcmp.ge.s32.totalorder %v73, 4294967294
    %vm1814 = vcmp.lt.s32.totalorder %v73, 14
    %vm1815 = vmand %vm1813, %vm1814
    %vm1816 = vmand %vm1815, %vm287
    %vm1817 = vmand %vm1816, %vm289
    %1818 = vrot.lane.b32.xlu0 %v282, 99
    %v1819 = vpop.permute.xlu0 %1818
    %1820 = vrot.lane.b32.xlu0 %v283, 99
    %v1821 = vpop.permute.xlu0 %1820
    %vm1822 = vcmp.lt.s32.totalorder %v296, 99
    %v1823 = vsel %vm1822, %v1819, %v1821
    %v1824 = vsel %vm1822, %v1821, %v1819
    %v1825 = vstv %s110
    %v1826 = vmul.f32 %v1825, %v1823
    %v1827 = vmul.f32 %v1825, %v1824
    %v1828 = vstv %s159
    %v1829 = vmul.f32 %v1828, %v1823
    %v1830 = vmul.f32 %v1828, %v1824
    %v1833 = vrot.slane %v1829, 1
    %v1834 = vrot.slane %v1830, 1
    %v1837 = vadd.f32 %v1826, %v1833
    %v1838 = vadd.f32 %v1827, %v1834
    %v1841 = vcombine.low %v1837, %v1838
    %v1843 = vunpack.c.l.s4 1966171168
    %v1844 = vunpack.c.0.s8 %v1843
    %v1845 = vlaneseq
    %v1846 = vshrl.u32 %v1845, 7
    %v1847 = vsub.s32 %v1844, %v1846
    %v1848 = vrot.slane %v1841, %v1847
    %v1850 = vunpack.c.l.s4 1966171168
    %v1851 = vunpack.c.0.s8 %v1850
    %v1852 = vlaneseq
    %v1853 = vshrl.u32 %v1852, 7
    %v1854 = vsub.s32 %v1851, %v1853
    %v1855 = vrot.slane %v1848, %v1854
    %v1857 = vsel %vm1817, %v1855, 0.0
    %v1858 = vadd.f32 %v1812, %v1857
    %vm1859 = vmand %vm1815, %vm334
    %vm1860 = vmand %vm1859, %vm336
    %1861 = vrot.lane.b32.xlu0 %v282, 98
    %v1862 = vpop.permute.xlu0 %1861
    %1863 = vrot.lane.b32.xlu0 %v283, 98
    %v1864 = vpop.permute.xlu0 %1863
    %vm1865 = vcmp.lt.s32.totalorder %v296, 98
    %v1866 = vsel %vm1865, %v1862, %v1864
    %v1867 = vsel %vm1865, %v1864, %v1862
    %v1868 = vstv %s111
    %v1869 = vmul.f32 %v1868, %v1866
    %v1870 = vmul.f32 %v1868, %v1867
    %v1871 = vstv %s160
    %v1872 = vmul.f32 %v1871, %v1866
    %v1873 = vmul.f32 %v1871, %v1867
    %v1876 = vrot.slane %v1872, 1
    %v1877 = vrot.slane %v1873, 1
    %v1880 = vadd.f32 %v1869, %v1876
    %v1881 = vadd.f32 %v1870, %v1877
    %v1884 = vcombine.low %v1880, %v1881
    %v1886 = vunpack.c.l.s4 1966171168
    %v1887 = vunpack.c.0.s8 %v1886
    %v1888 = vlaneseq
    %v1889 = vshrl.u32 %v1888, 7
    %v1890 = vsub.s32 %v1887, %v1889
    %v1891 = vrot.slane %v1884, %v1890
    %v1893 = vunpack.c.l.s4 1966171168
    %v1894 = vunpack.c.0.s8 %v1893
    %v1895 = vlaneseq
    %v1896 = vshrl.u32 %v1895, 7
    %v1897 = vsub.s32 %v1894, %v1896
    %v1898 = vrot.slane %v1891, %v1897
    %v1900 = vsel %vm1860, %v1898, 0.0
    %v1901 = vadd.f32 %v1858, %v1900
    %vm1902 = vmand %vm1815, %vm379
    %vm1903 = vmand %vm1902, %vm381
    %1904 = vrot.lane.b32.xlu0 %v282, 97
    %v1905 = vpop.permute.xlu0 %1904
    %1906 = vrot.lane.b32.xlu0 %v283, 97
    %v1907 = vpop.permute.xlu0 %1906
    %vm1908 = vcmp.lt.s32.totalorder %v296, 97
    %v1909 = vsel %vm1908, %v1905, %v1907
    %v1910 = vsel %vm1908, %v1907, %v1905
    %v1911 = vstv %s112
    %v1912 = vmul.f32 %v1911, %v1909
    %v1913 = vmul.f32 %v1911, %v1910
    %v1914 = vstv %s161
    %v1915 = vmul.f32 %v1914, %v1909
    %v1916 = vmul.f32 %v1914, %v1910
    %v1919 = vrot.slane %v1915, 1
    %v1920 = vrot.slane %v1916, 1
    %v1923 = vadd.f32 %v1912, %v1919
    %v1924 = vadd.f32 %v1913, %v1920
    %v1927 = vcombine.low %v1923, %v1924
    %v1929 = vunpack.c.l.s4 1966171168
    %v1930 = vunpack.c.0.s8 %v1929
    %v1931 = vlaneseq
    %v1932 = vshrl.u32 %v1931, 7
    %v1933 = vsub.s32 %v1930, %v1932
    %v1934 = vrot.slane %v1927, %v1933
    %v1936 = vunpack.c.l.s4 1966171168
    %v1937 = vunpack.c.0.s8 %v1936
    %v1938 = vlaneseq
    %v1939 = vshrl.u32 %v1938, 7
    %v1940 = vsub.s32 %v1937, %v1939
    %v1941 = vrot.slane %v1934, %v1940
    %v1943 = vsel %vm1903, %v1941, 0.0
    %v1944 = vadd.f32 %v1901, %v1943
    %vm1945 = vmand %vm1815, %vm424
    %vm1946 = vmand %vm1945, %vm426
    %1947 = vrot.lane.b32.xlu0 %v282, 96
    %v1948 = vpop.permute.xlu0 %1947
    %1949 = vrot.lane.b32.xlu0 %v283, 96
    %v1950 = vpop.permute.xlu0 %1949
    %vm1951 = vcmp.lt.s32.totalorder %v296, 96
    %v1952 = vsel %vm1951, %v1948, %v1950
    %v1953 = vsel %vm1951, %v1950, %v1948
    %v1954 = vstv %s113
    %v1955 = vmul.f32 %v1954, %v1952
    %v1956 = vmul.f32 %v1954, %v1953
    %v1957 = vstv %s162
    %v1958 = vmul.f32 %v1957, %v1952
    %v1959 = vmul.f32 %v1957, %v1953
    %v1962 = vrot.slane %v1958, 1
    %v1963 = vrot.slane %v1959, 1
    %v1966 = vadd.f32 %v1955, %v1962
    %v1967 = vadd.f32 %v1956, %v1963
    %v1970 = vcombine.low %v1966, %v1967
    %v1972 = vunpack.c.l.s4 1966171168
    %v1973 = vunpack.c.0.s8 %v1972
    %v1974 = vlaneseq
    %v1975 = vshrl.u32 %v1974, 7
    %v1976 = vsub.s32 %v1973, %v1975
    %v1977 = vrot.slane %v1970, %v1976
    %v1979 = vunpack.c.l.s4 1966171168
    %v1980 = vunpack.c.0.s8 %v1979
    %v1981 = vlaneseq
    %v1982 = vshrl.u32 %v1981, 7
    %v1983 = vsub.s32 %v1980, %v1982
    %v1984 = vrot.slane %v1977, %v1983
    %v1986 = vsel %vm1946, %v1984, 0.0
    %v1987 = vadd.f32 %v1944, %v1986
    %vm1988 = vmand %vm1815, %vm469
    %vm1989 = vmand %vm1988, %vm471
    %1990 = vrot.lane.b32.xlu0 %v282, 95
    %v1991 = vpop.permute.xlu0 %1990
    %1992 = vrot.lane.b32.xlu0 %v283, 95
    %v1993 = vpop.permute.xlu0 %1992
    %vm1994 = vcmp.lt.s32.totalorder %v296, 95
    %v1995 = vsel %vm1994, %v1991, %v1993
    %v1996 = vsel %vm1994, %v1993, %v1991
    %v1997 = vstv %s114
    %v1998 = vmul.f32 %v1997, %v1995
    %v1999 = vmul.f32 %v1997, %v1996
    %v2000 = vstv %s163
    %v2001 = vmul.f32 %v2000, %v1995
    %v2002 = vmul.f32 %v2000, %v1996
    %v2005 = vrot.slane %v2001, 1
    %v2006 = vrot.slane %v2002, 1
    %v2009 = vadd.f32 %v1998, %v2005
    %v2010 = vadd.f32 %v1999, %v2006
    %v2013 = vcombine.low %v2009, %v2010
    %v2015 = vunpack.c.l.s4 1966171168
    %v2016 = vunpack.c.0.s8 %v2015
    %v2017 = vlaneseq
    %v2018 = vshrl.u32 %v2017, 7
    %v2019 = vsub.s32 %v2016, %v2018
    %v2020 = vrot.slane %v2013, %v2019
    %v2022 = vunpack.c.l.s4 1966171168
    %v2023 = vunpack.c.0.s8 %v2022
    %v2024 = vlaneseq
    %v2025 = vshrl.u32 %v2024, 7
    %v2026 = vsub.s32 %v2023, %v2025
    %v2027 = vrot.slane %v2020, %v2026
    %v2029 = vsel %vm1989, %v2027, 0.0
    %v2030 = vadd.f32 %v1987, %v2029
    %vm2031 = vmand %vm1815, %vm514
    %vm2032 = vmand %vm2031, %vm516
    %2033 = vrot.lane.b32.xlu0 %v282, 94
    %v2034 = vpop.permute.xlu0 %2033
    %2035 = vrot.lane.b32.xlu0 %v283, 94
    %v2036 = vpop.permute.xlu0 %2035
    %vm2037 = vcmp.lt.s32.totalorder %v296, 94
    %v2038 = vsel %vm2037, %v2034, %v2036
    %v2039 = vsel %vm2037, %v2036, %v2034
    %v2040 = vstv %s115
    %v2041 = vmul.f32 %v2040, %v2038
    %v2042 = vmul.f32 %v2040, %v2039
    %v2043 = vstv %s164
    %v2044 = vmul.f32 %v2043, %v2038
    %v2045 = vmul.f32 %v2043, %v2039
    %v2048 = vrot.slane %v2044, 1
    %v2049 = vrot.slane %v2045, 1
    %v2052 = vadd.f32 %v2041, %v2048
    %v2053 = vadd.f32 %v2042, %v2049
    %v2056 = vcombine.low %v2052, %v2053
    %v2058 = vunpack.c.l.s4 1966171168
    %v2059 = vunpack.c.0.s8 %v2058
    %v2060 = vlaneseq
    %v2061 = vshrl.u32 %v2060, 7
    %v2062 = vsub.s32 %v2059, %v2061
    %v2063 = vrot.slane %v2056, %v2062
    %v2065 = vunpack.c.l.s4 1966171168
    %v2066 = vunpack.c.0.s8 %v2065
    %v2067 = vlaneseq
    %v2068 = vshrl.u32 %v2067, 7
    %v2069 = vsub.s32 %v2066, %v2068
    %v2070 = vrot.slane %v2063, %v2069
    %v2072 = vsel %vm2032, %v2070, 0.0
    %v2073 = vadd.f32 %v2030, %v2072
    %vm2074 = vmand %vm1815, %vm559
    %vm2075 = vmand %vm2074, %vm561
    %2076 = vrot.lane.b32.xlu0 %v282, 93
    %v2077 = vpop.permute.xlu0 %2076
    %2078 = vrot.lane.b32.xlu0 %v283, 93
    %v2079 = vpop.permute.xlu0 %2078
    %vm2080 = vcmp.lt.s32.totalorder %v296, 93
    %v2081 = vsel %vm2080, %v2077, %v2079
    %v2082 = vsel %vm2080, %v2079, %v2077
    %v2083 = vstv %s116
    %v2084 = vmul.f32 %v2083, %v2081
    %v2085 = vmul.f32 %v2083, %v2082
    %v2086 = vstv %s165
    %v2087 = vmul.f32 %v2086, %v2081
    %v2088 = vmul.f32 %v2086, %v2082
    %v2091 = vrot.slane %v2087, 1
    %v2092 = vrot.slane %v2088, 1
    %v2095 = vadd.f32 %v2084, %v2091
    %v2096 = vadd.f32 %v2085, %v2092
    %v2099 = vcombine.low %v2095, %v2096
    %v2101 = vunpack.c.l.s4 1966171168
    %v2102 = vunpack.c.0.s8 %v2101
    %v2103 = vlaneseq
    %v2104 = vshrl.u32 %v2103, 7
    %v2105 = vsub.s32 %v2102, %v2104
    %v2106 = vrot.slane %v2099, %v2105
    %v2108 = vunpack.c.l.s4 1966171168
    %v2109 = vunpack.c.0.s8 %v2108
    %v2110 = vlaneseq
    %v2111 = vshrl.u32 %v2110, 7
    %v2112 = vsub.s32 %v2109, %v2111
    %v2113 = vrot.slane %v2106, %v2112
    %v2115 = vsel %vm2075, %v2113, 0.0
    %v2116 = vadd.f32 %v2073, %v2115
    %vm2117 = vcmp.ge.s32.totalorder %v73, 4294967293
    %vm2118 = vcmp.lt.s32.totalorder %v73, 13
    %vm2119 = vmand %vm2117, %vm2118
    %vm2120 = vmand %vm2119, %vm287
    %vm2121 = vmand %vm2120, %vm289
    %2122 = vrot.lane.b32.xlu0 %v282, 83
    %v2123 = vpop.permute.xlu0 %2122
    %2124 = vrot.lane.b32.xlu0 %v283, 83
    %v2125 = vpop.permute.xlu0 %2124
    %vm2126 = vcmp.lt.s32.totalorder %v296, 83
    %v2127 = vsel %vm2126, %v2123, %v2125
    %v2128 = vsel %vm2126, %v2125, %v2123
    %v2129 = vstv %s117
    %v2130 = vmul.f32 %v2129, %v2127
    %v2131 = vmul.f32 %v2129, %v2128
    %v2132 = vstv %s166
    %v2133 = vmul.f32 %v2132, %v2127
    %v2134 = vmul.f32 %v2132, %v2128
    %v2137 = vrot.slane %v2133, 1
    %v2138 = vrot.slane %v2134, 1
    %v2141 = vadd.f32 %v2130, %v2137
    %v2142 = vadd.f32 %v2131, %v2138
    %v2145 = vcombine.low %v2141, %v2142
    %v2147 = vunpack.c.l.s4 1966171168
    %v2148 = vunpack.c.0.s8 %v2147
    %v2149 = vlaneseq
    %v2150 = vshrl.u32 %v2149, 7
    %v2151 = vsub.s32 %v2148, %v2150
    %v2152 = vrot.slane %v2145, %v2151
    %v2154 = vunpack.c.l.s4 1966171168
    %v2155 = vunpack.c.0.s8 %v2154
    %v2156 = vlaneseq
    %v2157 = vshrl.u32 %v2156, 7
    %v2158 = vsub.s32 %v2155, %v2157
    %v2159 = vrot.slane %v2152, %v2158
    %v2161 = vsel %vm2121, %v2159, 0.0
    %v2162 = vadd.f32 %v2116, %v2161
    %vm2163 = vmand %vm2119, %vm334
    %vm2164 = vmand %vm2163, %vm336
    %2165 = vrot.lane.b32.xlu0 %v282, 82
    %v2166 = vpop.permute.xlu0 %2165
    %2167 = vrot.lane.b32.xlu0 %v283, 82
    %v2168 = vpop.permute.xlu0 %2167
    %vm2169 = vcmp.lt.s32.totalorder %v296, 82
    %v2170 = vsel %vm2169, %v2166, %v2168
    %v2171 = vsel %vm2169, %v2168, %v2166
    %v2172 = vstv %s118
    %v2173 = vmul.f32 %v2172, %v2170
    %v2174 = vmul.f32 %v2172, %v2171
    %v2175 = vstv %s167
    %v2176 = vmul.f32 %v2175, %v2170
    %v2177 = vmul.f32 %v2175, %v2171
    %v2180 = vrot.slane %v2176, 1
    %v2181 = vrot.slane %v2177, 1
    %v2184 = vadd.f32 %v2173, %v2180
    %v2185 = vadd.f32 %v2174, %v2181
    %v2188 = vcombine.low %v2184, %v2185
    %v2190 = vunpack.c.l.s4 1966171168
    %v2191 = vunpack.c.0.s8 %v2190
    %v2192 = vlaneseq
    %v2193 = vshrl.u32 %v2192, 7
    %v2194 = vsub.s32 %v2191, %v2193
    %v2195 = vrot.slane %v2188, %v2194
    %v2197 = vunpack.c.l.s4 1966171168
    %v2198 = vunpack.c.0.s8 %v2197
    %v2199 = vlaneseq
    %v2200 = vshrl.u32 %v2199, 7
    %v2201 = vsub.s32 %v2198, %v2200
    %v2202 = vrot.slane %v2195, %v2201
    %v2204 = vsel %vm2164, %v2202, 0.0
    %v2205 = vadd.f32 %v2162, %v2204
    %vm2206 = vmand %vm2119, %vm379
    %vm2207 = vmand %vm2206, %vm381
    %2208 = vrot.lane.b32.xlu0 %v282, 81
    %v2209 = vpop.permute.xlu0 %2208
    %2210 = vrot.lane.b32.xlu0 %v283, 81
    %v2211 = vpop.permute.xlu0 %2210
    %vm2212 = vcmp.lt.s32.totalorder %v296, 81
    %v2213 = vsel %vm2212, %v2209, %v2211
    %v2214 = vsel %vm2212, %v2211, %v2209
    %v2215 = vstv %s119
    %v2216 = vmul.f32 %v2215, %v2213
    %v2217 = vmul.f32 %v2215, %v2214
    %v2218 = vstv %s168
    %v2219 = vmul.f32 %v2218, %v2213
    %v2220 = vmul.f32 %v2218, %v2214
    %v2223 = vrot.slane %v2219, 1
    %v2224 = vrot.slane %v2220, 1
    %v2227 = vadd.f32 %v2216, %v2223
    %v2228 = vadd.f32 %v2217, %v2224
    %v2231 = vcombine.low %v2227, %v2228
    %v2233 = vunpack.c.l.s4 1966171168
    %v2234 = vunpack.c.0.s8 %v2233
    %v2235 = vlaneseq
    %v2236 = vshrl.u32 %v2235, 7
    %v2237 = vsub.s32 %v2234, %v2236
    %v2238 = vrot.slane %v2231, %v2237
    %v2240 = vunpack.c.l.s4 1966171168
    %v2241 = vunpack.c.0.s8 %v2240
    %v2242 = vlaneseq
    %v2243 = vshrl.u32 %v2242, 7
    %v2244 = vsub.s32 %v2241, %v2243
    %v2245 = vrot.slane %v2238, %v2244
    %v2247 = vsel %vm2207, %v2245, 0.0
    %v2248 = vadd.f32 %v2205, %v2247
    %vm2249 = vmand %vm2119, %vm424
    %vm2250 = vmand %vm2249, %vm426
    %2251 = vrot.lane.b32.xlu0 %v282, 80
    %v2252 = vpop.permute.xlu0 %2251
    %2253 = vrot.lane.b32.xlu0 %v283, 80
    %v2254 = vpop.permute.xlu0 %2253
    %vm2255 = vcmp.lt.s32.totalorder %v296, 80
    %v2256 = vsel %vm2255, %v2252, %v2254
    %v2257 = vsel %vm2255, %v2254, %v2252
    %v2258 = vstv %s120
    %v2259 = vmul.f32 %v2258, %v2256
    %v2260 = vmul.f32 %v2258, %v2257
    %v2261 = vstv %s169
    %v2262 = vmul.f32 %v2261, %v2256
    %v2263 = vmul.f32 %v2261, %v2257
    %v2266 = vrot.slane %v2262, 1
    %v2267 = vrot.slane %v2263, 1
    %v2270 = vadd.f32 %v2259, %v2266
    %v2271 = vadd.f32 %v2260, %v2267
    %v2274 = vcombine.low %v2270, %v2271
    %v2276 = vunpack.c.l.s4 1966171168
    %v2277 = vunpack.c.0.s8 %v2276
    %v2278 = vlaneseq
    %v2279 = vshrl.u32 %v2278, 7
    %v2280 = vsub.s32 %v2277, %v2279
    %v2281 = vrot.slane %v2274, %v2280
    %v2283 = vunpack.c.l.s4 1966171168
    %v2284 = vunpack.c.0.s8 %v2283
    %v2285 = vlaneseq
    %v2286 = vshrl.u32 %v2285, 7
    %v2287 = vsub.s32 %v2284, %v2286
    %v2288 = vrot.slane %v2281, %v2287
    %v2290 = vsel %vm2250, %v2288, 0.0
    %v2291 = vadd.f32 %v2248, %v2290
    %vm2292 = vmand %vm2119, %vm469
    %vm2293 = vmand %vm2292, %vm471
    %2294 = vrot.lane.b32.xlu0 %v282, 79
    %v2295 = vpop.permute.xlu0 %2294
    %2296 = vrot.lane.b32.xlu0 %v283, 79
    %v2297 = vpop.permute.xlu0 %2296
    %vm2298 = vcmp.lt.s32.totalorder %v296, 79
    %v2299 = vsel %vm2298, %v2295, %v2297
    %v2300 = vsel %vm2298, %v2297, %v2295
    %v2301 = vstv %s121
    %v2302 = vmul.f32 %v2301, %v2299
    %v2303 = vmul.f32 %v2301, %v2300
    %v2304 = vstv %s170
    %v2305 = vmul.f32 %v2304, %v2299
    %v2306 = vmul.f32 %v2304, %v2300
    %v2309 = vrot.slane %v2305, 1
    %v2310 = vrot.slane %v2306, 1
    %v2313 = vadd.f32 %v2302, %v2309
    %v2314 = vadd.f32 %v2303, %v2310
    %v2317 = vcombine.low %v2313, %v2314
    %v2319 = vunpack.c.l.s4 1966171168
    %v2320 = vunpack.c.0.s8 %v2319
    %v2321 = vlaneseq
    %v2322 = vshrl.u32 %v2321, 7
    %v2323 = vsub.s32 %v2320, %v2322
    %v2324 = vrot.slane %v2317, %v2323
    %v2326 = vunpack.c.l.s4 1966171168
    %v2327 = vunpack.c.0.s8 %v2326
    %v2328 = vlaneseq
    %v2329 = vshrl.u32 %v2328, 7
    %v2330 = vsub.s32 %v2327, %v2329
    %v2331 = vrot.slane %v2324, %v2330
    %v2333 = vsel %vm2293, %v2331, 0.0
    %v2334 = vadd.f32 %v2291, %v2333
    %vm2335 = vmand %vm2119, %vm514
    %vm2336 = vmand %vm2335, %vm516
    %2337 = vrot.lane.b32.xlu0 %v282, 78
    %v2338 = vpop.permute.xlu0 %2337
    %2339 = vrot.lane.b32.xlu0 %v283, 78
    %v2340 = vpop.permute.xlu0 %2339
    %vm2341 = vcmp.lt.s32.totalorder %v296, 78
    %v2342 = vsel %vm2341, %v2338, %v2340
    %v2343 = vsel %vm2341, %v2340, %v2338
    %v2344 = vstv %s122
    %v2345 = vmul.f32 %v2344, %v2342
    %v2346 = vmul.f32 %v2344, %v2343
    %v2347 = vstv %s171
    %v2348 = vmul.f32 %v2347, %v2342
    %v2349 = vmul.f32 %v2347, %v2343
    %v2352 = vrot.slane %v2348, 1
    %v2353 = vrot.slane %v2349, 1
    %v2356 = vadd.f32 %v2345, %v2352
    %v2357 = vadd.f32 %v2346, %v2353
    %v2360 = vcombine.low %v2356, %v2357
    %v2362 = vunpack.c.l.s4 1966171168
    %v2363 = vunpack.c.0.s8 %v2362
    %v2364 = vlaneseq
    %v2365 = vshrl.u32 %v2364, 7
    %v2366 = vsub.s32 %v2363, %v2365
    %v2367 = vrot.slane %v2360, %v2366
    %v2369 = vunpack.c.l.s4 1966171168
    %v2370 = vunpack.c.0.s8 %v2369
    %v2371 = vlaneseq
    %v2372 = vshrl.u32 %v2371, 7
    %v2373 = vsub.s32 %v2370, %v2372
    %v2374 = vrot.slane %v2367, %v2373
    %v2376 = vsel %vm2336, %v2374, 0.0
    %v2377 = vadd.f32 %v2334, %v2376
    %vm2378 = vmand %vm2119, %vm559
    %vm2379 = vmand %vm2378, %vm561
    %2380 = vrot.lane.b32.xlu0 %v282, 77
    %v2381 = vpop.permute.xlu0 %2380
    %2382 = vrot.lane.b32.xlu0 %v283, 77
    %v2383 = vpop.permute.xlu0 %2382
    %vm2384 = vcmp.lt.s32.totalorder %v296, 77
    %v2385 = vsel %vm2384, %v2381, %v2383
    %v2386 = vsel %vm2384, %v2383, %v2381
    %v2387 = vstv %s123
    %v2388 = vmul.f32 %v2387, %v2385
    %v2389 = vmul.f32 %v2387, %v2386
    %v2390 = vstv %s172
    %v2391 = vmul.f32 %v2390, %v2385
    %v2392 = vmul.f32 %v2390, %v2386
    %v2395 = vrot.slane %v2391, 1
    %v2396 = vrot.slane %v2392, 1
    %v2399 = vadd.f32 %v2388, %v2395
    %v2400 = vadd.f32 %v2389, %v2396
    %v2403 = vcombine.low %v2399, %v2400
    %v2405 = vunpack.c.l.s4 1966171168
    %v2406 = vunpack.c.0.s8 %v2405
    %v2407 = vlaneseq
    %v2408 = vshrl.u32 %v2407, 7
    %v2409 = vsub.s32 %v2406, %v2408
    %v2410 = vrot.slane %v2403, %v2409
    %v2412 = vunpack.c.l.s4 1966171168
    %v2413 = vunpack.c.0.s8 %v2412
    %v2414 = vlaneseq
    %v2415 = vshrl.u32 %v2414, 7
    %v2416 = vsub.s32 %v2413, %v2415
    %v2417 = vrot.slane %v2410, %v2416
    %v2419 = vsel %vm2379, %v2417, 0.0
    %v2420 = vadd.f32 %v2377, %v2419
    %v2421 = vxor.u32 %v2420, 2147483648
    %v2422 = vmul.f32 %v2421, 1.442695
    %v2423 = vpow.pop %v2422
    %v2424 = vadd.f32 %v2423, 1.0
    %v2425 = vrcp.pop %v2424
    %v2426 = vmul.f32 1.0, %v2425
    %v2428 = vlaneseq
    %v2429 = vshrl.u32 %v2428, 7
    %v2430 = vsub.s32 0, %v2429
    %v2431 = vrot.slane %v2426, %v2430
    %v2432 = vlaneseq
    %v2433 = vshrl.u32 %v2432, 7
    %v2434 = vsub.s32 1, %v2433
    %v2435 = vrot.slane %v2426, %v2434
    %v2436 = vcombine.low %v2431, %v2435
    %v2438 = vmul.f32 %v247, %v2436
    %2439 = vst [vmem:[#allocation9] sm:$0xff] %v2438
    %s2440 = scalar_lea.vmem [#allocation2], 8
    %v2441 = vld [vmem:[%s2440] sm:$0xff]
    %v2443 = vcombine.high %v2441, %v2441
    %v2445 = vsel %vm177, %v2441, -inf
    %v2446 = vsel %vm177, %v2443, -inf
    %v2447 = vmax.f32 %v2445, %v2446
    %2448 = vmax.xlane.f32.xlu0 %v2447
    %v2449 = vpop.xlane.xlu0 %2448
    %v2450 = vsel %vm177, %v2441, 0.0
    %v2451 = vsel %vm177, %v2443, 0.0
    %v2452 = vadd.f32 %v2450, %v2451
    %2453 = vadd.xlane.f32.xlu0 %v2452
    %v2454 = vpop.xlane.xlu0 %2453
    %v2455 = vmul.f32 %v2454, 0.00390625
    %v2456 = vmul.f32 %v69, %v2449
    %v2457 = vsel %vm190, %v2456, 0.0
    %v2458 = vrot.slane %v2457, 4
    %v2459 = vadd.f32 %v2457, %v2458
    %v2460 = vrot.slane %v2459, 2
    %v2461 = vadd.f32 %v2459, %v2460
    %v2462 = vrot.slane %v2461, 1
    %v2463 = vadd.f32 %v2461, %v2462
    %v2464 = vadd.f32 %v2463, %v71
    %v2465 = vmax.f32 %v2464, 0.0
    %v2466 = vmul.f32 %v69, %v2455
    %v2467 = vsel %vm190, %v2466, 0.0
    %v2468 = vrot.slane %v2467, 4
    %v2469 = vadd.f32 %v2467, %v2468
    %v2470 = vrot.slane %v2469, 2
    %v2471 = vadd.f32 %v2469, %v2470
    %v2472 = vrot.slane %v2471, 1
    %v2473 = vadd.f32 %v2471, %v2472
    %v2474 = vadd.f32 %v2473, %v71
    %v2475 = vmax.f32 %v2474, 0.0
    %v2476 = vlaneseq
    %v2477 = vshrl.u32 %v2476, 7
    %v2478 = vsub.s32 0, %v2477
    %v2479 = vrot.slane %v2465, %v2478
    %v2480 = vmul.f32 %v70, %v2479
    %v2481 = vsel %vm190, %v2480, 0.0
    %2482 = vadd.xlane.f32.xlu0 %v2481
    %v2483 = vpop.xlane.xlu0 %2482
    %v2484 = vadd.f32 %v2483, %v72
    %v2485 = vlaneseq
    %v2486 = vshrl.u32 %v2485, 7
    %v2487 = vsub.s32 0, %v2486
    %v2488 = vrot.slane %v2475, %v2487
    %v2489 = vmul.f32 %v70, %v2488
    %v2490 = vsel %vm190, %v2489, 0.0
    %2491 = vadd.xlane.f32.xlu0 %v2490
    %v2492 = vpop.xlane.xlu0 %2491
    %v2493 = vadd.f32 %v2492, %v72
    %v2494 = vadd.f32 %v2484, %v2493
    %v2495 = vxor.u32 %v2494, 2147483648
    %v2496 = vmul.f32 %v2495, 1.442695
    %v2497 = vpow.pop %v2496
    %v2498 = vadd.f32 %v2497, 1.0
    %v2499 = vrcp.pop %v2498
    %v2500 = vmul.f32 1.0, %v2499
    %2502 = vset.pattern.permute.xlu0 0
    %2503 = vperm.xlu0 %2502, %v2500
    %v2504 = vpop.permute.xlu0 %2503
    %v2506 = vunpack.c.l.s4 839922192
    %v2507 = vunpack.c.0.s8 %v2506
    %v2508 = vlaneseq
    %v2509 = vshrl.u32 %v2508, 7
    %v2510 = vsub.s32 %v2507, %v2509
    %v2511 = vrot.slane %v2504, %v2510
    %v2513 = vmul.f32 %v2441, %v2511
    %v2515 = vcombine.high %v2513, %v2513
    %v2517 = vsel %vm177, %v2513, -inf
    %v2518 = vrot.slane %v2517, 4
    %v2519 = vmax.f32 %v2517, %v2518
    %v2520 = vrot.slane %v2519, 2
    %v2521 = vmax.f32 %v2519, %v2520
    %v2522 = vrot.slane %v2521, 1
    %v2523 = vmax.f32 %v2521, %v2522
    %v2524 = vsel %vm177, %v2515, -inf
    %v2525 = vrot.slane %v2524, 4
    %v2526 = vmax.f32 %v2524, %v2525
    %v2527 = vrot.slane %v2526, 2
    %v2528 = vmax.f32 %v2526, %v2527
    %v2529 = vrot.slane %v2528, 1
    %v2530 = vmax.f32 %v2528, %v2529
    %v2531 = vsel %vm177, %v2513, 0.0
    %v2532 = vrot.slane %v2531, 4
    %v2533 = vadd.f32 %v2531, %v2532
    %v2534 = vrot.slane %v2533, 2
    %v2535 = vadd.f32 %v2533, %v2534
    %v2536 = vrot.slane %v2535, 1
    %v2537 = vadd.f32 %v2535, %v2536
    %v2538 = vsel %vm177, %v2515, 0.0
    %v2539 = vrot.slane %v2538, 4
    %v2540 = vadd.f32 %v2538, %v2539
    %v2541 = vrot.slane %v2540, 2
    %v2542 = vadd.f32 %v2540, %v2541
    %v2543 = vrot.slane %v2542, 1
    %v2544 = vadd.f32 %v2542, %v2543
    %v2545 = vmul.f32 %v2537, 0.25
    %v2546 = vmul.f32 %v2544, 0.25
    %v2547 = vsel %vm281, %v2523, %v2545
    %v2548 = vsel %vm281, %v2530, %v2546
    %2549 = vrot.lane.b32.xlu0 %v2547, 51
    %v2550 = vpop.permute.xlu0 %2549
    %2551 = vrot.lane.b32.xlu0 %v2548, 51
    %v2552 = vpop.permute.xlu0 %2551
    %v2553 = vsel %vm297, %v2550, %v2552
    %v2554 = vsel %vm297, %v2552, %v2550
    %v2555 = vmul.f32 %v300, %v2554
    %v2556 = vmul.f32 %v300, %v2553
    %v2557 = vmul.f32 %v303, %v2554
    %v2558 = vmul.f32 %v303, %v2553
    %v2561 = vrot.slane %v2557, 1
    %v2562 = vrot.slane %v2558, 1
    %v2565 = vadd.f32 %v2555, %v2561
    %v2566 = vadd.f32 %v2556, %v2562
    %v2569 = vcombine.low %v2565, %v2566
    %v2571 = vunpack.c.l.s4 1966171168
    %v2572 = vunpack.c.0.s8 %v2571
    %v2573 = vlaneseq
    %v2574 = vshrl.u32 %v2573, 7
    %v2575 = vsub.s32 %v2572, %v2574
    %v2576 = vrot.slane %v2569, %v2575
    %v2578 = vunpack.c.l.s4 1966171168
    %v2579 = vunpack.c.0.s8 %v2578
    %v2580 = vlaneseq
    %v2581 = vshrl.u32 %v2580, 7
    %v2582 = vsub.s32 %v2579, %v2581
    %v2583 = vrot.slane %v2576, %v2582
    %v2585 = vsel %vm290, %v2583, 0.0
    %v2586 = vadd.f32 %v2585, 0.0
    %2587 = vrot.lane.b32.xlu0 %v2547, 50
    %v2588 = vpop.permute.xlu0 %2587
    %2589 = vrot.lane.b32.xlu0 %v2548, 50
    %v2590 = vpop.permute.xlu0 %2589
    %v2591 = vsel %vm342, %v2588, %v2590
    %v2592 = vsel %vm342, %v2590, %v2588
    %v2593 = vmul.f32 %v345, %v2592
    %v2594 = vmul.f32 %v345, %v2591
    %v2595 = vmul.f32 %v348, %v2592
    %v2596 = vmul.f32 %v348, %v2591
    %v2599 = vrot.slane %v2595, 1
    %v2600 = vrot.slane %v2596, 1
    %v2603 = vadd.f32 %v2593, %v2599
    %v2604 = vadd.f32 %v2594, %v2600
    %v2607 = vcombine.low %v2603, %v2604
    %v2609 = vunpack.c.l.s4 1966171168
    %v2610 = vunpack.c.0.s8 %v2609
    %v2611 = vlaneseq
    %v2612 = vshrl.u32 %v2611, 7
    %v2613 = vsub.s32 %v2610, %v2612
    %v2614 = vrot.slane %v2607, %v2613
    %v2616 = vunpack.c.l.s4 1966171168
    %v2617 = vunpack.c.0.s8 %v2616
    %v2618 = vlaneseq
    %v2619 = vshrl.u32 %v2618, 7
    %v2620 = vsub.s32 %v2617, %v2619
    %v2621 = vrot.slane %v2614, %v2620
    %v2623 = vsel %vm337, %v2621, 0.0
    %v2624 = vadd.f32 %v2586, %v2623
    %2625 = vrot.lane.b32.xlu0 %v2547, 49
    %v2626 = vpop.permute.xlu0 %2625
    %2627 = vrot.lane.b32.xlu0 %v2548, 49
    %v2628 = vpop.permute.xlu0 %2627
    %v2629 = vsel %vm387, %v2626, %v2628
    %v2630 = vsel %vm387, %v2628, %v2626
    %v2631 = vmul.f32 %v390, %v2630
    %v2632 = vmul.f32 %v390, %v2629
    %v2633 = vmul.f32 %v393, %v2630
    %v2634 = vmul.f32 %v393, %v2629
    %v2637 = vrot.slane %v2633, 1
    %v2638 = vrot.slane %v2634, 1
    %v2641 = vadd.f32 %v2631, %v2637
    %v2642 = vadd.f32 %v2632, %v2638
    %v2645 = vcombine.low %v2641, %v2642
    %v2647 = vunpack.c.l.s4 1966171168
    %v2648 = vunpack.c.0.s8 %v2647
    %v2649 = vlaneseq
    %v2650 = vshrl.u32 %v2649, 7
    %v2651 = vsub.s32 %v2648, %v2650
    %v2652 = vrot.slane %v2645, %v2651
    %v2654 = vunpack.c.l.s4 1966171168
    %v2655 = vunpack.c.0.s8 %v2654
    %v2656 = vlaneseq
    %v2657 = vshrl.u32 %v2656, 7
    %v2658 = vsub.s32 %v2655, %v2657
    %v2659 = vrot.slane %v2652, %v2658
    %v2661 = vsel %vm382, %v2659, 0.0
    %v2662 = vadd.f32 %v2624, %v2661
    %2663 = vrot.lane.b32.xlu0 %v2547, 48
    %v2664 = vpop.permute.xlu0 %2663
    %2665 = vrot.lane.b32.xlu0 %v2548, 48
    %v2666 = vpop.permute.xlu0 %2665
    %v2667 = vsel %vm432, %v2664, %v2666
    %v2668 = vsel %vm432, %v2666, %v2664
    %v2669 = vmul.f32 %v435, %v2668
    %v2670 = vmul.f32 %v435, %v2667
    %v2671 = vmul.f32 %v438, %v2668
    %v2672 = vmul.f32 %v438, %v2667
    %v2675 = vrot.slane %v2671, 1
    %v2676 = vrot.slane %v2672, 1
    %v2679 = vadd.f32 %v2669, %v2675
    %v2680 = vadd.f32 %v2670, %v2676
    %v2683 = vcombine.low %v2679, %v2680
    %v2685 = vunpack.c.l.s4 1966171168
    %v2686 = vunpack.c.0.s8 %v2685
    %v2687 = vlaneseq
    %v2688 = vshrl.u32 %v2687, 7
    %v2689 = vsub.s32 %v2686, %v2688
    %v2690 = vrot.slane %v2683, %v2689
    %v2692 = vunpack.c.l.s4 1966171168
    %v2693 = vunpack.c.0.s8 %v2692
    %v2694 = vlaneseq
    %v2695 = vshrl.u32 %v2694, 7
    %v2696 = vsub.s32 %v2693, %v2695
    %v2697 = vrot.slane %v2690, %v2696
    %v2699 = vsel %vm427, %v2697, 0.0
    %v2700 = vadd.f32 %v2662, %v2699
    %2701 = vrot.lane.b32.xlu0 %v2547, 47
    %v2702 = vpop.permute.xlu0 %2701
    %2703 = vrot.lane.b32.xlu0 %v2548, 47
    %v2704 = vpop.permute.xlu0 %2703
    %v2705 = vsel %vm477, %v2702, %v2704
    %v2706 = vsel %vm477, %v2704, %v2702
    %v2707 = vmul.f32 %v480, %v2706
    %v2708 = vmul.f32 %v480, %v2705
    %v2709 = vmul.f32 %v483, %v2706
    %v2710 = vmul.f32 %v483, %v2705
    %v2713 = vrot.slane %v2709, 1
    %v2714 = vrot.slane %v2710, 1
    %v2717 = vadd.f32 %v2707, %v2713
    %v2718 = vadd.f32 %v2708, %v2714
    %v2721 = vcombine.low %v2717, %v2718
    %v2723 = vunpack.c.l.s4 1966171168
    %v2724 = vunpack.c.0.s8 %v2723
    %v2725 = vlaneseq
    %v2726 = vshrl.u32 %v2725, 7
    %v2727 = vsub.s32 %v2724, %v2726
    %v2728 = vrot.slane %v2721, %v2727
    %v2730 = vunpack.c.l.s4 1966171168
    %v2731 = vunpack.c.0.s8 %v2730
    %v2732 = vlaneseq
    %v2733 = vshrl.u32 %v2732, 7
    %v2734 = vsub.s32 %v2731, %v2733
    %v2735 = vrot.slane %v2728, %v2734
    %v2737 = vsel %vm472, %v2735, 0.0
    %v2738 = vadd.f32 %v2700, %v2737
    %2739 = vrot.lane.b32.xlu0 %v2547, 46
    %v2740 = vpop.permute.xlu0 %2739
    %2741 = vrot.lane.b32.xlu0 %v2548, 46
    %v2742 = vpop.permute.xlu0 %2741
    %v2743 = vsel %vm522, %v2740, %v2742
    %v2744 = vsel %vm522, %v2742, %v2740
    %v2745 = vmul.f32 %v525, %v2744
    %v2746 = vmul.f32 %v525, %v2743
    %v2747 = vmul.f32 %v528, %v2744
    %v2748 = vmul.f32 %v528, %v2743
    %v2751 = vrot.slane %v2747, 1
    %v2752 = vrot.slane %v2748, 1
    %v2755 = vadd.f32 %v2745, %v2751
    %v2756 = vadd.f32 %v2746, %v2752
    %v2759 = vcombine.low %v2755, %v2756
    %v2761 = vunpack.c.l.s4 1966171168
    %v2762 = vunpack.c.0.s8 %v2761
    %v2763 = vlaneseq
    %v2764 = vshrl.u32 %v2763, 7
    %v2765 = vsub.s32 %v2762, %v2764
    %v2766 = vrot.slane %v2759, %v2765
    %v2768 = vunpack.c.l.s4 1966171168
    %v2769 = vunpack.c.0.s8 %v2768
    %v2770 = vlaneseq
    %v2771 = vshrl.u32 %v2770, 7
    %v2772 = vsub.s32 %v2769, %v2771
    %v2773 = vrot.slane %v2766, %v2772
    %v2775 = vsel %vm517, %v2773, 0.0
    %v2776 = vadd.f32 %v2738, %v2775
    %2777 = vrot.lane.b32.xlu0 %v2547, 45
    %v2778 = vpop.permute.xlu0 %2777
    %2779 = vrot.lane.b32.xlu0 %v2548, 45
    %v2780 = vpop.permute.xlu0 %2779
    %v2781 = vsel %vm567, %v2778, %v2780
    %v2782 = vsel %vm567, %v2780, %v2778
    %v2783 = vmul.f32 %v570, %v2782
    %v2784 = vmul.f32 %v570, %v2781
    %v2785 = vmul.f32 %v573, %v2782
    %v2786 = vmul.f32 %v573, %v2781
    %v2789 = vrot.slane %v2785, 1
    %v2790 = vrot.slane %v2786, 1
    %v2793 = vadd.f32 %v2783, %v2789
    %v2794 = vadd.f32 %v2784, %v2790
    %v2797 = vcombine.low %v2793, %v2794
    %v2799 = vunpack.c.l.s4 1966171168
    %v2800 = vunpack.c.0.s8 %v2799
    %v2801 = vlaneseq
    %v2802 = vshrl.u32 %v2801, 7
    %v2803 = vsub.s32 %v2800, %v2802
    %v2804 = vrot.slane %v2797, %v2803
    %v2806 = vunpack.c.l.s4 1966171168
    %v2807 = vunpack.c.0.s8 %v2806
    %v2808 = vlaneseq
    %v2809 = vshrl.u32 %v2808, 7
    %v2810 = vsub.s32 %v2807, %v2809
    %v2811 = vrot.slane %v2804, %v2810
    %v2813 = vsel %vm562, %v2811, 0.0
    %v2814 = vadd.f32 %v2776, %v2813
    %2815 = vrot.lane.b32.xlu0 %v2547, 35
    %v2816 = vpop.permute.xlu0 %2815
    %2817 = vrot.lane.b32.xlu0 %v2548, 35
    %v2818 = vpop.permute.xlu0 %2817
    %v2819 = vsel %vm613, %v2816, %v2818
    %v2820 = vsel %vm613, %v2818, %v2816
    %v2821 = vmul.f32 %v616, %v2820
    %v2822 = vmul.f32 %v616, %v2819
    %v2823 = vmul.f32 %v619, %v2820
    %v2824 = vmul.f32 %v619, %v2819
    %v2827 = vrot.slane %v2823, 1
    %v2828 = vrot.slane %v2824, 1
    %v2831 = vadd.f32 %v2821, %v2827
    %v2832 = vadd.f32 %v2822, %v2828
    %v2835 = vcombine.low %v2831, %v2832
    %v2837 = vunpack.c.l.s4 1966171168
    %v2838 = vunpack.c.0.s8 %v2837
    %v2839 = vlaneseq
    %v2840 = vshrl.u32 %v2839, 7
    %v2841 = vsub.s32 %v2838, %v2840
    %v2842 = vrot.slane %v2835, %v2841
    %v2844 = vunpack.c.l.s4 1966171168
    %v2845 = vunpack.c.0.s8 %v2844
    %v2846 = vlaneseq
    %v2847 = vshrl.u32 %v2846, 7
    %v2848 = vsub.s32 %v2845, %v2847
    %v2849 = vrot.slane %v2842, %v2848
    %v2851 = vsel %vm608, %v2849, 0.0
    %v2852 = vadd.f32 %v2814, %v2851
    %2853 = vrot.lane.b32.xlu0 %v2547, 34
    %v2854 = vpop.permute.xlu0 %2853
    %2855 = vrot.lane.b32.xlu0 %v2548, 34
    %v2856 = vpop.permute.xlu0 %2855
    %v2857 = vsel %vm656, %v2854, %v2856
    %v2858 = vsel %vm656, %v2856, %v2854
    %v2859 = vmul.f32 %v659, %v2858
    %v2860 = vmul.f32 %v659, %v2857
    %v2861 = vmul.f32 %v662, %v2858
    %v2862 = vmul.f32 %v662, %v2857
    %v2865 = vrot.slane %v2861, 1
    %v2866 = vrot.slane %v2862, 1
    %v2869 = vadd.f32 %v2859, %v2865
    %v2870 = vadd.f32 %v2860, %v2866
    %v2873 = vcombine.low %v2869, %v2870
    %v2875 = vunpack.c.l.s4 1966171168
    %v2876 = vunpack.c.0.s8 %v2875
    %v2877 = vlaneseq
    %v2878 = vshrl.u32 %v2877, 7
    %v2879 = vsub.s32 %v2876, %v2878
    %v2880 = vrot.slane %v2873, %v2879
    %v2882 = vunpack.c.l.s4 1966171168
    %v2883 = vunpack.c.0.s8 %v2882
    %v2884 = vlaneseq
    %v2885 = vshrl.u32 %v2884, 7
    %v2886 = vsub.s32 %v2883, %v2885
    %v2887 = vrot.slane %v2880, %v2886
    %v2889 = vsel %vm651, %v2887, 0.0
    %v2890 = vadd.f32 %v2852, %v2889
    %2891 = vrot.lane.b32.xlu0 %v2547, 33
    %v2892 = vpop.permute.xlu0 %2891
    %2893 = vrot.lane.b32.xlu0 %v2548, 33
    %v2894 = vpop.permute.xlu0 %2893
    %v2895 = vsel %vm699, %v2892, %v2894
    %v2896 = vsel %vm699, %v2894, %v2892
    %v2897 = vmul.f32 %v702, %v2896
    %v2898 = vmul.f32 %v702, %v2895
    %v2899 = vmul.f32 %v705, %v2896
    %v2900 = vmul.f32 %v705, %v2895
    %v2903 = vrot.slane %v2899, 1
    %v2904 = vrot.slane %v2900, 1
    %v2907 = vadd.f32 %v2897, %v2903
    %v2908 = vadd.f32 %v2898, %v2904
    %v2911 = vcombine.low %v2907, %v2908
    %v2913 = vunpack.c.l.s4 1966171168
    %v2914 = vunpack.c.0.s8 %v2913
    %v2915 = vlaneseq
    %v2916 = vshrl.u32 %v2915, 7
    %v2917 = vsub.s32 %v2914, %v2916
    %v2918 = vrot.slane %v2911, %v2917
    %v2920 = vunpack.c.l.s4 1966171168
    %v2921 = vunpack.c.0.s8 %v2920
    %v2922 = vlaneseq
    %v2923 = vshrl.u32 %v2922, 7
    %v2924 = vsub.s32 %v2921, %v2923
    %v2925 = vrot.slane %v2918, %v2924
    %v2927 = vsel %vm694, %v2925, 0.0
    %v2928 = vadd.f32 %v2890, %v2927
    %2929 = vrot.lane.b32.xlu0 %v2547, 32
    %v2930 = vpop.permute.xlu0 %2929
    %2931 = vrot.lane.b32.xlu0 %v2548, 32
    %v2932 = vpop.permute.xlu0 %2931
    %v2933 = vsel %vm742, %v2930, %v2932
    %v2934 = vsel %vm742, %v2932, %v2930
    %v2935 = vmul.f32 %v745, %v2934
    %v2936 = vmul.f32 %v745, %v2933
    %v2937 = vmul.f32 %v748, %v2934
    %v2938 = vmul.f32 %v748, %v2933
    %v2941 = vrot.slane %v2937, 1
    %v2942 = vrot.slane %v2938, 1
    %v2945 = vadd.f32 %v2935, %v2941
    %v2946 = vadd.f32 %v2936, %v2942
    %v2949 = vcombine.low %v2945, %v2946
    %v2951 = vunpack.c.l.s4 1966171168
    %v2952 = vunpack.c.0.s8 %v2951
    %v2953 = vlaneseq
    %v2954 = vshrl.u32 %v2953, 7
    %v2955 = vsub.s32 %v2952, %v2954
    %v2956 = vrot.slane %v2949, %v2955
    %v2958 = vunpack.c.l.s4 1966171168
    %v2959 = vunpack.c.0.s8 %v2958
    %v2960 = vlaneseq
    %v2961 = vshrl.u32 %v2960, 7
    %v2962 = vsub.s32 %v2959, %v2961
    %v2963 = vrot.slane %v2956, %v2962
    %v2965 = vsel %vm737, %v2963, 0.0
    %v2966 = vadd.f32 %v2928, %v2965
    %2967 = vrot.lane.b32.xlu0 %v2547, 31
    %v2968 = vpop.permute.xlu0 %2967
    %2969 = vrot.lane.b32.xlu0 %v2548, 31
    %v2970 = vpop.permute.xlu0 %2969
    %v2971 = vsel %vm785, %v2968, %v2970
    %v2972 = vsel %vm785, %v2970, %v2968
    %v2973 = vmul.f32 %v788, %v2972
    %v2974 = vmul.f32 %v788, %v2971
    %v2975 = vmul.f32 %v791, %v2972
    %v2976 = vmul.f32 %v791, %v2971
    %v2979 = vrot.slane %v2975, 1
    %v2980 = vrot.slane %v2976, 1
    %v2983 = vadd.f32 %v2973, %v2979
    %v2984 = vadd.f32 %v2974, %v2980
    %v2987 = vcombine.low %v2983, %v2984
    %v2989 = vunpack.c.l.s4 1966171168
    %v2990 = vunpack.c.0.s8 %v2989
    %v2991 = vlaneseq
    %v2992 = vshrl.u32 %v2991, 7
    %v2993 = vsub.s32 %v2990, %v2992
    %v2994 = vrot.slane %v2987, %v2993
    %v2996 = vunpack.c.l.s4 1966171168
    %v2997 = vunpack.c.0.s8 %v2996
    %v2998 = vlaneseq
    %v2999 = vshrl.u32 %v2998, 7
    %v3000 = vsub.s32 %v2997, %v2999
    %v3001 = vrot.slane %v2994, %v3000
    %v3003 = vsel %vm780, %v3001, 0.0
    %v3004 = vadd.f32 %v2966, %v3003
    %3005 = vrot.lane.b32.xlu0 %v2547, 30
    %v3006 = vpop.permute.xlu0 %3005
    %3007 = vrot.lane.b32.xlu0 %v2548, 30
    %v3008 = vpop.permute.xlu0 %3007
    %v3009 = vsel %vm828, %v3006, %v3008
    %v3010 = vsel %vm828, %v3008, %v3006
    %v3011 = vmul.f32 %v831, %v3010
    %v3012 = vmul.f32 %v831, %v3009
    %v3013 = vmul.f32 %v834, %v3010
    %v3014 = vmul.f32 %v834, %v3009
    %v3017 = vrot.slane %v3013, 1
    %v3018 = vrot.slane %v3014, 1
    %v3021 = vadd.f32 %v3011, %v3017
    %v3022 = vadd.f32 %v3012, %v3018
    %v3025 = vcombine.low %v3021, %v3022
    %v3027 = vunpack.c.l.s4 1966171168
    %v3028 = vunpack.c.0.s8 %v3027
    %v3029 = vlaneseq
    %v3030 = vshrl.u32 %v3029, 7
    %v3031 = vsub.s32 %v3028, %v3030
    %v3032 = vrot.slane %v3025, %v3031
    %v3034 = vunpack.c.l.s4 1966171168
    %v3035 = vunpack.c.0.s8 %v3034
    %v3036 = vlaneseq
    %v3037 = vshrl.u32 %v3036, 7
    %v3038 = vsub.s32 %v3035, %v3037
    %v3039 = vrot.slane %v3032, %v3038
    %v3041 = vsel %vm823, %v3039, 0.0
    %v3042 = vadd.f32 %v3004, %v3041
    %3043 = vrot.lane.b32.xlu0 %v2547, 29
    %v3044 = vpop.permute.xlu0 %3043
    %3045 = vrot.lane.b32.xlu0 %v2548, 29
    %v3046 = vpop.permute.xlu0 %3045
    %v3047 = vsel %vm871, %v3044, %v3046
    %v3048 = vsel %vm871, %v3046, %v3044
    %v3049 = vmul.f32 %v874, %v3048
    %v3050 = vmul.f32 %v874, %v3047
    %v3051 = vmul.f32 %v877, %v3048
    %v3052 = vmul.f32 %v877, %v3047
    %v3055 = vrot.slane %v3051, 1
    %v3056 = vrot.slane %v3052, 1
    %v3059 = vadd.f32 %v3049, %v3055
    %v3060 = vadd.f32 %v3050, %v3056
    %v3063 = vcombine.low %v3059, %v3060
    %v3065 = vunpack.c.l.s4 1966171168
    %v3066 = vunpack.c.0.s8 %v3065
    %v3067 = vlaneseq
    %v3068 = vshrl.u32 %v3067, 7
    %v3069 = vsub.s32 %v3066, %v3068
    %v3070 = vrot.slane %v3063, %v3069
    %v3072 = vunpack.c.l.s4 1966171168
    %v3073 = vunpack.c.0.s8 %v3072
    %v3074 = vlaneseq
    %v3075 = vshrl.u32 %v3074, 7
    %v3076 = vsub.s32 %v3073, %v3075
    %v3077 = vrot.slane %v3070, %v3076
    %v3079 = vsel %vm866, %v3077, 0.0
    %v3080 = vadd.f32 %v3042, %v3079
    %3081 = vrot.lane.b32.xlu0 %v2547, 19
    %v3082 = vpop.permute.xlu0 %3081
    %3083 = vrot.lane.b32.xlu0 %v2548, 19
    %v3084 = vpop.permute.xlu0 %3083
    %v3085 = vsel %vm917, %v3082, %v3084
    %v3086 = vsel %vm917, %v3084, %v3082
    %v3087 = vmul.f32 %v920, %v3086
    %v3088 = vmul.f32 %v920, %v3085
    %v3089 = vmul.f32 %v923, %v3086
    %v3090 = vmul.f32 %v923, %v3085
    %v3093 = vrot.slane %v3089, 1
    %v3094 = vrot.slane %v3090, 1
    %v3097 = vadd.f32 %v3087, %v3093
    %v3098 = vadd.f32 %v3088, %v3094
    %v3101 = vcombine.low %v3097, %v3098
    %v3103 = vunpack.c.l.s4 1966171168
    %v3104 = vunpack.c.0.s8 %v3103
    %v3105 = vlaneseq
    %v3106 = vshrl.u32 %v3105, 7
    %v3107 = vsub.s32 %v3104, %v3106
    %v3108 = vrot.slane %v3101, %v3107
    %v3110 = vunpack.c.l.s4 1966171168
    %v3111 = vunpack.c.0.s8 %v3110
    %v3112 = vlaneseq
    %v3113 = vshrl.u32 %v3112, 7
    %v3114 = vsub.s32 %v3111, %v3113
    %v3115 = vrot.slane %v3108, %v3114
    %v3117 = vsel %vm912, %v3115, 0.0
    %v3118 = vadd.f32 %v3080, %v3117
    %3119 = vrot.lane.b32.xlu0 %v2547, 18
    %v3120 = vpop.permute.xlu0 %3119
    %3121 = vrot.lane.b32.xlu0 %v2548, 18
    %v3122 = vpop.permute.xlu0 %3121
    %v3123 = vsel %vm960, %v3120, %v3122
    %v3124 = vsel %vm960, %v3122, %v3120
    %v3125 = vmul.f32 %v963, %v3124
    %v3126 = vmul.f32 %v963, %v3123
    %v3127 = vmul.f32 %v966, %v3124
    %v3128 = vmul.f32 %v966, %v3123
    %v3131 = vrot.slane %v3127, 1
    %v3132 = vrot.slane %v3128, 1
    %v3135 = vadd.f32 %v3125, %v3131
    %v3136 = vadd.f32 %v3126, %v3132
    %v3139 = vcombine.low %v3135, %v3136
    %v3141 = vunpack.c.l.s4 1966171168
    %v3142 = vunpack.c.0.s8 %v3141
    %v3143 = vlaneseq
    %v3144 = vshrl.u32 %v3143, 7
    %v3145 = vsub.s32 %v3142, %v3144
    %v3146 = vrot.slane %v3139, %v3145
    %v3148 = vunpack.c.l.s4 1966171168
    %v3149 = vunpack.c.0.s8 %v3148
    %v3150 = vlaneseq
    %v3151 = vshrl.u32 %v3150, 7
    %v3152 = vsub.s32 %v3149, %v3151
    %v3153 = vrot.slane %v3146, %v3152
    %v3155 = vsel %vm955, %v3153, 0.0
    %v3156 = vadd.f32 %v3118, %v3155
    %3157 = vrot.lane.b32.xlu0 %v2547, 17
    %v3158 = vpop.permute.xlu0 %3157
    %3159 = vrot.lane.b32.xlu0 %v2548, 17
    %v3160 = vpop.permute.xlu0 %3159
    %v3161 = vsel %vm1003, %v3158, %v3160
    %v3162 = vsel %vm1003, %v3160, %v3158
    %v3163 = vmul.f32 %v1006, %v3162
    %v3164 = vmul.f32 %v1006, %v3161
    %v3165 = vmul.f32 %v1009, %v3162
    %v3166 = vmul.f32 %v1009, %v3161
    %v3169 = vrot.slane %v3165, 1
    %v3170 = vrot.slane %v3166, 1
    %v3173 = vadd.f32 %v3163, %v3169
    %v3174 = vadd.f32 %v3164, %v3170
    %v3177 = vcombine.low %v3173, %v3174
    %v3179 = vunpack.c.l.s4 1966171168
    %v3180 = vunpack.c.0.s8 %v3179
    %v3181 = vlaneseq
    %v3182 = vshrl.u32 %v3181, 7
    %v3183 = vsub.s32 %v3180, %v3182
    %v3184 = vrot.slane %v3177, %v3183
    %v3186 = vunpack.c.l.s4 1966171168
    %v3187 = vunpack.c.0.s8 %v3186
    %v3188 = vlaneseq
    %v3189 = vshrl.u32 %v3188, 7
    %v3190 = vsub.s32 %v3187, %v3189
    %v3191 = vrot.slane %v3184, %v3190
    %v3193 = vsel %vm998, %v3191, 0.0
    %v3194 = vadd.f32 %v3156, %v3193
    %3195 = vrot.lane.b32.xlu0 %v2547, 16
    %v3196 = vpop.permute.xlu0 %3195
    %3197 = vrot.lane.b32.xlu0 %v2548, 16
    %v3198 = vpop.permute.xlu0 %3197
    %v3199 = vsel %vm1046, %v3196, %v3198
    %v3200 = vsel %vm1046, %v3198, %v3196
    %v3201 = vmul.f32 %v1049, %v3200
    %v3202 = vmul.f32 %v1049, %v3199
    %v3203 = vmul.f32 %v1052, %v3200
    %v3204 = vmul.f32 %v1052, %v3199
    %v3207 = vrot.slane %v3203, 1
    %v3208 = vrot.slane %v3204, 1
    %v3211 = vadd.f32 %v3201, %v3207
    %v3212 = vadd.f32 %v3202, %v3208
    %v3215 = vcombine.low %v3211, %v3212
    %v3217 = vunpack.c.l.s4 1966171168
    %v3218 = vunpack.c.0.s8 %v3217
    %v3219 = vlaneseq
    %v3220 = vshrl.u32 %v3219, 7
    %v3221 = vsub.s32 %v3218, %v3220
    %v3222 = vrot.slane %v3215, %v3221
    %v3224 = vunpack.c.l.s4 1966171168
    %v3225 = vunpack.c.0.s8 %v3224
    %v3226 = vlaneseq
    %v3227 = vshrl.u32 %v3226, 7
    %v3228 = vsub.s32 %v3225, %v3227
    %v3229 = vrot.slane %v3222, %v3228
    %v3231 = vsel %vm1041, %v3229, 0.0
    %v3232 = vadd.f32 %v3194, %v3231
    %3233 = vrot.lane.b32.xlu0 %v2547, 15
    %v3234 = vpop.permute.xlu0 %3233
    %3235 = vrot.lane.b32.xlu0 %v2548, 15
    %v3236 = vpop.permute.xlu0 %3235
    %v3237 = vsel %vm1089, %v3234, %v3236
    %v3238 = vsel %vm1089, %v3236, %v3234
    %v3239 = vmul.f32 %v1092, %v3238
    %v3240 = vmul.f32 %v1092, %v3237
    %v3241 = vmul.f32 %v1095, %v3238
    %v3242 = vmul.f32 %v1095, %v3237
    %v3245 = vrot.slane %v3241, 1
    %v3246 = vrot.slane %v3242, 1
    %v3249 = vadd.f32 %v3239, %v3245
    %v3250 = vadd.f32 %v3240, %v3246
    %v3253 = vcombine.low %v3249, %v3250
    %v3255 = vunpack.c.l.s4 1966171168
    %v3256 = vunpack.c.0.s8 %v3255
    %v3257 = vlaneseq
    %v3258 = vshrl.u32 %v3257, 7
    %v3259 = vsub.s32 %v3256, %v3258
    %v3260 = vrot.slane %v3253, %v3259
    %v3262 = vunpack.c.l.s4 1966171168
    %v3263 = vunpack.c.0.s8 %v3262
    %v3264 = vlaneseq
    %v3265 = vshrl.u32 %v3264, 7
    %v3266 = vsub.s32 %v3263, %v3265
    %v3267 = vrot.slane %v3260, %v3266
    %v3269 = vsel %vm1084, %v3267, 0.0
    %v3270 = vadd.f32 %v3232, %v3269
    %3271 = vrot.lane.b32.xlu0 %v2547, 14
    %v3272 = vpop.permute.xlu0 %3271
    %3273 = vrot.lane.b32.xlu0 %v2548, 14
    %v3274 = vpop.permute.xlu0 %3273
    %v3275 = vsel %vm1132, %v3272, %v3274
    %v3276 = vsel %vm1132, %v3274, %v3272
    %v3277 = vmul.f32 %v1135, %v3276
    %v3278 = vmul.f32 %v1135, %v3275
    %v3279 = vmul.f32 %v1138, %v3276
    %v3280 = vmul.f32 %v1138, %v3275
    %v3283 = vrot.slane %v3279, 1
    %v3284 = vrot.slane %v3280, 1
    %v3287 = vadd.f32 %v3277, %v3283
    %v3288 = vadd.f32 %v3278, %v3284
    %v3291 = vcombine.low %v3287, %v3288
    %v3293 = vunpack.c.l.s4 1966171168
    %v3294 = vunpack.c.0.s8 %v3293
    %v3295 = vlaneseq
    %v3296 = vshrl.u32 %v3295, 7
    %v3297 = vsub.s32 %v3294, %v3296
    %v3298 = vrot.slane %v3291, %v3297
    %v3300 = vunpack.c.l.s4 1966171168
    %v3301 = vunpack.c.0.s8 %v3300
    %v3302 = vlaneseq
    %v3303 = vshrl.u32 %v3302, 7
    %v3304 = vsub.s32 %v3301, %v3303
    %v3305 = vrot.slane %v3298, %v3304
    %v3307 = vsel %vm1127, %v3305, 0.0
    %v3308 = vadd.f32 %v3270, %v3307
    %3309 = vrot.lane.b32.xlu0 %v2547, 13
    %v3310 = vpop.permute.xlu0 %3309
    %3311 = vrot.lane.b32.xlu0 %v2548, 13
    %v3312 = vpop.permute.xlu0 %3311
    %v3313 = vsel %vm1175, %v3310, %v3312
    %v3314 = vsel %vm1175, %v3312, %v3310
    %v3315 = vmul.f32 %v1178, %v3314
    %v3316 = vmul.f32 %v1178, %v3313
    %v3317 = vmul.f32 %v1181, %v3314
    %v3318 = vmul.f32 %v1181, %v3313
    %v3321 = vrot.slane %v3317, 1
    %v3322 = vrot.slane %v3318, 1
    %v3325 = vadd.f32 %v3315, %v3321
    %v3326 = vadd.f32 %v3316, %v3322
    %v3329 = vcombine.low %v3325, %v3326
    %v3331 = vunpack.c.l.s4 1966171168
    %v3332 = vunpack.c.0.s8 %v3331
    %v3333 = vlaneseq
    %v3334 = vshrl.u32 %v3333, 7
    %v3335 = vsub.s32 %v3332, %v3334
    %v3336 = vrot.slane %v3329, %v3335
    %v3338 = vunpack.c.l.s4 1966171168
    %v3339 = vunpack.c.0.s8 %v3338
    %v3340 = vlaneseq
    %v3341 = vshrl.u32 %v3340, 7
    %v3342 = vsub.s32 %v3339, %v3341
    %v3343 = vrot.slane %v3336, %v3342
    %v3345 = vsel %vm1170, %v3343, 0.0
    %v3346 = vadd.f32 %v3308, %v3345
    %3347 = vrot.lane.b32.xlu0 %v2547, 3
    %v3348 = vpop.permute.xlu0 %3347
    %3349 = vrot.lane.b32.xlu0 %v2548, 3
    %v3350 = vpop.permute.xlu0 %3349
    %v3351 = vsel %vm1221, %v3348, %v3350
    %v3352 = vsel %vm1221, %v3350, %v3348
    %v3353 = vmul.f32 %v1224, %v3352
    %v3354 = vmul.f32 %v1224, %v3351
    %v3355 = vmul.f32 %v1227, %v3352
    %v3356 = vmul.f32 %v1227, %v3351
    %v3359 = vrot.slane %v3355, 1
    %v3360 = vrot.slane %v3356, 1
    %v3363 = vadd.f32 %v3353, %v3359
    %v3364 = vadd.f32 %v3354, %v3360
    %v3367 = vcombine.low %v3363, %v3364
    %v3369 = vunpack.c.l.s4 1966171168
    %v3370 = vunpack.c.0.s8 %v3369
    %v3371 = vlaneseq
    %v3372 = vshrl.u32 %v3371, 7
    %v3373 = vsub.s32 %v3370, %v3372
    %v3374 = vrot.slane %v3367, %v3373
    %v3376 = vunpack.c.l.s4 1966171168
    %v3377 = vunpack.c.0.s8 %v3376
    %v3378 = vlaneseq
    %v3379 = vshrl.u32 %v3378, 7
    %v3380 = vsub.s32 %v3377, %v3379
    %v3381 = vrot.slane %v3374, %v3380
    %v3383 = vsel %vm1216, %v3381, 0.0
    %v3384 = vadd.f32 %v3346, %v3383
    %3385 = vrot.lane.b32.xlu0 %v2547, 2
    %v3386 = vpop.permute.xlu0 %3385
    %3387 = vrot.lane.b32.xlu0 %v2548, 2
    %v3388 = vpop.permute.xlu0 %3387
    %v3389 = vsel %vm1264, %v3386, %v3388
    %v3390 = vsel %vm1264, %v3388, %v3386
    %v3391 = vmul.f32 %v1267, %v3390
    %v3392 = vmul.f32 %v1267, %v3389
    %v3393 = vmul.f32 %v1270, %v3390
    %v3394 = vmul.f32 %v1270, %v3389
    %v3397 = vrot.slane %v3393, 1
    %v3398 = vrot.slane %v3394, 1
    %v3401 = vadd.f32 %v3391, %v3397
    %v3402 = vadd.f32 %v3392, %v3398
    %v3405 = vcombine.low %v3401, %v3402
    %v3407 = vunpack.c.l.s4 1966171168
    %v3408 = vunpack.c.0.s8 %v3407
    %v3409 = vlaneseq
    %v3410 = vshrl.u32 %v3409, 7
    %v3411 = vsub.s32 %v3408, %v3410
    %v3412 = vrot.slane %v3405, %v3411
    %v3414 = vunpack.c.l.s4 1966171168
    %v3415 = vunpack.c.0.s8 %v3414
    %v3416 = vlaneseq
    %v3417 = vshrl.u32 %v3416, 7
    %v3418 = vsub.s32 %v3415, %v3417
    %v3419 = vrot.slane %v3412, %v3418
    %v3421 = vsel %vm1259, %v3419, 0.0
    %v3422 = vadd.f32 %v3384, %v3421
    %3423 = vrot.lane.b32.xlu0 %v2547, 1
    %v3424 = vpop.permute.xlu0 %3423
    %3425 = vrot.lane.b32.xlu0 %v2548, 1
    %v3426 = vpop.permute.xlu0 %3425
    %v3427 = vsel %vm1307, %v3424, %v3426
    %v3428 = vsel %vm1307, %v3426, %v3424
    %v3429 = vmul.f32 %v1310, %v3428
    %v3430 = vmul.f32 %v1310, %v3427
    %v3431 = vmul.f32 %v1313, %v3428
    %v3432 = vmul.f32 %v1313, %v3427
    %v3435 = vrot.slane %v3431, 1
    %v3436 = vrot.slane %v3432, 1
    %v3439 = vadd.f32 %v3429, %v3435
    %v3440 = vadd.f32 %v3430, %v3436
    %v3443 = vcombine.low %v3439, %v3440
    %v3445 = vunpack.c.l.s4 1966171168
    %v3446 = vunpack.c.0.s8 %v3445
    %v3447 = vlaneseq
    %v3448 = vshrl.u32 %v3447, 7
    %v3449 = vsub.s32 %v3446, %v3448
    %v3450 = vrot.slane %v3443, %v3449
    %v3452 = vunpack.c.l.s4 1966171168
    %v3453 = vunpack.c.0.s8 %v3452
    %v3454 = vlaneseq
    %v3455 = vshrl.u32 %v3454, 7
    %v3456 = vsub.s32 %v3453, %v3455
    %v3457 = vrot.slane %v3450, %v3456
    %v3459 = vsel %vm1302, %v3457, 0.0
    %v3460 = vadd.f32 %v3422, %v3459
    %v3461 = vmul.f32 %v1346, %v2547
    %v3462 = vmul.f32 %v1346, %v2548
    %v3463 = vmul.f32 %v1349, %v2547
    %v3464 = vmul.f32 %v1349, %v2548
    %v3467 = vrot.slane %v3463, 1
    %v3468 = vrot.slane %v3464, 1
    %v3471 = vadd.f32 %v3461, %v3467
    %v3472 = vadd.f32 %v3462, %v3468
    %v3475 = vcombine.low %v3471, %v3472
    %v3477 = vunpack.c.l.s4 1966171168
    %v3478 = vunpack.c.0.s8 %v3477
    %v3479 = vlaneseq
    %v3480 = vshrl.u32 %v3479, 7
    %v3481 = vsub.s32 %v3478, %v3480
    %v3482 = vrot.slane %v3475, %v3481
    %v3484 = vunpack.c.l.s4 1966171168
    %v3485 = vunpack.c.0.s8 %v3484
    %v3486 = vlaneseq
    %v3487 = vshrl.u32 %v3486, 7
    %v3488 = vsub.s32 %v3485, %v3487
    %v3489 = vrot.slane %v3482, %v3488
    %v3491 = vsel %vm1345, %v3489, 0.0
    %v3492 = vadd.f32 %v3460, %v3491
    %3493 = vrot.lane.b32.xlu0 %v2547, 127
    %v3494 = vpop.permute.xlu0 %3493
    %3495 = vrot.lane.b32.xlu0 %v2548, 127
    %v3496 = vpop.permute.xlu0 %3495
    %v3497 = vsel %vm1386, %v3494, %v3496
    %v3498 = vsel %vm1386, %v3496, %v3494
    %v3499 = vmul.f32 %v1389, %v3497
    %v3500 = vmul.f32 %v1389, %v3498
    %v3501 = vmul.f32 %v1392, %v3497
    %v3502 = vmul.f32 %v1392, %v3498
    %v3505 = vrot.slane %v3501, 1
    %v3506 = vrot.slane %v3502, 1
    %v3509 = vadd.f32 %v3499, %v3505
    %v3510 = vadd.f32 %v3500, %v3506
    %v3513 = vcombine.low %v3509, %v3510
    %v3515 = vunpack.c.l.s4 1966171168
    %v3516 = vunpack.c.0.s8 %v3515
    %v3517 = vlaneseq
    %v3518 = vshrl.u32 %v3517, 7
    %v3519 = vsub.s32 %v3516, %v3518
    %v3520 = vrot.slane %v3513, %v3519
    %v3522 = vunpack.c.l.s4 1966171168
    %v3523 = vunpack.c.0.s8 %v3522
    %v3524 = vlaneseq
    %v3525 = vshrl.u32 %v3524, 7
    %v3526 = vsub.s32 %v3523, %v3525
    %v3527 = vrot.slane %v3520, %v3526
    %v3529 = vsel %vm1381, %v3527, 0.0
    %v3530 = vadd.f32 %v3492, %v3529
    %3531 = vrot.lane.b32.xlu0 %v2547, 126
    %v3532 = vpop.permute.xlu0 %3531
    %3533 = vrot.lane.b32.xlu0 %v2548, 126
    %v3534 = vpop.permute.xlu0 %3533
    %v3535 = vsel %vm1429, %v3532, %v3534
    %v3536 = vsel %vm1429, %v3534, %v3532
    %v3537 = vmul.f32 %v1432, %v3535
    %v3538 = vmul.f32 %v1432, %v3536
    %v3539 = vmul.f32 %v1435, %v3535
    %v3540 = vmul.f32 %v1435, %v3536
    %v3543 = vrot.slane %v3539, 1
    %v3544 = vrot.slane %v3540, 1
    %v3547 = vadd.f32 %v3537, %v3543
    %v3548 = vadd.f32 %v3538, %v3544
    %v3551 = vcombine.low %v3547, %v3548
    %v3553 = vunpack.c.l.s4 1966171168
    %v3554 = vunpack.c.0.s8 %v3553
    %v3555 = vlaneseq
    %v3556 = vshrl.u32 %v3555, 7
    %v3557 = vsub.s32 %v3554, %v3556
    %v3558 = vrot.slane %v3551, %v3557
    %v3560 = vunpack.c.l.s4 1966171168
    %v3561 = vunpack.c.0.s8 %v3560
    %v3562 = vlaneseq
    %v3563 = vshrl.u32 %v3562, 7
    %v3564 = vsub.s32 %v3561, %v3563
    %v3565 = vrot.slane %v3558, %v3564
    %v3567 = vsel %vm1424, %v3565, 0.0
    %v3568 = vadd.f32 %v3530, %v3567
    %3569 = vrot.lane.b32.xlu0 %v2547, 125
    %v3570 = vpop.permute.xlu0 %3569
    %3571 = vrot.lane.b32.xlu0 %v2548, 125
    %v3572 = vpop.permute.xlu0 %3571
    %v3573 = vsel %vm1472, %v3570, %v3572
    %v3574 = vsel %vm1472, %v3572, %v3570
    %v3575 = vmul.f32 %v1475, %v3573
    %v3576 = vmul.f32 %v1475, %v3574
    %v3577 = vmul.f32 %v1478, %v3573
    %v3578 = vmul.f32 %v1478, %v3574
    %v3581 = vrot.slane %v3577, 1
    %v3582 = vrot.slane %v3578, 1
    %v3585 = vadd.f32 %v3575, %v3581
    %v3586 = vadd.f32 %v3576, %v3582
    %v3589 = vcombine.low %v3585, %v3586
    %v3591 = vunpack.c.l.s4 1966171168
    %v3592 = vunpack.c.0.s8 %v3591
    %v3593 = vlaneseq
    %v3594 = vshrl.u32 %v3593, 7
    %v3595 = vsub.s32 %v3592, %v3594
    %v3596 = vrot.slane %v3589, %v3595
    %v3598 = vunpack.c.l.s4 1966171168
    %v3599 = vunpack.c.0.s8 %v3598
    %v3600 = vlaneseq
    %v3601 = vshrl.u32 %v3600, 7
    %v3602 = vsub.s32 %v3599, %v3601
    %v3603 = vrot.slane %v3596, %v3602
    %v3605 = vsel %vm1467, %v3603, 0.0
    %v3606 = vadd.f32 %v3568, %v3605
    %3607 = vrot.lane.b32.xlu0 %v2547, 115
    %v3608 = vpop.permute.xlu0 %3607
    %3609 = vrot.lane.b32.xlu0 %v2548, 115
    %v3610 = vpop.permute.xlu0 %3609
    %v3611 = vsel %vm1518, %v3608, %v3610
    %v3612 = vsel %vm1518, %v3610, %v3608
    %v3613 = vmul.f32 %v1521, %v3611
    %v3614 = vmul.f32 %v1521, %v3612
    %v3615 = vmul.f32 %v1524, %v3611
    %v3616 = vmul.f32 %v1524, %v3612
    %v3619 = vrot.slane %v3615, 1
    %v3620 = vrot.slane %v3616, 1
    %v3623 = vadd.f32 %v3613, %v3619
    %v3624 = vadd.f32 %v3614, %v3620
    %v3627 = vcombine.low %v3623, %v3624
    %v3629 = vunpack.c.l.s4 1966171168
    %v3630 = vunpack.c.0.s8 %v3629
    %v3631 = vlaneseq
    %v3632 = vshrl.u32 %v3631, 7
    %v3633 = vsub.s32 %v3630, %v3632
    %v3634 = vrot.slane %v3627, %v3633
    %v3636 = vunpack.c.l.s4 1966171168
    %v3637 = vunpack.c.0.s8 %v3636
    %v3638 = vlaneseq
    %v3639 = vshrl.u32 %v3638, 7
    %v3640 = vsub.s32 %v3637, %v3639
    %v3641 = vrot.slane %v3634, %v3640
    %v3643 = vsel %vm1513, %v3641, 0.0
    %v3644 = vadd.f32 %v3606, %v3643
    %3645 = vrot.lane.b32.xlu0 %v2547, 114
    %v3646 = vpop.permute.xlu0 %3645
    %3647 = vrot.lane.b32.xlu0 %v2548, 114
    %v3648 = vpop.permute.xlu0 %3647
    %v3649 = vsel %vm1561, %v3646, %v3648
    %v3650 = vsel %vm1561, %v3648, %v3646
    %v3651 = vmul.f32 %v1564, %v3649
    %v3652 = vmul.f32 %v1564, %v3650
    %v3653 = vmul.f32 %v1567, %v3649
    %v3654 = vmul.f32 %v1567, %v3650
    %v3657 = vrot.slane %v3653, 1
    %v3658 = vrot.slane %v3654, 1
    %v3661 = vadd.f32 %v3651, %v3657
    %v3662 = vadd.f32 %v3652, %v3658
    %v3665 = vcombine.low %v3661, %v3662
    %v3667 = vunpack.c.l.s4 1966171168
    %v3668 = vunpack.c.0.s8 %v3667
    %v3669 = vlaneseq
    %v3670 = vshrl.u32 %v3669, 7
    %v3671 = vsub.s32 %v3668, %v3670
    %v3672 = vrot.slane %v3665, %v3671
    %v3674 = vunpack.c.l.s4 1966171168
    %v3675 = vunpack.c.0.s8 %v3674
    %v3676 = vlaneseq
    %v3677 = vshrl.u32 %v3676, 7
    %v3678 = vsub.s32 %v3675, %v3677
    %v3679 = vrot.slane %v3672, %v3678
    %v3681 = vsel %vm1556, %v3679, 0.0
    %v3682 = vadd.f32 %v3644, %v3681
    %3683 = vrot.lane.b32.xlu0 %v2547, 113
    %v3684 = vpop.permute.xlu0 %3683
    %3685 = vrot.lane.b32.xlu0 %v2548, 113
    %v3686 = vpop.permute.xlu0 %3685
    %v3687 = vsel %vm1604, %v3684, %v3686
    %v3688 = vsel %vm1604, %v3686, %v3684
    %v3689 = vmul.f32 %v1607, %v3687
    %v3690 = vmul.f32 %v1607, %v3688
    %v3691 = vmul.f32 %v1610, %v3687
    %v3692 = vmul.f32 %v1610, %v3688
    %v3695 = vrot.slane %v3691, 1
    %v3696 = vrot.slane %v3692, 1
    %v3699 = vadd.f32 %v3689, %v3695
    %v3700 = vadd.f32 %v3690, %v3696
    %v3703 = vcombine.low %v3699, %v3700
    %v3705 = vunpack.c.l.s4 1966171168
    %v3706 = vunpack.c.0.s8 %v3705
    %v3707 = vlaneseq
    %v3708 = vshrl.u32 %v3707, 7
    %v3709 = vsub.s32 %v3706, %v3708
    %v3710 = vrot.slane %v3703, %v3709
    %v3712 = vunpack.c.l.s4 1966171168
    %v3713 = vunpack.c.0.s8 %v3712
    %v3714 = vlaneseq
    %v3715 = vshrl.u32 %v3714, 7
    %v3716 = vsub.s32 %v3713, %v3715
    %v3717 = vrot.slane %v3710, %v3716
    %v3719 = vsel %vm1599, %v3717, 0.0
    %v3720 = vadd.f32 %v3682, %v3719
    %3721 = vrot.lane.b32.xlu0 %v2547, 112
    %v3722 = vpop.permute.xlu0 %3721
    %3723 = vrot.lane.b32.xlu0 %v2548, 112
    %v3724 = vpop.permute.xlu0 %3723
    %v3725 = vsel %vm1647, %v3722, %v3724
    %v3726 = vsel %vm1647, %v3724, %v3722
    %v3727 = vmul.f32 %v1650, %v3725
    %v3728 = vmul.f32 %v1650, %v3726
    %v3729 = vmul.f32 %v1653, %v3725
    %v3730 = vmul.f32 %v1653, %v3726
    %v3733 = vrot.slane %v3729, 1
    %v3734 = vrot.slane %v3730, 1
    %v3737 = vadd.f32 %v3727, %v3733
    %v3738 = vadd.f32 %v3728, %v3734
    %v3741 = vcombine.low %v3737, %v3738
    %v3743 = vunpack.c.l.s4 1966171168
    %v3744 = vunpack.c.0.s8 %v3743
    %v3745 = vlaneseq
    %v3746 = vshrl.u32 %v3745, 7
    %v3747 = vsub.s32 %v3744, %v3746
    %v3748 = vrot.slane %v3741, %v3747
    %v3750 = vunpack.c.l.s4 1966171168
    %v3751 = vunpack.c.0.s8 %v3750
    %v3752 = vlaneseq
    %v3753 = vshrl.u32 %v3752, 7
    %v3754 = vsub.s32 %v3751, %v3753
    %v3755 = vrot.slane %v3748, %v3754
    %v3757 = vsel %vm1642, %v3755, 0.0
    %v3758 = vadd.f32 %v3720, %v3757
    %3759 = vrot.lane.b32.xlu0 %v2547, 111
    %v3760 = vpop.permute.xlu0 %3759
    %3761 = vrot.lane.b32.xlu0 %v2548, 111
    %v3762 = vpop.permute.xlu0 %3761
    %v3763 = vsel %vm1690, %v3760, %v3762
    %v3764 = vsel %vm1690, %v3762, %v3760
    %v3765 = vmul.f32 %v1693, %v3763
    %v3766 = vmul.f32 %v1693, %v3764
    %v3767 = vmul.f32 %v1696, %v3763
    %v3768 = vmul.f32 %v1696, %v3764
    %v3771 = vrot.slane %v3767, 1
    %v3772 = vrot.slane %v3768, 1
    %v3775 = vadd.f32 %v3765, %v3771
    %v3776 = vadd.f32 %v3766, %v3772
    %v3779 = vcombine.low %v3775, %v3776
    %v3781 = vunpack.c.l.s4 1966171168
    %v3782 = vunpack.c.0.s8 %v3781
    %v3783 = vlaneseq
    %v3784 = vshrl.u32 %v3783, 7
    %v3785 = vsub.s32 %v3782, %v3784
    %v3786 = vrot.slane %v3779, %v3785
    %v3788 = vunpack.c.l.s4 1966171168
    %v3789 = vunpack.c.0.s8 %v3788
    %v3790 = vlaneseq
    %v3791 = vshrl.u32 %v3790, 7
    %v3792 = vsub.s32 %v3789, %v3791
    %v3793 = vrot.slane %v3786, %v3792
    %v3795 = vsel %vm1685, %v3793, 0.0
    %v3796 = vadd.f32 %v3758, %v3795
    %3797 = vrot.lane.b32.xlu0 %v2547, 110
    %v3798 = vpop.permute.xlu0 %3797
    %3799 = vrot.lane.b32.xlu0 %v2548, 110
    %v3800 = vpop.permute.xlu0 %3799
    %v3801 = vsel %vm1733, %v3798, %v3800
    %v3802 = vsel %vm1733, %v3800, %v3798
    %v3803 = vmul.f32 %v1736, %v3801
    %v3804 = vmul.f32 %v1736, %v3802
    %v3805 = vmul.f32 %v1739, %v3801
    %v3806 = vmul.f32 %v1739, %v3802
    %v3809 = vrot.slane %v3805, 1
    %v3810 = vrot.slane %v3806, 1
    %v3813 = vadd.f32 %v3803, %v3809
    %v3814 = vadd.f32 %v3804, %v3810
    %v3817 = vcombine.low %v3813, %v3814
    %v3819 = vunpack.c.l.s4 1966171168
    %v3820 = vunpack.c.0.s8 %v3819
    %v3821 = vlaneseq
    %v3822 = vshrl.u32 %v3821, 7
    %v3823 = vsub.s32 %v3820, %v3822
    %v3824 = vrot.slane %v3817, %v3823
    %v3826 = vunpack.c.l.s4 1966171168
    %v3827 = vunpack.c.0.s8 %v3826
    %v3828 = vlaneseq
    %v3829 = vshrl.u32 %v3828, 7
    %v3830 = vsub.s32 %v3827, %v3829
    %v3831 = vrot.slane %v3824, %v3830
    %v3833 = vsel %vm1728, %v3831, 0.0
    %v3834 = vadd.f32 %v3796, %v3833
    %3835 = vrot.lane.b32.xlu0 %v2547, 109
    %v3836 = vpop.permute.xlu0 %3835
    %3837 = vrot.lane.b32.xlu0 %v2548, 109
    %v3838 = vpop.permute.xlu0 %3837
    %v3839 = vsel %vm1776, %v3836, %v3838
    %v3840 = vsel %vm1776, %v3838, %v3836
    %v3841 = vmul.f32 %v1779, %v3839
    %v3842 = vmul.f32 %v1779, %v3840
    %v3843 = vmul.f32 %v1782, %v3839
    %v3844 = vmul.f32 %v1782, %v3840
    %v3847 = vrot.slane %v3843, 1
    %v3848 = vrot.slane %v3844, 1
    %v3851 = vadd.f32 %v3841, %v3847
    %v3852 = vadd.f32 %v3842, %v3848
    %v3855 = vcombine.low %v3851, %v3852
    %v3857 = vunpack.c.l.s4 1966171168
    %v3858 = vunpack.c.0.s8 %v3857
    %v3859 = vlaneseq
    %v3860 = vshrl.u32 %v3859, 7
    %v3861 = vsub.s32 %v3858, %v3860
    %v3862 = vrot.slane %v3855, %v3861
    %v3864 = vunpack.c.l.s4 1966171168
    %v3865 = vunpack.c.0.s8 %v3864
    %v3866 = vlaneseq
    %v3867 = vshrl.u32 %v3866, 7
    %v3868 = vsub.s32 %v3865, %v3867
    %v3869 = vrot.slane %v3862, %v3868
    %v3871 = vsel %vm1771, %v3869, 0.0
    %v3872 = vadd.f32 %v3834, %v3871
    %3873 = vrot.lane.b32.xlu0 %v2547, 99
    %v3874 = vpop.permute.xlu0 %3873
    %3875 = vrot.lane.b32.xlu0 %v2548, 99
    %v3876 = vpop.permute.xlu0 %3875
    %v3877 = vsel %vm1822, %v3874, %v3876
    %v3878 = vsel %vm1822, %v3876, %v3874
    %v3879 = vmul.f32 %v1825, %v3877
    %v3880 = vmul.f32 %v1825, %v3878
    %v3881 = vmul.f32 %v1828, %v3877
    %v3882 = vmul.f32 %v1828, %v3878
    %v3885 = vrot.slane %v3881, 1
    %v3886 = vrot.slane %v3882, 1
    %v3889 = vadd.f32 %v3879, %v3885
    %v3890 = vadd.f32 %v3880, %v3886
    %v3893 = vcombine.low %v3889, %v3890
    %v3895 = vunpack.c.l.s4 1966171168
    %v3896 = vunpack.c.0.s8 %v3895
    %v3897 = vlaneseq
    %v3898 = vshrl.u32 %v3897, 7
    %v3899 = vsub.s32 %v3896, %v3898
    %v3900 = vrot.slane %v3893, %v3899
    %v3902 = vunpack.c.l.s4 1966171168
    %v3903 = vunpack.c.0.s8 %v3902
    %v3904 = vlaneseq
    %v3905 = vshrl.u32 %v3904, 7
    %v3906 = vsub.s32 %v3903, %v3905
    %v3907 = vrot.slane %v3900, %v3906
    %v3909 = vsel %vm1817, %v3907, 0.0
    %v3910 = vadd.f32 %v3872, %v3909
    %3911 = vrot.lane.b32.xlu0 %v2547, 98
    %v3912 = vpop.permute.xlu0 %3911
    %3913 = vrot.lane.b32.xlu0 %v2548, 98
    %v3914 = vpop.permute.xlu0 %3913
    %v3915 = vsel %vm1865, %v3912, %v3914
    %v3916 = vsel %vm1865, %v3914, %v3912
    %v3917 = vmul.f32 %v1868, %v3915
    %v3918 = vmul.f32 %v1868, %v3916
    %v3919 = vmul.f32 %v1871, %v3915
    %v3920 = vmul.f32 %v1871, %v3916
    %v3923 = vrot.slane %v3919, 1
    %v3924 = vrot.slane %v3920, 1
    %v3927 = vadd.f32 %v3917, %v3923
    %v3928 = vadd.f32 %v3918, %v3924
    %v3931 = vcombine.low %v3927, %v3928
    %v3933 = vunpack.c.l.s4 1966171168
    %v3934 = vunpack.c.0.s8 %v3933
    %v3935 = vlaneseq
    %v3936 = vshrl.u32 %v3935, 7
    %v3937 = vsub.s32 %v3934, %v3936
    %v3938 = vrot.slane %v3931, %v3937
    %v3940 = vunpack.c.l.s4 1966171168
    %v3941 = vunpack.c.0.s8 %v3940
    %v3942 = vlaneseq
    %v3943 = vshrl.u32 %v3942, 7
    %v3944 = vsub.s32 %v3941, %v3943
    %v3945 = vrot.slane %v3938, %v3944
    %v3947 = vsel %vm1860, %v3945, 0.0
    %v3948 = vadd.f32 %v3910, %v3947
    %3949 = vrot.lane.b32.xlu0 %v2547, 97
    %v3950 = vpop.permute.xlu0 %3949
    %3951 = vrot.lane.b32.xlu0 %v2548, 97
    %v3952 = vpop.permute.xlu0 %3951
    %v3953 = vsel %vm1908, %v3950, %v3952
    %v3954 = vsel %vm1908, %v3952, %v3950
    %v3955 = vmul.f32 %v1911, %v3953
    %v3956 = vmul.f32 %v1911, %v3954
    %v3957 = vmul.f32 %v1914, %v3953
    %v3958 = vmul.f32 %v1914, %v3954
    %v3961 = vrot.slane %v3957, 1
    %v3962 = vrot.slane %v3958, 1
    %v3965 = vadd.f32 %v3955, %v3961
    %v3966 = vadd.f32 %v3956, %v3962
    %v3969 = vcombine.low %v3965, %v3966
    %v3971 = vunpack.c.l.s4 1966171168
    %v3972 = vunpack.c.0.s8 %v3971
    %v3973 = vlaneseq
    %v3974 = vshrl.u32 %v3973, 7
    %v3975 = vsub.s32 %v3972, %v3974
    %v3976 = vrot.slane %v3969, %v3975
    %v3978 = vunpack.c.l.s4 1966171168
    %v3979 = vunpack.c.0.s8 %v3978
    %v3980 = vlaneseq
    %v3981 = vshrl.u32 %v3980, 7
    %v3982 = vsub.s32 %v3979, %v3981
    %v3983 = vrot.slane %v3976, %v3982
    %v3985 = vsel %vm1903, %v3983, 0.0
    %v3986 = vadd.f32 %v3948, %v3985
    %3987 = vrot.lane.b32.xlu0 %v2547, 96
    %v3988 = vpop.permute.xlu0 %3987
    %3989 = vrot.lane.b32.xlu0 %v2548, 96
    %v3990 = vpop.permute.xlu0 %3989
    %v3991 = vsel %vm1951, %v3988, %v3990
    %v3992 = vsel %vm1951, %v3990, %v3988
    %v3993 = vmul.f32 %v1954, %v3991
    %v3994 = vmul.f32 %v1954, %v3992
    %v3995 = vmul.f32 %v1957, %v3991
    %v3996 = vmul.f32 %v1957, %v3992
    %v3999 = vrot.slane %v3995, 1
    %v4000 = vrot.slane %v3996, 1
    %v4003 = vadd.f32 %v3993, %v3999
    %v4004 = vadd.f32 %v3994, %v4000
    %v4007 = vcombine.low %v4003, %v4004
    %v4009 = vunpack.c.l.s4 1966171168
    %v4010 = vunpack.c.0.s8 %v4009
    %v4011 = vlaneseq
    %v4012 = vshrl.u32 %v4011, 7
    %v4013 = vsub.s32 %v4010, %v4012
    %v4014 = vrot.slane %v4007, %v4013
    %v4016 = vunpack.c.l.s4 1966171168
    %v4017 = vunpack.c.0.s8 %v4016
    %v4018 = vlaneseq
    %v4019 = vshrl.u32 %v4018, 7
    %v4020 = vsub.s32 %v4017, %v4019
    %v4021 = vrot.slane %v4014, %v4020
    %v4023 = vsel %vm1946, %v4021, 0.0
    %v4024 = vadd.f32 %v3986, %v4023
    %4025 = vrot.lane.b32.xlu0 %v2547, 95
    %v4026 = vpop.permute.xlu0 %4025
    %4027 = vrot.lane.b32.xlu0 %v2548, 95
    %v4028 = vpop.permute.xlu0 %4027
    %v4029 = vsel %vm1994, %v4026, %v4028
    %v4030 = vsel %vm1994, %v4028, %v4026
    %v4031 = vmul.f32 %v1997, %v4029
    %v4032 = vmul.f32 %v1997, %v4030
    %v4033 = vmul.f32 %v2000, %v4029
    %v4034 = vmul.f32 %v2000, %v4030
    %v4037 = vrot.slane %v4033, 1
    %v4038 = vrot.slane %v4034, 1
    %v4041 = vadd.f32 %v4031, %v4037
    %v4042 = vadd.f32 %v4032, %v4038
    %v4045 = vcombine.low %v4041, %v4042
    %v4047 = vunpack.c.l.s4 1966171168
    %v4048 = vunpack.c.0.s8 %v4047
    %v4049 = vlaneseq
    %v4050 = vshrl.u32 %v4049, 7
    %v4051 = vsub.s32 %v4048, %v4050
    %v4052 = vrot.slane %v4045, %v4051
    %v4054 = vunpack.c.l.s4 1966171168
    %v4055 = vunpack.c.0.s8 %v4054
    %v4056 = vlaneseq
    %v4057 = vshrl.u32 %v4056, 7
    %v4058 = vsub.s32 %v4055, %v4057
    %v4059 = vrot.slane %v4052, %v4058
    %v4061 = vsel %vm1989, %v4059, 0.0
    %v4062 = vadd.f32 %v4024, %v4061
    %4063 = vrot.lane.b32.xlu0 %v2547, 94
    %v4064 = vpop.permute.xlu0 %4063
    %4065 = vrot.lane.b32.xlu0 %v2548, 94
    %v4066 = vpop.permute.xlu0 %4065
    %v4067 = vsel %vm2037, %v4064, %v4066
    %v4068 = vsel %vm2037, %v4066, %v4064
    %v4069 = vmul.f32 %v2040, %v4067
    %v4070 = vmul.f32 %v2040, %v4068
    %v4071 = vmul.f32 %v2043, %v4067
    %v4072 = vmul.f32 %v2043, %v4068
    %v4075 = vrot.slane %v4071, 1
    %v4076 = vrot.slane %v4072, 1
    %v4079 = vadd.f32 %v4069, %v4075
    %v4080 = vadd.f32 %v4070, %v4076
    %v4083 = vcombine.low %v4079, %v4080
    %v4085 = vunpack.c.l.s4 1966171168
    %v4086 = vunpack.c.0.s8 %v4085
    %v4087 = vlaneseq
    %v4088 = vshrl.u32 %v4087, 7
    %v4089 = vsub.s32 %v4086, %v4088
    %v4090 = vrot.slane %v4083, %v4089
    %v4092 = vunpack.c.l.s4 1966171168
    %v4093 = vunpack.c.0.s8 %v4092
    %v4094 = vlaneseq
    %v4095 = vshrl.u32 %v4094, 7
    %v4096 = vsub.s32 %v4093, %v4095
    %v4097 = vrot.slane %v4090, %v4096
    %v4099 = vsel %vm2032, %v4097, 0.0
    %v4100 = vadd.f32 %v4062, %v4099
    %4101 = vrot.lane.b32.xlu0 %v2547, 93
    %v4102 = vpop.permute.xlu0 %4101
    %4103 = vrot.lane.b32.xlu0 %v2548, 93
    %v4104 = vpop.permute.xlu0 %4103
    %v4105 = vsel %vm2080, %v4102, %v4104
    %v4106 = vsel %vm2080, %v4104, %v4102
    %v4107 = vmul.f32 %v2083, %v4105
    %v4108 = vmul.f32 %v2083, %v4106
    %v4109 = vmul.f32 %v2086, %v4105
    %v4110 = vmul.f32 %v2086, %v4106
    %v4113 = vrot.slane %v4109, 1
    %v4114 = vrot.slane %v4110, 1
    %v4117 = vadd.f32 %v4107, %v4113
    %v4118 = vadd.f32 %v4108, %v4114
    %v4121 = vcombine.low %v4117, %v4118
    %v4123 = vunpack.c.l.s4 1966171168
    %v4124 = vunpack.c.0.s8 %v4123
    %v4125 = vlaneseq
    %v4126 = vshrl.u32 %v4125, 7
    %v4127 = vsub.s32 %v4124, %v4126
    %v4128 = vrot.slane %v4121, %v4127
    %v4130 = vunpack.c.l.s4 1966171168
    %v4131 = vunpack.c.0.s8 %v4130
    %v4132 = vlaneseq
    %v4133 = vshrl.u32 %v4132, 7
    %v4134 = vsub.s32 %v4131, %v4133
    %v4135 = vrot.slane %v4128, %v4134
    %v4137 = vsel %vm2075, %v4135, 0.0
    %v4138 = vadd.f32 %v4100, %v4137
    %4139 = vrot.lane.b32.xlu0 %v2547, 83
    %v4140 = vpop.permute.xlu0 %4139
    %4141 = vrot.lane.b32.xlu0 %v2548, 83
    %v4142 = vpop.permute.xlu0 %4141
    %v4143 = vsel %vm2126, %v4140, %v4142
    %v4144 = vsel %vm2126, %v4142, %v4140
    %v4145 = vmul.f32 %v2129, %v4143
    %v4146 = vmul.f32 %v2129, %v4144
    %v4147 = vmul.f32 %v2132, %v4143
    %v4148 = vmul.f32 %v2132, %v4144
    %v4151 = vrot.slane %v4147, 1
    %v4152 = vrot.slane %v4148, 1
    %v4155 = vadd.f32 %v4145, %v4151
    %v4156 = vadd.f32 %v4146, %v4152
    %v4159 = vcombine.low %v4155, %v4156
    %v4161 = vunpack.c.l.s4 1966171168
    %v4162 = vunpack.c.0.s8 %v4161
    %v4163 = vlaneseq
    %v4164 = vshrl.u32 %v4163, 7
    %v4165 = vsub.s32 %v4162, %v4164
    %v4166 = vrot.slane %v4159, %v4165
    %v4168 = vunpack.c.l.s4 1966171168
    %v4169 = vunpack.c.0.s8 %v4168
    %v4170 = vlaneseq
    %v4171 = vshrl.u32 %v4170, 7
    %v4172 = vsub.s32 %v4169, %v4171
    %v4173 = vrot.slane %v4166, %v4172
    %v4175 = vsel %vm2121, %v4173, 0.0
    %v4176 = vadd.f32 %v4138, %v4175
    %4177 = vrot.lane.b32.xlu0 %v2547, 82
    %v4178 = vpop.permute.xlu0 %4177
    %4179 = vrot.lane.b32.xlu0 %v2548, 82
    %v4180 = vpop.permute.xlu0 %4179
    %v4181 = vsel %vm2169, %v4178, %v4180
    %v4182 = vsel %vm2169, %v4180, %v4178
    %v4183 = vmul.f32 %v2172, %v4181
    %v4184 = vmul.f32 %v2172, %v4182
    %v4185 = vmul.f32 %v2175, %v4181
    %v4186 = vmul.f32 %v2175, %v4182
    %v4189 = vrot.slane %v4185, 1
    %v4190 = vrot.slane %v4186, 1
    %v4193 = vadd.f32 %v4183, %v4189
    %v4194 = vadd.f32 %v4184, %v4190
    %v4197 = vcombine.low %v4193, %v4194
    %v4199 = vunpack.c.l.s4 1966171168
    %v4200 = vunpack.c.0.s8 %v4199
    %v4201 = vlaneseq
    %v4202 = vshrl.u32 %v4201, 7
    %v4203 = vsub.s32 %v4200, %v4202
    %v4204 = vrot.slane %v4197, %v4203
    %v4206 = vunpack.c.l.s4 1966171168
    %v4207 = vunpack.c.0.s8 %v4206
    %v4208 = vlaneseq
    %v4209 = vshrl.u32 %v4208, 7
    %v4210 = vsub.s32 %v4207, %v4209
    %v4211 = vrot.slane %v4204, %v4210
    %v4213 = vsel %vm2164, %v4211, 0.0
    %v4214 = vadd.f32 %v4176, %v4213
    %4215 = vrot.lane.b32.xlu0 %v2547, 81
    %v4216 = vpop.permute.xlu0 %4215
    %4217 = vrot.lane.b32.xlu0 %v2548, 81
    %v4218 = vpop.permute.xlu0 %4217
    %v4219 = vsel %vm2212, %v4216, %v4218
    %v4220 = vsel %vm2212, %v4218, %v4216
    %v4221 = vmul.f32 %v2215, %v4219
    %v4222 = vmul.f32 %v2215, %v4220
    %v4223 = vmul.f32 %v2218, %v4219
    %v4224 = vmul.f32 %v2218, %v4220
    %v4227 = vrot.slane %v4223, 1
    %v4228 = vrot.slane %v4224, 1
    %v4231 = vadd.f32 %v4221, %v4227
    %v4232 = vadd.f32 %v4222, %v4228
    %v4235 = vcombine.low %v4231, %v4232
    %v4237 = vunpack.c.l.s4 1966171168
    %v4238 = vunpack.c.0.s8 %v4237
    %v4239 = vlaneseq
    %v4240 = vshrl.u32 %v4239, 7
    %v4241 = vsub.s32 %v4238, %v4240
    %v4242 = vrot.slane %v4235, %v4241
    %v4244 = vunpack.c.l.s4 1966171168
    %v4245 = vunpack.c.0.s8 %v4244
    %v4246 = vlaneseq
    %v4247 = vshrl.u32 %v4246, 7
    %v4248 = vsub.s32 %v4245, %v4247
    %v4249 = vrot.slane %v4242, %v4248
    %v4251 = vsel %vm2207, %v4249, 0.0
    %v4252 = vadd.f32 %v4214, %v4251
    %4253 = vrot.lane.b32.xlu0 %v2547, 80
    %v4254 = vpop.permute.xlu0 %4253
    %4255 = vrot.lane.b32.xlu0 %v2548, 80
    %v4256 = vpop.permute.xlu0 %4255
    %v4257 = vsel %vm2255, %v4254, %v4256
    %v4258 = vsel %vm2255, %v4256, %v4254
    %v4259 = vmul.f32 %v2258, %v4257
    %v4260 = vmul.f32 %v2258, %v4258
    %v4261 = vmul.f32 %v2261, %v4257
    %v4262 = vmul.f32 %v2261, %v4258
    %v4265 = vrot.slane %v4261, 1
    %v4266 = vrot.slane %v4262, 1
    %v4269 = vadd.f32 %v4259, %v4265
    %v4270 = vadd.f32 %v4260, %v4266
    %v4273 = vcombine.low %v4269, %v4270
    %v4275 = vunpack.c.l.s4 1966171168
    %v4276 = vunpack.c.0.s8 %v4275
    %v4277 = vlaneseq
    %v4278 = vshrl.u32 %v4277, 7
    %v4279 = vsub.s32 %v4276, %v4278
    %v4280 = vrot.slane %v4273, %v4279
    %v4282 = vunpack.c.l.s4 1966171168
    %v4283 = vunpack.c.0.s8 %v4282
    %v4284 = vlaneseq
    %v4285 = vshrl.u32 %v4284, 7
    %v4286 = vsub.s32 %v4283, %v4285
    %v4287 = vrot.slane %v4280, %v4286
    %v4289 = vsel %vm2250, %v4287, 0.0
    %v4290 = vadd.f32 %v4252, %v4289
    %4291 = vrot.lane.b32.xlu0 %v2547, 79
    %v4292 = vpop.permute.xlu0 %4291
    %4293 = vrot.lane.b32.xlu0 %v2548, 79
    %v4294 = vpop.permute.xlu0 %4293
    %v4295 = vsel %vm2298, %v4292, %v4294
    %v4296 = vsel %vm2298, %v4294, %v4292
    %v4297 = vmul.f32 %v2301, %v4295
    %v4298 = vmul.f32 %v2301, %v4296
    %v4299 = vmul.f32 %v2304, %v4295
    %v4300 = vmul.f32 %v2304, %v4296
    %v4303 = vrot.slane %v4299, 1
    %v4304 = vrot.slane %v4300, 1
    %v4307 = vadd.f32 %v4297, %v4303
    %v4308 = vadd.f32 %v4298, %v4304
    %v4311 = vcombine.low %v4307, %v4308
    %v4313 = vunpack.c.l.s4 1966171168
    %v4314 = vunpack.c.0.s8 %v4313
    %v4315 = vlaneseq
    %v4316 = vshrl.u32 %v4315, 7
    %v4317 = vsub.s32 %v4314, %v4316
    %v4318 = vrot.slane %v4311, %v4317
    %v4320 = vunpack.c.l.s4 1966171168
    %v4321 = vunpack.c.0.s8 %v4320
    %v4322 = vlaneseq
    %v4323 = vshrl.u32 %v4322, 7
    %v4324 = vsub.s32 %v4321, %v4323
    %v4325 = vrot.slane %v4318, %v4324
    %v4327 = vsel %vm2293, %v4325, 0.0
    %v4328 = vadd.f32 %v4290, %v4327
    %4329 = vrot.lane.b32.xlu0 %v2547, 78
    %v4330 = vpop.permute.xlu0 %4329
    %4331 = vrot.lane.b32.xlu0 %v2548, 78
    %v4332 = vpop.permute.xlu0 %4331
    %v4333 = vsel %vm2341, %v4330, %v4332
    %v4334 = vsel %vm2341, %v4332, %v4330
    %v4335 = vmul.f32 %v2344, %v4333
    %v4336 = vmul.f32 %v2344, %v4334
    %v4337 = vmul.f32 %v2347, %v4333
    %v4338 = vmul.f32 %v2347, %v4334
    %v4341 = vrot.slane %v4337, 1
    %v4342 = vrot.slane %v4338, 1
    %v4345 = vadd.f32 %v4335, %v4341
    %v4346 = vadd.f32 %v4336, %v4342
    %v4349 = vcombine.low %v4345, %v4346
    %v4351 = vunpack.c.l.s4 1966171168
    %v4352 = vunpack.c.0.s8 %v4351
    %v4353 = vlaneseq
    %v4354 = vshrl.u32 %v4353, 7
    %v4355 = vsub.s32 %v4352, %v4354
    %v4356 = vrot.slane %v4349, %v4355
    %v4358 = vunpack.c.l.s4 1966171168
    %v4359 = vunpack.c.0.s8 %v4358
    %v4360 = vlaneseq
    %v4361 = vshrl.u32 %v4360, 7
    %v4362 = vsub.s32 %v4359, %v4361
    %v4363 = vrot.slane %v4356, %v4362
    %v4365 = vsel %vm2336, %v4363, 0.0
    %v4366 = vadd.f32 %v4328, %v4365
    %4367 = vrot.lane.b32.xlu0 %v2547, 77
    %v4368 = vpop.permute.xlu0 %4367
    %4369 = vrot.lane.b32.xlu0 %v2548, 77
    %v4370 = vpop.permute.xlu0 %4369
    %v4371 = vsel %vm2384, %v4368, %v4370
    %v4372 = vsel %vm2384, %v4370, %v4368
    %v4373 = vmul.f32 %v2387, %v4371
    %v4374 = vmul.f32 %v2387, %v4372
    %v4375 = vmul.f32 %v2390, %v4371
    %v4376 = vmul.f32 %v2390, %v4372
    %v4379 = vrot.slane %v4375, 1
    %v4380 = vrot.slane %v4376, 1
    %v4383 = vadd.f32 %v4373, %v4379
    %v4384 = vadd.f32 %v4374, %v4380
    %v4387 = vcombine.low %v4383, %v4384
    %v4389 = vunpack.c.l.s4 1966171168
    %v4390 = vunpack.c.0.s8 %v4389
    %v4391 = vlaneseq
    %v4392 = vshrl.u32 %v4391, 7
    %v4393 = vsub.s32 %v4390, %v4392
    %v4394 = vrot.slane %v4387, %v4393
    %v4396 = vunpack.c.l.s4 1966171168
    %v4397 = vunpack.c.0.s8 %v4396
    %v4398 = vlaneseq
    %v4399 = vshrl.u32 %v4398, 7
    %v4400 = vsub.s32 %v4397, %v4399
    %v4401 = vrot.slane %v4394, %v4400
    %v4403 = vsel %vm2379, %v4401, 0.0
    %v4404 = vadd.f32 %v4366, %v4403
    %v4405 = vxor.u32 %v4404, 2147483648
    %v4406 = vmul.f32 %v4405, 1.442695
    %v4407 = vpow.pop %v4406
    %v4408 = vadd.f32 %v4407, 1.0
    %v4409 = vrcp.pop %v4408
    %v4410 = vmul.f32 1.0, %v4409
    %v4412 = vlaneseq
    %v4413 = vshrl.u32 %v4412, 7
    %v4414 = vsub.s32 0, %v4413
    %v4415 = vrot.slane %v4410, %v4414
    %v4416 = vlaneseq
    %v4417 = vshrl.u32 %v4416, 7
    %v4418 = vsub.s32 1, %v4417
    %v4419 = vrot.slane %v4410, %v4418
    %v4420 = vcombine.low %v4415, %v4419
    %v4422 = vmul.f32 %v2513, %v4420
    %s4423 = scalar_lea.vmem [#allocation9], 8
    %4424 = vst [vmem:[%s4423] sm:$0xff] %v4422
    // Predicated region
    $region46: #{tpu_custom_call.1} parent=1 // pred_check
      _
    $region47: #{tpu_custom_call.1} parent=1 // pred_check_branch
      %4426 = sbr.rel (0) target = $region49
    $region48: #{tpu_custom_call.1} parent=1 // pred_region
      %s4428 = ssub.s32 256, 256
      %4429 = vsyncadd [#allocation4], %s4428
      %s4430 = sshll.u32 [#allocation9], 4
      %s4431 = int_to_ptr.vmem [resolvable:$true] %s4430
      %4436 = dma.vmem_to_hbm [thread:$0]  %s4431, 256, %s8, [#allocation4], 128, 128, 8
    $region49: #{tpu_custom_call.1} parent=1 // pred_fallthru
      _
    // Predicated region
    $region50: #{tpu_custom_call.1} parent=1 // pred_check
      _
    $region51: #{tpu_custom_call.1} parent=1 // pred_check_branch
      %4438 = sbr.rel (0) target = $region53
    $region52: #{tpu_custom_call.1} parent=1 // pred_region
      %4439 = dma.done [#allocation4], 256
    $region53: #{tpu_custom_call.1} parent=1 // pred_fallthru
      _
    %4440 = vsyncpa [#allocation3], 1
    %4441 = vsyncpa [#allocation7], 1
    %4442 = vsyncpa [#allocation4], 1
    %4443 = vsyncpa [#allocation5], 1

</llo_original>
